<compile_context>
chip_gen: v7x
topology: tpu7x:2x2x1
jax: 0.10.0
libtpu: 0.0.40
codegen_flags: <defaults>
</compile_context>

<pallas_src>
import functools

import jax
import jax.numpy as jnp
from jax.experimental import pallas as pl
from jax.experimental.pallas import tpu as pltpu


def gat_layer_kernel(item_ref, ent_ref, adj_ref, wa_ref, out_ref, *, alpha):
    # item_ref: (tn, F) stream dtype; ent_ref: (tn, M, F) stream dtype
    # adj_ref:  (tn, M) bf16 0/1 mask; wa_ref: (2, F) f32 = [W@a[:O], W@a[O:]]
    f32 = jnp.float32
    ent = ent_ref[...]                 # keep the long-lived value in the narrow dtype
    adj = adj_ref[...]                 # (tn, M) bf16 mask
    wa1 = wa_ref[0:1, :]               # (1, F) — keep 2-D, no 1-D relayout
    wa2 = wa_ref[1:2, :]               # (1, F)

    # e_ij = LeakyReLU( Wh_i @ a[:O] + We_ij @ a[O:] )
    #      = LeakyReLU( item_i @ (W a1) + ent_ij @ (W a2) )   [W folded outside]
    # f32 upcasts happen inside each consumer so the full-tile f32 copies are
    # transient (mul + lane-axis reduce on the VPU/XLU; no MXU matvec).
    s1 = jnp.sum(item_ref[...].astype(f32) * wa1, axis=-1, keepdims=True)   # (tn, 1)
    s2 = jnp.sum(ent.astype(f32) * wa2[:, None, :], axis=-1)                # (tn, M)
    logits = s1 + s2
    e = jnp.where(logits > 0, logits, alpha * logits)                       # LeakyReLU

    # adjacency mask + softmax over the neighbor axis (dim=1)
    masked = jnp.where(adj > 0, e, jnp.float32(-9e15))
    m = jnp.max(masked, axis=1, keepdims=True)
    p = jnp.exp(masked - m)
    attn = p / jnp.sum(p, axis=1, keepdims=True)                            # (tn, M)

    # entity_emb_weighted = bmm(attn.unsqueeze(1), entity_embs).squeeze()
    # M is tiny (16): keep on the VPU (mul + sublane reduce), do not force MXU.
    weighted = jnp.sum(attn[:, :, None] * ent.astype(f32), axis=1)          # (tn, F)

    h = weighted + item_ref[...].astype(f32)                                # residual
    # ELU (concat=True); clamp so exp never produces inf for h > 0.
    out = jnp.where(h > 0, h, jnp.exp(jnp.minimum(h, 0.0)) - 1.0)
    out_ref[...] = out.astype(out_ref.dtype)


def _tpu_vmem_capacity_bytes():
    """Physical VMEM per TensorCore; conservative 64 MiB (v7x) fallback."""
    try:
        info = pltpu.get_tpu_info()
        cap = getattr(info, "vmem_capacity_bytes", None)
        if cap:
            return int(cap)
    except Exception:
        pass
    return 64 << 20


def _num_tensorcores_per_chip():
    """2 on v7x / megacore chips (so 'parallel' can shard the grid), else 1."""
    try:
        kind = jax.devices()[0].device_kind.lower()
    except Exception:
        return 1
    if "v7" in kind or "v4" in kind or "v5p" in kind:
        return 2
    return 1


def _pick_tile_n(N, M, F, itemsize, budget_bytes, min_grid_steps=1):
    """Largest row-tile (multiple of 32, or N itself — keeps all dtypes' sublane
    tiling legal) whose entity block fits the per-buffer VMEM budget while
    leaving at least `min_grid_steps` grid steps for multi-TC sharding."""
    cands = [t for t in range(1, N + 1) if N % t == 0 and (t % 32 == 0 or t == N)]
    fits = [t for t in cands if t * M * F * itemsize <= budget_bytes]
    pool = fits if fits else [min(cands)]
    sharded = [t for t in pool if N // t >= min_grid_steps]
    return max(sharded) if sharded else max(pool)


def gat_forward(item_embs, entity_embs, adj, W, a, *, alpha=0.2, tile_n=None,
                stream_dtype=jnp.bfloat16, out_dtype=None):
    N, F = item_embs.shape
    _, M, _ = entity_embs.shape
    O = W.shape[1]
    if out_dtype is None:
        out_dtype = stream_dtype   # lane-dense writeback in the stream dtype

    # Fold W into `a` once in the wrapper: Wh / We only enter through the
    # rank-1 contraction with `a`, so only two (F,) vectors are needed inside
    # the kernel (no (F,O) weight tile, no big MXU matmul).
    W = W.astype(jnp.float32)
    a = a.astype(jnp.float32)
    wa = jnp.stack([W @ a[:O, 0], W @ a[O:, 0]], axis=0)        # (2, F)

    # Stream the large embedding tensors at reduced precision (kernel is
    # HBM-bandwidth-bound on v5e/v6e); upcast to f32 inside the kernel.
    x = item_embs.astype(stream_dtype)
    y = entity_embs.astype(stream_dtype)
    # Narrow 0/1 adjacency mask (exact in bf16); compared `> 0` in-kernel.
    adj_mask = (adj > 0).astype(jnp.bfloat16)

    itemsize = jnp.dtype(stream_dtype).itemsize
    vmem_cap = _tpu_vmem_capacity_bytes()
    if tile_n is None:
        # Per-buffer budget scales with the generation's VMEM (128 MiB -> 8 MiB
        # on v5e/v6e, 64 MiB -> 4 MiB on v7x); on 2-TC chips keep >= 2 steps.
        budget = max(4 << 20, vmem_cap // 16)
        tile_n = _pick_tile_n(N, M, F, itemsize, budget,
                              min_grid_steps=_num_tensorcores_per_chip())
    assert N % tile_n == 0, (N, tile_n)

    out_isize = jnp.dtype(out_dtype).itemsize
    tile_bytes = (tile_n * M * F * itemsize        # entity block
                  + tile_n * F * itemsize          # item block
                  + tile_n * M * 2                 # adj mask block (bf16)
                  + tile_n * F * out_isize         # output block
                  + 2 * F * 4)                     # folded weights
    # Double-buffered pipeline => ~4x tile bytes; cap well below physical VMEM
    # (never exceeds v7x's 64 MiB per TensorCore).
    vmem_limit = int(min(max(4 * tile_bytes, 32 << 20), int(0.8 * vmem_cap)))

    kernel = functools.partial(gat_layer_kernel, alpha=alpha)
    return pl.pallas_call(
        kernel,
        out_shape=jax.ShapeDtypeStruct((N, F), out_dtype),
        grid=(N // tile_n,),
        in_specs=[
            pl.BlockSpec((tile_n, F), lambda i: (i, 0)),
            pl.BlockSpec((tile_n, M, F), lambda i: (i, 0, 0)),
            pl.BlockSpec((tile_n, M), lambda i: (i, 0)),
            pl.BlockSpec((2, F), lambda i: (0, 0)),
        ],
        out_specs=pl.BlockSpec((tile_n, F), lambda i: (i, 0)),
        compiler_params=pltpu.CompilerParams(
            dimension_semantics=("parallel",),
            vmem_limit_bytes=vmem_limit),
    )(x, y, adj_mask, wa)


def gat_reference(item_embs, entity_embs, adj, W, a, *, alpha=0.2):
    """Pure-JAX reference mirroring GraphAttentionLayer.forward (eval mode)."""
    O = W.shape[1]
    Wh = item_embs @ W
    We = jnp.einsum("nmf,fo->nmo", entity_embs, W)
    a_in = jnp.concatenate(
        [jnp.broadcast_to(Wh[:, None, :], We.shape), We], axis=-1)
    e = (a_in @ a)[..., 0]
    e = jnp.where(e > 0, e, alpha * e)
    att = jnp.where(adj > 0, e, jnp.float32(-9e15))
    att = jax.nn.softmax(att, axis=1)
    h = jnp.einsum("nm,nmf->nf", att, entity_embs) + item_embs
    return jnp.where(h > 0, h, jnp.exp(jnp.minimum(h, 0.0)) - 1.0)


if __name__ == "__main__":
    # GAT(nfeat, nhid, dropout, alpha); eval mode => dropouts are identity.
    N, M, nfeat, nhid = 256, 16, 128, 64
    alpha = 0.2                              # LeakyReLU slope

    key = jax.random.PRNGKey(0)
    k1, k2, k3, k4, k5 = jax.random.split(key, 5)

    item_embs = jax.random.normal(k1, (N, nfeat), jnp.float32)
    entity_embs = jax.random.normal(k2, (N, M, nfeat), jnp.float32)
    adj = (jax.random.uniform(k3, (N, M)) > 0.5).astype(jnp.float32)

    # xavier_uniform_ with gain=1.414 (deterministic synthetic init)
    gain = 1.414
    bw = gain * (6.0 / (nfeat + nhid)) ** 0.5
    W = jax.random.uniform(k4, (nfeat, nhid), jnp.float32, -bw, bw)
    ba = gain * (6.0 / (2 * nhid + 1)) ** 0.5
    a = jax.random.uniform(k5, (2 * nhid, 1), jnp.float32, -ba, ba)

    # 1) Full-precision validation path (f32 streaming + f32 output, tight check).
    out_f32 = gat_forward(item_embs, entity_embs, adj, W, a, alpha=alpha,
                          stream_dtype=jnp.float32, out_dtype=jnp.float32)
    out_f32 = jax.block_until_ready(out_f32)
    ref_f32 = gat_reference(item_embs, entity_embs, adj, W, a, alpha=alpha)
    assert out_f32.shape == (N, nfeat)
    assert jnp.allclose(out_f32, ref_f32, rtol=1e-4, atol=1e-4), "f32 path mismatch"

    # 2) Default optimized path (bf16 streaming + bf16 output, auto tiling);
    #    checked against a reference built from the same bf16-rounded inputs.
    out_bf16 = gat_forward(item_embs, entity_embs, adj, W, a, alpha=alpha)
    out_bf16 = jax.block_until_ready(out_bf16)
    item_q = item_embs.astype(jnp.bfloat16).astype(jnp.float32)
    ent_q = entity_embs.astype(jnp.bfloat16).astype(jnp.float32)
    ref_q = gat_reference(item_q, ent_q, adj, W, a, alpha=alpha)
    assert out_bf16.shape == (N, nfeat) and out_bf16.dtype == jnp.bfloat16
    assert jnp.allclose(out_bf16.astype(jnp.float32), ref_q,
                        rtol=3e-2, atol=3e-2), "bf16 path mismatch"

    print("KERNEL_OK")
</pallas_src>

<mosaic_0001>
module attributes {stable_mosaic.version = 11 : i64} {
  func.func @gat_layer_kernel(%arg0: i32, %arg1: memref<256x128xf32, #tpu.memory_space<vmem>>, %arg2: memref<256x16x128xf32, #tpu.memory_space<vmem>>, %arg3: memref<256x16xbf16, #tpu.memory_space<vmem>>, %arg4: memref<2x128xf32, #tpu.memory_space<vmem>>, %arg5: memref<256x128xf32, #tpu.memory_space<vmem>>) attributes {dimension_semantics = [#tpu.dimension_semantics<parallel>], iteration_bounds = array<i64: 1>, scalar_prefetch = 0 : i64, scratch_operands = 0 : i64, tpu.core_type = #tpu.core_type<tc>, window_params = [{transform_indices = @transform_0, window_bounds = array<i64: 256, 128>}, {transform_indices = @transform_1, window_bounds = array<i64: 256, 16, 128>}, {transform_indices = @transform_2, window_bounds = array<i64: 256, 16>}, {pipeline_mode = #tpu.pipeline_mode<synchronous>, transform_indices = @transform_3, window_bounds = array<i64: 2, 128>}, {transform_indices = @transform_4, window_bounds = array<i64: 256, 128>}]} {
    %c0 = arith.constant 0 : index
    %c0_0 = arith.constant 0 : index
    %c0_1 = arith.constant 0 : index
    %0 = vector.load %arg2[%c0, %c0_0, %c0_1] : memref<256x16x128xf32, #tpu.memory_space<vmem>>, vector<256x16x128xf32>
    %c0_2 = arith.constant 0 : index
    %c0_3 = arith.constant 0 : index
    %1 = vector.load %arg3[%c0_2, %c0_3] : memref<256x16xbf16, #tpu.memory_space<vmem>>, vector<256x16xbf16>
    %c0_4 = arith.constant 0 : index
    %c0_5 = arith.constant 0 : index
    %2 = vector.load %arg4[%c0_4, %c0_5] : memref<2x128xf32, #tpu.memory_space<vmem>>, vector<1x128xf32>
    %c1 = arith.constant 1 : index
    %c0_6 = arith.constant 0 : index
    %3 = vector.load %arg4[%c1, %c0_6] : memref<2x128xf32, #tpu.memory_space<vmem>>, vector<1x128xf32>
    %c0_7 = arith.constant 0 : index
    %c0_8 = arith.constant 0 : index
    %4 = vector.load %arg1[%c0_7, %c0_8] : memref<256x128xf32, #tpu.memory_space<vmem>>, vector<256x128xf32>
    %5 = vector.broadcast %2 : vector<1x128xf32> to vector<256x128xf32>
    %6 = arith.mulf %4, %5 : vector<256x128xf32>
    %cst = arith.constant dense<0.000000e+00> : vector<256xf32>
    %7 = vector.multi_reduction <add>, %6, %cst [1] : vector<256x128xf32> to vector<256xf32>
    %8 = vector.shape_cast %7 : vector<256xf32> to vector<256x1xf32>
    %9 = vector.shape_cast %3 : vector<1x128xf32> to vector<1x1x128xf32>
    %10 = vector.broadcast %9 : vector<1x1x128xf32> to vector<256x16x128xf32>
    %11 = arith.mulf %0, %10 : vector<256x16x128xf32>
    %cst_9 = arith.constant dense<0.000000e+00> : vector<256x16xf32>
    %12 = vector.multi_reduction <add>, %11, %cst_9 [2] : vector<256x16x128xf32> to vector<256x16xf32>
    %13 = vector.broadcast %8 : vector<256x1xf32> to vector<256x16xf32>
    %14 = arith.addf %13, %12 : vector<256x16xf32>
    %cst_10 = arith.constant 0.000000e+00 : f32
    %15 = vector.broadcast %cst_10 : f32 to vector<256x16xf32>
    %16 = arith.cmpf ogt, %14, %15 : vector<256x16xf32>
    %cst_11 = arith.constant 2.000000e-01 : f32
    %17 = vector.broadcast %cst_11 : f32 to vector<256x16xf32>
    %18 = arith.mulf %17, %14 : vector<256x16xf32>
    %19 = arith.select %16, %14, %18 : vector<256x16xi1>, vector<256x16xf32>
    %cst_12 = arith.constant 0.000000e+00 : bf16
    %20 = vector.broadcast %cst_12 : bf16 to vector<256x16xbf16>
    %21 = arith.cmpf ogt, %1, %20 : vector<256x16xbf16>
    %cst_13 = arith.constant -9.000000e+15 : f32
    %22 = vector.broadcast %cst_13 : f32 to vector<256x16xf32>
    %23 = arith.select %21, %19, %22 : vector<256x16xi1>, vector<256x16xf32>
    %cst_14 = arith.constant dense<0xFF800000> : vector<256xf32>
    %24 = vector.multi_reduction <maximumf>, %23, %cst_14 [1] : vector<256x16xf32> to vector<256xf32>
    %25 = vector.shape_cast %24 : vector<256xf32> to vector<256x1xf32>
    %26 = vector.broadcast %25 : vector<256x1xf32> to vector<256x16xf32>
    %27 = arith.subf %23, %26 : vector<256x16xf32>
    %28 = math.exp %27 : vector<256x16xf32>
    %cst_15 = arith.constant dense<0.000000e+00> : vector<256xf32>
    %29 = vector.multi_reduction <add>, %28, %cst_15 [1] : vector<256x16xf32> to vector<256xf32>
    %30 = vector.shape_cast %29 : vector<256xf32> to vector<256x1xf32>
    %31 = vector.broadcast %30 : vector<256x1xf32> to vector<256x16xf32>
    %32 = arith.divf %28, %31 : vector<256x16xf32>
    %33 = vector.shape_cast %32 : vector<256x16xf32> to vector<256x16x1xf32>
    %34 = vector.broadcast %33 : vector<256x16x1xf32> to vector<256x16x128xf32>
    %35 = arith.mulf %34, %0 : vector<256x16x128xf32>
    %cst_16 = arith.constant dense<0.000000e+00> : vector<256x128xf32>
    %36 = vector.multi_reduction <add>, %35, %cst_16 [1] : vector<256x16x128xf32> to vector<256x128xf32>
    %c0_17 = arith.constant 0 : index
    %c0_18 = arith.constant 0 : index
    %37 = vector.load %arg1[%c0_17, %c0_18] : memref<256x128xf32, #tpu.memory_space<vmem>>, vector<256x128xf32>
    %38 = arith.addf %36, %37 : vector<256x128xf32>
    %cst_19 = arith.constant 0.000000e+00 : f32
    %39 = vector.broadcast %cst_19 : f32 to vector<256x128xf32>
    %40 = arith.cmpf ogt, %38, %39 : vector<256x128xf32>
    %cst_20 = arith.constant 0.000000e+00 : f32
    %41 = vector.broadcast %cst_20 : f32 to vector<256x128xf32>
    %42 = arith.minimumf %38, %41 : vector<256x128xf32>
    %43 = math.exp %42 : vector<256x128xf32>
    %cst_21 = arith.constant 1.000000e+00 : f32
    %44 = vector.broadcast %cst_21 : f32 to vector<256x128xf32>
    %45 = arith.subf %43, %44 : vector<256x128xf32>
    %46 = arith.select %40, %38, %45 : vector<256x128xi1>, vector<256x128xf32>
    %c0_22 = arith.constant 0 : index
    %c0_23 = arith.constant 0 : index
    %47 = vector.load %arg5[%c0_22, %c0_23] : memref<256x128xf32, #tpu.memory_space<vmem>>, vector<256x128xf32>
    tpu.vector_store %arg5[%c0_22, %c0_23], %46 {strides = array<i32>} : memref<256x128xf32, #tpu.memory_space<vmem>>, vector<256x128xf32>,
    return
  }
  func.func @transform_0(%arg0: i32) -> (i32, i32) {
    %c0_i32 = arith.constant 0 : i32
    %c0_i32_0 = arith.constant 0 : i32
    return %arg0, %c0_i32 : i32, i32
  }
  func.func @transform_1(%arg0: i32) -> (i32, i32, i32) {
    %c0_i32 = arith.constant 0 : i32
    %c0_i32_0 = arith.constant 0 : i32
    %c0_i32_1 = arith.constant 0 : i32
    return %arg0, %c0_i32, %c0_i32_0 : i32, i32, i32
  }
  func.func @transform_2(%arg0: i32) -> (i32, i32) {
    %c0_i32 = arith.constant 0 : i32
    %c0_i32_0 = arith.constant 0 : i32
    return %arg0, %c0_i32 : i32, i32
  }
  func.func @transform_3(%arg0: i32) -> (i32, i32) {
    %c0_i32 = arith.constant 0 : i32
    %c0_i32_0 = arith.constant 0 : i32
    %c0_i32_1 = arith.constant 0 : i32
    return %c0_i32, %c0_i32_0 : i32, i32
  }
  func.func @transform_4(%arg0: i32) -> (i32, i32) {
    %c0_i32 = arith.constant 0 : i32
    %c0_i32_0 = arith.constant 0 : i32
    return %arg0, %c0_i32 : i32, i32
  }
}

</mosaic_0001>

<llo_original>
// kernel: tpu_custom_call.1
$region0: #{tpu_custom_call.1}
  #allocation0 [shape = 'u32[]', space=smem, size = 0x4, offset = 0x4, fixed_abs, tag = 'smem constant byte address 0x4 - core index']
  #allocation1 [shape = 'u32[144,128]{1,0:T(1,128)}', space=vmem, size = 0x12000, scoped, tag = 'internal scratch']
  %s0 = inlined_call_operand.hbm [shape: f32[256,128], index: 0, kind: input, shape index: {}]
  %s1 = inlined_call_operand.hbm [shape: f32[256,16,128], index: 1, kind: input, shape index: {}]
  %s2 = inlined_call_operand.vmem [shape: bf16[256,16], index: 2, kind: input, shape index: {}]
  %s3 = inlined_call_operand.hbm [shape: f32[2,128], index: 3, kind: input, shape index: {}]
  %s4 = inlined_call_operand.hbm [shape: f32[256,128], index: 4, kind: output, shape index: {}]
  %s5 = sld [smem:[#allocation0]]
  $region38: #{tpu_custom_call.1} parent=0
    _
  %s7 = ssub.s32 1, %s5
  %s8 = scalar_select 0, %s7, %s5
  $region1: #{tpu_custom_call.1} parent=0
    #allocation2 [shape = 'u8[131072]{0}', space=vmem, size = 0x20000, scoped, tag = 'input window, operand 0, single buffered']
    #allocation3 [shape = 's32[1]{0}', space=sflag, size = 0x4, scoped, tag = 'scoped memory for tpu_custom_call.1']
    #allocation4 [shape = 's32[1]{0}', space=sflag, size = 0x4, scoped, tag = 'scoped memory for tpu_custom_call.1']
    #allocation5 [shape = 'u8[2097152]{0}', space=vmem, size = 0x200000, scoped, tag = 'input window, operand 1, single buffered']
    #allocation6 [shape = 's32[1]{0}', space=sflag, size = 0x4, scoped, tag = 'scoped memory for tpu_custom_call.1']
    #allocation7 [shape = 'u8[1024]{0}', space=vmem, size = 0x400, scoped, tag = 'input window, operand 3, single buffered']
    #allocation8 [shape = 'u8[131072]{0}', space=vmem, size = 0x20000, scoped, tag = 'output window, operand 0, single buffered']
    %9 = vsyncpa [#allocation3], 0
    %10 = vsyncpa [#allocation6], 0
    %11 = vsyncpa [#allocation4], 0
    // Predicated region
    $region2: #{tpu_custom_call.1} parent=1 // pred_check
      _
    $region3: #{tpu_custom_call.1} parent=1 // pred_check_branch
      %13 = sbr.rel (0) target = $region5
    $region4: #{tpu_custom_call.1} parent=1 // pred_region
      %s15 = ssub.s32 4096, 4096
      %16 = vsyncadd [#allocation3], %s15
      %s17 = sshll.u32 [#allocation2], 4
      %s18 = int_to_ptr.vmem [resolvable:$true] %s17
      %23 = dma.hbm_to_vmem [thread:$0]  %s0, 4096, %s18, [#allocation3], 128, 128, 8
    $region5: #{tpu_custom_call.1} parent=1 // pred_fallthru
      _
    // Predicated region
    $region6: #{tpu_custom_call.1} parent=1 // pred_check
      _
    $region7: #{tpu_custom_call.1} parent=1 // pred_check_branch
      %25 = sbr.rel (0) target = $region9
    $region8: #{tpu_custom_call.1} parent=1 // pred_region
      %s27 = ssub.s32 65536, 65536
      %28 = vsyncadd [#allocation6], %s27
      %s29 = sshll.u32 [#allocation5], 4
      %s30 = int_to_ptr.vmem [resolvable:$true] %s29
      %35 = dma.hbm_to_vmem [thread:$0]  %s1, 65536, %s30, [#allocation6], 128, 128, 8
    $region9: #{tpu_custom_call.1} parent=1 // pred_fallthru
      _
    // Predicated region
    $region10: #{tpu_custom_call.1} parent=1 // pred_check
      _
    $region11: #{tpu_custom_call.1} parent=1 // pred_check_branch
      %37 = sbr.rel (0) target = $region13
    $region12: #{tpu_custom_call.1} parent=1 // pred_region
      _
    $region13: #{tpu_custom_call.1} parent=1 // pred_fallthru
      _
    // Predicated region
    $region14: #{tpu_custom_call.1} parent=1 // pred_check
      _
    $region15: #{tpu_custom_call.1} parent=1 // pred_check_branch
      %39 = sbr.rel (0) target = $region17
    $region16: #{tpu_custom_call.1} parent=1 // pred_region
      %s41 = ssub.s32 32, 32
      %42 = vsyncadd [#allocation6], %s41
      %s44 = sshll.u32 [#allocation7], 4
      %s45 = int_to_ptr.vmem [resolvable:$true] %s44
      %47 = dma.hbm_to_vmem [thread:$0]  %s3, 32, %s45, [#allocation6]
    $region17: #{tpu_custom_call.1} parent=1 // pred_fallthru
      _
    // Predicated region
    $region18: #{tpu_custom_call.1} parent=1 // pred_check
      _
    $region19: #{tpu_custom_call.1} parent=1 // pred_check_branch
      %49 = sbr.rel (0) target = $region21
    $region20: #{tpu_custom_call.1} parent=1 // pred_region
      %50 = dma.done [#allocation3], 4096
    $region21: #{tpu_custom_call.1} parent=1 // pred_fallthru
      _
    // Predicated region
    $region22: #{tpu_custom_call.1} parent=1 // pred_check
      _
    $region23: #{tpu_custom_call.1} parent=1 // pred_check_branch
      %52 = sbr.rel (0) target = $region25
    $region24: #{tpu_custom_call.1} parent=1 // pred_region
      %53 = dma.done [#allocation6], 65536
    $region25: #{tpu_custom_call.1} parent=1 // pred_fallthru
      _
    // Predicated region
    $region26: #{tpu_custom_call.1} parent=1 // pred_check
      _
    $region27: #{tpu_custom_call.1} parent=1 // pred_check_branch
      %55 = sbr.rel (0) target = $region29
    $region28: #{tpu_custom_call.1} parent=1 // pred_region
      %56 = dma.done [#allocation6], 32
    $region29: #{tpu_custom_call.1} parent=1 // pred_fallthru
      _
    %v60 = vld [vmem:[#allocation5] sm:$0xff]
    %v61 = vld [vmem:[#allocation5 + $0x8] sm:$0xff]
    %v62 = vld [vmem:[#allocation5 + $0x10] sm:$0xff]
    %v63 = vld [vmem:[#allocation5 + $0x18] sm:$0xff]
    %v64 = vld [vmem:[#allocation5 + $0x20] sm:$0xff]
    %v65 = vld [vmem:[#allocation5 + $0x28] sm:$0xff]
    %v66 = vld [vmem:[#allocation5 + $0x30] sm:$0xff]
    %v67 = vld [vmem:[#allocation5 + $0x38] sm:$0xff]
    %v68 = vld [vmem:[#allocation5 + $0x40] sm:$0xff]
    %v69 = vld [vmem:[#allocation5 + $0x48] sm:$0xff]
    %v70 = vld [vmem:[#allocation5 + $0x50] sm:$0xff]
    %v71 = vld [vmem:[#allocation5 + $0x58] sm:$0xff]
    %v72 = vld [vmem:[#allocation5 + $0x60] sm:$0xff]
    %v73 = vld [vmem:[#allocation5 + $0x68] sm:$0xff]
    %v74 = vld [vmem:[#allocation5 + $0x70] sm:$0xff]
    %v75 = vld [vmem:[#allocation5 + $0x78] sm:$0xff]
    %v76 = vld [vmem:[#allocation5 + $0x80] sm:$0xff]
    %v77 = vld [vmem:[#allocation5 + $0x88] sm:$0xff]
    %v78 = vld [vmem:[#allocation5 + $0x90] sm:$0xff]
    %v79 = vld [vmem:[#allocation5 + $0x98] sm:$0xff]
    %v80 = vld [vmem:[#allocation5 + $0xa0] sm:$0xff]
    %v81 = vld [vmem:[#allocation5 + $0xa8] sm:$0xff]
    %v82 = vld [vmem:[#allocation5 + $0xb0] sm:$0xff]
    %v83 = vld [vmem:[#allocation5 + $0xb8] sm:$0xff]
    %v84 = vld [vmem:[#allocation5 + $0xc0] sm:$0xff]
    %v85 = vld [vmem:[#allocation5 + $0xc8] sm:$0xff]
    %v86 = vld [vmem:[#allocation5 + $0xd0] sm:$0xff]
    %v87 = vld [vmem:[#allocation5 + $0xd8] sm:$0xff]
    %v88 = vld [vmem:[#allocation5 + $0xe0] sm:$0xff]
    %v89 = vld [vmem:[#allocation5 + $0xe8] sm:$0xff]
    %v90 = vld [vmem:[#allocation5 + $0xf0] sm:$0xff]
    %v91 = vld [vmem:[#allocation5 + $0xf8] sm:$0xff]
    %v92 = vld [vmem:[#allocation5 + $0x100] sm:$0xff]
    %v93 = vld [vmem:[#allocation5 + $0x108] sm:$0xff]
    %v94 = vld [vmem:[#allocation5 + $0x110] sm:$0xff]
    %v95 = vld [vmem:[#allocation5 + $0x118] sm:$0xff]
    %v96 = vld [vmem:[#allocation5 + $0x120] sm:$0xff]
    %v97 = vld [vmem:[#allocation5 + $0x128] sm:$0xff]
    %v98 = vld [vmem:[#allocation5 + $0x130] sm:$0xff]
    %v99 = vld [vmem:[#allocation5 + $0x138] sm:$0xff]
    %v100 = vld [vmem:[#allocation5 + $0x140] sm:$0xff]
    %v101 = vld [vmem:[#allocation5 + $0x148] sm:$0xff]
    %v102 = vld [vmem:[#allocation5 + $0x150] sm:$0xff]
    %v103 = vld [vmem:[#allocation5 + $0x158] sm:$0xff]
    %v104 = vld [vmem:[#allocation5 + $0x160] sm:$0xff]
    %v105 = vld [vmem:[#allocation5 + $0x168] sm:$0xff]
    %v106 = vld [vmem:[#allocation5 + $0x170] sm:$0xff]
    %v107 = vld [vmem:[#allocation5 + $0x178] sm:$0xff]
    %v108 = vld [vmem:[#allocation5 + $0x180] sm:$0xff]
    %v109 = vld [vmem:[#allocation5 + $0x188] sm:$0xff]
    %v110 = vld [vmem:[#allocation5 + $0x190] sm:$0xff]
    %v111 = vld [vmem:[#allocation5 + $0x198] sm:$0xff]
    %v112 = vld [vmem:[#allocation5 + $0x1a0] sm:$0xff]
    %v113 = vld [vmem:[#allocation5 + $0x1a8] sm:$0xff]
    %v114 = vld [vmem:[#allocation5 + $0x1b0] sm:$0xff]
    %v115 = vld [vmem:[#allocation5 + $0x1b8] sm:$0xff]
    %v116 = vld [vmem:[#allocation5 + $0x1c0] sm:$0xff]
    %v117 = vld [vmem:[#allocation5 + $0x1c8] sm:$0xff]
    %v118 = vld [vmem:[#allocation5 + $0x1d0] sm:$0xff]
    %v119 = vld [vmem:[#allocation5 + $0x1d8] sm:$0xff]
    %v120 = vld [vmem:[#allocation5 + $0x1e0] sm:$0xff]
    %v121 = vld [vmem:[#allocation5 + $0x1e8] sm:$0xff]
    %v122 = vld [vmem:[#allocation5 + $0x1f0] sm:$0xff]
    %v123 = vld [vmem:[#allocation5 + $0x1f8] sm:$0xff]
    %v124 = vld [vmem:[#allocation5 + $0x200] sm:$0xff]
    %v125 = vld [vmem:[#allocation5 + $0x208] sm:$0xff]
    %v126 = vld [vmem:[#allocation5 + $0x210] sm:$0xff]
    %v127 = vld [vmem:[#allocation5 + $0x218] sm:$0xff]
    %v128 = vld [vmem:[#allocation5 + $0x220] sm:$0xff]
    %v129 = vld [vmem:[#allocation5 + $0x228] sm:$0xff]
    %v130 = vld [vmem:[#allocation5 + $0x230] sm:$0xff]
    %v131 = vld [vmem:[#allocation5 + $0x238] sm:$0xff]
    %v132 = vld [vmem:[#allocation5 + $0x240] sm:$0xff]
    %v133 = vld [vmem:[#allocation5 + $0x248] sm:$0xff]
    %v134 = vld [vmem:[#allocation5 + $0x250] sm:$0xff]
    %v135 = vld [vmem:[#allocation5 + $0x258] sm:$0xff]
    %v136 = vld [vmem:[#allocation5 + $0x260] sm:$0xff]
    %v137 = vld [vmem:[#allocation5 + $0x268] sm:$0xff]
    %v138 = vld [vmem:[#allocation5 + $0x270] sm:$0xff]
    %v139 = vld [vmem:[#allocation5 + $0x278] sm:$0xff]
    %v140 = vld [vmem:[#allocation5 + $0x280] sm:$0xff]
    %v141 = vld [vmem:[#allocation5 + $0x288] sm:$0xff]
    %v142 = vld [vmem:[#allocation5 + $0x290] sm:$0xff]
    %v143 = vld [vmem:[#allocation5 + $0x298] sm:$0xff]
    %v144 = vld [vmem:[#allocation5 + $0x2a0] sm:$0xff]
    %v145 = vld [vmem:[#allocation5 + $0x2a8] sm:$0xff]
    %v146 = vld [vmem:[#allocation5 + $0x2b0] sm:$0xff]
    %v147 = vld [vmem:[#allocation5 + $0x2b8] sm:$0xff]
    %v148 = vld [vmem:[#allocation5 + $0x2c0] sm:$0xff]
    %v149 = vld [vmem:[#allocation5 + $0x2c8] sm:$0xff]
    %v150 = vld [vmem:[#allocation5 + $0x2d0] sm:$0xff]
    %v151 = vld [vmem:[#allocation5 + $0x2d8] sm:$0xff]
    %v152 = vld [vmem:[#allocation5 + $0x2e0] sm:$0xff]
    %v153 = vld [vmem:[#allocation5 + $0x2e8] sm:$0xff]
    %v154 = vld [vmem:[#allocation5 + $0x2f0] sm:$0xff]
    %v155 = vld [vmem:[#allocation5 + $0x2f8] sm:$0xff]
    %v156 = vld [vmem:[#allocation5 + $0x300] sm:$0xff]
    %v157 = vld [vmem:[#allocation5 + $0x308] sm:$0xff]
    %v158 = vld [vmem:[#allocation5 + $0x310] sm:$0xff]
    %v159 = vld [vmem:[#allocation5 + $0x318] sm:$0xff]
    %v160 = vld [vmem:[#allocation5 + $0x320] sm:$0xff]
    %v161 = vld [vmem:[#allocation5 + $0x328] sm:$0xff]
    %v162 = vld [vmem:[#allocation5 + $0x330] sm:$0xff]
    %v163 = vld [vmem:[#allocation5 + $0x338] sm:$0xff]
    %v164 = vld [vmem:[#allocation5 + $0x340] sm:$0xff]
    %v165 = vld [vmem:[#allocation5 + $0x348] sm:$0xff]
    %v166 = vld [vmem:[#allocation5 + $0x350] sm:$0xff]
    %v167 = vld [vmem:[#allocation5 + $0x358] sm:$0xff]
    %v168 = vld [vmem:[#allocation5 + $0x360] sm:$0xff]
    %v169 = vld [vmem:[#allocation5 + $0x368] sm:$0xff]
    %v170 = vld [vmem:[#allocation5 + $0x370] sm:$0xff]
    %v171 = vld [vmem:[#allocation5 + $0x378] sm:$0xff]
    %v172 = vld [vmem:[#allocation5 + $0x380] sm:$0xff]
    %v173 = vld [vmem:[#allocation5 + $0x388] sm:$0xff]
    %v174 = vld [vmem:[#allocation5 + $0x390] sm:$0xff]
    %v175 = vld [vmem:[#allocation5 + $0x398] sm:$0xff]
    %v176 = vld [vmem:[#allocation5 + $0x3a0] sm:$0xff]
    %v177 = vld [vmem:[#allocation5 + $0x3a8] sm:$0xff]
    %v178 = vld [vmem:[#allocation5 + $0x3b0] sm:$0xff]
    %v179 = vld [vmem:[#allocation5 + $0x3b8] sm:$0xff]
    %v180 = vld [vmem:[#allocation5 + $0x3c0] sm:$0xff]
    %v181 = vld [vmem:[#allocation5 + $0x3c8] sm:$0xff]
    %v182 = vld [vmem:[#allocation5 + $0x3d0] sm:$0xff]
    %v183 = vld [vmem:[#allocation5 + $0x3d8] sm:$0xff]
    %v184 = vld [vmem:[#allocation5 + $0x3e0] sm:$0xff]
    %v185 = vld [vmem:[#allocation5 + $0x3e8] sm:$0xff]
    %v186 = vld [vmem:[#allocation5 + $0x3f0] sm:$0xff]
    %v187 = vld [vmem:[#allocation5 + $0x3f8] sm:$0xff]
    %v188 = vld [vmem:[#allocation5 + $0x400] sm:$0xff]
    %v189 = vld [vmem:[#allocation5 + $0x408] sm:$0xff]
    %v190 = vld [vmem:[#allocation5 + $0x410] sm:$0xff]
    %v191 = vld [vmem:[#allocation5 + $0x418] sm:$0xff]
    %v192 = vld [vmem:[#allocation5 + $0x420] sm:$0xff]
    %v193 = vld [vmem:[#allocation5 + $0x428] sm:$0xff]
    %v194 = vld [vmem:[#allocation5 + $0x430] sm:$0xff]
    %v195 = vld [vmem:[#allocation5 + $0x438] sm:$0xff]
    %v196 = vld [vmem:[#allocation5 + $0x440] sm:$0xff]
    %v197 = vld [vmem:[#allocation5 + $0x448] sm:$0xff]
    %v198 = vld [vmem:[#allocation5 + $0x450] sm:$0xff]
    %v199 = vld [vmem:[#allocation5 + $0x458] sm:$0xff]
    %v200 = vld [vmem:[#allocation5 + $0x460] sm:$0xff]
    %v201 = vld [vmem:[#allocation5 + $0x468] sm:$0xff]
    %v202 = vld [vmem:[#allocation5 + $0x470] sm:$0xff]
    %v203 = vld [vmem:[#allocation5 + $0x478] sm:$0xff]
    %v204 = vld [vmem:[#allocation5 + $0x480] sm:$0xff]
    %v205 = vld [vmem:[#allocation5 + $0x488] sm:$0xff]
    %v206 = vld [vmem:[#allocation5 + $0x490] sm:$0xff]
    %v207 = vld [vmem:[#allocation5 + $0x498] sm:$0xff]
    %v208 = vld [vmem:[#allocation5 + $0x4a0] sm:$0xff]
    %v209 = vld [vmem:[#allocation5 + $0x4a8] sm:$0xff]
    %v210 = vld [vmem:[#allocation5 + $0x4b0] sm:$0xff]
    %v211 = vld [vmem:[#allocation5 + $0x4b8] sm:$0xff]
    %v212 = vld [vmem:[#allocation5 + $0x4c0] sm:$0xff]
    %v213 = vld [vmem:[#allocation5 + $0x4c8] sm:$0xff]
    %v214 = vld [vmem:[#allocation5 + $0x4d0] sm:$0xff]
    %v215 = vld [vmem:[#allocation5 + $0x4d8] sm:$0xff]
    %v216 = vld [vmem:[#allocation5 + $0x4e0] sm:$0xff]
    %v217 = vld [vmem:[#allocation5 + $0x4e8] sm:$0xff]
    %v218 = vld [vmem:[#allocation5 + $0x4f0] sm:$0xff]
    %v219 = vld [vmem:[#allocation5 + $0x4f8] sm:$0xff]
    %v220 = vld [vmem:[#allocation5 + $0x500] sm:$0xff]
    %v221 = vld [vmem:[#allocation5 + $0x508] sm:$0xff]
    %v222 = vld [vmem:[#allocation5 + $0x510] sm:$0xff]
    %v223 = vld [vmem:[#allocation5 + $0x518] sm:$0xff]
    %v224 = vld [vmem:[#allocation5 + $0x520] sm:$0xff]
    %v225 = vld [vmem:[#allocation5 + $0x528] sm:$0xff]
    %v226 = vld [vmem:[#allocation5 + $0x530] sm:$0xff]
    %v227 = vld [vmem:[#allocation5 + $0x538] sm:$0xff]
    %v228 = vld [vmem:[#allocation5 + $0x540] sm:$0xff]
    %v229 = vld [vmem:[#allocation5 + $0x548] sm:$0xff]
    %v230 = vld [vmem:[#allocation5 + $0x550] sm:$0xff]
    %v231 = vld [vmem:[#allocation5 + $0x558] sm:$0xff]
    %v232 = vld [vmem:[#allocation5 + $0x560] sm:$0xff]
    %v233 = vld [vmem:[#allocation5 + $0x568] sm:$0xff]
    %v234 = vld [vmem:[#allocation5 + $0x570] sm:$0xff]
    %v235 = vld [vmem:[#allocation5 + $0x578] sm:$0xff]
    %v236 = vld [vmem:[#allocation5 + $0x580] sm:$0xff]
    %v237 = vld [vmem:[#allocation5 + $0x588] sm:$0xff]
    %v238 = vld [vmem:[#allocation5 + $0x590] sm:$0xff]
    %v239 = vld [vmem:[#allocation5 + $0x598] sm:$0xff]
    %v240 = vld [vmem:[#allocation5 + $0x5a0] sm:$0xff]
    %v241 = vld [vmem:[#allocation5 + $0x5a8] sm:$0xff]
    %v242 = vld [vmem:[#allocation5 + $0x5b0] sm:$0xff]
    %v243 = vld [vmem:[#allocation5 + $0x5b8] sm:$0xff]
    %v244 = vld [vmem:[#allocation5 + $0x5c0] sm:$0xff]
    %v245 = vld [vmem:[#allocation5 + $0x5c8] sm:$0xff]
    %v246 = vld [vmem:[#allocation5 + $0x5d0] sm:$0xff]
    %v247 = vld [vmem:[#allocation5 + $0x5d8] sm:$0xff]
    %v248 = vld [vmem:[#allocation5 + $0x5e0] sm:$0xff]
    %v249 = vld [vmem:[#allocation5 + $0x5e8] sm:$0xff]
    %v250 = vld [vmem:[#allocation5 + $0x5f0] sm:$0xff]
    %v251 = vld [vmem:[#allocation5 + $0x5f8] sm:$0xff]
    %v252 = vld [vmem:[#allocation5 + $0x600] sm:$0xff]
    %v253 = vld [vmem:[#allocation5 + $0x608] sm:$0xff]
    %v254 = vld [vmem:[#allocation5 + $0x610] sm:$0xff]
    %v255 = vld [vmem:[#allocation5 + $0x618] sm:$0xff]
    %v256 = vld [vmem:[#allocation5 + $0x620] sm:$0xff]
    %v257 = vld [vmem:[#allocation5 + $0x628] sm:$0xff]
    %v258 = vld [vmem:[#allocation5 + $0x630] sm:$0xff]
    %v259 = vld [vmem:[#allocation5 + $0x638] sm:$0xff]
    %v260 = vld [vmem:[#allocation5 + $0x640] sm:$0xff]
    %v261 = vld [vmem:[#allocation5 + $0x648] sm:$0xff]
    %v262 = vld [vmem:[#allocation5 + $0x650] sm:$0xff]
    %v263 = vld [vmem:[#allocation5 + $0x658] sm:$0xff]
    %v264 = vld [vmem:[#allocation5 + $0x660] sm:$0xff]
    %v265 = vld [vmem:[#allocation5 + $0x668] sm:$0xff]
    %v266 = vld [vmem:[#allocation5 + $0x670] sm:$0xff]
    %v267 = vld [vmem:[#allocation5 + $0x678] sm:$0xff]
    %v268 = vld [vmem:[#allocation5 + $0x680] sm:$0xff]
    %v269 = vld [vmem:[#allocation5 + $0x688] sm:$0xff]
    %v270 = vld [vmem:[#allocation5 + $0x690] sm:$0xff]
    %v271 = vld [vmem:[#allocation5 + $0x698] sm:$0xff]
    %v272 = vld [vmem:[#allocation5 + $0x6a0] sm:$0xff]
    %v273 = vld [vmem:[#allocation5 + $0x6a8] sm:$0xff]
    %v274 = vld [vmem:[#allocation5 + $0x6b0] sm:$0xff]
    %v275 = vld [vmem:[#allocation5 + $0x6b8] sm:$0xff]
    %v276 = vld [vmem:[#allocation5 + $0x6c0] sm:$0xff]
    %v277 = vld [vmem:[#allocation5 + $0x6c8] sm:$0xff]
    %v278 = vld [vmem:[#allocation5 + $0x6d0] sm:$0xff]
    %v279 = vld [vmem:[#allocation5 + $0x6d8] sm:$0xff]
    %v280 = vld [vmem:[#allocation5 + $0x6e0] sm:$0xff]
    %v281 = vld [vmem:[#allocation5 + $0x6e8] sm:$0xff]
    %v282 = vld [vmem:[#allocation5 + $0x6f0] sm:$0xff]
    %v283 = vld [vmem:[#allocation5 + $0x6f8] sm:$0xff]
    %v284 = vld [vmem:[#allocation5 + $0x700] sm:$0xff]
    %v285 = vld [vmem:[#allocation5 + $0x708] sm:$0xff]
    %v286 = vld [vmem:[#allocation5 + $0x710] sm:$0xff]
    %v287 = vld [vmem:[#allocation5 + $0x718] sm:$0xff]
    %v288 = vld [vmem:[#allocation5 + $0x720] sm:$0xff]
    %v289 = vld [vmem:[#allocation5 + $0x728] sm:$0xff]
    %v290 = vld [vmem:[#allocation5 + $0x730] sm:$0xff]
    %v291 = vld [vmem:[#allocation5 + $0x738] sm:$0xff]
    %v292 = vld [vmem:[#allocation5 + $0x740] sm:$0xff]
    %v293 = vld [vmem:[#allocation5 + $0x748] sm:$0xff]
    %v294 = vld [vmem:[#allocation5 + $0x750] sm:$0xff]
    %v295 = vld [vmem:[#allocation5 + $0x758] sm:$0xff]
    %v296 = vld [vmem:[#allocation5 + $0x760] sm:$0xff]
    %v297 = vld [vmem:[#allocation5 + $0x768] sm:$0xff]
    %v298 = vld [vmem:[#allocation5 + $0x770] sm:$0xff]
    %v299 = vld [vmem:[#allocation5 + $0x778] sm:$0xff]
    %v300 = vld [vmem:[#allocation5 + $0x780] sm:$0xff]
    %v301 = vld [vmem:[#allocation5 + $0x788] sm:$0xff]
    %v302 = vld [vmem:[#allocation5 + $0x790] sm:$0xff]
    %v303 = vld [vmem:[#allocation5 + $0x798] sm:$0xff]
    %v304 = vld [vmem:[#allocation5 + $0x7a0] sm:$0xff]
    %v305 = vld [vmem:[#allocation5 + $0x7a8] sm:$0xff]
    %v306 = vld [vmem:[#allocation5 + $0x7b0] sm:$0xff]
    %v307 = vld [vmem:[#allocation5 + $0x7b8] sm:$0xff]
    %v308 = vld [vmem:[#allocation5 + $0x7c0] sm:$0xff]
    %v309 = vld [vmem:[#allocation5 + $0x7c8] sm:$0xff]
    %v310 = vld [vmem:[#allocation5 + $0x7d0] sm:$0xff]
    %v311 = vld [vmem:[#allocation5 + $0x7d8] sm:$0xff]
    %v312 = vld [vmem:[#allocation5 + $0x7e0] sm:$0xff]
    %v313 = vld [vmem:[#allocation5 + $0x7e8] sm:$0xff]
    %v314 = vld [vmem:[#allocation5 + $0x7f0] sm:$0xff]
    %v315 = vld [vmem:[#allocation5 + $0x7f8] sm:$0xff]
    %v316 = vld [vmem:[#allocation5 + $0x800] sm:$0xff]
    %v317 = vld [vmem:[#allocation5 + $0x808] sm:$0xff]
    %v318 = vld [vmem:[#allocation5 + $0x810] sm:$0xff]
    %v319 = vld [vmem:[#allocation5 + $0x818] sm:$0xff]
    %v320 = vld [vmem:[#allocation5 + $0x820] sm:$0xff]
    %v321 = vld [vmem:[#allocation5 + $0x828] sm:$0xff]
    %v322 = vld [vmem:[#allocation5 + $0x830] sm:$0xff]
    %v323 = vld [vmem:[#allocation5 + $0x838] sm:$0xff]
    %v324 = vld [vmem:[#allocation5 + $0x840] sm:$0xff]
    %v325 = vld [vmem:[#allocation5 + $0x848] sm:$0xff]
    %v326 = vld [vmem:[#allocation5 + $0x850] sm:$0xff]
    %v327 = vld [vmem:[#allocation5 + $0x858] sm:$0xff]
    %v328 = vld [vmem:[#allocation5 + $0x860] sm:$0xff]
    %v329 = vld [vmem:[#allocation5 + $0x868] sm:$0xff]
    %v330 = vld [vmem:[#allocation5 + $0x870] sm:$0xff]
    %v331 = vld [vmem:[#allocation5 + $0x878] sm:$0xff]
    %v332 = vld [vmem:[#allocation5 + $0x880] sm:$0xff]
    %v333 = vld [vmem:[#allocation5 + $0x888] sm:$0xff]
    %v334 = vld [vmem:[#allocation5 + $0x890] sm:$0xff]
    %v335 = vld [vmem:[#allocation5 + $0x898] sm:$0xff]
    %v336 = vld [vmem:[#allocation5 + $0x8a0] sm:$0xff]
    %v337 = vld [vmem:[#allocation5 + $0x8a8] sm:$0xff]
    %v338 = vld [vmem:[#allocation5 + $0x8b0] sm:$0xff]
    %v339 = vld [vmem:[#allocation5 + $0x8b8] sm:$0xff]
    %v340 = vld [vmem:[#allocation5 + $0x8c0] sm:$0xff]
    %v341 = vld [vmem:[#allocation5 + $0x8c8] sm:$0xff]
    %v342 = vld [vmem:[#allocation5 + $0x8d0] sm:$0xff]
    %v343 = vld [vmem:[#allocation5 + $0x8d8] sm:$0xff]
    %v344 = vld [vmem:[#allocation5 + $0x8e0] sm:$0xff]
    %v345 = vld [vmem:[#allocation5 + $0x8e8] sm:$0xff]
    %v346 = vld [vmem:[#allocation5 + $0x8f0] sm:$0xff]
    %v347 = vld [vmem:[#allocation5 + $0x8f8] sm:$0xff]
    %v348 = vld [vmem:[#allocation5 + $0x900] sm:$0xff]
    %v349 = vld [vmem:[#allocation5 + $0x908] sm:$0xff]
    %v350 = vld [vmem:[#allocation5 + $0x910] sm:$0xff]
    %v351 = vld [vmem:[#allocation5 + $0x918] sm:$0xff]
    %v352 = vld [vmem:[#allocation5 + $0x920] sm:$0xff]
    %v353 = vld [vmem:[#allocation5 + $0x928] sm:$0xff]
    %v354 = vld [vmem:[#allocation5 + $0x930] sm:$0xff]
    %v355 = vld [vmem:[#allocation5 + $0x938] sm:$0xff]
    %v356 = vld [vmem:[#allocation5 + $0x940] sm:$0xff]
    %v357 = vld [vmem:[#allocation5 + $0x948] sm:$0xff]
    %v358 = vld [vmem:[#allocation5 + $0x950] sm:$0xff]
    %v359 = vld [vmem:[#allocation5 + $0x958] sm:$0xff]
    %v360 = vld [vmem:[#allocation5 + $0x960] sm:$0xff]
    %v361 = vld [vmem:[#allocation5 + $0x968] sm:$0xff]
    %v362 = vld [vmem:[#allocation5 + $0x970] sm:$0xff]
    %v363 = vld [vmem:[#allocation5 + $0x978] sm:$0xff]
    %v364 = vld [vmem:[#allocation5 + $0x980] sm:$0xff]
    %v365 = vld [vmem:[#allocation5 + $0x988] sm:$0xff]
    %v366 = vld [vmem:[#allocation5 + $0x990] sm:$0xff]
    %v367 = vld [vmem:[#allocation5 + $0x998] sm:$0xff]
    %v368 = vld [vmem:[#allocation5 + $0x9a0] sm:$0xff]
    %v369 = vld [vmem:[#allocation5 + $0x9a8] sm:$0xff]
    %v370 = vld [vmem:[#allocation5 + $0x9b0] sm:$0xff]
    %v371 = vld [vmem:[#allocation5 + $0x9b8] sm:$0xff]
    %v372 = vld [vmem:[#allocation5 + $0x9c0] sm:$0xff]
    %v373 = vld [vmem:[#allocation5 + $0x9c8] sm:$0xff]
    %v374 = vld [vmem:[#allocation5 + $0x9d0] sm:$0xff]
    %v375 = vld [vmem:[#allocation5 + $0x9d8] sm:$0xff]
    %v376 = vld [vmem:[#allocation5 + $0x9e0] sm:$0xff]
    %v377 = vld [vmem:[#allocation5 + $0x9e8] sm:$0xff]
    %v378 = vld [vmem:[#allocation5 + $0x9f0] sm:$0xff]
    %v379 = vld [vmem:[#allocation5 + $0x9f8] sm:$0xff]
    %v380 = vld [vmem:[#allocation5 + $0xa00] sm:$0xff]
    %v381 = vld [vmem:[#allocation5 + $0xa08] sm:$0xff]
    %v382 = vld [vmem:[#allocation5 + $0xa10] sm:$0xff]
    %v383 = vld [vmem:[#allocation5 + $0xa18] sm:$0xff]
    %v384 = vld [vmem:[#allocation5 + $0xa20] sm:$0xff]
    %v385 = vld [vmem:[#allocation5 + $0xa28] sm:$0xff]
    %v386 = vld [vmem:[#allocation5 + $0xa30] sm:$0xff]
    %v387 = vld [vmem:[#allocation5 + $0xa38] sm:$0xff]
    %v388 = vld [vmem:[#allocation5 + $0xa40] sm:$0xff]
    %v389 = vld [vmem:[#allocation5 + $0xa48] sm:$0xff]
    %v390 = vld [vmem:[#allocation5 + $0xa50] sm:$0xff]
    %v391 = vld [vmem:[#allocation5 + $0xa58] sm:$0xff]
    %v392 = vld [vmem:[#allocation5 + $0xa60] sm:$0xff]
    %v393 = vld [vmem:[#allocation5 + $0xa68] sm:$0xff]
    %v394 = vld [vmem:[#allocation5 + $0xa70] sm:$0xff]
    %v395 = vld [vmem:[#allocation5 + $0xa78] sm:$0xff]
    %v396 = vld [vmem:[#allocation5 + $0xa80] sm:$0xff]
    %v397 = vld [vmem:[#allocation5 + $0xa88] sm:$0xff]
    %v398 = vld [vmem:[#allocation5 + $0xa90] sm:$0xff]
    %v399 = vld [vmem:[#allocation5 + $0xa98] sm:$0xff]
    %v400 = vld [vmem:[#allocation5 + $0xaa0] sm:$0xff]
    %v401 = vld [vmem:[#allocation5 + $0xaa8] sm:$0xff]
    %v402 = vld [vmem:[#allocation5 + $0xab0] sm:$0xff]
    %v403 = vld [vmem:[#allocation5 + $0xab8] sm:$0xff]
    %v404 = vld [vmem:[#allocation5 + $0xac0] sm:$0xff]
    %v405 = vld [vmem:[#allocation5 + $0xac8] sm:$0xff]
    %v406 = vld [vmem:[#allocation5 + $0xad0] sm:$0xff]
    %v407 = vld [vmem:[#allocation5 + $0xad8] sm:$0xff]
    %v408 = vld [vmem:[#allocation5 + $0xae0] sm:$0xff]
    %v409 = vld [vmem:[#allocation5 + $0xae8] sm:$0xff]
    %v410 = vld [vmem:[#allocation5 + $0xaf0] sm:$0xff]
    %v411 = vld [vmem:[#allocation5 + $0xaf8] sm:$0xff]
    %v412 = vld [vmem:[#allocation5 + $0xb00] sm:$0xff]
    %v413 = vld [vmem:[#allocation5 + $0xb08] sm:$0xff]
    %v414 = vld [vmem:[#allocation5 + $0xb10] sm:$0xff]
    %v415 = vld [vmem:[#allocation5 + $0xb18] sm:$0xff]
    %v416 = vld [vmem:[#allocation5 + $0xb20] sm:$0xff]
    %v417 = vld [vmem:[#allocation5 + $0xb28] sm:$0xff]
    %v418 = vld [vmem:[#allocation5 + $0xb30] sm:$0xff]
    %v419 = vld [vmem:[#allocation5 + $0xb38] sm:$0xff]
    %v420 = vld [vmem:[#allocation5 + $0xb40] sm:$0xff]
    %v421 = vld [vmem:[#allocation5 + $0xb48] sm:$0xff]
    %v422 = vld [vmem:[#allocation5 + $0xb50] sm:$0xff]
    %v423 = vld [vmem:[#allocation5 + $0xb58] sm:$0xff]
    %v424 = vld [vmem:[#allocation5 + $0xb60] sm:$0xff]
    %v425 = vld [vmem:[#allocation5 + $0xb68] sm:$0xff]
    %v426 = vld [vmem:[#allocation5 + $0xb70] sm:$0xff]
    %v427 = vld [vmem:[#allocation5 + $0xb78] sm:$0xff]
    %v428 = vld [vmem:[#allocation5 + $0xb80] sm:$0xff]
    %v429 = vld [vmem:[#allocation5 + $0xb88] sm:$0xff]
    %v430 = vld [vmem:[#allocation5 + $0xb90] sm:$0xff]
    %v431 = vld [vmem:[#allocation5 + $0xb98] sm:$0xff]
    %v432 = vld [vmem:[#allocation5 + $0xba0] sm:$0xff]
    %v433 = vld [vmem:[#allocation5 + $0xba8] sm:$0xff]
    %v434 = vld [vmem:[#allocation5 + $0xbb0] sm:$0xff]
    %v435 = vld [vmem:[#allocation5 + $0xbb8] sm:$0xff]
    %v436 = vld [vmem:[#allocation5 + $0xbc0] sm:$0xff]
    %v437 = vld [vmem:[#allocation5 + $0xbc8] sm:$0xff]
    %v438 = vld [vmem:[#allocation5 + $0xbd0] sm:$0xff]
    %v439 = vld [vmem:[#allocation5 + $0xbd8] sm:$0xff]
    %v440 = vld [vmem:[#allocation5 + $0xbe0] sm:$0xff]
    %v441 = vld [vmem:[#allocation5 + $0xbe8] sm:$0xff]
    %v442 = vld [vmem:[#allocation5 + $0xbf0] sm:$0xff]
    %v443 = vld [vmem:[#allocation5 + $0xbf8] sm:$0xff]
    %v444 = vld [vmem:[#allocation5 + $0xc00] sm:$0xff]
    %v445 = vld [vmem:[#allocation5 + $0xc08] sm:$0xff]
    %v446 = vld [vmem:[#allocation5 + $0xc10] sm:$0xff]
    %v447 = vld [vmem:[#allocation5 + $0xc18] sm:$0xff]
    %v448 = vld [vmem:[#allocation5 + $0xc20] sm:$0xff]
    %v449 = vld [vmem:[#allocation5 + $0xc28] sm:$0xff]
    %v450 = vld [vmem:[#allocation5 + $0xc30] sm:$0xff]
    %v451 = vld [vmem:[#allocation5 + $0xc38] sm:$0xff]
    %v452 = vld [vmem:[#allocation5 + $0xc40] sm:$0xff]
    %v453 = vld [vmem:[#allocation5 + $0xc48] sm:$0xff]
    %v454 = vld [vmem:[#allocation5 + $0xc50] sm:$0xff]
    %v455 = vld [vmem:[#allocation5 + $0xc58] sm:$0xff]
    %v456 = vld [vmem:[#allocation5 + $0xc60] sm:$0xff]
    %v457 = vld [vmem:[#allocation5 + $0xc68] sm:$0xff]
    %v458 = vld [vmem:[#allocation5 + $0xc70] sm:$0xff]
    %v459 = vld [vmem:[#allocation5 + $0xc78] sm:$0xff]
    %v460 = vld [vmem:[#allocation5 + $0xc80] sm:$0xff]
    %v461 = vld [vmem:[#allocation5 + $0xc88] sm:$0xff]
    %v462 = vld [vmem:[#allocation5 + $0xc90] sm:$0xff]
    %v463 = vld [vmem:[#allocation5 + $0xc98] sm:$0xff]
    %v464 = vld [vmem:[#allocation5 + $0xca0] sm:$0xff]
    %v465 = vld [vmem:[#allocation5 + $0xca8] sm:$0xff]
    %v466 = vld [vmem:[#allocation5 + $0xcb0] sm:$0xff]
    %v467 = vld [vmem:[#allocation5 + $0xcb8] sm:$0xff]
    %v468 = vld [vmem:[#allocation5 + $0xcc0] sm:$0xff]
    %v469 = vld [vmem:[#allocation5 + $0xcc8] sm:$0xff]
    %v470 = vld [vmem:[#allocation5 + $0xcd0] sm:$0xff]
    %v471 = vld [vmem:[#allocation5 + $0xcd8] sm:$0xff]
    %v472 = vld [vmem:[#allocation5 + $0xce0] sm:$0xff]
    %v473 = vld [vmem:[#allocation5 + $0xce8] sm:$0xff]
    %v474 = vld [vmem:[#allocation5 + $0xcf0] sm:$0xff]
    %v475 = vld [vmem:[#allocation5 + $0xcf8] sm:$0xff]
    %v476 = vld [vmem:[#allocation5 + $0xd00] sm:$0xff]
    %v477 = vld [vmem:[#allocation5 + $0xd08] sm:$0xff]
    %v478 = vld [vmem:[#allocation5 + $0xd10] sm:$0xff]
    %v479 = vld [vmem:[#allocation5 + $0xd18] sm:$0xff]
    %v480 = vld [vmem:[#allocation5 + $0xd20] sm:$0xff]
    %v481 = vld [vmem:[#allocation5 + $0xd28] sm:$0xff]
    %v482 = vld [vmem:[#allocation5 + $0xd30] sm:$0xff]
    %v483 = vld [vmem:[#allocation5 + $0xd38] sm:$0xff]
    %v484 = vld [vmem:[#allocation5 + $0xd40] sm:$0xff]
    %v485 = vld [vmem:[#allocation5 + $0xd48] sm:$0xff]
    %v486 = vld [vmem:[#allocation5 + $0xd50] sm:$0xff]
    %v487 = vld [vmem:[#allocation5 + $0xd58] sm:$0xff]
    %v488 = vld [vmem:[#allocation5 + $0xd60] sm:$0xff]
    %v489 = vld [vmem:[#allocation5 + $0xd68] sm:$0xff]
    %v490 = vld [vmem:[#allocation5 + $0xd70] sm:$0xff]
    %v491 = vld [vmem:[#allocation5 + $0xd78] sm:$0xff]
    %v492 = vld [vmem:[#allocation5 + $0xd80] sm:$0xff]
    %v493 = vld [vmem:[#allocation5 + $0xd88] sm:$0xff]
    %v494 = vld [vmem:[#allocation5 + $0xd90] sm:$0xff]
    %v495 = vld [vmem:[#allocation5 + $0xd98] sm:$0xff]
    %v496 = vld [vmem:[#allocation5 + $0xda0] sm:$0xff]
    %v497 = vld [vmem:[#allocation5 + $0xda8] sm:$0xff]
    %v498 = vld [vmem:[#allocation5 + $0xdb0] sm:$0xff]
    %v499 = vld [vmem:[#allocation5 + $0xdb8] sm:$0xff]
    %v500 = vld [vmem:[#allocation5 + $0xdc0] sm:$0xff]
    %v501 = vld [vmem:[#allocation5 + $0xdc8] sm:$0xff]
    %v502 = vld [vmem:[#allocation5 + $0xdd0] sm:$0xff]
    %v503 = vld [vmem:[#allocation5 + $0xdd8] sm:$0xff]
    %v504 = vld [vmem:[#allocation5 + $0xde0] sm:$0xff]
    %v505 = vld [vmem:[#allocation5 + $0xde8] sm:$0xff]
    %v506 = vld [vmem:[#allocation5 + $0xdf0] sm:$0xff]
    %v507 = vld [vmem:[#allocation5 + $0xdf8] sm:$0xff]
    %v508 = vld [vmem:[#allocation5 + $0xe00] sm:$0xff]
    %v509 = vld [vmem:[#allocation5 + $0xe08] sm:$0xff]
    %v510 = vld [vmem:[#allocation5 + $0xe10] sm:$0xff]
    %v511 = vld [vmem:[#allocation5 + $0xe18] sm:$0xff]
    %v512 = vld [vmem:[#allocation5 + $0xe20] sm:$0xff]
    %v513 = vld [vmem:[#allocation5 + $0xe28] sm:$0xff]
    %v514 = vld [vmem:[#allocation5 + $0xe30] sm:$0xff]
    %v515 = vld [vmem:[#allocation5 + $0xe38] sm:$0xff]
    %v516 = vld [vmem:[#allocation5 + $0xe40] sm:$0xff]
    %v517 = vld [vmem:[#allocation5 + $0xe48] sm:$0xff]
    %v518 = vld [vmem:[#allocation5 + $0xe50] sm:$0xff]
    %v519 = vld [vmem:[#allocation5 + $0xe58] sm:$0xff]
    %v520 = vld [vmem:[#allocation5 + $0xe60] sm:$0xff]
    %v521 = vld [vmem:[#allocation5 + $0xe68] sm:$0xff]
    %v522 = vld [vmem:[#allocation5 + $0xe70] sm:$0xff]
    %v523 = vld [vmem:[#allocation5 + $0xe78] sm:$0xff]
    %v524 = vld [vmem:[#allocation5 + $0xe80] sm:$0xff]
    %v525 = vld [vmem:[#allocation5 + $0xe88] sm:$0xff]
    %v526 = vld [vmem:[#allocation5 + $0xe90] sm:$0xff]
    %v527 = vld [vmem:[#allocation5 + $0xe98] sm:$0xff]
    %v528 = vld [vmem:[#allocation5 + $0xea0] sm:$0xff]
    %v529 = vld [vmem:[#allocation5 + $0xea8] sm:$0xff]
    %v530 = vld [vmem:[#allocation5 + $0xeb0] sm:$0xff]
    %v531 = vld [vmem:[#allocation5 + $0xeb8] sm:$0xff]
    %v532 = vld [vmem:[#allocation5 + $0xec0] sm:$0xff]
    %v533 = vld [vmem:[#allocation5 + $0xec8] sm:$0xff]
    %v534 = vld [vmem:[#allocation5 + $0xed0] sm:$0xff]
    %v535 = vld [vmem:[#allocation5 + $0xed8] sm:$0xff]
    %v536 = vld [vmem:[#allocation5 + $0xee0] sm:$0xff]
    %v537 = vld [vmem:[#allocation5 + $0xee8] sm:$0xff]
    %v538 = vld [vmem:[#allocation5 + $0xef0] sm:$0xff]
    %v539 = vld [vmem:[#allocation5 + $0xef8] sm:$0xff]
    %v540 = vld [vmem:[#allocation5 + $0xf00] sm:$0xff]
    %v541 = vld [vmem:[#allocation5 + $0xf08] sm:$0xff]
    %v542 = vld [vmem:[#allocation5 + $0xf10] sm:$0xff]
    %v543 = vld [vmem:[#allocation5 + $0xf18] sm:$0xff]
    %v544 = vld [vmem:[#allocation5 + $0xf20] sm:$0xff]
    %v545 = vld [vmem:[#allocation5 + $0xf28] sm:$0xff]
    %v546 = vld [vmem:[#allocation5 + $0xf30] sm:$0xff]
    %v547 = vld [vmem:[#allocation5 + $0xf38] sm:$0xff]
    %v548 = vld [vmem:[#allocation5 + $0xf40] sm:$0xff]
    %v549 = vld [vmem:[#allocation5 + $0xf48] sm:$0xff]
    %v550 = vld [vmem:[#allocation5 + $0xf50] sm:$0xff]
    %v551 = vld [vmem:[#allocation5 + $0xf58] sm:$0xff]
    %v552 = vld [vmem:[#allocation5 + $0xf60] sm:$0xff]
    %v553 = vld [vmem:[#allocation5 + $0xf68] sm:$0xff]
    %v554 = vld [vmem:[#allocation5 + $0xf70] sm:$0xff]
    %v555 = vld [vmem:[#allocation5 + $0xf78] sm:$0xff]
    %v556 = vld [vmem:[#allocation5 + $0xf80] sm:$0xff]
    %v557 = vld [vmem:[#allocation5 + $0xf88] sm:$0xff]
    %v558 = vld [vmem:[#allocation5 + $0xf90] sm:$0xff]
    %v559 = vld [vmem:[#allocation5 + $0xf98] sm:$0xff]
    %v560 = vld [vmem:[#allocation5 + $0xfa0] sm:$0xff]
    %v561 = vld [vmem:[#allocation5 + $0xfa8] sm:$0xff]
    %v562 = vld [vmem:[#allocation5 + $0xfb0] sm:$0xff]
    %v563 = vld [vmem:[#allocation5 + $0xfb8] sm:$0xff]
    %v564 = vld [vmem:[#allocation5 + $0xfc0] sm:$0xff]
    %v565 = vld [vmem:[#allocation5 + $0xfc8] sm:$0xff]
    %v566 = vld [vmem:[#allocation5 + $0xfd0] sm:$0xff]
    %v567 = vld [vmem:[#allocation5 + $0xfd8] sm:$0xff]
    %v568 = vld [vmem:[#allocation5 + $0xfe0] sm:$0xff]
    %v569 = vld [vmem:[#allocation5 + $0xfe8] sm:$0xff]
    %v570 = vld [vmem:[#allocation5 + $0xff0] sm:$0xff]
    %v571 = vld [vmem:[#allocation5 + $0xff8] sm:$0xff]
    %v572 = vld [vmem:[%s2] sm:$0xf]
    %v573 = vld [vmem:[%s2 + $0x4] sm:$0xf]
    %v574 = vld [vmem:[%s2 + $0x8] sm:$0xf]
    %v575 = vld [vmem:[%s2 + $0xc] sm:$0xf]
    %v576 = vld [vmem:[%s2 + $0x10] sm:$0xf]
    %v577 = vld [vmem:[%s2 + $0x14] sm:$0xf]
    %v578 = vld [vmem:[%s2 + $0x18] sm:$0xf]
    %v579 = vld [vmem:[%s2 + $0x1c] sm:$0xf]
    %v580 = vld [vmem:[%s2 + $0x20] sm:$0xf]
    %v581 = vld [vmem:[%s2 + $0x24] sm:$0xf]
    %v582 = vld [vmem:[%s2 + $0x28] sm:$0xf]
    %v583 = vld [vmem:[%s2 + $0x2c] sm:$0xf]
    %v584 = vld [vmem:[%s2 + $0x30] sm:$0xf]
    %v585 = vld [vmem:[%s2 + $0x34] sm:$0xf]
    %v586 = vld [vmem:[%s2 + $0x38] sm:$0xf]
    %v587 = vld [vmem:[%s2 + $0x3c] sm:$0xf]
    %v588 = vld [vmem:[%s2 + $0x40] sm:$0xf]
    %v589 = vld [vmem:[%s2 + $0x44] sm:$0xf]
    %v590 = vld [vmem:[%s2 + $0x48] sm:$0xf]
    %v591 = vld [vmem:[%s2 + $0x4c] sm:$0xf]
    %v592 = vld [vmem:[%s2 + $0x50] sm:$0xf]
    %v593 = vld [vmem:[%s2 + $0x54] sm:$0xf]
    %v594 = vld [vmem:[%s2 + $0x58] sm:$0xf]
    %v595 = vld [vmem:[%s2 + $0x5c] sm:$0xf]
    %v596 = vld [vmem:[%s2 + $0x60] sm:$0xf]
    %v597 = vld [vmem:[%s2 + $0x64] sm:$0xf]
    %v598 = vld [vmem:[%s2 + $0x68] sm:$0xf]
    %v599 = vld [vmem:[%s2 + $0x6c] sm:$0xf]
    %v600 = vld [vmem:[%s2 + $0x70] sm:$0xf]
    %v601 = vld [vmem:[%s2 + $0x74] sm:$0xf]
    %v602 = vld [vmem:[%s2 + $0x78] sm:$0xf]
    %v603 = vld [vmem:[%s2 + $0x7c] sm:$0xf]
    %v604 = vld [vmem:[#allocation7] sm:$0x1]
    %v605 = vld [vmem:[#allocation7 + $0x1] sm:$0x1]
    %v606 = vld [vmem:[#allocation2] sm:$0xff]
    %v607 = vld [vmem:[#allocation2 + $0x8] sm:$0xff]
    %v608 = vld [vmem:[#allocation2 + $0x10] sm:$0xff]
    %v609 = vld [vmem:[#allocation2 + $0x18] sm:$0xff]
    %v610 = vld [vmem:[#allocation2 + $0x20] sm:$0xff]
    %v611 = vld [vmem:[#allocation2 + $0x28] sm:$0xff]
    %v612 = vld [vmem:[#allocation2 + $0x30] sm:$0xff]
    %v613 = vld [vmem:[#allocation2 + $0x38] sm:$0xff]
    %v614 = vld [vmem:[#allocation2 + $0x40] sm:$0xff]
    %v615 = vld [vmem:[#allocation2 + $0x48] sm:$0xff]
    %v616 = vld [vmem:[#allocation2 + $0x50] sm:$0xff]
    %v617 = vld [vmem:[#allocation2 + $0x58] sm:$0xff]
    %v618 = vld [vmem:[#allocation2 + $0x60] sm:$0xff]
    %v619 = vld [vmem:[#allocation2 + $0x68] sm:$0xff]
    %v620 = vld [vmem:[#allocation2 + $0x70] sm:$0xff]
    %v621 = vld [vmem:[#allocation2 + $0x78] sm:$0xff]
    %v622 = vld [vmem:[#allocation2 + $0x80] sm:$0xff]
    %v623 = vld [vmem:[#allocation2 + $0x88] sm:$0xff]
    %v624 = vld [vmem:[#allocation2 + $0x90] sm:$0xff]
    %v625 = vld [vmem:[#allocation2 + $0x98] sm:$0xff]
    %v626 = vld [vmem:[#allocation2 + $0xa0] sm:$0xff]
    %v627 = vld [vmem:[#allocation2 + $0xa8] sm:$0xff]
    %v628 = vld [vmem:[#allocation2 + $0xb0] sm:$0xff]
    %v629 = vld [vmem:[#allocation2 + $0xb8] sm:$0xff]
    %v630 = vld [vmem:[#allocation2 + $0xc0] sm:$0xff]
    %v631 = vld [vmem:[#allocation2 + $0xc8] sm:$0xff]
    %v632 = vld [vmem:[#allocation2 + $0xd0] sm:$0xff]
    %v633 = vld [vmem:[#allocation2 + $0xd8] sm:$0xff]
    %v634 = vld [vmem:[#allocation2 + $0xe0] sm:$0xff]
    %v635 = vld [vmem:[#allocation2 + $0xe8] sm:$0xff]
    %v636 = vld [vmem:[#allocation2 + $0xf0] sm:$0xff]
    %v637 = vld [vmem:[#allocation2 + $0xf8] sm:$0xff]
    %v638 = vlaneseq
    %v639 = vshrl.u32 %v638, 7
    %v640 = vsub.s32 0, %v639
    %v641 = vrot.slane %v604, %v640
    %v642 = vmul.f32 %v606, %v641
    %v643 = vmul.f32 %v607, %v641
    %v644 = vmul.f32 %v608, %v641
    %v645 = vmul.f32 %v609, %v641
    %v646 = vmul.f32 %v610, %v641
    %v647 = vmul.f32 %v611, %v641
    %v648 = vmul.f32 %v612, %v641
    %v649 = vmul.f32 %v613, %v641
    %v650 = vmul.f32 %v614, %v641
    %v651 = vmul.f32 %v615, %v641
    %v652 = vmul.f32 %v616, %v641
    %v653 = vmul.f32 %v617, %v641
    %v654 = vmul.f32 %v618, %v641
    %v655 = vmul.f32 %v619, %v641
    %v656 = vmul.f32 %v620, %v641
    %v657 = vmul.f32 %v621, %v641
    %v658 = vmul.f32 %v622, %v641
    %v659 = vmul.f32 %v623, %v641
    %v660 = vmul.f32 %v624, %v641
    %v661 = vmul.f32 %v625, %v641
    %v662 = vmul.f32 %v626, %v641
    %v663 = vmul.f32 %v627, %v641
    %v664 = vmul.f32 %v628, %v641
    %v665 = vmul.f32 %v629, %v641
    %v666 = vmul.f32 %v630, %v641
    %v667 = vmul.f32 %v631, %v641
    %v668 = vmul.f32 %v632, %v641
    %v669 = vmul.f32 %v633, %v641
    %v670 = vmul.f32 %v634, %v641
    %v671 = vmul.f32 %v635, %v641
    %v672 = vmul.f32 %v636, %v641
    %v673 = vmul.f32 %v637, %v641
    %674 = vadd.xlane.f32.xlu0 %v642
    %v675 = vpop.xlane.xlu0 %674
    %676 = vadd.xlane.f32.xlu0 %v643
    %v677 = vpop.xlane.xlu0 %676
    %678 = vadd.xlane.f32.xlu0 %v644
    %v679 = vpop.xlane.xlu0 %678
    %680 = vadd.xlane.f32.xlu0 %v645
    %v681 = vpop.xlane.xlu0 %680
    %682 = vadd.xlane.f32.xlu0 %v646
    %v683 = vpop.xlane.xlu0 %682
    %684 = vadd.xlane.f32.xlu0 %v647
    %v685 = vpop.xlane.xlu0 %684
    %686 = vadd.xlane.f32.xlu0 %v648
    %v687 = vpop.xlane.xlu0 %686
    %688 = vadd.xlane.f32.xlu0 %v649
    %v689 = vpop.xlane.xlu0 %688
    %690 = vadd.xlane.f32.xlu0 %v650
    %v691 = vpop.xlane.xlu0 %690
    %692 = vadd.xlane.f32.xlu0 %v651
    %v693 = vpop.xlane.xlu0 %692
    %694 = vadd.xlane.f32.xlu0 %v652
    %v695 = vpop.xlane.xlu0 %694
    %696 = vadd.xlane.f32.xlu0 %v653
    %v697 = vpop.xlane.xlu0 %696
    %698 = vadd.xlane.f32.xlu0 %v654
    %v699 = vpop.xlane.xlu0 %698
    %700 = vadd.xlane.f32.xlu0 %v655
    %v701 = vpop.xlane.xlu0 %700
    %702 = vadd.xlane.f32.xlu0 %v656
    %v703 = vpop.xlane.xlu0 %702
    %704 = vadd.xlane.f32.xlu0 %v657
    %v705 = vpop.xlane.xlu0 %704
    %706 = vadd.xlane.f32.xlu0 %v658
    %v707 = vpop.xlane.xlu0 %706
    %708 = vadd.xlane.f32.xlu0 %v659
    %v709 = vpop.xlane.xlu0 %708
    %710 = vadd.xlane.f32.xlu0 %v660
    %v711 = vpop.xlane.xlu0 %710
    %712 = vadd.xlane.f32.xlu0 %v661
    %v713 = vpop.xlane.xlu0 %712
    %714 = vadd.xlane.f32.xlu0 %v662
    %v715 = vpop.xlane.xlu0 %714
    %716 = vadd.xlane.f32.xlu0 %v663
    %v717 = vpop.xlane.xlu0 %716
    %718 = vadd.xlane.f32.xlu0 %v664
    %v719 = vpop.xlane.xlu0 %718
    %720 = vadd.xlane.f32.xlu0 %v665
    %v721 = vpop.xlane.xlu0 %720
    %722 = vadd.xlane.f32.xlu0 %v666
    %v723 = vpop.xlane.xlu0 %722
    %724 = vadd.xlane.f32.xlu0 %v667
    %v725 = vpop.xlane.xlu0 %724
    %726 = vadd.xlane.f32.xlu0 %v668
    %v727 = vpop.xlane.xlu0 %726
    %728 = vadd.xlane.f32.xlu0 %v669
    %v729 = vpop.xlane.xlu0 %728
    %730 = vadd.xlane.f32.xlu0 %v670
    %v731 = vpop.xlane.xlu0 %730
    %732 = vadd.xlane.f32.xlu0 %v671
    %v733 = vpop.xlane.xlu0 %732
    %734 = vadd.xlane.f32.xlu0 %v672
    %v735 = vpop.xlane.xlu0 %734
    %736 = vadd.xlane.f32.xlu0 %v673
    %v737 = vpop.xlane.xlu0 %736
    %v738 = vlaneseq
    %v739 = vshrl.u32 %v738, 7
    %v740 = vsub.s32 0, %v739
    %v741 = vrot.slane %v605, %v740
    %v742 = vmul.f32 %v60, %v741
    %v743 = vmul.f32 %v61, %v741
    %v744 = vmul.f32 %v62, %v741
    %v745 = vmul.f32 %v63, %v741
    %v746 = vmul.f32 %v64, %v741
    %v747 = vmul.f32 %v65, %v741
    %v748 = vmul.f32 %v66, %v741
    %v749 = vmul.f32 %v67, %v741
    %v750 = vmul.f32 %v68, %v741
    %v751 = vmul.f32 %v69, %v741
    %v752 = vmul.f32 %v70, %v741
    %v753 = vmul.f32 %v71, %v741
    %v754 = vmul.f32 %v72, %v741
    %v755 = vmul.f32 %v73, %v741
    %v756 = vmul.f32 %v74, %v741
    %v757 = vmul.f32 %v75, %v741
    %v758 = vmul.f32 %v76, %v741
    %v759 = vmul.f32 %v77, %v741
    %v760 = vmul.f32 %v78, %v741
    %v761 = vmul.f32 %v79, %v741
    %v762 = vmul.f32 %v80, %v741
    %v763 = vmul.f32 %v81, %v741
    %v764 = vmul.f32 %v82, %v741
    %v765 = vmul.f32 %v83, %v741
    %v766 = vmul.f32 %v84, %v741
    %v767 = vmul.f32 %v85, %v741
    %v768 = vmul.f32 %v86, %v741
    %v769 = vmul.f32 %v87, %v741
    %v770 = vmul.f32 %v88, %v741
    %v771 = vmul.f32 %v89, %v741
    %v772 = vmul.f32 %v90, %v741
    %v773 = vmul.f32 %v91, %v741
    %v774 = vmul.f32 %v92, %v741
    %v775 = vmul.f32 %v93, %v741
    %v776 = vmul.f32 %v94, %v741
    %v777 = vmul.f32 %v95, %v741
    %v778 = vmul.f32 %v96, %v741
    %v779 = vmul.f32 %v97, %v741
    %v780 = vmul.f32 %v98, %v741
    %v781 = vmul.f32 %v99, %v741
    %v782 = vmul.f32 %v100, %v741
    %v783 = vmul.f32 %v101, %v741
    %v784 = vmul.f32 %v102, %v741
    %v785 = vmul.f32 %v103, %v741
    %v786 = vmul.f32 %v104, %v741
    %v787 = vmul.f32 %v105, %v741
    %v788 = vmul.f32 %v106, %v741
    %v789 = vmul.f32 %v107, %v741
    %v790 = vmul.f32 %v108, %v741
    %v791 = vmul.f32 %v109, %v741
    %v792 = vmul.f32 %v110, %v741
    %v793 = vmul.f32 %v111, %v741
    %v794 = vmul.f32 %v112, %v741
    %v795 = vmul.f32 %v113, %v741
    %v796 = vmul.f32 %v114, %v741
    %v797 = vmul.f32 %v115, %v741
    %v798 = vmul.f32 %v116, %v741
    %v799 = vmul.f32 %v117, %v741
    %v800 = vmul.f32 %v118, %v741
    %v801 = vmul.f32 %v119, %v741
    %v802 = vmul.f32 %v120, %v741
    %v803 = vmul.f32 %v121, %v741
    %v804 = vmul.f32 %v122, %v741
    %v805 = vmul.f32 %v123, %v741
    %v806 = vmul.f32 %v124, %v741
    %v807 = vmul.f32 %v125, %v741
    %v808 = vmul.f32 %v126, %v741
    %v809 = vmul.f32 %v127, %v741
    %v810 = vmul.f32 %v128, %v741
    %v811 = vmul.f32 %v129, %v741
    %v812 = vmul.f32 %v130, %v741
    %v813 = vmul.f32 %v131, %v741
    %v814 = vmul.f32 %v132, %v741
    %v815 = vmul.f32 %v133, %v741
    %v816 = vmul.f32 %v134, %v741
    %v817 = vmul.f32 %v135, %v741
    %v818 = vmul.f32 %v136, %v741
    %v819 = vmul.f32 %v137, %v741
    %v820 = vmul.f32 %v138, %v741
    %v821 = vmul.f32 %v139, %v741
    %v822 = vmul.f32 %v140, %v741
    %v823 = vmul.f32 %v141, %v741
    %v824 = vmul.f32 %v142, %v741
    %v825 = vmul.f32 %v143, %v741
    %v826 = vmul.f32 %v144, %v741
    %v827 = vmul.f32 %v145, %v741
    %v828 = vmul.f32 %v146, %v741
    %v829 = vmul.f32 %v147, %v741
    %v830 = vmul.f32 %v148, %v741
    %v831 = vmul.f32 %v149, %v741
    %v832 = vmul.f32 %v150, %v741
    %v833 = vmul.f32 %v151, %v741
    %v834 = vmul.f32 %v152, %v741
    %v835 = vmul.f32 %v153, %v741
    %v836 = vmul.f32 %v154, %v741
    %v837 = vmul.f32 %v155, %v741
    %v838 = vmul.f32 %v156, %v741
    %v839 = vmul.f32 %v157, %v741
    %v840 = vmul.f32 %v158, %v741
    %v841 = vmul.f32 %v159, %v741
    %v842 = vmul.f32 %v160, %v741
    %v843 = vmul.f32 %v161, %v741
    %v844 = vmul.f32 %v162, %v741
    %v845 = vmul.f32 %v163, %v741
    %v846 = vmul.f32 %v164, %v741
    %v847 = vmul.f32 %v165, %v741
    %v848 = vmul.f32 %v166, %v741
    %v849 = vmul.f32 %v167, %v741
    %v850 = vmul.f32 %v168, %v741
    %v851 = vmul.f32 %v169, %v741
    %v852 = vmul.f32 %v170, %v741
    %v853 = vmul.f32 %v171, %v741
    %v854 = vmul.f32 %v172, %v741
    %v855 = vmul.f32 %v173, %v741
    %v856 = vmul.f32 %v174, %v741
    %v857 = vmul.f32 %v175, %v741
    %v858 = vmul.f32 %v176, %v741
    %v859 = vmul.f32 %v177, %v741
    %v860 = vmul.f32 %v178, %v741
    %v861 = vmul.f32 %v179, %v741
    %v862 = vmul.f32 %v180, %v741
    %v863 = vmul.f32 %v181, %v741
    %v864 = vmul.f32 %v182, %v741
    %v865 = vmul.f32 %v183, %v741
    %v866 = vmul.f32 %v184, %v741
    %v867 = vmul.f32 %v185, %v741
    %v868 = vmul.f32 %v186, %v741
    %v869 = vmul.f32 %v187, %v741
    %v870 = vmul.f32 %v188, %v741
    %v871 = vmul.f32 %v189, %v741
    %v872 = vmul.f32 %v190, %v741
    %v873 = vmul.f32 %v191, %v741
    %v874 = vmul.f32 %v192, %v741
    %v875 = vmul.f32 %v193, %v741
    %v876 = vmul.f32 %v194, %v741
    %v877 = vmul.f32 %v195, %v741
    %v878 = vmul.f32 %v196, %v741
    %v879 = vmul.f32 %v197, %v741
    %v880 = vmul.f32 %v198, %v741
    %v881 = vmul.f32 %v199, %v741
    %v882 = vmul.f32 %v200, %v741
    %v883 = vmul.f32 %v201, %v741
    %v884 = vmul.f32 %v202, %v741
    %v885 = vmul.f32 %v203, %v741
    %v886 = vmul.f32 %v204, %v741
    %v887 = vmul.f32 %v205, %v741
    %v888 = vmul.f32 %v206, %v741
    %v889 = vmul.f32 %v207, %v741
    %v890 = vmul.f32 %v208, %v741
    %v891 = vmul.f32 %v209, %v741
    %v892 = vmul.f32 %v210, %v741
    %v893 = vmul.f32 %v211, %v741
    %v894 = vmul.f32 %v212, %v741
    %v895 = vmul.f32 %v213, %v741
    %v896 = vmul.f32 %v214, %v741
    %v897 = vmul.f32 %v215, %v741
    %v898 = vmul.f32 %v216, %v741
    %v899 = vmul.f32 %v217, %v741
    %v900 = vmul.f32 %v218, %v741
    %v901 = vmul.f32 %v219, %v741
    %v902 = vmul.f32 %v220, %v741
    %v903 = vmul.f32 %v221, %v741
    %v904 = vmul.f32 %v222, %v741
    %v905 = vmul.f32 %v223, %v741
    %v906 = vmul.f32 %v224, %v741
    %v907 = vmul.f32 %v225, %v741
    %v908 = vmul.f32 %v226, %v741
    %v909 = vmul.f32 %v227, %v741
    %v910 = vmul.f32 %v228, %v741
    %v911 = vmul.f32 %v229, %v741
    %v912 = vmul.f32 %v230, %v741
    %v913 = vmul.f32 %v231, %v741
    %v914 = vmul.f32 %v232, %v741
    %v915 = vmul.f32 %v233, %v741
    %v916 = vmul.f32 %v234, %v741
    %v917 = vmul.f32 %v235, %v741
    %v918 = vmul.f32 %v236, %v741
    %v919 = vmul.f32 %v237, %v741
    %v920 = vmul.f32 %v238, %v741
    %v921 = vmul.f32 %v239, %v741
    %v922 = vmul.f32 %v240, %v741
    %v923 = vmul.f32 %v241, %v741
    %v924 = vmul.f32 %v242, %v741
    %v925 = vmul.f32 %v243, %v741
    %v926 = vmul.f32 %v244, %v741
    %v927 = vmul.f32 %v245, %v741
    %v928 = vmul.f32 %v246, %v741
    %v929 = vmul.f32 %v247, %v741
    %v930 = vmul.f32 %v248, %v741
    %v931 = vmul.f32 %v249, %v741
    %v932 = vmul.f32 %v250, %v741
    %v933 = vmul.f32 %v251, %v741
    %v934 = vmul.f32 %v252, %v741
    %v935 = vmul.f32 %v253, %v741
    %v936 = vmul.f32 %v254, %v741
    %v937 = vmul.f32 %v255, %v741
    %v938 = vmul.f32 %v256, %v741
    %v939 = vmul.f32 %v257, %v741
    %v940 = vmul.f32 %v258, %v741
    %v941 = vmul.f32 %v259, %v741
    %v942 = vmul.f32 %v260, %v741
    %v943 = vmul.f32 %v261, %v741
    %v944 = vmul.f32 %v262, %v741
    %v945 = vmul.f32 %v263, %v741
    %v946 = vmul.f32 %v264, %v741
    %v947 = vmul.f32 %v265, %v741
    %v948 = vmul.f32 %v266, %v741
    %v949 = vmul.f32 %v267, %v741
    %v950 = vmul.f32 %v268, %v741
    %v951 = vmul.f32 %v269, %v741
    %v952 = vmul.f32 %v270, %v741
    %v953 = vmul.f32 %v271, %v741
    %v954 = vmul.f32 %v272, %v741
    %v955 = vmul.f32 %v273, %v741
    %v956 = vmul.f32 %v274, %v741
    %v957 = vmul.f32 %v275, %v741
    %v958 = vmul.f32 %v276, %v741
    %v959 = vmul.f32 %v277, %v741
    %v960 = vmul.f32 %v278, %v741
    %v961 = vmul.f32 %v279, %v741
    %v962 = vmul.f32 %v280, %v741
    %v963 = vmul.f32 %v281, %v741
    %v964 = vmul.f32 %v282, %v741
    %v965 = vmul.f32 %v283, %v741
    %v966 = vmul.f32 %v284, %v741
    %v967 = vmul.f32 %v285, %v741
    %v968 = vmul.f32 %v286, %v741
    %v969 = vmul.f32 %v287, %v741
    %v970 = vmul.f32 %v288, %v741
    %v971 = vmul.f32 %v289, %v741
    %v972 = vmul.f32 %v290, %v741
    %v973 = vmul.f32 %v291, %v741
    %v974 = vmul.f32 %v292, %v741
    %v975 = vmul.f32 %v293, %v741
    %v976 = vmul.f32 %v294, %v741
    %v977 = vmul.f32 %v295, %v741
    %v978 = vmul.f32 %v296, %v741
    %v979 = vmul.f32 %v297, %v741
    %v980 = vmul.f32 %v298, %v741
    %v981 = vmul.f32 %v299, %v741
    %v982 = vmul.f32 %v300, %v741
    %v983 = vmul.f32 %v301, %v741
    %v984 = vmul.f32 %v302, %v741
    %v985 = vmul.f32 %v303, %v741
    %v986 = vmul.f32 %v304, %v741
    %v987 = vmul.f32 %v305, %v741
    %v988 = vmul.f32 %v306, %v741
    %v989 = vmul.f32 %v307, %v741
    %v990 = vmul.f32 %v308, %v741
    %v991 = vmul.f32 %v309, %v741
    %v992 = vmul.f32 %v310, %v741
    %v993 = vmul.f32 %v311, %v741
    %v994 = vmul.f32 %v312, %v741
    %v995 = vmul.f32 %v313, %v741
    %v996 = vmul.f32 %v314, %v741
    %v997 = vmul.f32 %v315, %v741
    %v998 = vmul.f32 %v316, %v741
    %v999 = vmul.f32 %v317, %v741
    %v1000 = vmul.f32 %v318, %v741
    %v1001 = vmul.f32 %v319, %v741
    %v1002 = vmul.f32 %v320, %v741
    %v1003 = vmul.f32 %v321, %v741
    %v1004 = vmul.f32 %v322, %v741
    %v1005 = vmul.f32 %v323, %v741
    %v1006 = vmul.f32 %v324, %v741
    %v1007 = vmul.f32 %v325, %v741
    %v1008 = vmul.f32 %v326, %v741
    %v1009 = vmul.f32 %v327, %v741
    %v1010 = vmul.f32 %v328, %v741
    %v1011 = vmul.f32 %v329, %v741
    %v1012 = vmul.f32 %v330, %v741
    %v1013 = vmul.f32 %v331, %v741
    %v1014 = vmul.f32 %v332, %v741
    %v1015 = vmul.f32 %v333, %v741
    %v1016 = vmul.f32 %v334, %v741
    %v1017 = vmul.f32 %v335, %v741
    %v1018 = vmul.f32 %v336, %v741
    %v1019 = vmul.f32 %v337, %v741
    %v1020 = vmul.f32 %v338, %v741
    %v1021 = vmul.f32 %v339, %v741
    %v1022 = vmul.f32 %v340, %v741
    %v1023 = vmul.f32 %v341, %v741
    %v1024 = vmul.f32 %v342, %v741
    %v1025 = vmul.f32 %v343, %v741
    %v1026 = vmul.f32 %v344, %v741
    %v1027 = vmul.f32 %v345, %v741
    %v1028 = vmul.f32 %v346, %v741
    %v1029 = vmul.f32 %v347, %v741
    %v1030 = vmul.f32 %v348, %v741
    %v1031 = vmul.f32 %v349, %v741
    %v1032 = vmul.f32 %v350, %v741
    %v1033 = vmul.f32 %v351, %v741
    %v1034 = vmul.f32 %v352, %v741
    %v1035 = vmul.f32 %v353, %v741
    %v1036 = vmul.f32 %v354, %v741
    %v1037 = vmul.f32 %v355, %v741
    %v1038 = vmul.f32 %v356, %v741
    %v1039 = vmul.f32 %v357, %v741
    %v1040 = vmul.f32 %v358, %v741
    %v1041 = vmul.f32 %v359, %v741
    %v1042 = vmul.f32 %v360, %v741
    %v1043 = vmul.f32 %v361, %v741
    %v1044 = vmul.f32 %v362, %v741
    %v1045 = vmul.f32 %v363, %v741
    %v1046 = vmul.f32 %v364, %v741
    %v1047 = vmul.f32 %v365, %v741
    %v1048 = vmul.f32 %v366, %v741
    %v1049 = vmul.f32 %v367, %v741
    %v1050 = vmul.f32 %v368, %v741
    %v1051 = vmul.f32 %v369, %v741
    %v1052 = vmul.f32 %v370, %v741
    %v1053 = vmul.f32 %v371, %v741
    %v1054 = vmul.f32 %v372, %v741
    %v1055 = vmul.f32 %v373, %v741
    %v1056 = vmul.f32 %v374, %v741
    %v1057 = vmul.f32 %v375, %v741
    %v1058 = vmul.f32 %v376, %v741
    %v1059 = vmul.f32 %v377, %v741
    %v1060 = vmul.f32 %v378, %v741
    %v1061 = vmul.f32 %v379, %v741
    %v1062 = vmul.f32 %v380, %v741
    %v1063 = vmul.f32 %v381, %v741
    %v1064 = vmul.f32 %v382, %v741
    %v1065 = vmul.f32 %v383, %v741
    %v1066 = vmul.f32 %v384, %v741
    %v1067 = vmul.f32 %v385, %v741
    %v1068 = vmul.f32 %v386, %v741
    %v1069 = vmul.f32 %v387, %v741
    %v1070 = vmul.f32 %v388, %v741
    %v1071 = vmul.f32 %v389, %v741
    %v1072 = vmul.f32 %v390, %v741
    %v1073 = vmul.f32 %v391, %v741
    %v1074 = vmul.f32 %v392, %v741
    %v1075 = vmul.f32 %v393, %v741
    %v1076 = vmul.f32 %v394, %v741
    %v1077 = vmul.f32 %v395, %v741
    %v1078 = vmul.f32 %v396, %v741
    %v1079 = vmul.f32 %v397, %v741
    %v1080 = vmul.f32 %v398, %v741
    %v1081 = vmul.f32 %v399, %v741
    %v1082 = vmul.f32 %v400, %v741
    %v1083 = vmul.f32 %v401, %v741
    %v1084 = vmul.f32 %v402, %v741
    %v1085 = vmul.f32 %v403, %v741
    %v1086 = vmul.f32 %v404, %v741
    %v1087 = vmul.f32 %v405, %v741
    %v1088 = vmul.f32 %v406, %v741
    %v1089 = vmul.f32 %v407, %v741
    %v1090 = vmul.f32 %v408, %v741
    %v1091 = vmul.f32 %v409, %v741
    %v1092 = vmul.f32 %v410, %v741
    %v1093 = vmul.f32 %v411, %v741
    %v1094 = vmul.f32 %v412, %v741
    %v1095 = vmul.f32 %v413, %v741
    %v1096 = vmul.f32 %v414, %v741
    %v1097 = vmul.f32 %v415, %v741
    %v1098 = vmul.f32 %v416, %v741
    %v1099 = vmul.f32 %v417, %v741
    %v1100 = vmul.f32 %v418, %v741
    %v1101 = vmul.f32 %v419, %v741
    %v1102 = vmul.f32 %v420, %v741
    %v1103 = vmul.f32 %v421, %v741
    %v1104 = vmul.f32 %v422, %v741
    %v1105 = vmul.f32 %v423, %v741
    %v1106 = vmul.f32 %v424, %v741
    %v1107 = vmul.f32 %v425, %v741
    %v1108 = vmul.f32 %v426, %v741
    %v1109 = vmul.f32 %v427, %v741
    %v1110 = vmul.f32 %v428, %v741
    %v1111 = vmul.f32 %v429, %v741
    %v1112 = vmul.f32 %v430, %v741
    %v1113 = vmul.f32 %v431, %v741
    %v1114 = vmul.f32 %v432, %v741
    %v1115 = vmul.f32 %v433, %v741
    %v1116 = vmul.f32 %v434, %v741
    %v1117 = vmul.f32 %v435, %v741
    %v1118 = vmul.f32 %v436, %v741
    %v1119 = vmul.f32 %v437, %v741
    %v1120 = vmul.f32 %v438, %v741
    %v1121 = vmul.f32 %v439, %v741
    %v1122 = vmul.f32 %v440, %v741
    %v1123 = vmul.f32 %v441, %v741
    %v1124 = vmul.f32 %v442, %v741
    %v1125 = vmul.f32 %v443, %v741
    %v1126 = vmul.f32 %v444, %v741
    %v1127 = vmul.f32 %v445, %v741
    %v1128 = vmul.f32 %v446, %v741
    %v1129 = vmul.f32 %v447, %v741
    %v1130 = vmul.f32 %v448, %v741
    %v1131 = vmul.f32 %v449, %v741
    %v1132 = vmul.f32 %v450, %v741
    %v1133 = vmul.f32 %v451, %v741
    %v1134 = vmul.f32 %v452, %v741
    %v1135 = vmul.f32 %v453, %v741
    %v1136 = vmul.f32 %v454, %v741
    %v1137 = vmul.f32 %v455, %v741
    %v1138 = vmul.f32 %v456, %v741
    %v1139 = vmul.f32 %v457, %v741
    %v1140 = vmul.f32 %v458, %v741
    %v1141 = vmul.f32 %v459, %v741
    %v1142 = vmul.f32 %v460, %v741
    %v1143 = vmul.f32 %v461, %v741
    %v1144 = vmul.f32 %v462, %v741
    %v1145 = vmul.f32 %v463, %v741
    %v1146 = vmul.f32 %v464, %v741
    %v1147 = vmul.f32 %v465, %v741
    %v1148 = vmul.f32 %v466, %v741
    %v1149 = vmul.f32 %v467, %v741
    %v1150 = vmul.f32 %v468, %v741
    %v1151 = vmul.f32 %v469, %v741
    %v1152 = vmul.f32 %v470, %v741
    %v1153 = vmul.f32 %v471, %v741
    %v1154 = vmul.f32 %v472, %v741
    %v1155 = vmul.f32 %v473, %v741
    %v1156 = vmul.f32 %v474, %v741
    %v1157 = vmul.f32 %v475, %v741
    %v1158 = vmul.f32 %v476, %v741
    %v1159 = vmul.f32 %v477, %v741
    %v1160 = vmul.f32 %v478, %v741
    %v1161 = vmul.f32 %v479, %v741
    %v1162 = vmul.f32 %v480, %v741
    %v1163 = vmul.f32 %v481, %v741
    %v1164 = vmul.f32 %v482, %v741
    %v1165 = vmul.f32 %v483, %v741
    %v1166 = vmul.f32 %v484, %v741
    %v1167 = vmul.f32 %v485, %v741
    %v1168 = vmul.f32 %v486, %v741
    %v1169 = vmul.f32 %v487, %v741
    %v1170 = vmul.f32 %v488, %v741
    %v1171 = vmul.f32 %v489, %v741
    %v1172 = vmul.f32 %v490, %v741
    %v1173 = vmul.f32 %v491, %v741
    %v1174 = vmul.f32 %v492, %v741
    %v1175 = vmul.f32 %v493, %v741
    %v1176 = vmul.f32 %v494, %v741
    %v1177 = vmul.f32 %v495, %v741
    %v1178 = vmul.f32 %v496, %v741
    %v1179 = vmul.f32 %v497, %v741
    %v1180 = vmul.f32 %v498, %v741
    %v1181 = vmul.f32 %v499, %v741
    %v1182 = vmul.f32 %v500, %v741
    %v1183 = vmul.f32 %v501, %v741
    %v1184 = vmul.f32 %v502, %v741
    %v1185 = vmul.f32 %v503, %v741
    %v1186 = vmul.f32 %v504, %v741
    %v1187 = vmul.f32 %v505, %v741
    %v1188 = vmul.f32 %v506, %v741
    %v1189 = vmul.f32 %v507, %v741
    %v1190 = vmul.f32 %v508, %v741
    %v1191 = vmul.f32 %v509, %v741
    %v1192 = vmul.f32 %v510, %v741
    %v1193 = vmul.f32 %v511, %v741
    %v1194 = vmul.f32 %v512, %v741
    %v1195 = vmul.f32 %v513, %v741
    %v1196 = vmul.f32 %v514, %v741
    %v1197 = vmul.f32 %v515, %v741
    %v1198 = vmul.f32 %v516, %v741
    %v1199 = vmul.f32 %v517, %v741
    %v1200 = vmul.f32 %v518, %v741
    %v1201 = vmul.f32 %v519, %v741
    %v1202 = vmul.f32 %v520, %v741
    %v1203 = vmul.f32 %v521, %v741
    %v1204 = vmul.f32 %v522, %v741
    %v1205 = vmul.f32 %v523, %v741
    %v1206 = vmul.f32 %v524, %v741
    %v1207 = vmul.f32 %v525, %v741
    %v1208 = vmul.f32 %v526, %v741
    %v1209 = vmul.f32 %v527, %v741
    %v1210 = vmul.f32 %v528, %v741
    %v1211 = vmul.f32 %v529, %v741
    %v1212 = vmul.f32 %v530, %v741
    %v1213 = vmul.f32 %v531, %v741
    %v1214 = vmul.f32 %v532, %v741
    %v1215 = vmul.f32 %v533, %v741
    %v1216 = vmul.f32 %v534, %v741
    %v1217 = vmul.f32 %v535, %v741
    %v1218 = vmul.f32 %v536, %v741
    %v1219 = vmul.f32 %v537, %v741
    %v1220 = vmul.f32 %v538, %v741
    %v1221 = vmul.f32 %v539, %v741
    %v1222 = vmul.f32 %v540, %v741
    %v1223 = vmul.f32 %v541, %v741
    %v1224 = vmul.f32 %v542, %v741
    %v1225 = vmul.f32 %v543, %v741
    %v1226 = vmul.f32 %v544, %v741
    %v1227 = vmul.f32 %v545, %v741
    %v1228 = vmul.f32 %v546, %v741
    %v1229 = vmul.f32 %v547, %v741
    %v1230 = vmul.f32 %v548, %v741
    %v1231 = vmul.f32 %v549, %v741
    %v1232 = vmul.f32 %v550, %v741
    %v1233 = vmul.f32 %v551, %v741
    %v1234 = vmul.f32 %v552, %v741
    %v1235 = vmul.f32 %v553, %v741
    %v1236 = vmul.f32 %v554, %v741
    %v1237 = vmul.f32 %v555, %v741
    %v1238 = vmul.f32 %v556, %v741
    %v1239 = vmul.f32 %v557, %v741
    %v1240 = vmul.f32 %v558, %v741
    %v1241 = vmul.f32 %v559, %v741
    %v1242 = vmul.f32 %v560, %v741
    %v1243 = vmul.f32 %v561, %v741
    %v1244 = vmul.f32 %v562, %v741
    %v1245 = vmul.f32 %v563, %v741
    %v1246 = vmul.f32 %v564, %v741
    %v1247 = vmul.f32 %v565, %v741
    %v1248 = vmul.f32 %v566, %v741
    %v1249 = vmul.f32 %v567, %v741
    %v1250 = vmul.f32 %v568, %v741
    %v1251 = vmul.f32 %v569, %v741
    %v1252 = vmul.f32 %v570, %v741
    %v1253 = vmul.f32 %v571, %v741
    %1254 = vadd.xlane.f32.xlu0 %v742
    %v1255 = vpop.xlane.xlu0 %1254
    %1256 = vadd.xlane.f32.xlu0 %v743
    %v1257 = vpop.xlane.xlu0 %1256
    %1258 = vadd.xlane.f32.xlu0 %v744
    %v1259 = vpop.xlane.xlu0 %1258
    %1260 = vadd.xlane.f32.xlu0 %v745
    %v1261 = vpop.xlane.xlu0 %1260
    %1262 = vadd.xlane.f32.xlu0 %v746
    %v1263 = vpop.xlane.xlu0 %1262
    %1264 = vadd.xlane.f32.xlu0 %v747
    %v1265 = vpop.xlane.xlu0 %1264
    %1266 = vadd.xlane.f32.xlu0 %v748
    %v1267 = vpop.xlane.xlu0 %1266
    %1268 = vadd.xlane.f32.xlu0 %v749
    %v1269 = vpop.xlane.xlu0 %1268
    %1270 = vadd.xlane.f32.xlu0 %v750
    %v1271 = vpop.xlane.xlu0 %1270
    %1272 = vadd.xlane.f32.xlu0 %v751
    %v1273 = vpop.xlane.xlu0 %1272
    %1274 = vadd.xlane.f32.xlu0 %v752
    %v1275 = vpop.xlane.xlu0 %1274
    %1276 = vadd.xlane.f32.xlu0 %v753
    %v1277 = vpop.xlane.xlu0 %1276
    %1278 = vadd.xlane.f32.xlu0 %v754
    %v1279 = vpop.xlane.xlu0 %1278
    %1280 = vadd.xlane.f32.xlu0 %v755
    %v1281 = vpop.xlane.xlu0 %1280
    %1282 = vadd.xlane.f32.xlu0 %v756
    %v1283 = vpop.xlane.xlu0 %1282
    %1284 = vadd.xlane.f32.xlu0 %v757
    %v1285 = vpop.xlane.xlu0 %1284
    %1286 = vadd.xlane.f32.xlu0 %v758
    %v1287 = vpop.xlane.xlu0 %1286
    %1288 = vadd.xlane.f32.xlu0 %v759
    %v1289 = vpop.xlane.xlu0 %1288
    %1290 = vadd.xlane.f32.xlu0 %v760
    %v1291 = vpop.xlane.xlu0 %1290
    %1292 = vadd.xlane.f32.xlu0 %v761
    %v1293 = vpop.xlane.xlu0 %1292
    %1294 = vadd.xlane.f32.xlu0 %v762
    %v1295 = vpop.xlane.xlu0 %1294
    %1296 = vadd.xlane.f32.xlu0 %v763
    %v1297 = vpop.xlane.xlu0 %1296
    %1298 = vadd.xlane.f32.xlu0 %v764
    %v1299 = vpop.xlane.xlu0 %1298
    %1300 = vadd.xlane.f32.xlu0 %v765
    %v1301 = vpop.xlane.xlu0 %1300
    %1302 = vadd.xlane.f32.xlu0 %v766
    %v1303 = vpop.xlane.xlu0 %1302
    %1304 = vadd.xlane.f32.xlu0 %v767
    %v1305 = vpop.xlane.xlu0 %1304
    %1306 = vadd.xlane.f32.xlu0 %v768
    %v1307 = vpop.xlane.xlu0 %1306
    %1308 = vadd.xlane.f32.xlu0 %v769
    %v1309 = vpop.xlane.xlu0 %1308
    %1310 = vadd.xlane.f32.xlu0 %v770
    %v1311 = vpop.xlane.xlu0 %1310
    %1312 = vadd.xlane.f32.xlu0 %v771
    %v1313 = vpop.xlane.xlu0 %1312
    %1314 = vadd.xlane.f32.xlu0 %v772
    %v1315 = vpop.xlane.xlu0 %1314
    %1316 = vadd.xlane.f32.xlu0 %v773
    %v1317 = vpop.xlane.xlu0 %1316
    %1318 = vadd.xlane.f32.xlu0 %v774
    %v1319 = vpop.xlane.xlu0 %1318
    %1320 = vadd.xlane.f32.xlu0 %v775
    %v1321 = vpop.xlane.xlu0 %1320
    %1322 = vadd.xlane.f32.xlu0 %v776
    %v1323 = vpop.xlane.xlu0 %1322
    %1324 = vadd.xlane.f32.xlu0 %v777
    %v1325 = vpop.xlane.xlu0 %1324
    %1326 = vadd.xlane.f32.xlu0 %v778
    %v1327 = vpop.xlane.xlu0 %1326
    %1328 = vadd.xlane.f32.xlu0 %v779
    %v1329 = vpop.xlane.xlu0 %1328
    %1330 = vadd.xlane.f32.xlu0 %v780
    %v1331 = vpop.xlane.xlu0 %1330
    %1332 = vadd.xlane.f32.xlu0 %v781
    %v1333 = vpop.xlane.xlu0 %1332
    %1334 = vadd.xlane.f32.xlu0 %v782
    %v1335 = vpop.xlane.xlu0 %1334
    %1336 = vadd.xlane.f32.xlu0 %v783
    %v1337 = vpop.xlane.xlu0 %1336
    %1338 = vadd.xlane.f32.xlu0 %v784
    %v1339 = vpop.xlane.xlu0 %1338
    %1340 = vadd.xlane.f32.xlu0 %v785
    %v1341 = vpop.xlane.xlu0 %1340
    %1342 = vadd.xlane.f32.xlu0 %v786
    %v1343 = vpop.xlane.xlu0 %1342
    %1344 = vadd.xlane.f32.xlu0 %v787
    %v1345 = vpop.xlane.xlu0 %1344
    %1346 = vadd.xlane.f32.xlu0 %v788
    %v1347 = vpop.xlane.xlu0 %1346
    %1348 = vadd.xlane.f32.xlu0 %v789
    %v1349 = vpop.xlane.xlu0 %1348
    %1350 = vadd.xlane.f32.xlu0 %v790
    %v1351 = vpop.xlane.xlu0 %1350
    %1352 = vadd.xlane.f32.xlu0 %v791
    %v1353 = vpop.xlane.xlu0 %1352
    %1354 = vadd.xlane.f32.xlu0 %v792
    %v1355 = vpop.xlane.xlu0 %1354
    %1356 = vadd.xlane.f32.xlu0 %v793
    %v1357 = vpop.xlane.xlu0 %1356
    %1358 = vadd.xlane.f32.xlu0 %v794
    %v1359 = vpop.xlane.xlu0 %1358
    %1360 = vadd.xlane.f32.xlu0 %v795
    %v1361 = vpop.xlane.xlu0 %1360
    %1362 = vadd.xlane.f32.xlu0 %v796
    %v1363 = vpop.xlane.xlu0 %1362
    %1364 = vadd.xlane.f32.xlu0 %v797
    %v1365 = vpop.xlane.xlu0 %1364
    %1366 = vadd.xlane.f32.xlu0 %v798
    %v1367 = vpop.xlane.xlu0 %1366
    %1368 = vadd.xlane.f32.xlu0 %v799
    %v1369 = vpop.xlane.xlu0 %1368
    %1370 = vadd.xlane.f32.xlu0 %v800
    %v1371 = vpop.xlane.xlu0 %1370
    %1372 = vadd.xlane.f32.xlu0 %v801
    %v1373 = vpop.xlane.xlu0 %1372
    %1374 = vadd.xlane.f32.xlu0 %v802
    %v1375 = vpop.xlane.xlu0 %1374
    %1376 = vadd.xlane.f32.xlu0 %v803
    %v1377 = vpop.xlane.xlu0 %1376
    %1378 = vadd.xlane.f32.xlu0 %v804
    %v1379 = vpop.xlane.xlu0 %1378
    %1380 = vadd.xlane.f32.xlu0 %v805
    %v1381 = vpop.xlane.xlu0 %1380
    %1382 = vadd.xlane.f32.xlu0 %v806
    %v1383 = vpop.xlane.xlu0 %1382
    %1384 = vadd.xlane.f32.xlu0 %v807
    %v1385 = vpop.xlane.xlu0 %1384
    %1386 = vadd.xlane.f32.xlu0 %v808
    %v1387 = vpop.xlane.xlu0 %1386
    %1388 = vadd.xlane.f32.xlu0 %v809
    %v1389 = vpop.xlane.xlu0 %1388
    %1390 = vadd.xlane.f32.xlu0 %v810
    %v1391 = vpop.xlane.xlu0 %1390
    %1392 = vadd.xlane.f32.xlu0 %v811
    %v1393 = vpop.xlane.xlu0 %1392
    %1394 = vadd.xlane.f32.xlu0 %v812
    %v1395 = vpop.xlane.xlu0 %1394
    %1396 = vadd.xlane.f32.xlu0 %v813
    %v1397 = vpop.xlane.xlu0 %1396
    %1398 = vadd.xlane.f32.xlu0 %v814
    %v1399 = vpop.xlane.xlu0 %1398
    %1400 = vadd.xlane.f32.xlu0 %v815
    %v1401 = vpop.xlane.xlu0 %1400
    %1402 = vadd.xlane.f32.xlu0 %v816
    %v1403 = vpop.xlane.xlu0 %1402
    %1404 = vadd.xlane.f32.xlu0 %v817
    %v1405 = vpop.xlane.xlu0 %1404
    %1406 = vadd.xlane.f32.xlu0 %v818
    %v1407 = vpop.xlane.xlu0 %1406
    %1408 = vadd.xlane.f32.xlu0 %v819
    %v1409 = vpop.xlane.xlu0 %1408
    %1410 = vadd.xlane.f32.xlu0 %v820
    %v1411 = vpop.xlane.xlu0 %1410
    %1412 = vadd.xlane.f32.xlu0 %v821
    %v1413 = vpop.xlane.xlu0 %1412
    %1414 = vadd.xlane.f32.xlu0 %v822
    %v1415 = vpop.xlane.xlu0 %1414
    %1416 = vadd.xlane.f32.xlu0 %v823
    %v1417 = vpop.xlane.xlu0 %1416
    %1418 = vadd.xlane.f32.xlu0 %v824
    %v1419 = vpop.xlane.xlu0 %1418
    %1420 = vadd.xlane.f32.xlu0 %v825
    %v1421 = vpop.xlane.xlu0 %1420
    %1422 = vadd.xlane.f32.xlu0 %v826
    %v1423 = vpop.xlane.xlu0 %1422
    %1424 = vadd.xlane.f32.xlu0 %v827
    %v1425 = vpop.xlane.xlu0 %1424
    %1426 = vadd.xlane.f32.xlu0 %v828
    %v1427 = vpop.xlane.xlu0 %1426
    %1428 = vadd.xlane.f32.xlu0 %v829
    %v1429 = vpop.xlane.xlu0 %1428
    %1430 = vadd.xlane.f32.xlu0 %v830
    %v1431 = vpop.xlane.xlu0 %1430
    %1432 = vadd.xlane.f32.xlu0 %v831
    %v1433 = vpop.xlane.xlu0 %1432
    %1434 = vadd.xlane.f32.xlu0 %v832
    %v1435 = vpop.xlane.xlu0 %1434
    %1436 = vadd.xlane.f32.xlu0 %v833
    %v1437 = vpop.xlane.xlu0 %1436
    %1438 = vadd.xlane.f32.xlu0 %v834
    %v1439 = vpop.xlane.xlu0 %1438
    %1440 = vadd.xlane.f32.xlu0 %v835
    %v1441 = vpop.xlane.xlu0 %1440
    %1442 = vadd.xlane.f32.xlu0 %v836
    %v1443 = vpop.xlane.xlu0 %1442
    %1444 = vadd.xlane.f32.xlu0 %v837
    %v1445 = vpop.xlane.xlu0 %1444
    %1446 = vadd.xlane.f32.xlu0 %v838
    %v1447 = vpop.xlane.xlu0 %1446
    %1448 = vadd.xlane.f32.xlu0 %v839
    %v1449 = vpop.xlane.xlu0 %1448
    %1450 = vadd.xlane.f32.xlu0 %v840
    %v1451 = vpop.xlane.xlu0 %1450
    %1452 = vadd.xlane.f32.xlu0 %v841
    %v1453 = vpop.xlane.xlu0 %1452
    %1454 = vadd.xlane.f32.xlu0 %v842
    %v1455 = vpop.xlane.xlu0 %1454
    %1456 = vadd.xlane.f32.xlu0 %v843
    %v1457 = vpop.xlane.xlu0 %1456
    %1458 = vadd.xlane.f32.xlu0 %v844
    %v1459 = vpop.xlane.xlu0 %1458
    %1460 = vadd.xlane.f32.xlu0 %v845
    %v1461 = vpop.xlane.xlu0 %1460
    %1462 = vadd.xlane.f32.xlu0 %v846
    %v1463 = vpop.xlane.xlu0 %1462
    %1464 = vadd.xlane.f32.xlu0 %v847
    %v1465 = vpop.xlane.xlu0 %1464
    %1466 = vadd.xlane.f32.xlu0 %v848
    %v1467 = vpop.xlane.xlu0 %1466
    %1468 = vadd.xlane.f32.xlu0 %v849
    %v1469 = vpop.xlane.xlu0 %1468
    %1470 = vadd.xlane.f32.xlu0 %v850
    %v1471 = vpop.xlane.xlu0 %1470
    %1472 = vadd.xlane.f32.xlu0 %v851
    %v1473 = vpop.xlane.xlu0 %1472
    %1474 = vadd.xlane.f32.xlu0 %v852
    %v1475 = vpop.xlane.xlu0 %1474
    %1476 = vadd.xlane.f32.xlu0 %v853
    %v1477 = vpop.xlane.xlu0 %1476
    %1478 = vadd.xlane.f32.xlu0 %v854
    %v1479 = vpop.xlane.xlu0 %1478
    %1480 = vadd.xlane.f32.xlu0 %v855
    %v1481 = vpop.xlane.xlu0 %1480
    %1482 = vadd.xlane.f32.xlu0 %v856
    %v1483 = vpop.xlane.xlu0 %1482
    %1484 = vadd.xlane.f32.xlu0 %v857
    %v1485 = vpop.xlane.xlu0 %1484
    %1486 = vadd.xlane.f32.xlu0 %v858
    %v1487 = vpop.xlane.xlu0 %1486
    %1488 = vadd.xlane.f32.xlu0 %v859
    %v1489 = vpop.xlane.xlu0 %1488
    %1490 = vadd.xlane.f32.xlu0 %v860
    %v1491 = vpop.xlane.xlu0 %1490
    %1492 = vadd.xlane.f32.xlu0 %v861
    %v1493 = vpop.xlane.xlu0 %1492
    %1494 = vadd.xlane.f32.xlu0 %v862
    %v1495 = vpop.xlane.xlu0 %1494
    %1496 = vadd.xlane.f32.xlu0 %v863
    %v1497 = vpop.xlane.xlu0 %1496
    %1498 = vadd.xlane.f32.xlu0 %v864
    %v1499 = vpop.xlane.xlu0 %1498
    %1500 = vadd.xlane.f32.xlu0 %v865
    %v1501 = vpop.xlane.xlu0 %1500
    %1502 = vadd.xlane.f32.xlu0 %v866
    %v1503 = vpop.xlane.xlu0 %1502
    %1504 = vadd.xlane.f32.xlu0 %v867
    %v1505 = vpop.xlane.xlu0 %1504
    %1506 = vadd.xlane.f32.xlu0 %v868
    %v1507 = vpop.xlane.xlu0 %1506
    %1508 = vadd.xlane.f32.xlu0 %v869
    %v1509 = vpop.xlane.xlu0 %1508
    %1510 = vadd.xlane.f32.xlu0 %v870
    %v1511 = vpop.xlane.xlu0 %1510
    %1512 = vadd.xlane.f32.xlu0 %v871
    %v1513 = vpop.xlane.xlu0 %1512
    %1514 = vadd.xlane.f32.xlu0 %v872
    %v1515 = vpop.xlane.xlu0 %1514
    %1516 = vadd.xlane.f32.xlu0 %v873
    %v1517 = vpop.xlane.xlu0 %1516
    %1518 = vadd.xlane.f32.xlu0 %v874
    %v1519 = vpop.xlane.xlu0 %1518
    %1520 = vadd.xlane.f32.xlu0 %v875
    %v1521 = vpop.xlane.xlu0 %1520
    %1522 = vadd.xlane.f32.xlu0 %v876
    %v1523 = vpop.xlane.xlu0 %1522
    %1524 = vadd.xlane.f32.xlu0 %v877
    %v1525 = vpop.xlane.xlu0 %1524
    %1526 = vadd.xlane.f32.xlu0 %v878
    %v1527 = vpop.xlane.xlu0 %1526
    %1528 = vadd.xlane.f32.xlu0 %v879
    %v1529 = vpop.xlane.xlu0 %1528
    %1530 = vadd.xlane.f32.xlu0 %v880
    %v1531 = vpop.xlane.xlu0 %1530
    %1532 = vadd.xlane.f32.xlu0 %v881
    %v1533 = vpop.xlane.xlu0 %1532
    %1534 = vadd.xlane.f32.xlu0 %v882
    %v1535 = vpop.xlane.xlu0 %1534
    %1536 = vadd.xlane.f32.xlu0 %v883
    %v1537 = vpop.xlane.xlu0 %1536
    %1538 = vadd.xlane.f32.xlu0 %v884
    %v1539 = vpop.xlane.xlu0 %1538
    %1540 = vadd.xlane.f32.xlu0 %v885
    %v1541 = vpop.xlane.xlu0 %1540
    %1542 = vadd.xlane.f32.xlu0 %v886
    %v1543 = vpop.xlane.xlu0 %1542
    %1544 = vadd.xlane.f32.xlu0 %v887
    %v1545 = vpop.xlane.xlu0 %1544
    %1546 = vadd.xlane.f32.xlu0 %v888
    %v1547 = vpop.xlane.xlu0 %1546
    %1548 = vadd.xlane.f32.xlu0 %v889
    %v1549 = vpop.xlane.xlu0 %1548
    %1550 = vadd.xlane.f32.xlu0 %v890
    %v1551 = vpop.xlane.xlu0 %1550
    %1552 = vadd.xlane.f32.xlu0 %v891
    %v1553 = vpop.xlane.xlu0 %1552
    %1554 = vadd.xlane.f32.xlu0 %v892
    %v1555 = vpop.xlane.xlu0 %1554
    %1556 = vadd.xlane.f32.xlu0 %v893
    %v1557 = vpop.xlane.xlu0 %1556
    %1558 = vadd.xlane.f32.xlu0 %v894
    %v1559 = vpop.xlane.xlu0 %1558
    %1560 = vadd.xlane.f32.xlu0 %v895
    %v1561 = vpop.xlane.xlu0 %1560
    %1562 = vadd.xlane.f32.xlu0 %v896
    %v1563 = vpop.xlane.xlu0 %1562
    %1564 = vadd.xlane.f32.xlu0 %v897
    %v1565 = vpop.xlane.xlu0 %1564
    %1566 = vadd.xlane.f32.xlu0 %v898
    %v1567 = vpop.xlane.xlu0 %1566
    %1568 = vadd.xlane.f32.xlu0 %v899
    %v1569 = vpop.xlane.xlu0 %1568
    %1570 = vadd.xlane.f32.xlu0 %v900
    %v1571 = vpop.xlane.xlu0 %1570
    %1572 = vadd.xlane.f32.xlu0 %v901
    %v1573 = vpop.xlane.xlu0 %1572
    %1574 = vadd.xlane.f32.xlu0 %v902
    %v1575 = vpop.xlane.xlu0 %1574
    %1576 = vadd.xlane.f32.xlu0 %v903
    %v1577 = vpop.xlane.xlu0 %1576
    %1578 = vadd.xlane.f32.xlu0 %v904
    %v1579 = vpop.xlane.xlu0 %1578
    %1580 = vadd.xlane.f32.xlu0 %v905
    %v1581 = vpop.xlane.xlu0 %1580
    %1582 = vadd.xlane.f32.xlu0 %v906
    %v1583 = vpop.xlane.xlu0 %1582
    %1584 = vadd.xlane.f32.xlu0 %v907
    %v1585 = vpop.xlane.xlu0 %1584
    %1586 = vadd.xlane.f32.xlu0 %v908
    %v1587 = vpop.xlane.xlu0 %1586
    %1588 = vadd.xlane.f32.xlu0 %v909
    %v1589 = vpop.xlane.xlu0 %1588
    %1590 = vadd.xlane.f32.xlu0 %v910
    %v1591 = vpop.xlane.xlu0 %1590
    %1592 = vadd.xlane.f32.xlu0 %v911
    %v1593 = vpop.xlane.xlu0 %1592
    %1594 = vadd.xlane.f32.xlu0 %v912
    %v1595 = vpop.xlane.xlu0 %1594
    %1596 = vadd.xlane.f32.xlu0 %v913
    %v1597 = vpop.xlane.xlu0 %1596
    %1598 = vadd.xlane.f32.xlu0 %v914
    %v1599 = vpop.xlane.xlu0 %1598
    %1600 = vadd.xlane.f32.xlu0 %v915
    %v1601 = vpop.xlane.xlu0 %1600
    %1602 = vadd.xlane.f32.xlu0 %v916
    %v1603 = vpop.xlane.xlu0 %1602
    %1604 = vadd.xlane.f32.xlu0 %v917
    %v1605 = vpop.xlane.xlu0 %1604
    %1606 = vadd.xlane.f32.xlu0 %v918
    %v1607 = vpop.xlane.xlu0 %1606
    %1608 = vadd.xlane.f32.xlu0 %v919
    %v1609 = vpop.xlane.xlu0 %1608
    %1610 = vadd.xlane.f32.xlu0 %v920
    %v1611 = vpop.xlane.xlu0 %1610
    %1612 = vadd.xlane.f32.xlu0 %v921
    %v1613 = vpop.xlane.xlu0 %1612
    %1614 = vadd.xlane.f32.xlu0 %v922
    %v1615 = vpop.xlane.xlu0 %1614
    %1616 = vadd.xlane.f32.xlu0 %v923
    %v1617 = vpop.xlane.xlu0 %1616
    %1618 = vadd.xlane.f32.xlu0 %v924
    %v1619 = vpop.xlane.xlu0 %1618
    %1620 = vadd.xlane.f32.xlu0 %v925
    %v1621 = vpop.xlane.xlu0 %1620
    %1622 = vadd.xlane.f32.xlu0 %v926
    %v1623 = vpop.xlane.xlu0 %1622
    %1624 = vadd.xlane.f32.xlu0 %v927
    %v1625 = vpop.xlane.xlu0 %1624
    %1626 = vadd.xlane.f32.xlu0 %v928
    %v1627 = vpop.xlane.xlu0 %1626
    %1628 = vadd.xlane.f32.xlu0 %v929
    %v1629 = vpop.xlane.xlu0 %1628
    %1630 = vadd.xlane.f32.xlu0 %v930
    %v1631 = vpop.xlane.xlu0 %1630
    %1632 = vadd.xlane.f32.xlu0 %v931
    %v1633 = vpop.xlane.xlu0 %1632
    %1634 = vadd.xlane.f32.xlu0 %v932
    %v1635 = vpop.xlane.xlu0 %1634
    %1636 = vadd.xlane.f32.xlu0 %v933
    %v1637 = vpop.xlane.xlu0 %1636
    %1638 = vadd.xlane.f32.xlu0 %v934
    %v1639 = vpop.xlane.xlu0 %1638
    %1640 = vadd.xlane.f32.xlu0 %v935
    %v1641 = vpop.xlane.xlu0 %1640
    %1642 = vadd.xlane.f32.xlu0 %v936
    %v1643 = vpop.xlane.xlu0 %1642
    %1644 = vadd.xlane.f32.xlu0 %v937
    %v1645 = vpop.xlane.xlu0 %1644
    %1646 = vadd.xlane.f32.xlu0 %v938
    %v1647 = vpop.xlane.xlu0 %1646
    %1648 = vadd.xlane.f32.xlu0 %v939
    %v1649 = vpop.xlane.xlu0 %1648
    %1650 = vadd.xlane.f32.xlu0 %v940
    %v1651 = vpop.xlane.xlu0 %1650
    %1652 = vadd.xlane.f32.xlu0 %v941
    %v1653 = vpop.xlane.xlu0 %1652
    %1654 = vadd.xlane.f32.xlu0 %v942
    %v1655 = vpop.xlane.xlu0 %1654
    %1656 = vadd.xlane.f32.xlu0 %v943
    %v1657 = vpop.xlane.xlu0 %1656
    %1658 = vadd.xlane.f32.xlu0 %v944
    %v1659 = vpop.xlane.xlu0 %1658
    %1660 = vadd.xlane.f32.xlu0 %v945
    %v1661 = vpop.xlane.xlu0 %1660
    %1662 = vadd.xlane.f32.xlu0 %v946
    %v1663 = vpop.xlane.xlu0 %1662
    %1664 = vadd.xlane.f32.xlu0 %v947
    %v1665 = vpop.xlane.xlu0 %1664
    %1666 = vadd.xlane.f32.xlu0 %v948
    %v1667 = vpop.xlane.xlu0 %1666
    %1668 = vadd.xlane.f32.xlu0 %v949
    %v1669 = vpop.xlane.xlu0 %1668
    %1670 = vadd.xlane.f32.xlu0 %v950
    %v1671 = vpop.xlane.xlu0 %1670
    %1672 = vadd.xlane.f32.xlu0 %v951
    %v1673 = vpop.xlane.xlu0 %1672
    %1674 = vadd.xlane.f32.xlu0 %v952
    %v1675 = vpop.xlane.xlu0 %1674
    %1676 = vadd.xlane.f32.xlu0 %v953
    %v1677 = vpop.xlane.xlu0 %1676
    %1678 = vadd.xlane.f32.xlu0 %v954
    %v1679 = vpop.xlane.xlu0 %1678
    %1680 = vadd.xlane.f32.xlu0 %v955
    %v1681 = vpop.xlane.xlu0 %1680
    %1682 = vadd.xlane.f32.xlu0 %v956
    %v1683 = vpop.xlane.xlu0 %1682
    %1684 = vadd.xlane.f32.xlu0 %v957
    %v1685 = vpop.xlane.xlu0 %1684
    %1686 = vadd.xlane.f32.xlu0 %v958
    %v1687 = vpop.xlane.xlu0 %1686
    %1688 = vadd.xlane.f32.xlu0 %v959
    %v1689 = vpop.xlane.xlu0 %1688
    %1690 = vadd.xlane.f32.xlu0 %v960
    %v1691 = vpop.xlane.xlu0 %1690
    %1692 = vadd.xlane.f32.xlu0 %v961
    %v1693 = vpop.xlane.xlu0 %1692
    %1694 = vadd.xlane.f32.xlu0 %v962
    %v1695 = vpop.xlane.xlu0 %1694
    %1696 = vadd.xlane.f32.xlu0 %v963
    %v1697 = vpop.xlane.xlu0 %1696
    %1698 = vadd.xlane.f32.xlu0 %v964
    %v1699 = vpop.xlane.xlu0 %1698
    %1700 = vadd.xlane.f32.xlu0 %v965
    %v1701 = vpop.xlane.xlu0 %1700
    %1702 = vadd.xlane.f32.xlu0 %v966
    %v1703 = vpop.xlane.xlu0 %1702
    %1704 = vadd.xlane.f32.xlu0 %v967
    %v1705 = vpop.xlane.xlu0 %1704
    %1706 = vadd.xlane.f32.xlu0 %v968
    %v1707 = vpop.xlane.xlu0 %1706
    %1708 = vadd.xlane.f32.xlu0 %v969
    %v1709 = vpop.xlane.xlu0 %1708
    %1710 = vadd.xlane.f32.xlu0 %v970
    %v1711 = vpop.xlane.xlu0 %1710
    %1712 = vadd.xlane.f32.xlu0 %v971
    %v1713 = vpop.xlane.xlu0 %1712
    %1714 = vadd.xlane.f32.xlu0 %v972
    %v1715 = vpop.xlane.xlu0 %1714
    %1716 = vadd.xlane.f32.xlu0 %v973
    %v1717 = vpop.xlane.xlu0 %1716
    %1718 = vadd.xlane.f32.xlu0 %v974
    %v1719 = vpop.xlane.xlu0 %1718
    %1720 = vadd.xlane.f32.xlu0 %v975
    %v1721 = vpop.xlane.xlu0 %1720
    %1722 = vadd.xlane.f32.xlu0 %v976
    %v1723 = vpop.xlane.xlu0 %1722
    %1724 = vadd.xlane.f32.xlu0 %v977
    %v1725 = vpop.xlane.xlu0 %1724
    %1726 = vadd.xlane.f32.xlu0 %v978
    %v1727 = vpop.xlane.xlu0 %1726
    %1728 = vadd.xlane.f32.xlu0 %v979
    %v1729 = vpop.xlane.xlu0 %1728
    %1730 = vadd.xlane.f32.xlu0 %v980
    %v1731 = vpop.xlane.xlu0 %1730
    %1732 = vadd.xlane.f32.xlu0 %v981
    %v1733 = vpop.xlane.xlu0 %1732
    %1734 = vadd.xlane.f32.xlu0 %v982
    %v1735 = vpop.xlane.xlu0 %1734
    %1736 = vadd.xlane.f32.xlu0 %v983
    %v1737 = vpop.xlane.xlu0 %1736
    %1738 = vadd.xlane.f32.xlu0 %v984
    %v1739 = vpop.xlane.xlu0 %1738
    %1740 = vadd.xlane.f32.xlu0 %v985
    %v1741 = vpop.xlane.xlu0 %1740
    %1742 = vadd.xlane.f32.xlu0 %v986
    %v1743 = vpop.xlane.xlu0 %1742
    %1744 = vadd.xlane.f32.xlu0 %v987
    %v1745 = vpop.xlane.xlu0 %1744
    %1746 = vadd.xlane.f32.xlu0 %v988
    %v1747 = vpop.xlane.xlu0 %1746
    %1748 = vadd.xlane.f32.xlu0 %v989
    %v1749 = vpop.xlane.xlu0 %1748
    %1750 = vadd.xlane.f32.xlu0 %v990
    %v1751 = vpop.xlane.xlu0 %1750
    %1752 = vadd.xlane.f32.xlu0 %v991
    %v1753 = vpop.xlane.xlu0 %1752
    %1754 = vadd.xlane.f32.xlu0 %v992
    %v1755 = vpop.xlane.xlu0 %1754
    %1756 = vadd.xlane.f32.xlu0 %v993
    %v1757 = vpop.xlane.xlu0 %1756
    %1758 = vadd.xlane.f32.xlu0 %v994
    %v1759 = vpop.xlane.xlu0 %1758
    %1760 = vadd.xlane.f32.xlu0 %v995
    %v1761 = vpop.xlane.xlu0 %1760
    %1762 = vadd.xlane.f32.xlu0 %v996
    %v1763 = vpop.xlane.xlu0 %1762
    %1764 = vadd.xlane.f32.xlu0 %v997
    %v1765 = vpop.xlane.xlu0 %1764
    %1766 = vadd.xlane.f32.xlu0 %v998
    %v1767 = vpop.xlane.xlu0 %1766
    %1768 = vadd.xlane.f32.xlu0 %v999
    %v1769 = vpop.xlane.xlu0 %1768
    %1770 = vadd.xlane.f32.xlu0 %v1000
    %v1771 = vpop.xlane.xlu0 %1770
    %1772 = vadd.xlane.f32.xlu0 %v1001
    %v1773 = vpop.xlane.xlu0 %1772
    %1774 = vadd.xlane.f32.xlu0 %v1002
    %v1775 = vpop.xlane.xlu0 %1774
    %1776 = vadd.xlane.f32.xlu0 %v1003
    %v1777 = vpop.xlane.xlu0 %1776
    %1778 = vadd.xlane.f32.xlu0 %v1004
    %v1779 = vpop.xlane.xlu0 %1778
    %1780 = vadd.xlane.f32.xlu0 %v1005
    %v1781 = vpop.xlane.xlu0 %1780
    %1782 = vadd.xlane.f32.xlu0 %v1006
    %v1783 = vpop.xlane.xlu0 %1782
    %1784 = vadd.xlane.f32.xlu0 %v1007
    %v1785 = vpop.xlane.xlu0 %1784
    %1786 = vadd.xlane.f32.xlu0 %v1008
    %v1787 = vpop.xlane.xlu0 %1786
    %1788 = vadd.xlane.f32.xlu0 %v1009
    %v1789 = vpop.xlane.xlu0 %1788
    %1790 = vadd.xlane.f32.xlu0 %v1010
    %v1791 = vpop.xlane.xlu0 %1790
    %1792 = vadd.xlane.f32.xlu0 %v1011
    %v1793 = vpop.xlane.xlu0 %1792
    %1794 = vadd.xlane.f32.xlu0 %v1012
    %v1795 = vpop.xlane.xlu0 %1794
    %1796 = vadd.xlane.f32.xlu0 %v1013
    %v1797 = vpop.xlane.xlu0 %1796
    %1798 = vadd.xlane.f32.xlu0 %v1014
    %v1799 = vpop.xlane.xlu0 %1798
    %1800 = vadd.xlane.f32.xlu0 %v1015
    %v1801 = vpop.xlane.xlu0 %1800
    %1802 = vadd.xlane.f32.xlu0 %v1016
    %v1803 = vpop.xlane.xlu0 %1802
    %1804 = vadd.xlane.f32.xlu0 %v1017
    %v1805 = vpop.xlane.xlu0 %1804
    %1806 = vadd.xlane.f32.xlu0 %v1018
    %v1807 = vpop.xlane.xlu0 %1806
    %1808 = vadd.xlane.f32.xlu0 %v1019
    %v1809 = vpop.xlane.xlu0 %1808
    %1810 = vadd.xlane.f32.xlu0 %v1020
    %v1811 = vpop.xlane.xlu0 %1810
    %1812 = vadd.xlane.f32.xlu0 %v1021
    %v1813 = vpop.xlane.xlu0 %1812
    %1814 = vadd.xlane.f32.xlu0 %v1022
    %v1815 = vpop.xlane.xlu0 %1814
    %1816 = vadd.xlane.f32.xlu0 %v1023
    %v1817 = vpop.xlane.xlu0 %1816
    %1818 = vadd.xlane.f32.xlu0 %v1024
    %v1819 = vpop.xlane.xlu0 %1818
    %1820 = vadd.xlane.f32.xlu0 %v1025
    %v1821 = vpop.xlane.xlu0 %1820
    %1822 = vadd.xlane.f32.xlu0 %v1026
    %v1823 = vpop.xlane.xlu0 %1822
    %1824 = vadd.xlane.f32.xlu0 %v1027
    %v1825 = vpop.xlane.xlu0 %1824
    %1826 = vadd.xlane.f32.xlu0 %v1028
    %v1827 = vpop.xlane.xlu0 %1826
    %1828 = vadd.xlane.f32.xlu0 %v1029
    %v1829 = vpop.xlane.xlu0 %1828
    %1830 = vadd.xlane.f32.xlu0 %v1030
    %v1831 = vpop.xlane.xlu0 %1830
    %1832 = vadd.xlane.f32.xlu0 %v1031
    %v1833 = vpop.xlane.xlu0 %1832
    %1834 = vadd.xlane.f32.xlu0 %v1032
    %v1835 = vpop.xlane.xlu0 %1834
    %1836 = vadd.xlane.f32.xlu0 %v1033
    %v1837 = vpop.xlane.xlu0 %1836
    %1838 = vadd.xlane.f32.xlu0 %v1034
    %v1839 = vpop.xlane.xlu0 %1838
    %1840 = vadd.xlane.f32.xlu0 %v1035
    %v1841 = vpop.xlane.xlu0 %1840
    %1842 = vadd.xlane.f32.xlu0 %v1036
    %v1843 = vpop.xlane.xlu0 %1842
    %1844 = vadd.xlane.f32.xlu0 %v1037
    %v1845 = vpop.xlane.xlu0 %1844
    %1846 = vadd.xlane.f32.xlu0 %v1038
    %v1847 = vpop.xlane.xlu0 %1846
    %1848 = vadd.xlane.f32.xlu0 %v1039
    %v1849 = vpop.xlane.xlu0 %1848
    %1850 = vadd.xlane.f32.xlu0 %v1040
    %v1851 = vpop.xlane.xlu0 %1850
    %1852 = vadd.xlane.f32.xlu0 %v1041
    %v1853 = vpop.xlane.xlu0 %1852
    %1854 = vadd.xlane.f32.xlu0 %v1042
    %v1855 = vpop.xlane.xlu0 %1854
    %1856 = vadd.xlane.f32.xlu0 %v1043
    %v1857 = vpop.xlane.xlu0 %1856
    %1858 = vadd.xlane.f32.xlu0 %v1044
    %v1859 = vpop.xlane.xlu0 %1858
    %1860 = vadd.xlane.f32.xlu0 %v1045
    %v1861 = vpop.xlane.xlu0 %1860
    %1862 = vadd.xlane.f32.xlu0 %v1046
    %v1863 = vpop.xlane.xlu0 %1862
    %1864 = vadd.xlane.f32.xlu0 %v1047
    %v1865 = vpop.xlane.xlu0 %1864
    %1866 = vadd.xlane.f32.xlu0 %v1048
    %v1867 = vpop.xlane.xlu0 %1866
    %1868 = vadd.xlane.f32.xlu0 %v1049
    %v1869 = vpop.xlane.xlu0 %1868
    %1870 = vadd.xlane.f32.xlu0 %v1050
    %v1871 = vpop.xlane.xlu0 %1870
    %1872 = vadd.xlane.f32.xlu0 %v1051
    %v1873 = vpop.xlane.xlu0 %1872
    %1874 = vadd.xlane.f32.xlu0 %v1052
    %v1875 = vpop.xlane.xlu0 %1874
    %1876 = vadd.xlane.f32.xlu0 %v1053
    %v1877 = vpop.xlane.xlu0 %1876
    %1878 = vadd.xlane.f32.xlu0 %v1054
    %v1879 = vpop.xlane.xlu0 %1878
    %1880 = vadd.xlane.f32.xlu0 %v1055
    %v1881 = vpop.xlane.xlu0 %1880
    %1882 = vadd.xlane.f32.xlu0 %v1056
    %v1883 = vpop.xlane.xlu0 %1882
    %1884 = vadd.xlane.f32.xlu0 %v1057
    %v1885 = vpop.xlane.xlu0 %1884
    %1886 = vadd.xlane.f32.xlu0 %v1058
    %v1887 = vpop.xlane.xlu0 %1886
    %1888 = vadd.xlane.f32.xlu0 %v1059
    %v1889 = vpop.xlane.xlu0 %1888
    %1890 = vadd.xlane.f32.xlu0 %v1060
    %v1891 = vpop.xlane.xlu0 %1890
    %1892 = vadd.xlane.f32.xlu0 %v1061
    %v1893 = vpop.xlane.xlu0 %1892
    %1894 = vadd.xlane.f32.xlu0 %v1062
    %v1895 = vpop.xlane.xlu0 %1894
    %1896 = vadd.xlane.f32.xlu0 %v1063
    %v1897 = vpop.xlane.xlu0 %1896
    %1898 = vadd.xlane.f32.xlu0 %v1064
    %v1899 = vpop.xlane.xlu0 %1898
    %1900 = vadd.xlane.f32.xlu0 %v1065
    %v1901 = vpop.xlane.xlu0 %1900
    %1902 = vadd.xlane.f32.xlu0 %v1066
    %v1903 = vpop.xlane.xlu0 %1902
    %1904 = vadd.xlane.f32.xlu0 %v1067
    %v1905 = vpop.xlane.xlu0 %1904
    %1906 = vadd.xlane.f32.xlu0 %v1068
    %v1907 = vpop.xlane.xlu0 %1906
    %1908 = vadd.xlane.f32.xlu0 %v1069
    %v1909 = vpop.xlane.xlu0 %1908
    %1910 = vadd.xlane.f32.xlu0 %v1070
    %v1911 = vpop.xlane.xlu0 %1910
    %1912 = vadd.xlane.f32.xlu0 %v1071
    %v1913 = vpop.xlane.xlu0 %1912
    %1914 = vadd.xlane.f32.xlu0 %v1072
    %v1915 = vpop.xlane.xlu0 %1914
    %1916 = vadd.xlane.f32.xlu0 %v1073
    %v1917 = vpop.xlane.xlu0 %1916
    %1918 = vadd.xlane.f32.xlu0 %v1074
    %v1919 = vpop.xlane.xlu0 %1918
    %1920 = vadd.xlane.f32.xlu0 %v1075
    %v1921 = vpop.xlane.xlu0 %1920
    %1922 = vadd.xlane.f32.xlu0 %v1076
    %v1923 = vpop.xlane.xlu0 %1922
    %1924 = vadd.xlane.f32.xlu0 %v1077
    %v1925 = vpop.xlane.xlu0 %1924
    %1926 = vadd.xlane.f32.xlu0 %v1078
    %v1927 = vpop.xlane.xlu0 %1926
    %1928 = vadd.xlane.f32.xlu0 %v1079
    %v1929 = vpop.xlane.xlu0 %1928
    %1930 = vadd.xlane.f32.xlu0 %v1080
    %v1931 = vpop.xlane.xlu0 %1930
    %1932 = vadd.xlane.f32.xlu0 %v1081
    %v1933 = vpop.xlane.xlu0 %1932
    %1934 = vadd.xlane.f32.xlu0 %v1082
    %v1935 = vpop.xlane.xlu0 %1934
    %1936 = vadd.xlane.f32.xlu0 %v1083
    %v1937 = vpop.xlane.xlu0 %1936
    %1938 = vadd.xlane.f32.xlu0 %v1084
    %v1939 = vpop.xlane.xlu0 %1938
    %1940 = vadd.xlane.f32.xlu0 %v1085
    %v1941 = vpop.xlane.xlu0 %1940
    %1942 = vadd.xlane.f32.xlu0 %v1086
    %v1943 = vpop.xlane.xlu0 %1942
    %1944 = vadd.xlane.f32.xlu0 %v1087
    %v1945 = vpop.xlane.xlu0 %1944
    %1946 = vadd.xlane.f32.xlu0 %v1088
    %v1947 = vpop.xlane.xlu0 %1946
    %1948 = vadd.xlane.f32.xlu0 %v1089
    %v1949 = vpop.xlane.xlu0 %1948
    %1950 = vadd.xlane.f32.xlu0 %v1090
    %v1951 = vpop.xlane.xlu0 %1950
    %1952 = vadd.xlane.f32.xlu0 %v1091
    %v1953 = vpop.xlane.xlu0 %1952
    %1954 = vadd.xlane.f32.xlu0 %v1092
    %v1955 = vpop.xlane.xlu0 %1954
    %1956 = vadd.xlane.f32.xlu0 %v1093
    %v1957 = vpop.xlane.xlu0 %1956
    %1958 = vadd.xlane.f32.xlu0 %v1094
    %v1959 = vpop.xlane.xlu0 %1958
    %1960 = vadd.xlane.f32.xlu0 %v1095
    %v1961 = vpop.xlane.xlu0 %1960
    %1962 = vadd.xlane.f32.xlu0 %v1096
    %v1963 = vpop.xlane.xlu0 %1962
    %1964 = vadd.xlane.f32.xlu0 %v1097
    %v1965 = vpop.xlane.xlu0 %1964
    %1966 = vadd.xlane.f32.xlu0 %v1098
    %v1967 = vpop.xlane.xlu0 %1966
    %1968 = vadd.xlane.f32.xlu0 %v1099
    %v1969 = vpop.xlane.xlu0 %1968
    %1970 = vadd.xlane.f32.xlu0 %v1100
    %v1971 = vpop.xlane.xlu0 %1970
    %1972 = vadd.xlane.f32.xlu0 %v1101
    %v1973 = vpop.xlane.xlu0 %1972
    %1974 = vadd.xlane.f32.xlu0 %v1102
    %v1975 = vpop.xlane.xlu0 %1974
    %1976 = vadd.xlane.f32.xlu0 %v1103
    %v1977 = vpop.xlane.xlu0 %1976
    %1978 = vadd.xlane.f32.xlu0 %v1104
    %v1979 = vpop.xlane.xlu0 %1978
    %1980 = vadd.xlane.f32.xlu0 %v1105
    %v1981 = vpop.xlane.xlu0 %1980
    %1982 = vadd.xlane.f32.xlu0 %v1106
    %v1983 = vpop.xlane.xlu0 %1982
    %1984 = vadd.xlane.f32.xlu0 %v1107
    %v1985 = vpop.xlane.xlu0 %1984
    %1986 = vadd.xlane.f32.xlu0 %v1108
    %v1987 = vpop.xlane.xlu0 %1986
    %1988 = vadd.xlane.f32.xlu0 %v1109
    %v1989 = vpop.xlane.xlu0 %1988
    %1990 = vadd.xlane.f32.xlu0 %v1110
    %v1991 = vpop.xlane.xlu0 %1990
    %1992 = vadd.xlane.f32.xlu0 %v1111
    %v1993 = vpop.xlane.xlu0 %1992
    %1994 = vadd.xlane.f32.xlu0 %v1112
    %v1995 = vpop.xlane.xlu0 %1994
    %1996 = vadd.xlane.f32.xlu0 %v1113
    %v1997 = vpop.xlane.xlu0 %1996
    %1998 = vadd.xlane.f32.xlu0 %v1114
    %v1999 = vpop.xlane.xlu0 %1998
    %2000 = vadd.xlane.f32.xlu0 %v1115
    %v2001 = vpop.xlane.xlu0 %2000
    %2002 = vadd.xlane.f32.xlu0 %v1116
    %v2003 = vpop.xlane.xlu0 %2002
    %2004 = vadd.xlane.f32.xlu0 %v1117
    %v2005 = vpop.xlane.xlu0 %2004
    %2006 = vadd.xlane.f32.xlu0 %v1118
    %v2007 = vpop.xlane.xlu0 %2006
    %2008 = vadd.xlane.f32.xlu0 %v1119
    %v2009 = vpop.xlane.xlu0 %2008
    %2010 = vadd.xlane.f32.xlu0 %v1120
    %v2011 = vpop.xlane.xlu0 %2010
    %2012 = vadd.xlane.f32.xlu0 %v1121
    %v2013 = vpop.xlane.xlu0 %2012
    %2014 = vadd.xlane.f32.xlu0 %v1122
    %v2015 = vpop.xlane.xlu0 %2014
    %2016 = vadd.xlane.f32.xlu0 %v1123
    %v2017 = vpop.xlane.xlu0 %2016
    %2018 = vadd.xlane.f32.xlu0 %v1124
    %v2019 = vpop.xlane.xlu0 %2018
    %2020 = vadd.xlane.f32.xlu0 %v1125
    %v2021 = vpop.xlane.xlu0 %2020
    %2022 = vadd.xlane.f32.xlu0 %v1126
    %v2023 = vpop.xlane.xlu0 %2022
    %2024 = vadd.xlane.f32.xlu0 %v1127
    %v2025 = vpop.xlane.xlu0 %2024
    %2026 = vadd.xlane.f32.xlu0 %v1128
    %v2027 = vpop.xlane.xlu0 %2026
    %2028 = vadd.xlane.f32.xlu0 %v1129
    %v2029 = vpop.xlane.xlu0 %2028
    %2030 = vadd.xlane.f32.xlu0 %v1130
    %v2031 = vpop.xlane.xlu0 %2030
    %2032 = vadd.xlane.f32.xlu0 %v1131
    %v2033 = vpop.xlane.xlu0 %2032
    %2034 = vadd.xlane.f32.xlu0 %v1132
    %v2035 = vpop.xlane.xlu0 %2034
    %2036 = vadd.xlane.f32.xlu0 %v1133
    %v2037 = vpop.xlane.xlu0 %2036
    %2038 = vadd.xlane.f32.xlu0 %v1134
    %v2039 = vpop.xlane.xlu0 %2038
    %2040 = vadd.xlane.f32.xlu0 %v1135
    %v2041 = vpop.xlane.xlu0 %2040
    %2042 = vadd.xlane.f32.xlu0 %v1136
    %v2043 = vpop.xlane.xlu0 %2042
    %2044 = vadd.xlane.f32.xlu0 %v1137
    %v2045 = vpop.xlane.xlu0 %2044
    %2046 = vadd.xlane.f32.xlu0 %v1138
    %v2047 = vpop.xlane.xlu0 %2046
    %2048 = vadd.xlane.f32.xlu0 %v1139
    %v2049 = vpop.xlane.xlu0 %2048
    %2050 = vadd.xlane.f32.xlu0 %v1140
    %v2051 = vpop.xlane.xlu0 %2050
    %2052 = vadd.xlane.f32.xlu0 %v1141
    %v2053 = vpop.xlane.xlu0 %2052
    %2054 = vadd.xlane.f32.xlu0 %v1142
    %v2055 = vpop.xlane.xlu0 %2054
    %2056 = vadd.xlane.f32.xlu0 %v1143
    %v2057 = vpop.xlane.xlu0 %2056
    %2058 = vadd.xlane.f32.xlu0 %v1144
    %v2059 = vpop.xlane.xlu0 %2058
    %2060 = vadd.xlane.f32.xlu0 %v1145
    %v2061 = vpop.xlane.xlu0 %2060
    %2062 = vadd.xlane.f32.xlu0 %v1146
    %v2063 = vpop.xlane.xlu0 %2062
    %2064 = vadd.xlane.f32.xlu0 %v1147
    %v2065 = vpop.xlane.xlu0 %2064
    %2066 = vadd.xlane.f32.xlu0 %v1148
    %v2067 = vpop.xlane.xlu0 %2066
    %2068 = vadd.xlane.f32.xlu0 %v1149
    %v2069 = vpop.xlane.xlu0 %2068
    %2070 = vadd.xlane.f32.xlu0 %v1150
    %v2071 = vpop.xlane.xlu0 %2070
    %2072 = vadd.xlane.f32.xlu0 %v1151
    %v2073 = vpop.xlane.xlu0 %2072
    %2074 = vadd.xlane.f32.xlu0 %v1152
    %v2075 = vpop.xlane.xlu0 %2074
    %2076 = vadd.xlane.f32.xlu0 %v1153
    %v2077 = vpop.xlane.xlu0 %2076
    %2078 = vadd.xlane.f32.xlu0 %v1154
    %v2079 = vpop.xlane.xlu0 %2078
    %2080 = vadd.xlane.f32.xlu0 %v1155
    %v2081 = vpop.xlane.xlu0 %2080
    %2082 = vadd.xlane.f32.xlu0 %v1156
    %v2083 = vpop.xlane.xlu0 %2082
    %2084 = vadd.xlane.f32.xlu0 %v1157
    %v2085 = vpop.xlane.xlu0 %2084
    %2086 = vadd.xlane.f32.xlu0 %v1158
    %v2087 = vpop.xlane.xlu0 %2086
    %2088 = vadd.xlane.f32.xlu0 %v1159
    %v2089 = vpop.xlane.xlu0 %2088
    %2090 = vadd.xlane.f32.xlu0 %v1160
    %v2091 = vpop.xlane.xlu0 %2090
    %2092 = vadd.xlane.f32.xlu0 %v1161
    %v2093 = vpop.xlane.xlu0 %2092
    %2094 = vadd.xlane.f32.xlu0 %v1162
    %v2095 = vpop.xlane.xlu0 %2094
    %2096 = vadd.xlane.f32.xlu0 %v1163
    %v2097 = vpop.xlane.xlu0 %2096
    %2098 = vadd.xlane.f32.xlu0 %v1164
    %v2099 = vpop.xlane.xlu0 %2098
    %2100 = vadd.xlane.f32.xlu0 %v1165
    %v2101 = vpop.xlane.xlu0 %2100
    %2102 = vadd.xlane.f32.xlu0 %v1166
    %v2103 = vpop.xlane.xlu0 %2102
    %2104 = vadd.xlane.f32.xlu0 %v1167
    %v2105 = vpop.xlane.xlu0 %2104
    %2106 = vadd.xlane.f32.xlu0 %v1168
    %v2107 = vpop.xlane.xlu0 %2106
    %2108 = vadd.xlane.f32.xlu0 %v1169
    %v2109 = vpop.xlane.xlu0 %2108
    %2110 = vadd.xlane.f32.xlu0 %v1170
    %v2111 = vpop.xlane.xlu0 %2110
    %2112 = vadd.xlane.f32.xlu0 %v1171
    %v2113 = vpop.xlane.xlu0 %2112
    %2114 = vadd.xlane.f32.xlu0 %v1172
    %v2115 = vpop.xlane.xlu0 %2114
    %2116 = vadd.xlane.f32.xlu0 %v1173
    %v2117 = vpop.xlane.xlu0 %2116
    %2118 = vadd.xlane.f32.xlu0 %v1174
    %v2119 = vpop.xlane.xlu0 %2118
    %2120 = vadd.xlane.f32.xlu0 %v1175
    %v2121 = vpop.xlane.xlu0 %2120
    %2122 = vadd.xlane.f32.xlu0 %v1176
    %v2123 = vpop.xlane.xlu0 %2122
    %2124 = vadd.xlane.f32.xlu0 %v1177
    %v2125 = vpop.xlane.xlu0 %2124
    %2126 = vadd.xlane.f32.xlu0 %v1178
    %v2127 = vpop.xlane.xlu0 %2126
    %2128 = vadd.xlane.f32.xlu0 %v1179
    %v2129 = vpop.xlane.xlu0 %2128
    %2130 = vadd.xlane.f32.xlu0 %v1180
    %v2131 = vpop.xlane.xlu0 %2130
    %2132 = vadd.xlane.f32.xlu0 %v1181
    %v2133 = vpop.xlane.xlu0 %2132
    %2134 = vadd.xlane.f32.xlu0 %v1182
    %v2135 = vpop.xlane.xlu0 %2134
    %2136 = vadd.xlane.f32.xlu0 %v1183
    %v2137 = vpop.xlane.xlu0 %2136
    %2138 = vadd.xlane.f32.xlu0 %v1184
    %v2139 = vpop.xlane.xlu0 %2138
    %2140 = vadd.xlane.f32.xlu0 %v1185
    %v2141 = vpop.xlane.xlu0 %2140
    %2142 = vadd.xlane.f32.xlu0 %v1186
    %v2143 = vpop.xlane.xlu0 %2142
    %2144 = vadd.xlane.f32.xlu0 %v1187
    %v2145 = vpop.xlane.xlu0 %2144
    %2146 = vadd.xlane.f32.xlu0 %v1188
    %v2147 = vpop.xlane.xlu0 %2146
    %2148 = vadd.xlane.f32.xlu0 %v1189
    %v2149 = vpop.xlane.xlu0 %2148
    %2150 = vadd.xlane.f32.xlu0 %v1190
    %v2151 = vpop.xlane.xlu0 %2150
    %2152 = vadd.xlane.f32.xlu0 %v1191
    %v2153 = vpop.xlane.xlu0 %2152
    %2154 = vadd.xlane.f32.xlu0 %v1192
    %v2155 = vpop.xlane.xlu0 %2154
    %2156 = vadd.xlane.f32.xlu0 %v1193
    %v2157 = vpop.xlane.xlu0 %2156
    %2158 = vadd.xlane.f32.xlu0 %v1194
    %v2159 = vpop.xlane.xlu0 %2158
    %2160 = vadd.xlane.f32.xlu0 %v1195
    %v2161 = vpop.xlane.xlu0 %2160
    %2162 = vadd.xlane.f32.xlu0 %v1196
    %v2163 = vpop.xlane.xlu0 %2162
    %2164 = vadd.xlane.f32.xlu0 %v1197
    %v2165 = vpop.xlane.xlu0 %2164
    %2166 = vadd.xlane.f32.xlu0 %v1198
    %v2167 = vpop.xlane.xlu0 %2166
    %2168 = vadd.xlane.f32.xlu0 %v1199
    %v2169 = vpop.xlane.xlu0 %2168
    %2170 = vadd.xlane.f32.xlu0 %v1200
    %v2171 = vpop.xlane.xlu0 %2170
    %2172 = vadd.xlane.f32.xlu0 %v1201
    %v2173 = vpop.xlane.xlu0 %2172
    %2174 = vadd.xlane.f32.xlu0 %v1202
    %v2175 = vpop.xlane.xlu0 %2174
    %2176 = vadd.xlane.f32.xlu0 %v1203
    %v2177 = vpop.xlane.xlu0 %2176
    %2178 = vadd.xlane.f32.xlu0 %v1204
    %v2179 = vpop.xlane.xlu0 %2178
    %2180 = vadd.xlane.f32.xlu0 %v1205
    %v2181 = vpop.xlane.xlu0 %2180
    %2182 = vadd.xlane.f32.xlu0 %v1206
    %v2183 = vpop.xlane.xlu0 %2182
    %2184 = vadd.xlane.f32.xlu0 %v1207
    %v2185 = vpop.xlane.xlu0 %2184
    %2186 = vadd.xlane.f32.xlu0 %v1208
    %v2187 = vpop.xlane.xlu0 %2186
    %2188 = vadd.xlane.f32.xlu0 %v1209
    %v2189 = vpop.xlane.xlu0 %2188
    %2190 = vadd.xlane.f32.xlu0 %v1210
    %v2191 = vpop.xlane.xlu0 %2190
    %2192 = vadd.xlane.f32.xlu0 %v1211
    %v2193 = vpop.xlane.xlu0 %2192
    %2194 = vadd.xlane.f32.xlu0 %v1212
    %v2195 = vpop.xlane.xlu0 %2194
    %2196 = vadd.xlane.f32.xlu0 %v1213
    %v2197 = vpop.xlane.xlu0 %2196
    %2198 = vadd.xlane.f32.xlu0 %v1214
    %v2199 = vpop.xlane.xlu0 %2198
    %2200 = vadd.xlane.f32.xlu0 %v1215
    %v2201 = vpop.xlane.xlu0 %2200
    %2202 = vadd.xlane.f32.xlu0 %v1216
    %v2203 = vpop.xlane.xlu0 %2202
    %2204 = vadd.xlane.f32.xlu0 %v1217
    %v2205 = vpop.xlane.xlu0 %2204
    %2206 = vadd.xlane.f32.xlu0 %v1218
    %v2207 = vpop.xlane.xlu0 %2206
    %2208 = vadd.xlane.f32.xlu0 %v1219
    %v2209 = vpop.xlane.xlu0 %2208
    %2210 = vadd.xlane.f32.xlu0 %v1220
    %v2211 = vpop.xlane.xlu0 %2210
    %2212 = vadd.xlane.f32.xlu0 %v1221
    %v2213 = vpop.xlane.xlu0 %2212
    %2214 = vadd.xlane.f32.xlu0 %v1222
    %v2215 = vpop.xlane.xlu0 %2214
    %2216 = vadd.xlane.f32.xlu0 %v1223
    %v2217 = vpop.xlane.xlu0 %2216
    %2218 = vadd.xlane.f32.xlu0 %v1224
    %v2219 = vpop.xlane.xlu0 %2218
    %2220 = vadd.xlane.f32.xlu0 %v1225
    %v2221 = vpop.xlane.xlu0 %2220
    %2222 = vadd.xlane.f32.xlu0 %v1226
    %v2223 = vpop.xlane.xlu0 %2222
    %2224 = vadd.xlane.f32.xlu0 %v1227
    %v2225 = vpop.xlane.xlu0 %2224
    %2226 = vadd.xlane.f32.xlu0 %v1228
    %v2227 = vpop.xlane.xlu0 %2226
    %2228 = vadd.xlane.f32.xlu0 %v1229
    %v2229 = vpop.xlane.xlu0 %2228
    %2230 = vadd.xlane.f32.xlu0 %v1230
    %v2231 = vpop.xlane.xlu0 %2230
    %2232 = vadd.xlane.f32.xlu0 %v1231
    %v2233 = vpop.xlane.xlu0 %2232
    %2234 = vadd.xlane.f32.xlu0 %v1232
    %v2235 = vpop.xlane.xlu0 %2234
    %2236 = vadd.xlane.f32.xlu0 %v1233
    %v2237 = vpop.xlane.xlu0 %2236
    %2238 = vadd.xlane.f32.xlu0 %v1234
    %v2239 = vpop.xlane.xlu0 %2238
    %2240 = vadd.xlane.f32.xlu0 %v1235
    %v2241 = vpop.xlane.xlu0 %2240
    %2242 = vadd.xlane.f32.xlu0 %v1236
    %v2243 = vpop.xlane.xlu0 %2242
    %2244 = vadd.xlane.f32.xlu0 %v1237
    %v2245 = vpop.xlane.xlu0 %2244
    %2246 = vadd.xlane.f32.xlu0 %v1238
    %v2247 = vpop.xlane.xlu0 %2246
    %2248 = vadd.xlane.f32.xlu0 %v1239
    %v2249 = vpop.xlane.xlu0 %2248
    %2250 = vadd.xlane.f32.xlu0 %v1240
    %v2251 = vpop.xlane.xlu0 %2250
    %2252 = vadd.xlane.f32.xlu0 %v1241
    %v2253 = vpop.xlane.xlu0 %2252
    %2254 = vadd.xlane.f32.xlu0 %v1242
    %v2255 = vpop.xlane.xlu0 %2254
    %2256 = vadd.xlane.f32.xlu0 %v1243
    %v2257 = vpop.xlane.xlu0 %2256
    %2258 = vadd.xlane.f32.xlu0 %v1244
    %v2259 = vpop.xlane.xlu0 %2258
    %2260 = vadd.xlane.f32.xlu0 %v1245
    %v2261 = vpop.xlane.xlu0 %2260
    %2262 = vadd.xlane.f32.xlu0 %v1246
    %v2263 = vpop.xlane.xlu0 %2262
    %2264 = vadd.xlane.f32.xlu0 %v1247
    %v2265 = vpop.xlane.xlu0 %2264
    %2266 = vadd.xlane.f32.xlu0 %v1248
    %v2267 = vpop.xlane.xlu0 %2266
    %2268 = vadd.xlane.f32.xlu0 %v1249
    %v2269 = vpop.xlane.xlu0 %2268
    %2270 = vadd.xlane.f32.xlu0 %v1250
    %v2271 = vpop.xlane.xlu0 %2270
    %2272 = vadd.xlane.f32.xlu0 %v1251
    %v2273 = vpop.xlane.xlu0 %2272
    %2274 = vadd.xlane.f32.xlu0 %v1252
    %v2275 = vpop.xlane.xlu0 %2274
    %2276 = vadd.xlane.f32.xlu0 %v1253
    %v2277 = vpop.xlane.xlu0 %2276
    %v2790 = vlaneseq
    %v2791 = vand.u32 %v2790, 127
    %v2792 = vlaneseq
    %v2793 = vshrl.u32 %v2792, 7
    %v2794 = vsub.s32 %v2791, %v2793
    %v2795 = vrot.slane %v1255, %v2794
    %v2796 = vadd.s32 %v2791, 4294967288
    %v2797 = vlaneseq
    %v2798 = vshrl.u32 %v2797, 7
    %v2799 = vsub.s32 %v2796, %v2798
    %v2800 = vrot.slane %v1257, %v2799
    %vm2801 = vcmask 130112
    %v2802 = vsel %vm2801, %v2800, %v2795
    %v2803 = vlaneseq
    %v2804 = vshrl.u32 %v2803, 7
    %v2805 = vsub.s32 %v2791, %v2804
    %v2806 = vrot.slane %v1259, %v2805
    %v2807 = vlaneseq
    %v2808 = vshrl.u32 %v2807, 7
    %v2809 = vsub.s32 %v2796, %v2808
    %v2810 = vrot.slane %v1261, %v2809
    %v2811 = vsel %vm2801, %v2810, %v2806
    %v2812 = vlaneseq
    %v2813 = vshrl.u32 %v2812, 7
    %v2814 = vsub.s32 %v2791, %v2813
    %v2815 = vrot.slane %v1263, %v2814
    %v2816 = vlaneseq
    %v2817 = vshrl.u32 %v2816, 7
    %v2818 = vsub.s32 %v2796, %v2817
    %v2819 = vrot.slane %v1265, %v2818
    %v2820 = vsel %vm2801, %v2819, %v2815
    %v2821 = vlaneseq
    %v2822 = vshrl.u32 %v2821, 7
    %v2823 = vsub.s32 %v2791, %v2822
    %v2824 = vrot.slane %v1267, %v2823
    %v2825 = vlaneseq
    %v2826 = vshrl.u32 %v2825, 7
    %v2827 = vsub.s32 %v2796, %v2826
    %v2828 = vrot.slane %v1269, %v2827
    %v2829 = vsel %vm2801, %v2828, %v2824
    %v2830 = vlaneseq
    %v2831 = vshrl.u32 %v2830, 7
    %v2832 = vsub.s32 %v2791, %v2831
    %v2833 = vrot.slane %v1271, %v2832
    %v2834 = vlaneseq
    %v2835 = vshrl.u32 %v2834, 7
    %v2836 = vsub.s32 %v2796, %v2835
    %v2837 = vrot.slane %v1273, %v2836
    %v2838 = vsel %vm2801, %v2837, %v2833
    %v2839 = vlaneseq
    %v2840 = vshrl.u32 %v2839, 7
    %v2841 = vsub.s32 %v2791, %v2840
    %v2842 = vrot.slane %v1275, %v2841
    %v2843 = vlaneseq
    %v2844 = vshrl.u32 %v2843, 7
    %v2845 = vsub.s32 %v2796, %v2844
    %v2846 = vrot.slane %v1277, %v2845
    %v2847 = vsel %vm2801, %v2846, %v2842
    %v2848 = vlaneseq
    %v2849 = vshrl.u32 %v2848, 7
    %v2850 = vsub.s32 %v2791, %v2849
    %v2851 = vrot.slane %v1279, %v2850
    %v2852 = vlaneseq
    %v2853 = vshrl.u32 %v2852, 7
    %v2854 = vsub.s32 %v2796, %v2853
    %v2855 = vrot.slane %v1281, %v2854
    %v2856 = vsel %vm2801, %v2855, %v2851
    %v2857 = vlaneseq
    %v2858 = vshrl.u32 %v2857, 7
    %v2859 = vsub.s32 %v2791, %v2858
    %v2860 = vrot.slane %v1283, %v2859
    %v2861 = vlaneseq
    %v2862 = vshrl.u32 %v2861, 7
    %v2863 = vsub.s32 %v2796, %v2862
    %v2864 = vrot.slane %v1285, %v2863
    %v2865 = vsel %vm2801, %v2864, %v2860
    %v2866 = vlaneseq
    %v2867 = vshrl.u32 %v2866, 7
    %v2868 = vsub.s32 %v2791, %v2867
    %v2869 = vrot.slane %v1287, %v2868
    %v2870 = vlaneseq
    %v2871 = vshrl.u32 %v2870, 7
    %v2872 = vsub.s32 %v2796, %v2871
    %v2873 = vrot.slane %v1289, %v2872
    %v2874 = vsel %vm2801, %v2873, %v2869
    %v2875 = vlaneseq
    %v2876 = vshrl.u32 %v2875, 7
    %v2877 = vsub.s32 %v2791, %v2876
    %v2878 = vrot.slane %v1291, %v2877
    %v2879 = vlaneseq
    %v2880 = vshrl.u32 %v2879, 7
    %v2881 = vsub.s32 %v2796, %v2880
    %v2882 = vrot.slane %v1293, %v2881
    %v2883 = vsel %vm2801, %v2882, %v2878
    %v2884 = vlaneseq
    %v2885 = vshrl.u32 %v2884, 7
    %v2886 = vsub.s32 %v2791, %v2885
    %v2887 = vrot.slane %v1295, %v2886
    %v2888 = vlaneseq
    %v2889 = vshrl.u32 %v2888, 7
    %v2890 = vsub.s32 %v2796, %v2889
    %v2891 = vrot.slane %v1297, %v2890
    %v2892 = vsel %vm2801, %v2891, %v2887
    %v2893 = vlaneseq
    %v2894 = vshrl.u32 %v2893, 7
    %v2895 = vsub.s32 %v2791, %v2894
    %v2896 = vrot.slane %v1299, %v2895
    %v2897 = vlaneseq
    %v2898 = vshrl.u32 %v2897, 7
    %v2899 = vsub.s32 %v2796, %v2898
    %v2900 = vrot.slane %v1301, %v2899
    %v2901 = vsel %vm2801, %v2900, %v2896
    %v2902 = vlaneseq
    %v2903 = vshrl.u32 %v2902, 7
    %v2904 = vsub.s32 %v2791, %v2903
    %v2905 = vrot.slane %v1303, %v2904
    %v2906 = vlaneseq
    %v2907 = vshrl.u32 %v2906, 7
    %v2908 = vsub.s32 %v2796, %v2907
    %v2909 = vrot.slane %v1305, %v2908
    %v2910 = vsel %vm2801, %v2909, %v2905
    %v2911 = vlaneseq
    %v2912 = vshrl.u32 %v2911, 7
    %v2913 = vsub.s32 %v2791, %v2912
    %v2914 = vrot.slane %v1307, %v2913
    %v2915 = vlaneseq
    %v2916 = vshrl.u32 %v2915, 7
    %v2917 = vsub.s32 %v2796, %v2916
    %v2918 = vrot.slane %v1309, %v2917
    %v2919 = vsel %vm2801, %v2918, %v2914
    %v2920 = vlaneseq
    %v2921 = vshrl.u32 %v2920, 7
    %v2922 = vsub.s32 %v2791, %v2921
    %v2923 = vrot.slane %v1311, %v2922
    %v2924 = vlaneseq
    %v2925 = vshrl.u32 %v2924, 7
    %v2926 = vsub.s32 %v2796, %v2925
    %v2927 = vrot.slane %v1313, %v2926
    %v2928 = vsel %vm2801, %v2927, %v2923
    %v2929 = vlaneseq
    %v2930 = vshrl.u32 %v2929, 7
    %v2931 = vsub.s32 %v2791, %v2930
    %v2932 = vrot.slane %v1315, %v2931
    %v2933 = vlaneseq
    %v2934 = vshrl.u32 %v2933, 7
    %v2935 = vsub.s32 %v2796, %v2934
    %v2936 = vrot.slane %v1317, %v2935
    %v2937 = vsel %vm2801, %v2936, %v2932
    %v2938 = vlaneseq
    %v2939 = vshrl.u32 %v2938, 7
    %v2940 = vsub.s32 %v2791, %v2939
    %v2941 = vrot.slane %v1319, %v2940
    %v2942 = vlaneseq
    %v2943 = vshrl.u32 %v2942, 7
    %v2944 = vsub.s32 %v2796, %v2943
    %v2945 = vrot.slane %v1321, %v2944
    %v2946 = vsel %vm2801, %v2945, %v2941
    %v2947 = vlaneseq
    %v2948 = vshrl.u32 %v2947, 7
    %v2949 = vsub.s32 %v2791, %v2948
    %v2950 = vrot.slane %v1323, %v2949
    %v2951 = vlaneseq
    %v2952 = vshrl.u32 %v2951, 7
    %v2953 = vsub.s32 %v2796, %v2952
    %v2954 = vrot.slane %v1325, %v2953
    %v2955 = vsel %vm2801, %v2954, %v2950
    %v2956 = vlaneseq
    %v2957 = vshrl.u32 %v2956, 7
    %v2958 = vsub.s32 %v2791, %v2957
    %v2959 = vrot.slane %v1327, %v2958
    %v2960 = vlaneseq
    %v2961 = vshrl.u32 %v2960, 7
    %v2962 = vsub.s32 %v2796, %v2961
    %v2963 = vrot.slane %v1329, %v2962
    %v2964 = vsel %vm2801, %v2963, %v2959
    %v2965 = vlaneseq
    %v2966 = vshrl.u32 %v2965, 7
    %v2967 = vsub.s32 %v2791, %v2966
    %v2968 = vrot.slane %v1331, %v2967
    %v2969 = vlaneseq
    %v2970 = vshrl.u32 %v2969, 7
    %v2971 = vsub.s32 %v2796, %v2970
    %v2972 = vrot.slane %v1333, %v2971
    %v2973 = vsel %vm2801, %v2972, %v2968
    %v2974 = vlaneseq
    %v2975 = vshrl.u32 %v2974, 7
    %v2976 = vsub.s32 %v2791, %v2975
    %v2977 = vrot.slane %v1335, %v2976
    %v2978 = vlaneseq
    %v2979 = vshrl.u32 %v2978, 7
    %v2980 = vsub.s32 %v2796, %v2979
    %v2981 = vrot.slane %v1337, %v2980
    %v2982 = vsel %vm2801, %v2981, %v2977
    %v2983 = vlaneseq
    %v2984 = vshrl.u32 %v2983, 7
    %v2985 = vsub.s32 %v2791, %v2984
    %v2986 = vrot.slane %v1339, %v2985
    %v2987 = vlaneseq
    %v2988 = vshrl.u32 %v2987, 7
    %v2989 = vsub.s32 %v2796, %v2988
    %v2990 = vrot.slane %v1341, %v2989
    %v2991 = vsel %vm2801, %v2990, %v2986
    %v2992 = vlaneseq
    %v2993 = vshrl.u32 %v2992, 7
    %v2994 = vsub.s32 %v2791, %v2993
    %v2995 = vrot.slane %v1343, %v2994
    %v2996 = vlaneseq
    %v2997 = vshrl.u32 %v2996, 7
    %v2998 = vsub.s32 %v2796, %v2997
    %v2999 = vrot.slane %v1345, %v2998
    %v3000 = vsel %vm2801, %v2999, %v2995
    %v3001 = vlaneseq
    %v3002 = vshrl.u32 %v3001, 7
    %v3003 = vsub.s32 %v2791, %v3002
    %v3004 = vrot.slane %v1347, %v3003
    %v3005 = vlaneseq
    %v3006 = vshrl.u32 %v3005, 7
    %v3007 = vsub.s32 %v2796, %v3006
    %v3008 = vrot.slane %v1349, %v3007
    %v3009 = vsel %vm2801, %v3008, %v3004
    %v3010 = vlaneseq
    %v3011 = vshrl.u32 %v3010, 7
    %v3012 = vsub.s32 %v2791, %v3011
    %v3013 = vrot.slane %v1351, %v3012
    %v3014 = vlaneseq
    %v3015 = vshrl.u32 %v3014, 7
    %v3016 = vsub.s32 %v2796, %v3015
    %v3017 = vrot.slane %v1353, %v3016
    %v3018 = vsel %vm2801, %v3017, %v3013
    %v3019 = vlaneseq
    %v3020 = vshrl.u32 %v3019, 7
    %v3021 = vsub.s32 %v2791, %v3020
    %v3022 = vrot.slane %v1355, %v3021
    %v3023 = vlaneseq
    %v3024 = vshrl.u32 %v3023, 7
    %v3025 = vsub.s32 %v2796, %v3024
    %v3026 = vrot.slane %v1357, %v3025
    %v3027 = vsel %vm2801, %v3026, %v3022
    %v3028 = vlaneseq
    %v3029 = vshrl.u32 %v3028, 7
    %v3030 = vsub.s32 %v2791, %v3029
    %v3031 = vrot.slane %v1359, %v3030
    %v3032 = vlaneseq
    %v3033 = vshrl.u32 %v3032, 7
    %v3034 = vsub.s32 %v2796, %v3033
    %v3035 = vrot.slane %v1361, %v3034
    %v3036 = vsel %vm2801, %v3035, %v3031
    %v3037 = vlaneseq
    %v3038 = vshrl.u32 %v3037, 7
    %v3039 = vsub.s32 %v2791, %v3038
    %v3040 = vrot.slane %v1363, %v3039
    %v3041 = vlaneseq
    %v3042 = vshrl.u32 %v3041, 7
    %v3043 = vsub.s32 %v2796, %v3042
    %v3044 = vrot.slane %v1365, %v3043
    %v3045 = vsel %vm2801, %v3044, %v3040
    %v3046 = vlaneseq
    %v3047 = vshrl.u32 %v3046, 7
    %v3048 = vsub.s32 %v2791, %v3047
    %v3049 = vrot.slane %v1367, %v3048
    %v3050 = vlaneseq
    %v3051 = vshrl.u32 %v3050, 7
    %v3052 = vsub.s32 %v2796, %v3051
    %v3053 = vrot.slane %v1369, %v3052
    %v3054 = vsel %vm2801, %v3053, %v3049
    %v3055 = vlaneseq
    %v3056 = vshrl.u32 %v3055, 7
    %v3057 = vsub.s32 %v2791, %v3056
    %v3058 = vrot.slane %v1371, %v3057
    %v3059 = vlaneseq
    %v3060 = vshrl.u32 %v3059, 7
    %v3061 = vsub.s32 %v2796, %v3060
    %v3062 = vrot.slane %v1373, %v3061
    %v3063 = vsel %vm2801, %v3062, %v3058
    %v3064 = vlaneseq
    %v3065 = vshrl.u32 %v3064, 7
    %v3066 = vsub.s32 %v2791, %v3065
    %v3067 = vrot.slane %v1375, %v3066
    %v3068 = vlaneseq
    %v3069 = vshrl.u32 %v3068, 7
    %v3070 = vsub.s32 %v2796, %v3069
    %v3071 = vrot.slane %v1377, %v3070
    %v3072 = vsel %vm2801, %v3071, %v3067
    %v3073 = vlaneseq
    %v3074 = vshrl.u32 %v3073, 7
    %v3075 = vsub.s32 %v2791, %v3074
    %v3076 = vrot.slane %v1379, %v3075
    %v3077 = vlaneseq
    %v3078 = vshrl.u32 %v3077, 7
    %v3079 = vsub.s32 %v2796, %v3078
    %v3080 = vrot.slane %v1381, %v3079
    %v3081 = vsel %vm2801, %v3080, %v3076
    %v3082 = vlaneseq
    %v3083 = vshrl.u32 %v3082, 7
    %v3084 = vsub.s32 %v2791, %v3083
    %v3085 = vrot.slane %v1383, %v3084
    %v3086 = vlaneseq
    %v3087 = vshrl.u32 %v3086, 7
    %v3088 = vsub.s32 %v2796, %v3087
    %v3089 = vrot.slane %v1385, %v3088
    %v3090 = vsel %vm2801, %v3089, %v3085
    %v3091 = vlaneseq
    %v3092 = vshrl.u32 %v3091, 7
    %v3093 = vsub.s32 %v2791, %v3092
    %v3094 = vrot.slane %v1387, %v3093
    %v3095 = vlaneseq
    %v3096 = vshrl.u32 %v3095, 7
    %v3097 = vsub.s32 %v2796, %v3096
    %v3098 = vrot.slane %v1389, %v3097
    %v3099 = vsel %vm2801, %v3098, %v3094
    %v3100 = vlaneseq
    %v3101 = vshrl.u32 %v3100, 7
    %v3102 = vsub.s32 %v2791, %v3101
    %v3103 = vrot.slane %v1391, %v3102
    %v3104 = vlaneseq
    %v3105 = vshrl.u32 %v3104, 7
    %v3106 = vsub.s32 %v2796, %v3105
    %v3107 = vrot.slane %v1393, %v3106
    %v3108 = vsel %vm2801, %v3107, %v3103
    %v3109 = vlaneseq
    %v3110 = vshrl.u32 %v3109, 7
    %v3111 = vsub.s32 %v2791, %v3110
    %v3112 = vrot.slane %v1395, %v3111
    %v3113 = vlaneseq
    %v3114 = vshrl.u32 %v3113, 7
    %v3115 = vsub.s32 %v2796, %v3114
    %v3116 = vrot.slane %v1397, %v3115
    %v3117 = vsel %vm2801, %v3116, %v3112
    %v3118 = vlaneseq
    %v3119 = vshrl.u32 %v3118, 7
    %v3120 = vsub.s32 %v2791, %v3119
    %v3121 = vrot.slane %v1399, %v3120
    %v3122 = vlaneseq
    %v3123 = vshrl.u32 %v3122, 7
    %v3124 = vsub.s32 %v2796, %v3123
    %v3125 = vrot.slane %v1401, %v3124
    %v3126 = vsel %vm2801, %v3125, %v3121
    %v3127 = vlaneseq
    %v3128 = vshrl.u32 %v3127, 7
    %v3129 = vsub.s32 %v2791, %v3128
    %v3130 = vrot.slane %v1403, %v3129
    %v3131 = vlaneseq
    %v3132 = vshrl.u32 %v3131, 7
    %v3133 = vsub.s32 %v2796, %v3132
    %v3134 = vrot.slane %v1405, %v3133
    %v3135 = vsel %vm2801, %v3134, %v3130
    %v3136 = vlaneseq
    %v3137 = vshrl.u32 %v3136, 7
    %v3138 = vsub.s32 %v2791, %v3137
    %v3139 = vrot.slane %v1407, %v3138
    %v3140 = vlaneseq
    %v3141 = vshrl.u32 %v3140, 7
    %v3142 = vsub.s32 %v2796, %v3141
    %v3143 = vrot.slane %v1409, %v3142
    %v3144 = vsel %vm2801, %v3143, %v3139
    %v3145 = vlaneseq
    %v3146 = vshrl.u32 %v3145, 7
    %v3147 = vsub.s32 %v2791, %v3146
    %v3148 = vrot.slane %v1411, %v3147
    %v3149 = vlaneseq
    %v3150 = vshrl.u32 %v3149, 7
    %v3151 = vsub.s32 %v2796, %v3150
    %v3152 = vrot.slane %v1413, %v3151
    %v3153 = vsel %vm2801, %v3152, %v3148
    %v3154 = vlaneseq
    %v3155 = vshrl.u32 %v3154, 7
    %v3156 = vsub.s32 %v2791, %v3155
    %v3157 = vrot.slane %v1415, %v3156
    %v3158 = vlaneseq
    %v3159 = vshrl.u32 %v3158, 7
    %v3160 = vsub.s32 %v2796, %v3159
    %v3161 = vrot.slane %v1417, %v3160
    %v3162 = vsel %vm2801, %v3161, %v3157
    %v3163 = vlaneseq
    %v3164 = vshrl.u32 %v3163, 7
    %v3165 = vsub.s32 %v2791, %v3164
    %v3166 = vrot.slane %v1419, %v3165
    %v3167 = vlaneseq
    %v3168 = vshrl.u32 %v3167, 7
    %v3169 = vsub.s32 %v2796, %v3168
    %v3170 = vrot.slane %v1421, %v3169
    %v3171 = vsel %vm2801, %v3170, %v3166
    %v3172 = vlaneseq
    %v3173 = vshrl.u32 %v3172, 7
    %v3174 = vsub.s32 %v2791, %v3173
    %v3175 = vrot.slane %v1423, %v3174
    %v3176 = vlaneseq
    %v3177 = vshrl.u32 %v3176, 7
    %v3178 = vsub.s32 %v2796, %v3177
    %v3179 = vrot.slane %v1425, %v3178
    %v3180 = vsel %vm2801, %v3179, %v3175
    %v3181 = vlaneseq
    %v3182 = vshrl.u32 %v3181, 7
    %v3183 = vsub.s32 %v2791, %v3182
    %v3184 = vrot.slane %v1427, %v3183
    %v3185 = vlaneseq
    %v3186 = vshrl.u32 %v3185, 7
    %v3187 = vsub.s32 %v2796, %v3186
    %v3188 = vrot.slane %v1429, %v3187
    %v3189 = vsel %vm2801, %v3188, %v3184
    %v3190 = vlaneseq
    %v3191 = vshrl.u32 %v3190, 7
    %v3192 = vsub.s32 %v2791, %v3191
    %v3193 = vrot.slane %v1431, %v3192
    %v3194 = vlaneseq
    %v3195 = vshrl.u32 %v3194, 7
    %v3196 = vsub.s32 %v2796, %v3195
    %v3197 = vrot.slane %v1433, %v3196
    %v3198 = vsel %vm2801, %v3197, %v3193
    %v3199 = vlaneseq
    %v3200 = vshrl.u32 %v3199, 7
    %v3201 = vsub.s32 %v2791, %v3200
    %v3202 = vrot.slane %v1435, %v3201
    %v3203 = vlaneseq
    %v3204 = vshrl.u32 %v3203, 7
    %v3205 = vsub.s32 %v2796, %v3204
    %v3206 = vrot.slane %v1437, %v3205
    %v3207 = vsel %vm2801, %v3206, %v3202
    %v3208 = vlaneseq
    %v3209 = vshrl.u32 %v3208, 7
    %v3210 = vsub.s32 %v2791, %v3209
    %v3211 = vrot.slane %v1439, %v3210
    %v3212 = vlaneseq
    %v3213 = vshrl.u32 %v3212, 7
    %v3214 = vsub.s32 %v2796, %v3213
    %v3215 = vrot.slane %v1441, %v3214
    %v3216 = vsel %vm2801, %v3215, %v3211
    %v3217 = vlaneseq
    %v3218 = vshrl.u32 %v3217, 7
    %v3219 = vsub.s32 %v2791, %v3218
    %v3220 = vrot.slane %v1443, %v3219
    %v3221 = vlaneseq
    %v3222 = vshrl.u32 %v3221, 7
    %v3223 = vsub.s32 %v2796, %v3222
    %v3224 = vrot.slane %v1445, %v3223
    %v3225 = vsel %vm2801, %v3224, %v3220
    %v3226 = vlaneseq
    %v3227 = vshrl.u32 %v3226, 7
    %v3228 = vsub.s32 %v2791, %v3227
    %v3229 = vrot.slane %v1447, %v3228
    %v3230 = vlaneseq
    %v3231 = vshrl.u32 %v3230, 7
    %v3232 = vsub.s32 %v2796, %v3231
    %v3233 = vrot.slane %v1449, %v3232
    %v3234 = vsel %vm2801, %v3233, %v3229
    %v3235 = vlaneseq
    %v3236 = vshrl.u32 %v3235, 7
    %v3237 = vsub.s32 %v2791, %v3236
    %v3238 = vrot.slane %v1451, %v3237
    %v3239 = vlaneseq
    %v3240 = vshrl.u32 %v3239, 7
    %v3241 = vsub.s32 %v2796, %v3240
    %v3242 = vrot.slane %v1453, %v3241
    %v3243 = vsel %vm2801, %v3242, %v3238
    %v3244 = vlaneseq
    %v3245 = vshrl.u32 %v3244, 7
    %v3246 = vsub.s32 %v2791, %v3245
    %v3247 = vrot.slane %v1455, %v3246
    %v3248 = vlaneseq
    %v3249 = vshrl.u32 %v3248, 7
    %v3250 = vsub.s32 %v2796, %v3249
    %v3251 = vrot.slane %v1457, %v3250
    %v3252 = vsel %vm2801, %v3251, %v3247
    %v3253 = vlaneseq
    %v3254 = vshrl.u32 %v3253, 7
    %v3255 = vsub.s32 %v2791, %v3254
    %v3256 = vrot.slane %v1459, %v3255
    %v3257 = vlaneseq
    %v3258 = vshrl.u32 %v3257, 7
    %v3259 = vsub.s32 %v2796, %v3258
    %v3260 = vrot.slane %v1461, %v3259
    %v3261 = vsel %vm2801, %v3260, %v3256
    %v3262 = vlaneseq
    %v3263 = vshrl.u32 %v3262, 7
    %v3264 = vsub.s32 %v2791, %v3263
    %v3265 = vrot.slane %v1463, %v3264
    %v3266 = vlaneseq
    %v3267 = vshrl.u32 %v3266, 7
    %v3268 = vsub.s32 %v2796, %v3267
    %v3269 = vrot.slane %v1465, %v3268
    %v3270 = vsel %vm2801, %v3269, %v3265
    %v3271 = vlaneseq
    %v3272 = vshrl.u32 %v3271, 7
    %v3273 = vsub.s32 %v2791, %v3272
    %v3274 = vrot.slane %v1467, %v3273
    %v3275 = vlaneseq
    %v3276 = vshrl.u32 %v3275, 7
    %v3277 = vsub.s32 %v2796, %v3276
    %v3278 = vrot.slane %v1469, %v3277
    %v3279 = vsel %vm2801, %v3278, %v3274
    %v3280 = vlaneseq
    %v3281 = vshrl.u32 %v3280, 7
    %v3282 = vsub.s32 %v2791, %v3281
    %v3283 = vrot.slane %v1471, %v3282
    %v3284 = vlaneseq
    %v3285 = vshrl.u32 %v3284, 7
    %v3286 = vsub.s32 %v2796, %v3285
    %v3287 = vrot.slane %v1473, %v3286
    %v3288 = vsel %vm2801, %v3287, %v3283
    %v3289 = vlaneseq
    %v3290 = vshrl.u32 %v3289, 7
    %v3291 = vsub.s32 %v2791, %v3290
    %v3292 = vrot.slane %v1475, %v3291
    %v3293 = vlaneseq
    %v3294 = vshrl.u32 %v3293, 7
    %v3295 = vsub.s32 %v2796, %v3294
    %v3296 = vrot.slane %v1477, %v3295
    %v3297 = vsel %vm2801, %v3296, %v3292
    %v3298 = vlaneseq
    %v3299 = vshrl.u32 %v3298, 7
    %v3300 = vsub.s32 %v2791, %v3299
    %v3301 = vrot.slane %v1479, %v3300
    %v3302 = vlaneseq
    %v3303 = vshrl.u32 %v3302, 7
    %v3304 = vsub.s32 %v2796, %v3303
    %v3305 = vrot.slane %v1481, %v3304
    %v3306 = vsel %vm2801, %v3305, %v3301
    %v3307 = vlaneseq
    %v3308 = vshrl.u32 %v3307, 7
    %v3309 = vsub.s32 %v2791, %v3308
    %v3310 = vrot.slane %v1483, %v3309
    %v3311 = vlaneseq
    %v3312 = vshrl.u32 %v3311, 7
    %v3313 = vsub.s32 %v2796, %v3312
    %v3314 = vrot.slane %v1485, %v3313
    %v3315 = vsel %vm2801, %v3314, %v3310
    %v3316 = vlaneseq
    %v3317 = vshrl.u32 %v3316, 7
    %v3318 = vsub.s32 %v2791, %v3317
    %v3319 = vrot.slane %v1487, %v3318
    %v3320 = vlaneseq
    %v3321 = vshrl.u32 %v3320, 7
    %v3322 = vsub.s32 %v2796, %v3321
    %v3323 = vrot.slane %v1489, %v3322
    %v3324 = vsel %vm2801, %v3323, %v3319
    %v3325 = vlaneseq
    %v3326 = vshrl.u32 %v3325, 7
    %v3327 = vsub.s32 %v2791, %v3326
    %v3328 = vrot.slane %v1491, %v3327
    %v3329 = vlaneseq
    %v3330 = vshrl.u32 %v3329, 7
    %v3331 = vsub.s32 %v2796, %v3330
    %v3332 = vrot.slane %v1493, %v3331
    %v3333 = vsel %vm2801, %v3332, %v3328
    %v3334 = vlaneseq
    %v3335 = vshrl.u32 %v3334, 7
    %v3336 = vsub.s32 %v2791, %v3335
    %v3337 = vrot.slane %v1495, %v3336
    %v3338 = vlaneseq
    %v3339 = vshrl.u32 %v3338, 7
    %v3340 = vsub.s32 %v2796, %v3339
    %v3341 = vrot.slane %v1497, %v3340
    %v3342 = vsel %vm2801, %v3341, %v3337
    %v3343 = vlaneseq
    %v3344 = vshrl.u32 %v3343, 7
    %v3345 = vsub.s32 %v2791, %v3344
    %v3346 = vrot.slane %v1499, %v3345
    %v3347 = vlaneseq
    %v3348 = vshrl.u32 %v3347, 7
    %v3349 = vsub.s32 %v2796, %v3348
    %v3350 = vrot.slane %v1501, %v3349
    %v3351 = vsel %vm2801, %v3350, %v3346
    %v3352 = vlaneseq
    %v3353 = vshrl.u32 %v3352, 7
    %v3354 = vsub.s32 %v2791, %v3353
    %v3355 = vrot.slane %v1503, %v3354
    %v3356 = vlaneseq
    %v3357 = vshrl.u32 %v3356, 7
    %v3358 = vsub.s32 %v2796, %v3357
    %v3359 = vrot.slane %v1505, %v3358
    %v3360 = vsel %vm2801, %v3359, %v3355
    %v3361 = vlaneseq
    %v3362 = vshrl.u32 %v3361, 7
    %v3363 = vsub.s32 %v2791, %v3362
    %v3364 = vrot.slane %v1507, %v3363
    %v3365 = vlaneseq
    %v3366 = vshrl.u32 %v3365, 7
    %v3367 = vsub.s32 %v2796, %v3366
    %v3368 = vrot.slane %v1509, %v3367
    %v3369 = vsel %vm2801, %v3368, %v3364
    %v3370 = vlaneseq
    %v3371 = vshrl.u32 %v3370, 7
    %v3372 = vsub.s32 %v2791, %v3371
    %v3373 = vrot.slane %v1511, %v3372
    %v3374 = vlaneseq
    %v3375 = vshrl.u32 %v3374, 7
    %v3376 = vsub.s32 %v2796, %v3375
    %v3377 = vrot.slane %v1513, %v3376
    %v3378 = vsel %vm2801, %v3377, %v3373
    %v3379 = vlaneseq
    %v3380 = vshrl.u32 %v3379, 7
    %v3381 = vsub.s32 %v2791, %v3380
    %v3382 = vrot.slane %v1515, %v3381
    %v3383 = vlaneseq
    %v3384 = vshrl.u32 %v3383, 7
    %v3385 = vsub.s32 %v2796, %v3384
    %v3386 = vrot.slane %v1517, %v3385
    %v3387 = vsel %vm2801, %v3386, %v3382
    %v3388 = vlaneseq
    %v3389 = vshrl.u32 %v3388, 7
    %v3390 = vsub.s32 %v2791, %v3389
    %v3391 = vrot.slane %v1519, %v3390
    %v3392 = vlaneseq
    %v3393 = vshrl.u32 %v3392, 7
    %v3394 = vsub.s32 %v2796, %v3393
    %v3395 = vrot.slane %v1521, %v3394
    %v3396 = vsel %vm2801, %v3395, %v3391
    %v3397 = vlaneseq
    %v3398 = vshrl.u32 %v3397, 7
    %v3399 = vsub.s32 %v2791, %v3398
    %v3400 = vrot.slane %v1523, %v3399
    %v3401 = vlaneseq
    %v3402 = vshrl.u32 %v3401, 7
    %v3403 = vsub.s32 %v2796, %v3402
    %v3404 = vrot.slane %v1525, %v3403
    %v3405 = vsel %vm2801, %v3404, %v3400
    %v3406 = vlaneseq
    %v3407 = vshrl.u32 %v3406, 7
    %v3408 = vsub.s32 %v2791, %v3407
    %v3409 = vrot.slane %v1527, %v3408
    %v3410 = vlaneseq
    %v3411 = vshrl.u32 %v3410, 7
    %v3412 = vsub.s32 %v2796, %v3411
    %v3413 = vrot.slane %v1529, %v3412
    %v3414 = vsel %vm2801, %v3413, %v3409
    %v3415 = vlaneseq
    %v3416 = vshrl.u32 %v3415, 7
    %v3417 = vsub.s32 %v2791, %v3416
    %v3418 = vrot.slane %v1531, %v3417
    %v3419 = vlaneseq
    %v3420 = vshrl.u32 %v3419, 7
    %v3421 = vsub.s32 %v2796, %v3420
    %v3422 = vrot.slane %v1533, %v3421
    %v3423 = vsel %vm2801, %v3422, %v3418
    %v3424 = vlaneseq
    %v3425 = vshrl.u32 %v3424, 7
    %v3426 = vsub.s32 %v2791, %v3425
    %v3427 = vrot.slane %v1535, %v3426
    %v3428 = vlaneseq
    %v3429 = vshrl.u32 %v3428, 7
    %v3430 = vsub.s32 %v2796, %v3429
    %v3431 = vrot.slane %v1537, %v3430
    %v3432 = vsel %vm2801, %v3431, %v3427
    %v3433 = vlaneseq
    %v3434 = vshrl.u32 %v3433, 7
    %v3435 = vsub.s32 %v2791, %v3434
    %v3436 = vrot.slane %v1539, %v3435
    %v3437 = vlaneseq
    %v3438 = vshrl.u32 %v3437, 7
    %v3439 = vsub.s32 %v2796, %v3438
    %v3440 = vrot.slane %v1541, %v3439
    %v3441 = vsel %vm2801, %v3440, %v3436
    %v3442 = vlaneseq
    %v3443 = vshrl.u32 %v3442, 7
    %v3444 = vsub.s32 %v2791, %v3443
    %v3445 = vrot.slane %v1543, %v3444
    %v3446 = vlaneseq
    %v3447 = vshrl.u32 %v3446, 7
    %v3448 = vsub.s32 %v2796, %v3447
    %v3449 = vrot.slane %v1545, %v3448
    %v3450 = vsel %vm2801, %v3449, %v3445
    %v3451 = vlaneseq
    %v3452 = vshrl.u32 %v3451, 7
    %v3453 = vsub.s32 %v2791, %v3452
    %v3454 = vrot.slane %v1547, %v3453
    %v3455 = vlaneseq
    %v3456 = vshrl.u32 %v3455, 7
    %v3457 = vsub.s32 %v2796, %v3456
    %v3458 = vrot.slane %v1549, %v3457
    %v3459 = vsel %vm2801, %v3458, %v3454
    %v3460 = vlaneseq
    %v3461 = vshrl.u32 %v3460, 7
    %v3462 = vsub.s32 %v2791, %v3461
    %v3463 = vrot.slane %v1551, %v3462
    %v3464 = vlaneseq
    %v3465 = vshrl.u32 %v3464, 7
    %v3466 = vsub.s32 %v2796, %v3465
    %v3467 = vrot.slane %v1553, %v3466
    %v3468 = vsel %vm2801, %v3467, %v3463
    %v3469 = vlaneseq
    %v3470 = vshrl.u32 %v3469, 7
    %v3471 = vsub.s32 %v2791, %v3470
    %v3472 = vrot.slane %v1555, %v3471
    %v3473 = vlaneseq
    %v3474 = vshrl.u32 %v3473, 7
    %v3475 = vsub.s32 %v2796, %v3474
    %v3476 = vrot.slane %v1557, %v3475
    %v3477 = vsel %vm2801, %v3476, %v3472
    %v3478 = vlaneseq
    %v3479 = vshrl.u32 %v3478, 7
    %v3480 = vsub.s32 %v2791, %v3479
    %v3481 = vrot.slane %v1559, %v3480
    %v3482 = vlaneseq
    %v3483 = vshrl.u32 %v3482, 7
    %v3484 = vsub.s32 %v2796, %v3483
    %v3485 = vrot.slane %v1561, %v3484
    %v3486 = vsel %vm2801, %v3485, %v3481
    %v3487 = vlaneseq
    %v3488 = vshrl.u32 %v3487, 7
    %v3489 = vsub.s32 %v2791, %v3488
    %v3490 = vrot.slane %v1563, %v3489
    %v3491 = vlaneseq
    %v3492 = vshrl.u32 %v3491, 7
    %v3493 = vsub.s32 %v2796, %v3492
    %v3494 = vrot.slane %v1565, %v3493
    %v3495 = vsel %vm2801, %v3494, %v3490
    %v3496 = vlaneseq
    %v3497 = vshrl.u32 %v3496, 7
    %v3498 = vsub.s32 %v2791, %v3497
    %v3499 = vrot.slane %v1567, %v3498
    %v3500 = vlaneseq
    %v3501 = vshrl.u32 %v3500, 7
    %v3502 = vsub.s32 %v2796, %v3501
    %v3503 = vrot.slane %v1569, %v3502
    %v3504 = vsel %vm2801, %v3503, %v3499
    %v3505 = vlaneseq
    %v3506 = vshrl.u32 %v3505, 7
    %v3507 = vsub.s32 %v2791, %v3506
    %v3508 = vrot.slane %v1571, %v3507
    %v3509 = vlaneseq
    %v3510 = vshrl.u32 %v3509, 7
    %v3511 = vsub.s32 %v2796, %v3510
    %v3512 = vrot.slane %v1573, %v3511
    %v3513 = vsel %vm2801, %v3512, %v3508
    %v3514 = vlaneseq
    %v3515 = vshrl.u32 %v3514, 7
    %v3516 = vsub.s32 %v2791, %v3515
    %v3517 = vrot.slane %v1575, %v3516
    %v3518 = vlaneseq
    %v3519 = vshrl.u32 %v3518, 7
    %v3520 = vsub.s32 %v2796, %v3519
    %v3521 = vrot.slane %v1577, %v3520
    %v3522 = vsel %vm2801, %v3521, %v3517
    %v3523 = vlaneseq
    %v3524 = vshrl.u32 %v3523, 7
    %v3525 = vsub.s32 %v2791, %v3524
    %v3526 = vrot.slane %v1579, %v3525
    %v3527 = vlaneseq
    %v3528 = vshrl.u32 %v3527, 7
    %v3529 = vsub.s32 %v2796, %v3528
    %v3530 = vrot.slane %v1581, %v3529
    %v3531 = vsel %vm2801, %v3530, %v3526
    %v3532 = vlaneseq
    %v3533 = vshrl.u32 %v3532, 7
    %v3534 = vsub.s32 %v2791, %v3533
    %v3535 = vrot.slane %v1583, %v3534
    %v3536 = vlaneseq
    %v3537 = vshrl.u32 %v3536, 7
    %v3538 = vsub.s32 %v2796, %v3537
    %v3539 = vrot.slane %v1585, %v3538
    %v3540 = vsel %vm2801, %v3539, %v3535
    %v3541 = vlaneseq
    %v3542 = vshrl.u32 %v3541, 7
    %v3543 = vsub.s32 %v2791, %v3542
    %v3544 = vrot.slane %v1587, %v3543
    %v3545 = vlaneseq
    %v3546 = vshrl.u32 %v3545, 7
    %v3547 = vsub.s32 %v2796, %v3546
    %v3548 = vrot.slane %v1589, %v3547
    %v3549 = vsel %vm2801, %v3548, %v3544
    %v3550 = vlaneseq
    %v3551 = vshrl.u32 %v3550, 7
    %v3552 = vsub.s32 %v2791, %v3551
    %v3553 = vrot.slane %v1591, %v3552
    %v3554 = vlaneseq
    %v3555 = vshrl.u32 %v3554, 7
    %v3556 = vsub.s32 %v2796, %v3555
    %v3557 = vrot.slane %v1593, %v3556
    %v3558 = vsel %vm2801, %v3557, %v3553
    %v3559 = vlaneseq
    %v3560 = vshrl.u32 %v3559, 7
    %v3561 = vsub.s32 %v2791, %v3560
    %v3562 = vrot.slane %v1595, %v3561
    %v3563 = vlaneseq
    %v3564 = vshrl.u32 %v3563, 7
    %v3565 = vsub.s32 %v2796, %v3564
    %v3566 = vrot.slane %v1597, %v3565
    %v3567 = vsel %vm2801, %v3566, %v3562
    %v3568 = vlaneseq
    %v3569 = vshrl.u32 %v3568, 7
    %v3570 = vsub.s32 %v2791, %v3569
    %v3571 = vrot.slane %v1599, %v3570
    %v3572 = vlaneseq
    %v3573 = vshrl.u32 %v3572, 7
    %v3574 = vsub.s32 %v2796, %v3573
    %v3575 = vrot.slane %v1601, %v3574
    %v3576 = vsel %vm2801, %v3575, %v3571
    %v3577 = vlaneseq
    %v3578 = vshrl.u32 %v3577, 7
    %v3579 = vsub.s32 %v2791, %v3578
    %v3580 = vrot.slane %v1603, %v3579
    %v3581 = vlaneseq
    %v3582 = vshrl.u32 %v3581, 7
    %v3583 = vsub.s32 %v2796, %v3582
    %v3584 = vrot.slane %v1605, %v3583
    %v3585 = vsel %vm2801, %v3584, %v3580
    %v3586 = vlaneseq
    %v3587 = vshrl.u32 %v3586, 7
    %v3588 = vsub.s32 %v2791, %v3587
    %v3589 = vrot.slane %v1607, %v3588
    %v3590 = vlaneseq
    %v3591 = vshrl.u32 %v3590, 7
    %v3592 = vsub.s32 %v2796, %v3591
    %v3593 = vrot.slane %v1609, %v3592
    %v3594 = vsel %vm2801, %v3593, %v3589
    %v3595 = vlaneseq
    %v3596 = vshrl.u32 %v3595, 7
    %v3597 = vsub.s32 %v2791, %v3596
    %v3598 = vrot.slane %v1611, %v3597
    %v3599 = vlaneseq
    %v3600 = vshrl.u32 %v3599, 7
    %v3601 = vsub.s32 %v2796, %v3600
    %v3602 = vrot.slane %v1613, %v3601
    %v3603 = vsel %vm2801, %v3602, %v3598
    %v3604 = vlaneseq
    %v3605 = vshrl.u32 %v3604, 7
    %v3606 = vsub.s32 %v2791, %v3605
    %v3607 = vrot.slane %v1615, %v3606
    %v3608 = vlaneseq
    %v3609 = vshrl.u32 %v3608, 7
    %v3610 = vsub.s32 %v2796, %v3609
    %v3611 = vrot.slane %v1617, %v3610
    %v3612 = vsel %vm2801, %v3611, %v3607
    %v3613 = vlaneseq
    %v3614 = vshrl.u32 %v3613, 7
    %v3615 = vsub.s32 %v2791, %v3614
    %v3616 = vrot.slane %v1619, %v3615
    %v3617 = vlaneseq
    %v3618 = vshrl.u32 %v3617, 7
    %v3619 = vsub.s32 %v2796, %v3618
    %v3620 = vrot.slane %v1621, %v3619
    %v3621 = vsel %vm2801, %v3620, %v3616
    %v3622 = vlaneseq
    %v3623 = vshrl.u32 %v3622, 7
    %v3624 = vsub.s32 %v2791, %v3623
    %v3625 = vrot.slane %v1623, %v3624
    %v3626 = vlaneseq
    %v3627 = vshrl.u32 %v3626, 7
    %v3628 = vsub.s32 %v2796, %v3627
    %v3629 = vrot.slane %v1625, %v3628
    %v3630 = vsel %vm2801, %v3629, %v3625
    %v3631 = vlaneseq
    %v3632 = vshrl.u32 %v3631, 7
    %v3633 = vsub.s32 %v2791, %v3632
    %v3634 = vrot.slane %v1627, %v3633
    %v3635 = vlaneseq
    %v3636 = vshrl.u32 %v3635, 7
    %v3637 = vsub.s32 %v2796, %v3636
    %v3638 = vrot.slane %v1629, %v3637
    %v3639 = vsel %vm2801, %v3638, %v3634
    %v3640 = vlaneseq
    %v3641 = vshrl.u32 %v3640, 7
    %v3642 = vsub.s32 %v2791, %v3641
    %v3643 = vrot.slane %v1631, %v3642
    %v3644 = vlaneseq
    %v3645 = vshrl.u32 %v3644, 7
    %v3646 = vsub.s32 %v2796, %v3645
    %v3647 = vrot.slane %v1633, %v3646
    %v3648 = vsel %vm2801, %v3647, %v3643
    %v3649 = vlaneseq
    %v3650 = vshrl.u32 %v3649, 7
    %v3651 = vsub.s32 %v2791, %v3650
    %v3652 = vrot.slane %v1635, %v3651
    %v3653 = vlaneseq
    %v3654 = vshrl.u32 %v3653, 7
    %v3655 = vsub.s32 %v2796, %v3654
    %v3656 = vrot.slane %v1637, %v3655
    %v3657 = vsel %vm2801, %v3656, %v3652
    %v3658 = vlaneseq
    %v3659 = vshrl.u32 %v3658, 7
    %v3660 = vsub.s32 %v2791, %v3659
    %v3661 = vrot.slane %v1639, %v3660
    %v3662 = vlaneseq
    %v3663 = vshrl.u32 %v3662, 7
    %v3664 = vsub.s32 %v2796, %v3663
    %v3665 = vrot.slane %v1641, %v3664
    %v3666 = vsel %vm2801, %v3665, %v3661
    %v3667 = vlaneseq
    %v3668 = vshrl.u32 %v3667, 7
    %v3669 = vsub.s32 %v2791, %v3668
    %v3670 = vrot.slane %v1643, %v3669
    %v3671 = vlaneseq
    %v3672 = vshrl.u32 %v3671, 7
    %v3673 = vsub.s32 %v2796, %v3672
    %v3674 = vrot.slane %v1645, %v3673
    %v3675 = vsel %vm2801, %v3674, %v3670
    %v3676 = vlaneseq
    %v3677 = vshrl.u32 %v3676, 7
    %v3678 = vsub.s32 %v2791, %v3677
    %v3679 = vrot.slane %v1647, %v3678
    %v3680 = vlaneseq
    %v3681 = vshrl.u32 %v3680, 7
    %v3682 = vsub.s32 %v2796, %v3681
    %v3683 = vrot.slane %v1649, %v3682
    %v3684 = vsel %vm2801, %v3683, %v3679
    %v3685 = vlaneseq
    %v3686 = vshrl.u32 %v3685, 7
    %v3687 = vsub.s32 %v2791, %v3686
    %v3688 = vrot.slane %v1651, %v3687
    %v3689 = vlaneseq
    %v3690 = vshrl.u32 %v3689, 7
    %v3691 = vsub.s32 %v2796, %v3690
    %v3692 = vrot.slane %v1653, %v3691
    %v3693 = vsel %vm2801, %v3692, %v3688
    %v3694 = vlaneseq
    %v3695 = vshrl.u32 %v3694, 7
    %v3696 = vsub.s32 %v2791, %v3695
    %v3697 = vrot.slane %v1655, %v3696
    %v3698 = vlaneseq
    %v3699 = vshrl.u32 %v3698, 7
    %v3700 = vsub.s32 %v2796, %v3699
    %v3701 = vrot.slane %v1657, %v3700
    %v3702 = vsel %vm2801, %v3701, %v3697
    %v3703 = vlaneseq
    %v3704 = vshrl.u32 %v3703, 7
    %v3705 = vsub.s32 %v2791, %v3704
    %v3706 = vrot.slane %v1659, %v3705
    %v3707 = vlaneseq
    %v3708 = vshrl.u32 %v3707, 7
    %v3709 = vsub.s32 %v2796, %v3708
    %v3710 = vrot.slane %v1661, %v3709
    %v3711 = vsel %vm2801, %v3710, %v3706
    %v3712 = vlaneseq
    %v3713 = vshrl.u32 %v3712, 7
    %v3714 = vsub.s32 %v2791, %v3713
    %v3715 = vrot.slane %v1663, %v3714
    %v3716 = vlaneseq
    %v3717 = vshrl.u32 %v3716, 7
    %v3718 = vsub.s32 %v2796, %v3717
    %v3719 = vrot.slane %v1665, %v3718
    %v3720 = vsel %vm2801, %v3719, %v3715
    %v3721 = vlaneseq
    %v3722 = vshrl.u32 %v3721, 7
    %v3723 = vsub.s32 %v2791, %v3722
    %v3724 = vrot.slane %v1667, %v3723
    %v3725 = vlaneseq
    %v3726 = vshrl.u32 %v3725, 7
    %v3727 = vsub.s32 %v2796, %v3726
    %v3728 = vrot.slane %v1669, %v3727
    %v3729 = vsel %vm2801, %v3728, %v3724
    %v3730 = vlaneseq
    %v3731 = vshrl.u32 %v3730, 7
    %v3732 = vsub.s32 %v2791, %v3731
    %v3733 = vrot.slane %v1671, %v3732
    %v3734 = vlaneseq
    %v3735 = vshrl.u32 %v3734, 7
    %v3736 = vsub.s32 %v2796, %v3735
    %v3737 = vrot.slane %v1673, %v3736
    %v3738 = vsel %vm2801, %v3737, %v3733
    %v3739 = vlaneseq
    %v3740 = vshrl.u32 %v3739, 7
    %v3741 = vsub.s32 %v2791, %v3740
    %v3742 = vrot.slane %v1675, %v3741
    %v3743 = vlaneseq
    %v3744 = vshrl.u32 %v3743, 7
    %v3745 = vsub.s32 %v2796, %v3744
    %v3746 = vrot.slane %v1677, %v3745
    %v3747 = vsel %vm2801, %v3746, %v3742
    %v3748 = vlaneseq
    %v3749 = vshrl.u32 %v3748, 7
    %v3750 = vsub.s32 %v2791, %v3749
    %v3751 = vrot.slane %v1679, %v3750
    %v3752 = vlaneseq
    %v3753 = vshrl.u32 %v3752, 7
    %v3754 = vsub.s32 %v2796, %v3753
    %v3755 = vrot.slane %v1681, %v3754
    %v3756 = vsel %vm2801, %v3755, %v3751
    %v3757 = vlaneseq
    %v3758 = vshrl.u32 %v3757, 7
    %v3759 = vsub.s32 %v2791, %v3758
    %v3760 = vrot.slane %v1683, %v3759
    %v3761 = vlaneseq
    %v3762 = vshrl.u32 %v3761, 7
    %v3763 = vsub.s32 %v2796, %v3762
    %v3764 = vrot.slane %v1685, %v3763
    %v3765 = vsel %vm2801, %v3764, %v3760
    %v3766 = vlaneseq
    %v3767 = vshrl.u32 %v3766, 7
    %v3768 = vsub.s32 %v2791, %v3767
    %v3769 = vrot.slane %v1687, %v3768
    %v3770 = vlaneseq
    %v3771 = vshrl.u32 %v3770, 7
    %v3772 = vsub.s32 %v2796, %v3771
    %v3773 = vrot.slane %v1689, %v3772
    %v3774 = vsel %vm2801, %v3773, %v3769
    %v3775 = vlaneseq
    %v3776 = vshrl.u32 %v3775, 7
    %v3777 = vsub.s32 %v2791, %v3776
    %v3778 = vrot.slane %v1691, %v3777
    %v3779 = vlaneseq
    %v3780 = vshrl.u32 %v3779, 7
    %v3781 = vsub.s32 %v2796, %v3780
    %v3782 = vrot.slane %v1693, %v3781
    %v3783 = vsel %vm2801, %v3782, %v3778
    %v3784 = vlaneseq
    %v3785 = vshrl.u32 %v3784, 7
    %v3786 = vsub.s32 %v2791, %v3785
    %v3787 = vrot.slane %v1695, %v3786
    %v3788 = vlaneseq
    %v3789 = vshrl.u32 %v3788, 7
    %v3790 = vsub.s32 %v2796, %v3789
    %v3791 = vrot.slane %v1697, %v3790
    %v3792 = vsel %vm2801, %v3791, %v3787
    %v3793 = vlaneseq
    %v3794 = vshrl.u32 %v3793, 7
    %v3795 = vsub.s32 %v2791, %v3794
    %v3796 = vrot.slane %v1699, %v3795
    %v3797 = vlaneseq
    %v3798 = vshrl.u32 %v3797, 7
    %v3799 = vsub.s32 %v2796, %v3798
    %v3800 = vrot.slane %v1701, %v3799
    %v3801 = vsel %vm2801, %v3800, %v3796
    %v3802 = vlaneseq
    %v3803 = vshrl.u32 %v3802, 7
    %v3804 = vsub.s32 %v2791, %v3803
    %v3805 = vrot.slane %v1703, %v3804
    %v3806 = vlaneseq
    %v3807 = vshrl.u32 %v3806, 7
    %v3808 = vsub.s32 %v2796, %v3807
    %v3809 = vrot.slane %v1705, %v3808
    %v3810 = vsel %vm2801, %v3809, %v3805
    %v3811 = vlaneseq
    %v3812 = vshrl.u32 %v3811, 7
    %v3813 = vsub.s32 %v2791, %v3812
    %v3814 = vrot.slane %v1707, %v3813
    %v3815 = vlaneseq
    %v3816 = vshrl.u32 %v3815, 7
    %v3817 = vsub.s32 %v2796, %v3816
    %v3818 = vrot.slane %v1709, %v3817
    %v3819 = vsel %vm2801, %v3818, %v3814
    %v3820 = vlaneseq
    %v3821 = vshrl.u32 %v3820, 7
    %v3822 = vsub.s32 %v2791, %v3821
    %v3823 = vrot.slane %v1711, %v3822
    %v3824 = vlaneseq
    %v3825 = vshrl.u32 %v3824, 7
    %v3826 = vsub.s32 %v2796, %v3825
    %v3827 = vrot.slane %v1713, %v3826
    %v3828 = vsel %vm2801, %v3827, %v3823
    %v3829 = vlaneseq
    %v3830 = vshrl.u32 %v3829, 7
    %v3831 = vsub.s32 %v2791, %v3830
    %v3832 = vrot.slane %v1715, %v3831
    %v3833 = vlaneseq
    %v3834 = vshrl.u32 %v3833, 7
    %v3835 = vsub.s32 %v2796, %v3834
    %v3836 = vrot.slane %v1717, %v3835
    %v3837 = vsel %vm2801, %v3836, %v3832
    %v3838 = vlaneseq
    %v3839 = vshrl.u32 %v3838, 7
    %v3840 = vsub.s32 %v2791, %v3839
    %v3841 = vrot.slane %v1719, %v3840
    %v3842 = vlaneseq
    %v3843 = vshrl.u32 %v3842, 7
    %v3844 = vsub.s32 %v2796, %v3843
    %v3845 = vrot.slane %v1721, %v3844
    %v3846 = vsel %vm2801, %v3845, %v3841
    %v3847 = vlaneseq
    %v3848 = vshrl.u32 %v3847, 7
    %v3849 = vsub.s32 %v2791, %v3848
    %v3850 = vrot.slane %v1723, %v3849
    %v3851 = vlaneseq
    %v3852 = vshrl.u32 %v3851, 7
    %v3853 = vsub.s32 %v2796, %v3852
    %v3854 = vrot.slane %v1725, %v3853
    %v3855 = vsel %vm2801, %v3854, %v3850
    %v3856 = vlaneseq
    %v3857 = vshrl.u32 %v3856, 7
    %v3858 = vsub.s32 %v2791, %v3857
    %v3859 = vrot.slane %v1727, %v3858
    %v3860 = vlaneseq
    %v3861 = vshrl.u32 %v3860, 7
    %v3862 = vsub.s32 %v2796, %v3861
    %v3863 = vrot.slane %v1729, %v3862
    %v3864 = vsel %vm2801, %v3863, %v3859
    %v3865 = vlaneseq
    %v3866 = vshrl.u32 %v3865, 7
    %v3867 = vsub.s32 %v2791, %v3866
    %v3868 = vrot.slane %v1731, %v3867
    %v3869 = vlaneseq
    %v3870 = vshrl.u32 %v3869, 7
    %v3871 = vsub.s32 %v2796, %v3870
    %v3872 = vrot.slane %v1733, %v3871
    %v3873 = vsel %vm2801, %v3872, %v3868
    %v3874 = vlaneseq
    %v3875 = vshrl.u32 %v3874, 7
    %v3876 = vsub.s32 %v2791, %v3875
    %v3877 = vrot.slane %v1735, %v3876
    %v3878 = vlaneseq
    %v3879 = vshrl.u32 %v3878, 7
    %v3880 = vsub.s32 %v2796, %v3879
    %v3881 = vrot.slane %v1737, %v3880
    %v3882 = vsel %vm2801, %v3881, %v3877
    %v3883 = vlaneseq
    %v3884 = vshrl.u32 %v3883, 7
    %v3885 = vsub.s32 %v2791, %v3884
    %v3886 = vrot.slane %v1739, %v3885
    %v3887 = vlaneseq
    %v3888 = vshrl.u32 %v3887, 7
    %v3889 = vsub.s32 %v2796, %v3888
    %v3890 = vrot.slane %v1741, %v3889
    %v3891 = vsel %vm2801, %v3890, %v3886
    %v3892 = vlaneseq
    %v3893 = vshrl.u32 %v3892, 7
    %v3894 = vsub.s32 %v2791, %v3893
    %v3895 = vrot.slane %v1743, %v3894
    %v3896 = vlaneseq
    %v3897 = vshrl.u32 %v3896, 7
    %v3898 = vsub.s32 %v2796, %v3897
    %v3899 = vrot.slane %v1745, %v3898
    %v3900 = vsel %vm2801, %v3899, %v3895
    %v3901 = vlaneseq
    %v3902 = vshrl.u32 %v3901, 7
    %v3903 = vsub.s32 %v2791, %v3902
    %v3904 = vrot.slane %v1747, %v3903
    %v3905 = vlaneseq
    %v3906 = vshrl.u32 %v3905, 7
    %v3907 = vsub.s32 %v2796, %v3906
    %v3908 = vrot.slane %v1749, %v3907
    %v3909 = vsel %vm2801, %v3908, %v3904
    %v3910 = vlaneseq
    %v3911 = vshrl.u32 %v3910, 7
    %v3912 = vsub.s32 %v2791, %v3911
    %v3913 = vrot.slane %v1751, %v3912
    %v3914 = vlaneseq
    %v3915 = vshrl.u32 %v3914, 7
    %v3916 = vsub.s32 %v2796, %v3915
    %v3917 = vrot.slane %v1753, %v3916
    %v3918 = vsel %vm2801, %v3917, %v3913
    %v3919 = vlaneseq
    %v3920 = vshrl.u32 %v3919, 7
    %v3921 = vsub.s32 %v2791, %v3920
    %v3922 = vrot.slane %v1755, %v3921
    %v3923 = vlaneseq
    %v3924 = vshrl.u32 %v3923, 7
    %v3925 = vsub.s32 %v2796, %v3924
    %v3926 = vrot.slane %v1757, %v3925
    %v3927 = vsel %vm2801, %v3926, %v3922
    %v3928 = vlaneseq
    %v3929 = vshrl.u32 %v3928, 7
    %v3930 = vsub.s32 %v2791, %v3929
    %v3931 = vrot.slane %v1759, %v3930
    %v3932 = vlaneseq
    %v3933 = vshrl.u32 %v3932, 7
    %v3934 = vsub.s32 %v2796, %v3933
    %v3935 = vrot.slane %v1761, %v3934
    %v3936 = vsel %vm2801, %v3935, %v3931
    %v3937 = vlaneseq
    %v3938 = vshrl.u32 %v3937, 7
    %v3939 = vsub.s32 %v2791, %v3938
    %v3940 = vrot.slane %v1763, %v3939
    %v3941 = vlaneseq
    %v3942 = vshrl.u32 %v3941, 7
    %v3943 = vsub.s32 %v2796, %v3942
    %v3944 = vrot.slane %v1765, %v3943
    %v3945 = vsel %vm2801, %v3944, %v3940
    %v3946 = vlaneseq
    %v3947 = vshrl.u32 %v3946, 7
    %v3948 = vsub.s32 %v2791, %v3947
    %v3949 = vrot.slane %v1767, %v3948
    %v3950 = vlaneseq
    %v3951 = vshrl.u32 %v3950, 7
    %v3952 = vsub.s32 %v2796, %v3951
    %v3953 = vrot.slane %v1769, %v3952
    %v3954 = vsel %vm2801, %v3953, %v3949
    %v3955 = vlaneseq
    %v3956 = vshrl.u32 %v3955, 7
    %v3957 = vsub.s32 %v2791, %v3956
    %v3958 = vrot.slane %v1771, %v3957
    %v3959 = vlaneseq
    %v3960 = vshrl.u32 %v3959, 7
    %v3961 = vsub.s32 %v2796, %v3960
    %v3962 = vrot.slane %v1773, %v3961
    %v3963 = vsel %vm2801, %v3962, %v3958
    %v3964 = vlaneseq
    %v3965 = vshrl.u32 %v3964, 7
    %v3966 = vsub.s32 %v2791, %v3965
    %v3967 = vrot.slane %v1775, %v3966
    %v3968 = vlaneseq
    %v3969 = vshrl.u32 %v3968, 7
    %v3970 = vsub.s32 %v2796, %v3969
    %v3971 = vrot.slane %v1777, %v3970
    %v3972 = vsel %vm2801, %v3971, %v3967
    %v3973 = vlaneseq
    %v3974 = vshrl.u32 %v3973, 7
    %v3975 = vsub.s32 %v2791, %v3974
    %v3976 = vrot.slane %v1779, %v3975
    %v3977 = vlaneseq
    %v3978 = vshrl.u32 %v3977, 7
    %v3979 = vsub.s32 %v2796, %v3978
    %v3980 = vrot.slane %v1781, %v3979
    %v3981 = vsel %vm2801, %v3980, %v3976
    %v3982 = vlaneseq
    %v3983 = vshrl.u32 %v3982, 7
    %v3984 = vsub.s32 %v2791, %v3983
    %v3985 = vrot.slane %v1783, %v3984
    %v3986 = vlaneseq
    %v3987 = vshrl.u32 %v3986, 7
    %v3988 = vsub.s32 %v2796, %v3987
    %v3989 = vrot.slane %v1785, %v3988
    %v3990 = vsel %vm2801, %v3989, %v3985
    %v3991 = vlaneseq
    %v3992 = vshrl.u32 %v3991, 7
    %v3993 = vsub.s32 %v2791, %v3992
    %v3994 = vrot.slane %v1787, %v3993
    %v3995 = vlaneseq
    %v3996 = vshrl.u32 %v3995, 7
    %v3997 = vsub.s32 %v2796, %v3996
    %v3998 = vrot.slane %v1789, %v3997
    %v3999 = vsel %vm2801, %v3998, %v3994
    %v4000 = vlaneseq
    %v4001 = vshrl.u32 %v4000, 7
    %v4002 = vsub.s32 %v2791, %v4001
    %v4003 = vrot.slane %v1791, %v4002
    %v4004 = vlaneseq
    %v4005 = vshrl.u32 %v4004, 7
    %v4006 = vsub.s32 %v2796, %v4005
    %v4007 = vrot.slane %v1793, %v4006
    %v4008 = vsel %vm2801, %v4007, %v4003
    %v4009 = vlaneseq
    %v4010 = vshrl.u32 %v4009, 7
    %v4011 = vsub.s32 %v2791, %v4010
    %v4012 = vrot.slane %v1795, %v4011
    %v4013 = vlaneseq
    %v4014 = vshrl.u32 %v4013, 7
    %v4015 = vsub.s32 %v2796, %v4014
    %v4016 = vrot.slane %v1797, %v4015
    %v4017 = vsel %vm2801, %v4016, %v4012
    %v4018 = vlaneseq
    %v4019 = vshrl.u32 %v4018, 7
    %v4020 = vsub.s32 %v2791, %v4019
    %v4021 = vrot.slane %v1799, %v4020
    %v4022 = vlaneseq
    %v4023 = vshrl.u32 %v4022, 7
    %v4024 = vsub.s32 %v2796, %v4023
    %v4025 = vrot.slane %v1801, %v4024
    %v4026 = vsel %vm2801, %v4025, %v4021
    %v4027 = vlaneseq
    %v4028 = vshrl.u32 %v4027, 7
    %v4029 = vsub.s32 %v2791, %v4028
    %v4030 = vrot.slane %v1803, %v4029
    %v4031 = vlaneseq
    %v4032 = vshrl.u32 %v4031, 7
    %v4033 = vsub.s32 %v2796, %v4032
    %v4034 = vrot.slane %v1805, %v4033
    %v4035 = vsel %vm2801, %v4034, %v4030
    %v4036 = vlaneseq
    %v4037 = vshrl.u32 %v4036, 7
    %v4038 = vsub.s32 %v2791, %v4037
    %v4039 = vrot.slane %v1807, %v4038
    %v4040 = vlaneseq
    %v4041 = vshrl.u32 %v4040, 7
    %v4042 = vsub.s32 %v2796, %v4041
    %v4043 = vrot.slane %v1809, %v4042
    %v4044 = vsel %vm2801, %v4043, %v4039
    %v4045 = vlaneseq
    %v4046 = vshrl.u32 %v4045, 7
    %v4047 = vsub.s32 %v2791, %v4046
    %v4048 = vrot.slane %v1811, %v4047
    %v4049 = vlaneseq
    %v4050 = vshrl.u32 %v4049, 7
    %v4051 = vsub.s32 %v2796, %v4050
    %v4052 = vrot.slane %v1813, %v4051
    %v4053 = vsel %vm2801, %v4052, %v4048
    %v4054 = vlaneseq
    %v4055 = vshrl.u32 %v4054, 7
    %v4056 = vsub.s32 %v2791, %v4055
    %v4057 = vrot.slane %v1815, %v4056
    %v4058 = vlaneseq
    %v4059 = vshrl.u32 %v4058, 7
    %v4060 = vsub.s32 %v2796, %v4059
    %v4061 = vrot.slane %v1817, %v4060
    %v4062 = vsel %vm2801, %v4061, %v4057
    %v4063 = vlaneseq
    %v4064 = vshrl.u32 %v4063, 7
    %v4065 = vsub.s32 %v2791, %v4064
    %v4066 = vrot.slane %v1819, %v4065
    %v4067 = vlaneseq
    %v4068 = vshrl.u32 %v4067, 7
    %v4069 = vsub.s32 %v2796, %v4068
    %v4070 = vrot.slane %v1821, %v4069
    %v4071 = vsel %vm2801, %v4070, %v4066
    %v4072 = vlaneseq
    %v4073 = vshrl.u32 %v4072, 7
    %v4074 = vsub.s32 %v2791, %v4073
    %v4075 = vrot.slane %v1823, %v4074
    %v4076 = vlaneseq
    %v4077 = vshrl.u32 %v4076, 7
    %v4078 = vsub.s32 %v2796, %v4077
    %v4079 = vrot.slane %v1825, %v4078
    %v4080 = vsel %vm2801, %v4079, %v4075
    %v4081 = vlaneseq
    %v4082 = vshrl.u32 %v4081, 7
    %v4083 = vsub.s32 %v2791, %v4082
    %v4084 = vrot.slane %v1827, %v4083
    %v4085 = vlaneseq
    %v4086 = vshrl.u32 %v4085, 7
    %v4087 = vsub.s32 %v2796, %v4086
    %v4088 = vrot.slane %v1829, %v4087
    %v4089 = vsel %vm2801, %v4088, %v4084
    %v4090 = vlaneseq
    %v4091 = vshrl.u32 %v4090, 7
    %v4092 = vsub.s32 %v2791, %v4091
    %v4093 = vrot.slane %v1831, %v4092
    %v4094 = vlaneseq
    %v4095 = vshrl.u32 %v4094, 7
    %v4096 = vsub.s32 %v2796, %v4095
    %v4097 = vrot.slane %v1833, %v4096
    %v4098 = vsel %vm2801, %v4097, %v4093
    %v4099 = vlaneseq
    %v4100 = vshrl.u32 %v4099, 7
    %v4101 = vsub.s32 %v2791, %v4100
    %v4102 = vrot.slane %v1835, %v4101
    %v4103 = vlaneseq
    %v4104 = vshrl.u32 %v4103, 7
    %v4105 = vsub.s32 %v2796, %v4104
    %v4106 = vrot.slane %v1837, %v4105
    %v4107 = vsel %vm2801, %v4106, %v4102
    %v4108 = vlaneseq
    %v4109 = vshrl.u32 %v4108, 7
    %v4110 = vsub.s32 %v2791, %v4109
    %v4111 = vrot.slane %v1839, %v4110
    %v4112 = vlaneseq
    %v4113 = vshrl.u32 %v4112, 7
    %v4114 = vsub.s32 %v2796, %v4113
    %v4115 = vrot.slane %v1841, %v4114
    %v4116 = vsel %vm2801, %v4115, %v4111
    %v4117 = vlaneseq
    %v4118 = vshrl.u32 %v4117, 7
    %v4119 = vsub.s32 %v2791, %v4118
    %v4120 = vrot.slane %v1843, %v4119
    %v4121 = vlaneseq
    %v4122 = vshrl.u32 %v4121, 7
    %v4123 = vsub.s32 %v2796, %v4122
    %v4124 = vrot.slane %v1845, %v4123
    %v4125 = vsel %vm2801, %v4124, %v4120
    %v4126 = vlaneseq
    %v4127 = vshrl.u32 %v4126, 7
    %v4128 = vsub.s32 %v2791, %v4127
    %v4129 = vrot.slane %v1847, %v4128
    %v4130 = vlaneseq
    %v4131 = vshrl.u32 %v4130, 7
    %v4132 = vsub.s32 %v2796, %v4131
    %v4133 = vrot.slane %v1849, %v4132
    %v4134 = vsel %vm2801, %v4133, %v4129
    %v4135 = vlaneseq
    %v4136 = vshrl.u32 %v4135, 7
    %v4137 = vsub.s32 %v2791, %v4136
    %v4138 = vrot.slane %v1851, %v4137
    %v4139 = vlaneseq
    %v4140 = vshrl.u32 %v4139, 7
    %v4141 = vsub.s32 %v2796, %v4140
    %v4142 = vrot.slane %v1853, %v4141
    %v4143 = vsel %vm2801, %v4142, %v4138
    %v4144 = vlaneseq
    %v4145 = vshrl.u32 %v4144, 7
    %v4146 = vsub.s32 %v2791, %v4145
    %v4147 = vrot.slane %v1855, %v4146
    %v4148 = vlaneseq
    %v4149 = vshrl.u32 %v4148, 7
    %v4150 = vsub.s32 %v2796, %v4149
    %v4151 = vrot.slane %v1857, %v4150
    %v4152 = vsel %vm2801, %v4151, %v4147
    %v4153 = vlaneseq
    %v4154 = vshrl.u32 %v4153, 7
    %v4155 = vsub.s32 %v2791, %v4154
    %v4156 = vrot.slane %v1859, %v4155
    %v4157 = vlaneseq
    %v4158 = vshrl.u32 %v4157, 7
    %v4159 = vsub.s32 %v2796, %v4158
    %v4160 = vrot.slane %v1861, %v4159
    %v4161 = vsel %vm2801, %v4160, %v4156
    %v4162 = vlaneseq
    %v4163 = vshrl.u32 %v4162, 7
    %v4164 = vsub.s32 %v2791, %v4163
    %v4165 = vrot.slane %v1863, %v4164
    %v4166 = vlaneseq
    %v4167 = vshrl.u32 %v4166, 7
    %v4168 = vsub.s32 %v2796, %v4167
    %v4169 = vrot.slane %v1865, %v4168
    %v4170 = vsel %vm2801, %v4169, %v4165
    %v4171 = vlaneseq
    %v4172 = vshrl.u32 %v4171, 7
    %v4173 = vsub.s32 %v2791, %v4172
    %v4174 = vrot.slane %v1867, %v4173
    %v4175 = vlaneseq
    %v4176 = vshrl.u32 %v4175, 7
    %v4177 = vsub.s32 %v2796, %v4176
    %v4178 = vrot.slane %v1869, %v4177
    %v4179 = vsel %vm2801, %v4178, %v4174
    %v4180 = vlaneseq
    %v4181 = vshrl.u32 %v4180, 7
    %v4182 = vsub.s32 %v2791, %v4181
    %v4183 = vrot.slane %v1871, %v4182
    %v4184 = vlaneseq
    %v4185 = vshrl.u32 %v4184, 7
    %v4186 = vsub.s32 %v2796, %v4185
    %v4187 = vrot.slane %v1873, %v4186
    %v4188 = vsel %vm2801, %v4187, %v4183
    %v4189 = vlaneseq
    %v4190 = vshrl.u32 %v4189, 7
    %v4191 = vsub.s32 %v2791, %v4190
    %v4192 = vrot.slane %v1875, %v4191
    %v4193 = vlaneseq
    %v4194 = vshrl.u32 %v4193, 7
    %v4195 = vsub.s32 %v2796, %v4194
    %v4196 = vrot.slane %v1877, %v4195
    %v4197 = vsel %vm2801, %v4196, %v4192
    %v4198 = vlaneseq
    %v4199 = vshrl.u32 %v4198, 7
    %v4200 = vsub.s32 %v2791, %v4199
    %v4201 = vrot.slane %v1879, %v4200
    %v4202 = vlaneseq
    %v4203 = vshrl.u32 %v4202, 7
    %v4204 = vsub.s32 %v2796, %v4203
    %v4205 = vrot.slane %v1881, %v4204
    %v4206 = vsel %vm2801, %v4205, %v4201
    %v4207 = vlaneseq
    %v4208 = vshrl.u32 %v4207, 7
    %v4209 = vsub.s32 %v2791, %v4208
    %v4210 = vrot.slane %v1883, %v4209
    %v4211 = vlaneseq
    %v4212 = vshrl.u32 %v4211, 7
    %v4213 = vsub.s32 %v2796, %v4212
    %v4214 = vrot.slane %v1885, %v4213
    %v4215 = vsel %vm2801, %v4214, %v4210
    %v4216 = vlaneseq
    %v4217 = vshrl.u32 %v4216, 7
    %v4218 = vsub.s32 %v2791, %v4217
    %v4219 = vrot.slane %v1887, %v4218
    %v4220 = vlaneseq
    %v4221 = vshrl.u32 %v4220, 7
    %v4222 = vsub.s32 %v2796, %v4221
    %v4223 = vrot.slane %v1889, %v4222
    %v4224 = vsel %vm2801, %v4223, %v4219
    %v4225 = vlaneseq
    %v4226 = vshrl.u32 %v4225, 7
    %v4227 = vsub.s32 %v2791, %v4226
    %v4228 = vrot.slane %v1891, %v4227
    %v4229 = vlaneseq
    %v4230 = vshrl.u32 %v4229, 7
    %v4231 = vsub.s32 %v2796, %v4230
    %v4232 = vrot.slane %v1893, %v4231
    %v4233 = vsel %vm2801, %v4232, %v4228
    %v4234 = vlaneseq
    %v4235 = vshrl.u32 %v4234, 7
    %v4236 = vsub.s32 %v2791, %v4235
    %v4237 = vrot.slane %v1895, %v4236
    %v4238 = vlaneseq
    %v4239 = vshrl.u32 %v4238, 7
    %v4240 = vsub.s32 %v2796, %v4239
    %v4241 = vrot.slane %v1897, %v4240
    %v4242 = vsel %vm2801, %v4241, %v4237
    %v4243 = vlaneseq
    %v4244 = vshrl.u32 %v4243, 7
    %v4245 = vsub.s32 %v2791, %v4244
    %v4246 = vrot.slane %v1899, %v4245
    %v4247 = vlaneseq
    %v4248 = vshrl.u32 %v4247, 7
    %v4249 = vsub.s32 %v2796, %v4248
    %v4250 = vrot.slane %v1901, %v4249
    %v4251 = vsel %vm2801, %v4250, %v4246
    %v4252 = vlaneseq
    %v4253 = vshrl.u32 %v4252, 7
    %v4254 = vsub.s32 %v2791, %v4253
    %v4255 = vrot.slane %v1903, %v4254
    %v4256 = vlaneseq
    %v4257 = vshrl.u32 %v4256, 7
    %v4258 = vsub.s32 %v2796, %v4257
    %v4259 = vrot.slane %v1905, %v4258
    %v4260 = vsel %vm2801, %v4259, %v4255
    %v4261 = vlaneseq
    %v4262 = vshrl.u32 %v4261, 7
    %v4263 = vsub.s32 %v2791, %v4262
    %v4264 = vrot.slane %v1907, %v4263
    %v4265 = vlaneseq
    %v4266 = vshrl.u32 %v4265, 7
    %v4267 = vsub.s32 %v2796, %v4266
    %v4268 = vrot.slane %v1909, %v4267
    %v4269 = vsel %vm2801, %v4268, %v4264
    %v4270 = vlaneseq
    %v4271 = vshrl.u32 %v4270, 7
    %v4272 = vsub.s32 %v2791, %v4271
    %v4273 = vrot.slane %v1911, %v4272
    %v4274 = vlaneseq
    %v4275 = vshrl.u32 %v4274, 7
    %v4276 = vsub.s32 %v2796, %v4275
    %v4277 = vrot.slane %v1913, %v4276
    %v4278 = vsel %vm2801, %v4277, %v4273
    %v4279 = vlaneseq
    %v4280 = vshrl.u32 %v4279, 7
    %v4281 = vsub.s32 %v2791, %v4280
    %v4282 = vrot.slane %v1915, %v4281
    %v4283 = vlaneseq
    %v4284 = vshrl.u32 %v4283, 7
    %v4285 = vsub.s32 %v2796, %v4284
    %v4286 = vrot.slane %v1917, %v4285
    %v4287 = vsel %vm2801, %v4286, %v4282
    %v4288 = vlaneseq
    %v4289 = vshrl.u32 %v4288, 7
    %v4290 = vsub.s32 %v2791, %v4289
    %v4291 = vrot.slane %v1919, %v4290
    %v4292 = vlaneseq
    %v4293 = vshrl.u32 %v4292, 7
    %v4294 = vsub.s32 %v2796, %v4293
    %v4295 = vrot.slane %v1921, %v4294
    %v4296 = vsel %vm2801, %v4295, %v4291
    %v4297 = vlaneseq
    %v4298 = vshrl.u32 %v4297, 7
    %v4299 = vsub.s32 %v2791, %v4298
    %v4300 = vrot.slane %v1923, %v4299
    %v4301 = vlaneseq
    %v4302 = vshrl.u32 %v4301, 7
    %v4303 = vsub.s32 %v2796, %v4302
    %v4304 = vrot.slane %v1925, %v4303
    %v4305 = vsel %vm2801, %v4304, %v4300
    %v4306 = vlaneseq
    %v4307 = vshrl.u32 %v4306, 7
    %v4308 = vsub.s32 %v2791, %v4307
    %v4309 = vrot.slane %v1927, %v4308
    %v4310 = vlaneseq
    %v4311 = vshrl.u32 %v4310, 7
    %v4312 = vsub.s32 %v2796, %v4311
    %v4313 = vrot.slane %v1929, %v4312
    %v4314 = vsel %vm2801, %v4313, %v4309
    %v4315 = vlaneseq
    %v4316 = vshrl.u32 %v4315, 7
    %v4317 = vsub.s32 %v2791, %v4316
    %v4318 = vrot.slane %v1931, %v4317
    %v4319 = vlaneseq
    %v4320 = vshrl.u32 %v4319, 7
    %v4321 = vsub.s32 %v2796, %v4320
    %v4322 = vrot.slane %v1933, %v4321
    %v4323 = vsel %vm2801, %v4322, %v4318
    %v4324 = vlaneseq
    %v4325 = vshrl.u32 %v4324, 7
    %v4326 = vsub.s32 %v2791, %v4325
    %v4327 = vrot.slane %v1935, %v4326
    %v4328 = vlaneseq
    %v4329 = vshrl.u32 %v4328, 7
    %v4330 = vsub.s32 %v2796, %v4329
    %v4331 = vrot.slane %v1937, %v4330
    %v4332 = vsel %vm2801, %v4331, %v4327
    %v4333 = vlaneseq
    %v4334 = vshrl.u32 %v4333, 7
    %v4335 = vsub.s32 %v2791, %v4334
    %v4336 = vrot.slane %v1939, %v4335
    %v4337 = vlaneseq
    %v4338 = vshrl.u32 %v4337, 7
    %v4339 = vsub.s32 %v2796, %v4338
    %v4340 = vrot.slane %v1941, %v4339
    %v4341 = vsel %vm2801, %v4340, %v4336
    %v4342 = vlaneseq
    %v4343 = vshrl.u32 %v4342, 7
    %v4344 = vsub.s32 %v2791, %v4343
    %v4345 = vrot.slane %v1943, %v4344
    %v4346 = vlaneseq
    %v4347 = vshrl.u32 %v4346, 7
    %v4348 = vsub.s32 %v2796, %v4347
    %v4349 = vrot.slane %v1945, %v4348
    %v4350 = vsel %vm2801, %v4349, %v4345
    %v4351 = vlaneseq
    %v4352 = vshrl.u32 %v4351, 7
    %v4353 = vsub.s32 %v2791, %v4352
    %v4354 = vrot.slane %v1947, %v4353
    %v4355 = vlaneseq
    %v4356 = vshrl.u32 %v4355, 7
    %v4357 = vsub.s32 %v2796, %v4356
    %v4358 = vrot.slane %v1949, %v4357
    %v4359 = vsel %vm2801, %v4358, %v4354
    %v4360 = vlaneseq
    %v4361 = vshrl.u32 %v4360, 7
    %v4362 = vsub.s32 %v2791, %v4361
    %v4363 = vrot.slane %v1951, %v4362
    %v4364 = vlaneseq
    %v4365 = vshrl.u32 %v4364, 7
    %v4366 = vsub.s32 %v2796, %v4365
    %v4367 = vrot.slane %v1953, %v4366
    %v4368 = vsel %vm2801, %v4367, %v4363
    %v4369 = vlaneseq
    %v4370 = vshrl.u32 %v4369, 7
    %v4371 = vsub.s32 %v2791, %v4370
    %v4372 = vrot.slane %v1955, %v4371
    %v4373 = vlaneseq
    %v4374 = vshrl.u32 %v4373, 7
    %v4375 = vsub.s32 %v2796, %v4374
    %v4376 = vrot.slane %v1957, %v4375
    %v4377 = vsel %vm2801, %v4376, %v4372
    %v4378 = vlaneseq
    %v4379 = vshrl.u32 %v4378, 7
    %v4380 = vsub.s32 %v2791, %v4379
    %v4381 = vrot.slane %v1959, %v4380
    %v4382 = vlaneseq
    %v4383 = vshrl.u32 %v4382, 7
    %v4384 = vsub.s32 %v2796, %v4383
    %v4385 = vrot.slane %v1961, %v4384
    %v4386 = vsel %vm2801, %v4385, %v4381
    %v4387 = vlaneseq
    %v4388 = vshrl.u32 %v4387, 7
    %v4389 = vsub.s32 %v2791, %v4388
    %v4390 = vrot.slane %v1963, %v4389
    %v4391 = vlaneseq
    %v4392 = vshrl.u32 %v4391, 7
    %v4393 = vsub.s32 %v2796, %v4392
    %v4394 = vrot.slane %v1965, %v4393
    %v4395 = vsel %vm2801, %v4394, %v4390
    %v4396 = vlaneseq
    %v4397 = vshrl.u32 %v4396, 7
    %v4398 = vsub.s32 %v2791, %v4397
    %v4399 = vrot.slane %v1967, %v4398
    %v4400 = vlaneseq
    %v4401 = vshrl.u32 %v4400, 7
    %v4402 = vsub.s32 %v2796, %v4401
    %v4403 = vrot.slane %v1969, %v4402
    %v4404 = vsel %vm2801, %v4403, %v4399
    %v4405 = vlaneseq
    %v4406 = vshrl.u32 %v4405, 7
    %v4407 = vsub.s32 %v2791, %v4406
    %v4408 = vrot.slane %v1971, %v4407
    %v4409 = vlaneseq
    %v4410 = vshrl.u32 %v4409, 7
    %v4411 = vsub.s32 %v2796, %v4410
    %v4412 = vrot.slane %v1973, %v4411
    %v4413 = vsel %vm2801, %v4412, %v4408
    %v4414 = vlaneseq
    %v4415 = vshrl.u32 %v4414, 7
    %v4416 = vsub.s32 %v2791, %v4415
    %v4417 = vrot.slane %v1975, %v4416
    %v4418 = vlaneseq
    %v4419 = vshrl.u32 %v4418, 7
    %v4420 = vsub.s32 %v2796, %v4419
    %v4421 = vrot.slane %v1977, %v4420
    %v4422 = vsel %vm2801, %v4421, %v4417
    %v4423 = vlaneseq
    %v4424 = vshrl.u32 %v4423, 7
    %v4425 = vsub.s32 %v2791, %v4424
    %v4426 = vrot.slane %v1979, %v4425
    %v4427 = vlaneseq
    %v4428 = vshrl.u32 %v4427, 7
    %v4429 = vsub.s32 %v2796, %v4428
    %v4430 = vrot.slane %v1981, %v4429
    %v4431 = vsel %vm2801, %v4430, %v4426
    %v4432 = vlaneseq
    %v4433 = vshrl.u32 %v4432, 7
    %v4434 = vsub.s32 %v2791, %v4433
    %v4435 = vrot.slane %v1983, %v4434
    %v4436 = vlaneseq
    %v4437 = vshrl.u32 %v4436, 7
    %v4438 = vsub.s32 %v2796, %v4437
    %v4439 = vrot.slane %v1985, %v4438
    %v4440 = vsel %vm2801, %v4439, %v4435
    %v4441 = vlaneseq
    %v4442 = vshrl.u32 %v4441, 7
    %v4443 = vsub.s32 %v2791, %v4442
    %v4444 = vrot.slane %v1987, %v4443
    %v4445 = vlaneseq
    %v4446 = vshrl.u32 %v4445, 7
    %v4447 = vsub.s32 %v2796, %v4446
    %v4448 = vrot.slane %v1989, %v4447
    %v4449 = vsel %vm2801, %v4448, %v4444
    %v4450 = vlaneseq
    %v4451 = vshrl.u32 %v4450, 7
    %v4452 = vsub.s32 %v2791, %v4451
    %v4453 = vrot.slane %v1991, %v4452
    %v4454 = vlaneseq
    %v4455 = vshrl.u32 %v4454, 7
    %v4456 = vsub.s32 %v2796, %v4455
    %v4457 = vrot.slane %v1993, %v4456
    %v4458 = vsel %vm2801, %v4457, %v4453
    %v4459 = vlaneseq
    %v4460 = vshrl.u32 %v4459, 7
    %v4461 = vsub.s32 %v2791, %v4460
    %v4462 = vrot.slane %v1995, %v4461
    %v4463 = vlaneseq
    %v4464 = vshrl.u32 %v4463, 7
    %v4465 = vsub.s32 %v2796, %v4464
    %v4466 = vrot.slane %v1997, %v4465
    %v4467 = vsel %vm2801, %v4466, %v4462
    %v4468 = vlaneseq
    %v4469 = vshrl.u32 %v4468, 7
    %v4470 = vsub.s32 %v2791, %v4469
    %v4471 = vrot.slane %v1999, %v4470
    %v4472 = vlaneseq
    %v4473 = vshrl.u32 %v4472, 7
    %v4474 = vsub.s32 %v2796, %v4473
    %v4475 = vrot.slane %v2001, %v4474
    %v4476 = vsel %vm2801, %v4475, %v4471
    %v4477 = vlaneseq
    %v4478 = vshrl.u32 %v4477, 7
    %v4479 = vsub.s32 %v2791, %v4478
    %v4480 = vrot.slane %v2003, %v4479
    %v4481 = vlaneseq
    %v4482 = vshrl.u32 %v4481, 7
    %v4483 = vsub.s32 %v2796, %v4482
    %v4484 = vrot.slane %v2005, %v4483
    %v4485 = vsel %vm2801, %v4484, %v4480
    %v4486 = vlaneseq
    %v4487 = vshrl.u32 %v4486, 7
    %v4488 = vsub.s32 %v2791, %v4487
    %v4489 = vrot.slane %v2007, %v4488
    %v4490 = vlaneseq
    %v4491 = vshrl.u32 %v4490, 7
    %v4492 = vsub.s32 %v2796, %v4491
    %v4493 = vrot.slane %v2009, %v4492
    %v4494 = vsel %vm2801, %v4493, %v4489
    %v4495 = vlaneseq
    %v4496 = vshrl.u32 %v4495, 7
    %v4497 = vsub.s32 %v2791, %v4496
    %v4498 = vrot.slane %v2011, %v4497
    %v4499 = vlaneseq
    %v4500 = vshrl.u32 %v4499, 7
    %v4501 = vsub.s32 %v2796, %v4500
    %v4502 = vrot.slane %v2013, %v4501
    %v4503 = vsel %vm2801, %v4502, %v4498
    %v4504 = vlaneseq
    %v4505 = vshrl.u32 %v4504, 7
    %v4506 = vsub.s32 %v2791, %v4505
    %v4507 = vrot.slane %v2015, %v4506
    %v4508 = vlaneseq
    %v4509 = vshrl.u32 %v4508, 7
    %v4510 = vsub.s32 %v2796, %v4509
    %v4511 = vrot.slane %v2017, %v4510
    %v4512 = vsel %vm2801, %v4511, %v4507
    %v4513 = vlaneseq
    %v4514 = vshrl.u32 %v4513, 7
    %v4515 = vsub.s32 %v2791, %v4514
    %v4516 = vrot.slane %v2019, %v4515
    %v4517 = vlaneseq
    %v4518 = vshrl.u32 %v4517, 7
    %v4519 = vsub.s32 %v2796, %v4518
    %v4520 = vrot.slane %v2021, %v4519
    %v4521 = vsel %vm2801, %v4520, %v4516
    %v4522 = vlaneseq
    %v4523 = vshrl.u32 %v4522, 7
    %v4524 = vsub.s32 %v2791, %v4523
    %v4525 = vrot.slane %v2023, %v4524
    %v4526 = vlaneseq
    %v4527 = vshrl.u32 %v4526, 7
    %v4528 = vsub.s32 %v2796, %v4527
    %v4529 = vrot.slane %v2025, %v4528
    %v4530 = vsel %vm2801, %v4529, %v4525
    %v4531 = vlaneseq
    %v4532 = vshrl.u32 %v4531, 7
    %v4533 = vsub.s32 %v2791, %v4532
    %v4534 = vrot.slane %v2027, %v4533
    %v4535 = vlaneseq
    %v4536 = vshrl.u32 %v4535, 7
    %v4537 = vsub.s32 %v2796, %v4536
    %v4538 = vrot.slane %v2029, %v4537
    %v4539 = vsel %vm2801, %v4538, %v4534
    %v4540 = vlaneseq
    %v4541 = vshrl.u32 %v4540, 7
    %v4542 = vsub.s32 %v2791, %v4541
    %v4543 = vrot.slane %v2031, %v4542
    %v4544 = vlaneseq
    %v4545 = vshrl.u32 %v4544, 7
    %v4546 = vsub.s32 %v2796, %v4545
    %v4547 = vrot.slane %v2033, %v4546
    %v4548 = vsel %vm2801, %v4547, %v4543
    %v4549 = vlaneseq
    %v4550 = vshrl.u32 %v4549, 7
    %v4551 = vsub.s32 %v2791, %v4550
    %v4552 = vrot.slane %v2035, %v4551
    %v4553 = vlaneseq
    %v4554 = vshrl.u32 %v4553, 7
    %v4555 = vsub.s32 %v2796, %v4554
    %v4556 = vrot.slane %v2037, %v4555
    %v4557 = vsel %vm2801, %v4556, %v4552
    %v4558 = vlaneseq
    %v4559 = vshrl.u32 %v4558, 7
    %v4560 = vsub.s32 %v2791, %v4559
    %v4561 = vrot.slane %v2039, %v4560
    %v4562 = vlaneseq
    %v4563 = vshrl.u32 %v4562, 7
    %v4564 = vsub.s32 %v2796, %v4563
    %v4565 = vrot.slane %v2041, %v4564
    %v4566 = vsel %vm2801, %v4565, %v4561
    %v4567 = vlaneseq
    %v4568 = vshrl.u32 %v4567, 7
    %v4569 = vsub.s32 %v2791, %v4568
    %v4570 = vrot.slane %v2043, %v4569
    %v4571 = vlaneseq
    %v4572 = vshrl.u32 %v4571, 7
    %v4573 = vsub.s32 %v2796, %v4572
    %v4574 = vrot.slane %v2045, %v4573
    %v4575 = vsel %vm2801, %v4574, %v4570
    %v4576 = vlaneseq
    %v4577 = vshrl.u32 %v4576, 7
    %v4578 = vsub.s32 %v2791, %v4577
    %v4579 = vrot.slane %v2047, %v4578
    %v4580 = vlaneseq
    %v4581 = vshrl.u32 %v4580, 7
    %v4582 = vsub.s32 %v2796, %v4581
    %v4583 = vrot.slane %v2049, %v4582
    %v4584 = vsel %vm2801, %v4583, %v4579
    %v4585 = vlaneseq
    %v4586 = vshrl.u32 %v4585, 7
    %v4587 = vsub.s32 %v2791, %v4586
    %v4588 = vrot.slane %v2051, %v4587
    %v4589 = vlaneseq
    %v4590 = vshrl.u32 %v4589, 7
    %v4591 = vsub.s32 %v2796, %v4590
    %v4592 = vrot.slane %v2053, %v4591
    %v4593 = vsel %vm2801, %v4592, %v4588
    %v4594 = vlaneseq
    %v4595 = vshrl.u32 %v4594, 7
    %v4596 = vsub.s32 %v2791, %v4595
    %v4597 = vrot.slane %v2055, %v4596
    %v4598 = vlaneseq
    %v4599 = vshrl.u32 %v4598, 7
    %v4600 = vsub.s32 %v2796, %v4599
    %v4601 = vrot.slane %v2057, %v4600
    %v4602 = vsel %vm2801, %v4601, %v4597
    %v4603 = vlaneseq
    %v4604 = vshrl.u32 %v4603, 7
    %v4605 = vsub.s32 %v2791, %v4604
    %v4606 = vrot.slane %v2059, %v4605
    %v4607 = vlaneseq
    %v4608 = vshrl.u32 %v4607, 7
    %v4609 = vsub.s32 %v2796, %v4608
    %v4610 = vrot.slane %v2061, %v4609
    %v4611 = vsel %vm2801, %v4610, %v4606
    %v4612 = vlaneseq
    %v4613 = vshrl.u32 %v4612, 7
    %v4614 = vsub.s32 %v2791, %v4613
    %v4615 = vrot.slane %v2063, %v4614
    %v4616 = vlaneseq
    %v4617 = vshrl.u32 %v4616, 7
    %v4618 = vsub.s32 %v2796, %v4617
    %v4619 = vrot.slane %v2065, %v4618
    %v4620 = vsel %vm2801, %v4619, %v4615
    %v4621 = vlaneseq
    %v4622 = vshrl.u32 %v4621, 7
    %v4623 = vsub.s32 %v2791, %v4622
    %v4624 = vrot.slane %v2067, %v4623
    %v4625 = vlaneseq
    %v4626 = vshrl.u32 %v4625, 7
    %v4627 = vsub.s32 %v2796, %v4626
    %v4628 = vrot.slane %v2069, %v4627
    %v4629 = vsel %vm2801, %v4628, %v4624
    %v4630 = vlaneseq
    %v4631 = vshrl.u32 %v4630, 7
    %v4632 = vsub.s32 %v2791, %v4631
    %v4633 = vrot.slane %v2071, %v4632
    %v4634 = vlaneseq
    %v4635 = vshrl.u32 %v4634, 7
    %v4636 = vsub.s32 %v2796, %v4635
    %v4637 = vrot.slane %v2073, %v4636
    %v4638 = vsel %vm2801, %v4637, %v4633
    %v4639 = vlaneseq
    %v4640 = vshrl.u32 %v4639, 7
    %v4641 = vsub.s32 %v2791, %v4640
    %v4642 = vrot.slane %v2075, %v4641
    %v4643 = vlaneseq
    %v4644 = vshrl.u32 %v4643, 7
    %v4645 = vsub.s32 %v2796, %v4644
    %v4646 = vrot.slane %v2077, %v4645
    %v4647 = vsel %vm2801, %v4646, %v4642
    %v4648 = vlaneseq
    %v4649 = vshrl.u32 %v4648, 7
    %v4650 = vsub.s32 %v2791, %v4649
    %v4651 = vrot.slane %v2079, %v4650
    %v4652 = vlaneseq
    %v4653 = vshrl.u32 %v4652, 7
    %v4654 = vsub.s32 %v2796, %v4653
    %v4655 = vrot.slane %v2081, %v4654
    %v4656 = vsel %vm2801, %v4655, %v4651
    %v4657 = vlaneseq
    %v4658 = vshrl.u32 %v4657, 7
    %v4659 = vsub.s32 %v2791, %v4658
    %v4660 = vrot.slane %v2083, %v4659
    %v4661 = vlaneseq
    %v4662 = vshrl.u32 %v4661, 7
    %v4663 = vsub.s32 %v2796, %v4662
    %v4664 = vrot.slane %v2085, %v4663
    %v4665 = vsel %vm2801, %v4664, %v4660
    %v4666 = vlaneseq
    %v4667 = vshrl.u32 %v4666, 7
    %v4668 = vsub.s32 %v2791, %v4667
    %v4669 = vrot.slane %v2087, %v4668
    %v4670 = vlaneseq
    %v4671 = vshrl.u32 %v4670, 7
    %v4672 = vsub.s32 %v2796, %v4671
    %v4673 = vrot.slane %v2089, %v4672
    %v4674 = vsel %vm2801, %v4673, %v4669
    %v4675 = vlaneseq
    %v4676 = vshrl.u32 %v4675, 7
    %v4677 = vsub.s32 %v2791, %v4676
    %v4678 = vrot.slane %v2091, %v4677
    %v4679 = vlaneseq
    %v4680 = vshrl.u32 %v4679, 7
    %v4681 = vsub.s32 %v2796, %v4680
    %v4682 = vrot.slane %v2093, %v4681
    %v4683 = vsel %vm2801, %v4682, %v4678
    %v4684 = vlaneseq
    %v4685 = vshrl.u32 %v4684, 7
    %v4686 = vsub.s32 %v2791, %v4685
    %v4687 = vrot.slane %v2095, %v4686
    %v4688 = vlaneseq
    %v4689 = vshrl.u32 %v4688, 7
    %v4690 = vsub.s32 %v2796, %v4689
    %v4691 = vrot.slane %v2097, %v4690
    %v4692 = vsel %vm2801, %v4691, %v4687
    %v4693 = vlaneseq
    %v4694 = vshrl.u32 %v4693, 7
    %v4695 = vsub.s32 %v2791, %v4694
    %v4696 = vrot.slane %v2099, %v4695
    %v4697 = vlaneseq
    %v4698 = vshrl.u32 %v4697, 7
    %v4699 = vsub.s32 %v2796, %v4698
    %v4700 = vrot.slane %v2101, %v4699
    %v4701 = vsel %vm2801, %v4700, %v4696
    %v4702 = vlaneseq
    %v4703 = vshrl.u32 %v4702, 7
    %v4704 = vsub.s32 %v2791, %v4703
    %v4705 = vrot.slane %v2103, %v4704
    %v4706 = vlaneseq
    %v4707 = vshrl.u32 %v4706, 7
    %v4708 = vsub.s32 %v2796, %v4707
    %v4709 = vrot.slane %v2105, %v4708
    %v4710 = vsel %vm2801, %v4709, %v4705
    %v4711 = vlaneseq
    %v4712 = vshrl.u32 %v4711, 7
    %v4713 = vsub.s32 %v2791, %v4712
    %v4714 = vrot.slane %v2107, %v4713
    %v4715 = vlaneseq
    %v4716 = vshrl.u32 %v4715, 7
    %v4717 = vsub.s32 %v2796, %v4716
    %v4718 = vrot.slane %v2109, %v4717
    %v4719 = vsel %vm2801, %v4718, %v4714
    %v4720 = vlaneseq
    %v4721 = vshrl.u32 %v4720, 7
    %v4722 = vsub.s32 %v2791, %v4721
    %v4723 = vrot.slane %v2111, %v4722
    %v4724 = vlaneseq
    %v4725 = vshrl.u32 %v4724, 7
    %v4726 = vsub.s32 %v2796, %v4725
    %v4727 = vrot.slane %v2113, %v4726
    %v4728 = vsel %vm2801, %v4727, %v4723
    %v4729 = vlaneseq
    %v4730 = vshrl.u32 %v4729, 7
    %v4731 = vsub.s32 %v2791, %v4730
    %v4732 = vrot.slane %v2115, %v4731
    %v4733 = vlaneseq
    %v4734 = vshrl.u32 %v4733, 7
    %v4735 = vsub.s32 %v2796, %v4734
    %v4736 = vrot.slane %v2117, %v4735
    %v4737 = vsel %vm2801, %v4736, %v4732
    %v4738 = vlaneseq
    %v4739 = vshrl.u32 %v4738, 7
    %v4740 = vsub.s32 %v2791, %v4739
    %v4741 = vrot.slane %v2119, %v4740
    %v4742 = vlaneseq
    %v4743 = vshrl.u32 %v4742, 7
    %v4744 = vsub.s32 %v2796, %v4743
    %v4745 = vrot.slane %v2121, %v4744
    %v4746 = vsel %vm2801, %v4745, %v4741
    %v4747 = vlaneseq
    %v4748 = vshrl.u32 %v4747, 7
    %v4749 = vsub.s32 %v2791, %v4748
    %v4750 = vrot.slane %v2123, %v4749
    %v4751 = vlaneseq
    %v4752 = vshrl.u32 %v4751, 7
    %v4753 = vsub.s32 %v2796, %v4752
    %v4754 = vrot.slane %v2125, %v4753
    %v4755 = vsel %vm2801, %v4754, %v4750
    %v4756 = vlaneseq
    %v4757 = vshrl.u32 %v4756, 7
    %v4758 = vsub.s32 %v2791, %v4757
    %v4759 = vrot.slane %v2127, %v4758
    %v4760 = vlaneseq
    %v4761 = vshrl.u32 %v4760, 7
    %v4762 = vsub.s32 %v2796, %v4761
    %v4763 = vrot.slane %v2129, %v4762
    %v4764 = vsel %vm2801, %v4763, %v4759
    %v4765 = vlaneseq
    %v4766 = vshrl.u32 %v4765, 7
    %v4767 = vsub.s32 %v2791, %v4766
    %v4768 = vrot.slane %v2131, %v4767
    %v4769 = vlaneseq
    %v4770 = vshrl.u32 %v4769, 7
    %v4771 = vsub.s32 %v2796, %v4770
    %v4772 = vrot.slane %v2133, %v4771
    %v4773 = vsel %vm2801, %v4772, %v4768
    %v4774 = vlaneseq
    %v4775 = vshrl.u32 %v4774, 7
    %v4776 = vsub.s32 %v2791, %v4775
    %v4777 = vrot.slane %v2135, %v4776
    %v4778 = vlaneseq
    %v4779 = vshrl.u32 %v4778, 7
    %v4780 = vsub.s32 %v2796, %v4779
    %v4781 = vrot.slane %v2137, %v4780
    %v4782 = vsel %vm2801, %v4781, %v4777
    %v4783 = vlaneseq
    %v4784 = vshrl.u32 %v4783, 7
    %v4785 = vsub.s32 %v2791, %v4784
    %v4786 = vrot.slane %v2139, %v4785
    %v4787 = vlaneseq
    %v4788 = vshrl.u32 %v4787, 7
    %v4789 = vsub.s32 %v2796, %v4788
    %v4790 = vrot.slane %v2141, %v4789
    %v4791 = vsel %vm2801, %v4790, %v4786
    %v4792 = vlaneseq
    %v4793 = vshrl.u32 %v4792, 7
    %v4794 = vsub.s32 %v2791, %v4793
    %v4795 = vrot.slane %v2143, %v4794
    %v4796 = vlaneseq
    %v4797 = vshrl.u32 %v4796, 7
    %v4798 = vsub.s32 %v2796, %v4797
    %v4799 = vrot.slane %v2145, %v4798
    %v4800 = vsel %vm2801, %v4799, %v4795
    %v4801 = vlaneseq
    %v4802 = vshrl.u32 %v4801, 7
    %v4803 = vsub.s32 %v2791, %v4802
    %v4804 = vrot.slane %v2147, %v4803
    %v4805 = vlaneseq
    %v4806 = vshrl.u32 %v4805, 7
    %v4807 = vsub.s32 %v2796, %v4806
    %v4808 = vrot.slane %v2149, %v4807
    %v4809 = vsel %vm2801, %v4808, %v4804
    %v4810 = vlaneseq
    %v4811 = vshrl.u32 %v4810, 7
    %v4812 = vsub.s32 %v2791, %v4811
    %v4813 = vrot.slane %v2151, %v4812
    %v4814 = vlaneseq
    %v4815 = vshrl.u32 %v4814, 7
    %v4816 = vsub.s32 %v2796, %v4815
    %v4817 = vrot.slane %v2153, %v4816
    %v4818 = vsel %vm2801, %v4817, %v4813
    %v4819 = vlaneseq
    %v4820 = vshrl.u32 %v4819, 7
    %v4821 = vsub.s32 %v2791, %v4820
    %v4822 = vrot.slane %v2155, %v4821
    %v4823 = vlaneseq
    %v4824 = vshrl.u32 %v4823, 7
    %v4825 = vsub.s32 %v2796, %v4824
    %v4826 = vrot.slane %v2157, %v4825
    %v4827 = vsel %vm2801, %v4826, %v4822
    %v4828 = vlaneseq
    %v4829 = vshrl.u32 %v4828, 7
    %v4830 = vsub.s32 %v2791, %v4829
    %v4831 = vrot.slane %v2159, %v4830
    %v4832 = vlaneseq
    %v4833 = vshrl.u32 %v4832, 7
    %v4834 = vsub.s32 %v2796, %v4833
    %v4835 = vrot.slane %v2161, %v4834
    %v4836 = vsel %vm2801, %v4835, %v4831
    %v4837 = vlaneseq
    %v4838 = vshrl.u32 %v4837, 7
    %v4839 = vsub.s32 %v2791, %v4838
    %v4840 = vrot.slane %v2163, %v4839
    %v4841 = vlaneseq
    %v4842 = vshrl.u32 %v4841, 7
    %v4843 = vsub.s32 %v2796, %v4842
    %v4844 = vrot.slane %v2165, %v4843
    %v4845 = vsel %vm2801, %v4844, %v4840
    %v4846 = vlaneseq
    %v4847 = vshrl.u32 %v4846, 7
    %v4848 = vsub.s32 %v2791, %v4847
    %v4849 = vrot.slane %v2167, %v4848
    %v4850 = vlaneseq
    %v4851 = vshrl.u32 %v4850, 7
    %v4852 = vsub.s32 %v2796, %v4851
    %v4853 = vrot.slane %v2169, %v4852
    %v4854 = vsel %vm2801, %v4853, %v4849
    %v4855 = vlaneseq
    %v4856 = vshrl.u32 %v4855, 7
    %v4857 = vsub.s32 %v2791, %v4856
    %v4858 = vrot.slane %v2171, %v4857
    %v4859 = vlaneseq
    %v4860 = vshrl.u32 %v4859, 7
    %v4861 = vsub.s32 %v2796, %v4860
    %v4862 = vrot.slane %v2173, %v4861
    %v4863 = vsel %vm2801, %v4862, %v4858
    %v4864 = vlaneseq
    %v4865 = vshrl.u32 %v4864, 7
    %v4866 = vsub.s32 %v2791, %v4865
    %v4867 = vrot.slane %v2175, %v4866
    %v4868 = vlaneseq
    %v4869 = vshrl.u32 %v4868, 7
    %v4870 = vsub.s32 %v2796, %v4869
    %v4871 = vrot.slane %v2177, %v4870
    %v4872 = vsel %vm2801, %v4871, %v4867
    %v4873 = vlaneseq
    %v4874 = vshrl.u32 %v4873, 7
    %v4875 = vsub.s32 %v2791, %v4874
    %v4876 = vrot.slane %v2179, %v4875
    %v4877 = vlaneseq
    %v4878 = vshrl.u32 %v4877, 7
    %v4879 = vsub.s32 %v2796, %v4878
    %v4880 = vrot.slane %v2181, %v4879
    %v4881 = vsel %vm2801, %v4880, %v4876
    %v4882 = vlaneseq
    %v4883 = vshrl.u32 %v4882, 7
    %v4884 = vsub.s32 %v2791, %v4883
    %v4885 = vrot.slane %v2183, %v4884
    %v4886 = vlaneseq
    %v4887 = vshrl.u32 %v4886, 7
    %v4888 = vsub.s32 %v2796, %v4887
    %v4889 = vrot.slane %v2185, %v4888
    %v4890 = vsel %vm2801, %v4889, %v4885
    %v4891 = vlaneseq
    %v4892 = vshrl.u32 %v4891, 7
    %v4893 = vsub.s32 %v2791, %v4892
    %v4894 = vrot.slane %v2187, %v4893
    %v4895 = vlaneseq
    %v4896 = vshrl.u32 %v4895, 7
    %v4897 = vsub.s32 %v2796, %v4896
    %v4898 = vrot.slane %v2189, %v4897
    %v4899 = vsel %vm2801, %v4898, %v4894
    %v4900 = vlaneseq
    %v4901 = vshrl.u32 %v4900, 7
    %v4902 = vsub.s32 %v2791, %v4901
    %v4903 = vrot.slane %v2191, %v4902
    %v4904 = vlaneseq
    %v4905 = vshrl.u32 %v4904, 7
    %v4906 = vsub.s32 %v2796, %v4905
    %v4907 = vrot.slane %v2193, %v4906
    %v4908 = vsel %vm2801, %v4907, %v4903
    %v4909 = vlaneseq
    %v4910 = vshrl.u32 %v4909, 7
    %v4911 = vsub.s32 %v2791, %v4910
    %v4912 = vrot.slane %v2195, %v4911
    %v4913 = vlaneseq
    %v4914 = vshrl.u32 %v4913, 7
    %v4915 = vsub.s32 %v2796, %v4914
    %v4916 = vrot.slane %v2197, %v4915
    %v4917 = vsel %vm2801, %v4916, %v4912
    %v4918 = vlaneseq
    %v4919 = vshrl.u32 %v4918, 7
    %v4920 = vsub.s32 %v2791, %v4919
    %v4921 = vrot.slane %v2199, %v4920
    %v4922 = vlaneseq
    %v4923 = vshrl.u32 %v4922, 7
    %v4924 = vsub.s32 %v2796, %v4923
    %v4925 = vrot.slane %v2201, %v4924
    %v4926 = vsel %vm2801, %v4925, %v4921
    %v4927 = vlaneseq
    %v4928 = vshrl.u32 %v4927, 7
    %v4929 = vsub.s32 %v2791, %v4928
    %v4930 = vrot.slane %v2203, %v4929
    %v4931 = vlaneseq
    %v4932 = vshrl.u32 %v4931, 7
    %v4933 = vsub.s32 %v2796, %v4932
    %v4934 = vrot.slane %v2205, %v4933
    %v4935 = vsel %vm2801, %v4934, %v4930
    %v4936 = vlaneseq
    %v4937 = vshrl.u32 %v4936, 7
    %v4938 = vsub.s32 %v2791, %v4937
    %v4939 = vrot.slane %v2207, %v4938
    %v4940 = vlaneseq
    %v4941 = vshrl.u32 %v4940, 7
    %v4942 = vsub.s32 %v2796, %v4941
    %v4943 = vrot.slane %v2209, %v4942
    %v4944 = vsel %vm2801, %v4943, %v4939
    %v4945 = vlaneseq
    %v4946 = vshrl.u32 %v4945, 7
    %v4947 = vsub.s32 %v2791, %v4946
    %v4948 = vrot.slane %v2211, %v4947
    %v4949 = vlaneseq
    %v4950 = vshrl.u32 %v4949, 7
    %v4951 = vsub.s32 %v2796, %v4950
    %v4952 = vrot.slane %v2213, %v4951
    %v4953 = vsel %vm2801, %v4952, %v4948
    %v4954 = vlaneseq
    %v4955 = vshrl.u32 %v4954, 7
    %v4956 = vsub.s32 %v2791, %v4955
    %v4957 = vrot.slane %v2215, %v4956
    %v4958 = vlaneseq
    %v4959 = vshrl.u32 %v4958, 7
    %v4960 = vsub.s32 %v2796, %v4959
    %v4961 = vrot.slane %v2217, %v4960
    %v4962 = vsel %vm2801, %v4961, %v4957
    %v4963 = vlaneseq
    %v4964 = vshrl.u32 %v4963, 7
    %v4965 = vsub.s32 %v2791, %v4964
    %v4966 = vrot.slane %v2219, %v4965
    %v4967 = vlaneseq
    %v4968 = vshrl.u32 %v4967, 7
    %v4969 = vsub.s32 %v2796, %v4968
    %v4970 = vrot.slane %v2221, %v4969
    %v4971 = vsel %vm2801, %v4970, %v4966
    %v4972 = vlaneseq
    %v4973 = vshrl.u32 %v4972, 7
    %v4974 = vsub.s32 %v2791, %v4973
    %v4975 = vrot.slane %v2223, %v4974
    %v4976 = vlaneseq
    %v4977 = vshrl.u32 %v4976, 7
    %v4978 = vsub.s32 %v2796, %v4977
    %v4979 = vrot.slane %v2225, %v4978
    %v4980 = vsel %vm2801, %v4979, %v4975
    %v4981 = vlaneseq
    %v4982 = vshrl.u32 %v4981, 7
    %v4983 = vsub.s32 %v2791, %v4982
    %v4984 = vrot.slane %v2227, %v4983
    %v4985 = vlaneseq
    %v4986 = vshrl.u32 %v4985, 7
    %v4987 = vsub.s32 %v2796, %v4986
    %v4988 = vrot.slane %v2229, %v4987
    %v4989 = vsel %vm2801, %v4988, %v4984
    %v4990 = vlaneseq
    %v4991 = vshrl.u32 %v4990, 7
    %v4992 = vsub.s32 %v2791, %v4991
    %v4993 = vrot.slane %v2231, %v4992
    %v4994 = vlaneseq
    %v4995 = vshrl.u32 %v4994, 7
    %v4996 = vsub.s32 %v2796, %v4995
    %v4997 = vrot.slane %v2233, %v4996
    %v4998 = vsel %vm2801, %v4997, %v4993
    %v4999 = vlaneseq
    %v5000 = vshrl.u32 %v4999, 7
    %v5001 = vsub.s32 %v2791, %v5000
    %v5002 = vrot.slane %v2235, %v5001
    %v5003 = vlaneseq
    %v5004 = vshrl.u32 %v5003, 7
    %v5005 = vsub.s32 %v2796, %v5004
    %v5006 = vrot.slane %v2237, %v5005
    %v5007 = vsel %vm2801, %v5006, %v5002
    %v5008 = vlaneseq
    %v5009 = vshrl.u32 %v5008, 7
    %v5010 = vsub.s32 %v2791, %v5009
    %v5011 = vrot.slane %v2239, %v5010
    %v5012 = vlaneseq
    %v5013 = vshrl.u32 %v5012, 7
    %v5014 = vsub.s32 %v2796, %v5013
    %v5015 = vrot.slane %v2241, %v5014
    %v5016 = vsel %vm2801, %v5015, %v5011
    %v5017 = vlaneseq
    %v5018 = vshrl.u32 %v5017, 7
    %v5019 = vsub.s32 %v2791, %v5018
    %v5020 = vrot.slane %v2243, %v5019
    %v5021 = vlaneseq
    %v5022 = vshrl.u32 %v5021, 7
    %v5023 = vsub.s32 %v2796, %v5022
    %v5024 = vrot.slane %v2245, %v5023
    %v5025 = vsel %vm2801, %v5024, %v5020
    %v5026 = vlaneseq
    %v5027 = vshrl.u32 %v5026, 7
    %v5028 = vsub.s32 %v2791, %v5027
    %v5029 = vrot.slane %v2247, %v5028
    %v5030 = vlaneseq
    %v5031 = vshrl.u32 %v5030, 7
    %v5032 = vsub.s32 %v2796, %v5031
    %v5033 = vrot.slane %v2249, %v5032
    %v5034 = vsel %vm2801, %v5033, %v5029
    %v5035 = vlaneseq
    %v5036 = vshrl.u32 %v5035, 7
    %v5037 = vsub.s32 %v2791, %v5036
    %v5038 = vrot.slane %v2251, %v5037
    %v5039 = vlaneseq
    %v5040 = vshrl.u32 %v5039, 7
    %v5041 = vsub.s32 %v2796, %v5040
    %v5042 = vrot.slane %v2253, %v5041
    %v5043 = vsel %vm2801, %v5042, %v5038
    %v5044 = vlaneseq
    %v5045 = vshrl.u32 %v5044, 7
    %v5046 = vsub.s32 %v2791, %v5045
    %v5047 = vrot.slane %v2255, %v5046
    %v5048 = vlaneseq
    %v5049 = vshrl.u32 %v5048, 7
    %v5050 = vsub.s32 %v2796, %v5049
    %v5051 = vrot.slane %v2257, %v5050
    %v5052 = vsel %vm2801, %v5051, %v5047
    %v5053 = vlaneseq
    %v5054 = vshrl.u32 %v5053, 7
    %v5055 = vsub.s32 %v2791, %v5054
    %v5056 = vrot.slane %v2259, %v5055
    %v5057 = vlaneseq
    %v5058 = vshrl.u32 %v5057, 7
    %v5059 = vsub.s32 %v2796, %v5058
    %v5060 = vrot.slane %v2261, %v5059
    %v5061 = vsel %vm2801, %v5060, %v5056
    %v5062 = vlaneseq
    %v5063 = vshrl.u32 %v5062, 7
    %v5064 = vsub.s32 %v2791, %v5063
    %v5065 = vrot.slane %v2263, %v5064
    %v5066 = vlaneseq
    %v5067 = vshrl.u32 %v5066, 7
    %v5068 = vsub.s32 %v2796, %v5067
    %v5069 = vrot.slane %v2265, %v5068
    %v5070 = vsel %vm2801, %v5069, %v5065
    %v5071 = vlaneseq
    %v5072 = vshrl.u32 %v5071, 7
    %v5073 = vsub.s32 %v2791, %v5072
    %v5074 = vrot.slane %v2267, %v5073
    %v5075 = vlaneseq
    %v5076 = vshrl.u32 %v5075, 7
    %v5077 = vsub.s32 %v2796, %v5076
    %v5078 = vrot.slane %v2269, %v5077
    %v5079 = vsel %vm2801, %v5078, %v5074
    %v5080 = vlaneseq
    %v5081 = vshrl.u32 %v5080, 7
    %v5082 = vsub.s32 %v2791, %v5081
    %v5083 = vrot.slane %v2271, %v5082
    %v5084 = vlaneseq
    %v5085 = vshrl.u32 %v5084, 7
    %v5086 = vsub.s32 %v2796, %v5085
    %v5087 = vrot.slane %v2273, %v5086
    %v5088 = vsel %vm2801, %v5087, %v5083
    %v5089 = vlaneseq
    %v5090 = vshrl.u32 %v5089, 7
    %v5091 = vsub.s32 %v2791, %v5090
    %v5092 = vrot.slane %v2275, %v5091
    %v5093 = vlaneseq
    %v5094 = vshrl.u32 %v5093, 7
    %v5095 = vsub.s32 %v2796, %v5094
    %v5096 = vrot.slane %v2277, %v5095
    %v5097 = vsel %vm2801, %v5096, %v5092
    %vm5098 = vcmask 1041409
    %v5099 = vsel %vm5098, %v2811, %v2802
    %vm5100 = vcmask 1042434
    %v5101 = vsel %vm5100, %v2820, %v5099
    %vm5102 = vcmask 1043459
    %v5103 = vsel %vm5102, %v2829, %v5101
    %vm5104 = vcmask 1044484
    %v5105 = vsel %vm5104, %v2838, %v5103
    %vm5106 = vcmask 1045509
    %v5107 = vsel %vm5106, %v2847, %v5105
    %vm5108 = vcmask 1046534
    %v5109 = vsel %vm5108, %v2856, %v5107
    %vm5110 = vcmask 1047559
    %v5111 = vsel %vm5110, %v2865, %v5109
    %v5112 = vsel %vm5098, %v2883, %v2874
    %v5113 = vsel %vm5100, %v2892, %v5112
    %v5114 = vsel %vm5102, %v2901, %v5113
    %v5115 = vsel %vm5104, %v2910, %v5114
    %v5116 = vsel %vm5106, %v2919, %v5115
    %v5117 = vsel %vm5108, %v2928, %v5116
    %v5118 = vsel %vm5110, %v2937, %v5117
    %v5119 = vsel %vm5098, %v2955, %v2946
    %v5120 = vsel %vm5100, %v2964, %v5119
    %v5121 = vsel %vm5102, %v2973, %v5120
    %v5122 = vsel %vm5104, %v2982, %v5121
    %v5123 = vsel %vm5106, %v2991, %v5122
    %v5124 = vsel %vm5108, %v3000, %v5123
    %v5125 = vsel %vm5110, %v3009, %v5124
    %v5126 = vsel %vm5098, %v3027, %v3018
    %v5127 = vsel %vm5100, %v3036, %v5126
    %v5128 = vsel %vm5102, %v3045, %v5127
    %v5129 = vsel %vm5104, %v3054, %v5128
    %v5130 = vsel %vm5106, %v3063, %v5129
    %v5131 = vsel %vm5108, %v3072, %v5130
    %v5132 = vsel %vm5110, %v3081, %v5131
    %v5133 = vsel %vm5098, %v3099, %v3090
    %v5134 = vsel %vm5100, %v3108, %v5133
    %v5135 = vsel %vm5102, %v3117, %v5134
    %v5136 = vsel %vm5104, %v3126, %v5135
    %v5137 = vsel %vm5106, %v3135, %v5136
    %v5138 = vsel %vm5108, %v3144, %v5137
    %v5139 = vsel %vm5110, %v3153, %v5138
    %v5140 = vsel %vm5098, %v3171, %v3162
    %v5141 = vsel %vm5100, %v3180, %v5140
    %v5142 = vsel %vm5102, %v3189, %v5141
    %v5143 = vsel %vm5104, %v3198, %v5142
    %v5144 = vsel %vm5106, %v3207, %v5143
    %v5145 = vsel %vm5108, %v3216, %v5144
    %v5146 = vsel %vm5110, %v3225, %v5145
    %v5147 = vsel %vm5098, %v3243, %v3234
    %v5148 = vsel %vm5100, %v3252, %v5147
    %v5149 = vsel %vm5102, %v3261, %v5148
    %v5150 = vsel %vm5104, %v3270, %v5149
    %v5151 = vsel %vm5106, %v3279, %v5150
    %v5152 = vsel %vm5108, %v3288, %v5151
    %v5153 = vsel %vm5110, %v3297, %v5152
    %v5154 = vsel %vm5098, %v3315, %v3306
    %v5155 = vsel %vm5100, %v3324, %v5154
    %v5156 = vsel %vm5102, %v3333, %v5155
    %v5157 = vsel %vm5104, %v3342, %v5156
    %v5158 = vsel %vm5106, %v3351, %v5157
    %v5159 = vsel %vm5108, %v3360, %v5158
    %v5160 = vsel %vm5110, %v3369, %v5159
    %v5161 = vsel %vm5098, %v3387, %v3378
    %v5162 = vsel %vm5100, %v3396, %v5161
    %v5163 = vsel %vm5102, %v3405, %v5162
    %v5164 = vsel %vm5104, %v3414, %v5163
    %v5165 = vsel %vm5106, %v3423, %v5164
    %v5166 = vsel %vm5108, %v3432, %v5165
    %v5167 = vsel %vm5110, %v3441, %v5166
    %v5168 = vsel %vm5098, %v3459, %v3450
    %v5169 = vsel %vm5100, %v3468, %v5168
    %v5170 = vsel %vm5102, %v3477, %v5169
    %v5171 = vsel %vm5104, %v3486, %v5170
    %v5172 = vsel %vm5106, %v3495, %v5171
    %v5173 = vsel %vm5108, %v3504, %v5172
    %v5174 = vsel %vm5110, %v3513, %v5173
    %v5175 = vsel %vm5098, %v3531, %v3522
    %v5176 = vsel %vm5100, %v3540, %v5175
    %v5177 = vsel %vm5102, %v3549, %v5176
    %v5178 = vsel %vm5104, %v3558, %v5177
    %v5179 = vsel %vm5106, %v3567, %v5178
    %v5180 = vsel %vm5108, %v3576, %v5179
    %v5181 = vsel %vm5110, %v3585, %v5180
    %v5182 = vsel %vm5098, %v3603, %v3594
    %v5183 = vsel %vm5100, %v3612, %v5182
    %v5184 = vsel %vm5102, %v3621, %v5183
    %v5185 = vsel %vm5104, %v3630, %v5184
    %v5186 = vsel %vm5106, %v3639, %v5185
    %v5187 = vsel %vm5108, %v3648, %v5186
    %v5188 = vsel %vm5110, %v3657, %v5187
    %v5189 = vsel %vm5098, %v3675, %v3666
    %v5190 = vsel %vm5100, %v3684, %v5189
    %v5191 = vsel %vm5102, %v3693, %v5190
    %v5192 = vsel %vm5104, %v3702, %v5191
    %v5193 = vsel %vm5106, %v3711, %v5192
    %v5194 = vsel %vm5108, %v3720, %v5193
    %v5195 = vsel %vm5110, %v3729, %v5194
    %v5196 = vsel %vm5098, %v3747, %v3738
    %v5197 = vsel %vm5100, %v3756, %v5196
    %v5198 = vsel %vm5102, %v3765, %v5197
    %v5199 = vsel %vm5104, %v3774, %v5198
    %v5200 = vsel %vm5106, %v3783, %v5199
    %v5201 = vsel %vm5108, %v3792, %v5200
    %v5202 = vsel %vm5110, %v3801, %v5201
    %v5203 = vsel %vm5098, %v3819, %v3810
    %v5204 = vsel %vm5100, %v3828, %v5203
    %v5205 = vsel %vm5102, %v3837, %v5204
    %v5206 = vsel %vm5104, %v3846, %v5205
    %v5207 = vsel %vm5106, %v3855, %v5206
    %v5208 = vsel %vm5108, %v3864, %v5207
    %v5209 = vsel %vm5110, %v3873, %v5208
    %v5210 = vsel %vm5098, %v3891, %v3882
    %v5211 = vsel %vm5100, %v3900, %v5210
    %v5212 = vsel %vm5102, %v3909, %v5211
    %v5213 = vsel %vm5104, %v3918, %v5212
    %v5214 = vsel %vm5106, %v3927, %v5213
    %v5215 = vsel %vm5108, %v3936, %v5214
    %v5216 = vsel %vm5110, %v3945, %v5215
    %v5217 = vsel %vm5098, %v3963, %v3954
    %v5218 = vsel %vm5100, %v3972, %v5217
    %v5219 = vsel %vm5102, %v3981, %v5218
    %v5220 = vsel %vm5104, %v3990, %v5219
    %v5221 = vsel %vm5106, %v3999, %v5220
    %v5222 = vsel %vm5108, %v4008, %v5221
    %v5223 = vsel %vm5110, %v4017, %v5222
    %v5224 = vsel %vm5098, %v4035, %v4026
    %v5225 = vsel %vm5100, %v4044, %v5224
    %v5226 = vsel %vm5102, %v4053, %v5225
    %v5227 = vsel %vm5104, %v4062, %v5226
    %v5228 = vsel %vm5106, %v4071, %v5227
    %v5229 = vsel %vm5108, %v4080, %v5228
    %v5230 = vsel %vm5110, %v4089, %v5229
    %v5231 = vsel %vm5098, %v4107, %v4098
    %v5232 = vsel %vm5100, %v4116, %v5231
    %v5233 = vsel %vm5102, %v4125, %v5232
    %v5234 = vsel %vm5104, %v4134, %v5233
    %v5235 = vsel %vm5106, %v4143, %v5234
    %v5236 = vsel %vm5108, %v4152, %v5235
    %v5237 = vsel %vm5110, %v4161, %v5236
    %v5238 = vsel %vm5098, %v4179, %v4170
    %v5239 = vsel %vm5100, %v4188, %v5238
    %v5240 = vsel %vm5102, %v4197, %v5239
    %v5241 = vsel %vm5104, %v4206, %v5240
    %v5242 = vsel %vm5106, %v4215, %v5241
    %v5243 = vsel %vm5108, %v4224, %v5242
    %v5244 = vsel %vm5110, %v4233, %v5243
    %v5245 = vsel %vm5098, %v4251, %v4242
    %v5246 = vsel %vm5100, %v4260, %v5245
    %v5247 = vsel %vm5102, %v4269, %v5246
    %v5248 = vsel %vm5104, %v4278, %v5247
    %v5249 = vsel %vm5106, %v4287, %v5248
    %v5250 = vsel %vm5108, %v4296, %v5249
    %v5251 = vsel %vm5110, %v4305, %v5250
    %v5252 = vsel %vm5098, %v4323, %v4314
    %v5253 = vsel %vm5100, %v4332, %v5252
    %v5254 = vsel %vm5102, %v4341, %v5253
    %v5255 = vsel %vm5104, %v4350, %v5254
    %v5256 = vsel %vm5106, %v4359, %v5255
    %v5257 = vsel %vm5108, %v4368, %v5256
    %v5258 = vsel %vm5110, %v4377, %v5257
    %v5259 = vsel %vm5098, %v4395, %v4386
    %v5260 = vsel %vm5100, %v4404, %v5259
    %v5261 = vsel %vm5102, %v4413, %v5260
    %v5262 = vsel %vm5104, %v4422, %v5261
    %v5263 = vsel %vm5106, %v4431, %v5262
    %v5264 = vsel %vm5108, %v4440, %v5263
    %v5265 = vsel %vm5110, %v4449, %v5264
    %v5266 = vsel %vm5098, %v4467, %v4458
    %v5267 = vsel %vm5100, %v4476, %v5266
    %v5268 = vsel %vm5102, %v4485, %v5267
    %v5269 = vsel %vm5104, %v4494, %v5268
    %v5270 = vsel %vm5106, %v4503, %v5269
    %v5271 = vsel %vm5108, %v4512, %v5270
    %v5272 = vsel %vm5110, %v4521, %v5271
    %v5273 = vsel %vm5098, %v4539, %v4530
    %v5274 = vsel %vm5100, %v4548, %v5273
    %v5275 = vsel %vm5102, %v4557, %v5274
    %v5276 = vsel %vm5104, %v4566, %v5275
    %v5277 = vsel %vm5106, %v4575, %v5276
    %v5278 = vsel %vm5108, %v4584, %v5277
    %v5279 = vsel %vm5110, %v4593, %v5278
    %v5280 = vsel %vm5098, %v4611, %v4602
    %v5281 = vsel %vm5100, %v4620, %v5280
    %v5282 = vsel %vm5102, %v4629, %v5281
    %v5283 = vsel %vm5104, %v4638, %v5282
    %v5284 = vsel %vm5106, %v4647, %v5283
    %v5285 = vsel %vm5108, %v4656, %v5284
    %v5286 = vsel %vm5110, %v4665, %v5285
    %v5287 = vsel %vm5098, %v4683, %v4674
    %v5288 = vsel %vm5100, %v4692, %v5287
    %v5289 = vsel %vm5102, %v4701, %v5288
    %v5290 = vsel %vm5104, %v4710, %v5289
    %v5291 = vsel %vm5106, %v4719, %v5290
    %v5292 = vsel %vm5108, %v4728, %v5291
    %v5293 = vsel %vm5110, %v4737, %v5292
    %v5294 = vsel %vm5098, %v4755, %v4746
    %v5295 = vsel %vm5100, %v4764, %v5294
    %v5296 = vsel %vm5102, %v4773, %v5295
    %v5297 = vsel %vm5104, %v4782, %v5296
    %v5298 = vsel %vm5106, %v4791, %v5297
    %v5299 = vsel %vm5108, %v4800, %v5298
    %v5300 = vsel %vm5110, %v4809, %v5299
    %v5301 = vsel %vm5098, %v4827, %v4818
    %v5302 = vsel %vm5100, %v4836, %v5301
    %v5303 = vsel %vm5102, %v4845, %v5302
    %v5304 = vsel %vm5104, %v4854, %v5303
    %v5305 = vsel %vm5106, %v4863, %v5304
    %v5306 = vsel %vm5108, %v4872, %v5305
    %v5307 = vsel %vm5110, %v4881, %v5306
    %v5308 = vsel %vm5098, %v4899, %v4890
    %v5309 = vsel %vm5100, %v4908, %v5308
    %v5310 = vsel %vm5102, %v4917, %v5309
    %v5311 = vsel %vm5104, %v4926, %v5310
    %v5312 = vsel %vm5106, %v4935, %v5311
    %v5313 = vsel %vm5108, %v4944, %v5312
    %v5314 = vsel %vm5110, %v4953, %v5313
    %v5315 = vsel %vm5098, %v4971, %v4962
    %v5316 = vsel %vm5100, %v4980, %v5315
    %v5317 = vsel %vm5102, %v4989, %v5316
    %v5318 = vsel %vm5104, %v4998, %v5317
    %v5319 = vsel %vm5106, %v5007, %v5318
    %v5320 = vsel %vm5108, %v5016, %v5319
    %v5321 = vsel %vm5110, %v5025, %v5320
    %v5322 = vsel %vm5098, %v5043, %v5034
    %v5323 = vsel %vm5100, %v5052, %v5322
    %v5324 = vsel %vm5102, %v5061, %v5323
    %v5325 = vsel %vm5104, %v5070, %v5324
    %v5326 = vsel %vm5106, %v5079, %v5325
    %v5327 = vsel %vm5108, %v5088, %v5326
    %v5328 = vsel %vm5110, %v5097, %v5327
    %v5361 = vadd.f32 %v675, %v5111
    %v5362 = vadd.f32 %v677, %v5118
    %v5363 = vadd.f32 %v679, %v5125
    %v5364 = vadd.f32 %v681, %v5132
    %v5365 = vadd.f32 %v683, %v5139
    %v5366 = vadd.f32 %v685, %v5146
    %v5367 = vadd.f32 %v687, %v5153
    %v5368 = vadd.f32 %v689, %v5160
    %v5369 = vadd.f32 %v691, %v5167
    %v5370 = vadd.f32 %v693, %v5174
    %v5371 = vadd.f32 %v695, %v5181
    %v5372 = vadd.f32 %v697, %v5188
    %v5373 = vadd.f32 %v699, %v5195
    %v5374 = vadd.f32 %v701, %v5202
    %v5375 = vadd.f32 %v703, %v5209
    %v5376 = vadd.f32 %v705, %v5216
    %v5377 = vadd.f32 %v707, %v5223
    %v5378 = vadd.f32 %v709, %v5230
    %v5379 = vadd.f32 %v711, %v5237
    %v5380 = vadd.f32 %v713, %v5244
    %v5381 = vadd.f32 %v715, %v5251
    %v5382 = vadd.f32 %v717, %v5258
    %v5383 = vadd.f32 %v719, %v5265
    %v5384 = vadd.f32 %v721, %v5272
    %v5385 = vadd.f32 %v723, %v5279
    %v5386 = vadd.f32 %v725, %v5286
    %v5387 = vadd.f32 %v727, %v5293
    %v5388 = vadd.f32 %v729, %v5300
    %v5389 = vadd.f32 %v731, %v5307
    %v5390 = vadd.f32 %v733, %v5314
    %v5391 = vadd.f32 %v735, %v5321
    %v5392 = vadd.f32 %v737, %v5328
    %vm5393 = vcmp.gt.f32.partialorder %v5361, 0.0
    %vm5394 = vcmp.gt.f32.partialorder %v5362, 0.0
    %vm5395 = vcmp.gt.f32.partialorder %v5363, 0.0
    %vm5396 = vcmp.gt.f32.partialorder %v5364, 0.0
    %vm5397 = vcmp.gt.f32.partialorder %v5365, 0.0
    %vm5398 = vcmp.gt.f32.partialorder %v5366, 0.0
    %vm5399 = vcmp.gt.f32.partialorder %v5367, 0.0
    %vm5400 = vcmp.gt.f32.partialorder %v5368, 0.0
    %vm5401 = vcmp.gt.f32.partialorder %v5369, 0.0
    %vm5402 = vcmp.gt.f32.partialorder %v5370, 0.0
    %vm5403 = vcmp.gt.f32.partialorder %v5371, 0.0
    %vm5404 = vcmp.gt.f32.partialorder %v5372, 0.0
    %vm5405 = vcmp.gt.f32.partialorder %v5373, 0.0
    %vm5406 = vcmp.gt.f32.partialorder %v5374, 0.0
    %vm5407 = vcmp.gt.f32.partialorder %v5375, 0.0
    %vm5408 = vcmp.gt.f32.partialorder %v5376, 0.0
    %vm5409 = vcmp.gt.f32.partialorder %v5377, 0.0
    %vm5410 = vcmp.gt.f32.partialorder %v5378, 0.0
    %vm5411 = vcmp.gt.f32.partialorder %v5379, 0.0
    %vm5412 = vcmp.gt.f32.partialorder %v5380, 0.0
    %vm5413 = vcmp.gt.f32.partialorder %v5381, 0.0
    %vm5414 = vcmp.gt.f32.partialorder %v5382, 0.0
    %vm5415 = vcmp.gt.f32.partialorder %v5383, 0.0
    %vm5416 = vcmp.gt.f32.partialorder %v5384, 0.0
    %vm5417 = vcmp.gt.f32.partialorder %v5385, 0.0
    %vm5418 = vcmp.gt.f32.partialorder %v5386, 0.0
    %vm5419 = vcmp.gt.f32.partialorder %v5387, 0.0
    %vm5420 = vcmp.gt.f32.partialorder %v5388, 0.0
    %vm5421 = vcmp.gt.f32.partialorder %v5389, 0.0
    %vm5422 = vcmp.gt.f32.partialorder %v5390, 0.0
    %vm5423 = vcmp.gt.f32.partialorder %v5391, 0.0
    %vm5424 = vcmp.gt.f32.partialorder %v5392, 0.0
    %v5425 = vmul.f32 %v5361, 0.2
    %v5426 = vmul.f32 %v5362, 0.2
    %v5427 = vmul.f32 %v5363, 0.2
    %v5428 = vmul.f32 %v5364, 0.2
    %v5429 = vmul.f32 %v5365, 0.2
    %v5430 = vmul.f32 %v5366, 0.2
    %v5431 = vmul.f32 %v5367, 0.2
    %v5432 = vmul.f32 %v5368, 0.2
    %v5433 = vmul.f32 %v5369, 0.2
    %v5434 = vmul.f32 %v5370, 0.2
    %v5435 = vmul.f32 %v5371, 0.2
    %v5436 = vmul.f32 %v5372, 0.2
    %v5437 = vmul.f32 %v5373, 0.2
    %v5438 = vmul.f32 %v5374, 0.2
    %v5439 = vmul.f32 %v5375, 0.2
    %v5440 = vmul.f32 %v5376, 0.2
    %v5441 = vmul.f32 %v5377, 0.2
    %v5442 = vmul.f32 %v5378, 0.2
    %v5443 = vmul.f32 %v5379, 0.2
    %v5444 = vmul.f32 %v5380, 0.2
    %v5445 = vmul.f32 %v5381, 0.2
    %v5446 = vmul.f32 %v5382, 0.2
    %v5447 = vmul.f32 %v5383, 0.2
    %v5448 = vmul.f32 %v5384, 0.2
    %v5449 = vmul.f32 %v5385, 0.2
    %v5450 = vmul.f32 %v5386, 0.2
    %v5451 = vmul.f32 %v5387, 0.2
    %v5452 = vmul.f32 %v5388, 0.2
    %v5453 = vmul.f32 %v5389, 0.2
    %v5454 = vmul.f32 %v5390, 0.2
    %v5455 = vmul.f32 %v5391, 0.2
    %v5456 = vmul.f32 %v5392, 0.2
    %v5457 = vsel %vm5393, %v5361, %v5425
    %v5458 = vsel %vm5394, %v5362, %v5426
    %v5459 = vsel %vm5395, %v5363, %v5427
    %v5460 = vsel %vm5396, %v5364, %v5428
    %v5461 = vsel %vm5397, %v5365, %v5429
    %v5462 = vsel %vm5398, %v5366, %v5430
    %v5463 = vsel %vm5399, %v5367, %v5431
    %v5464 = vsel %vm5400, %v5368, %v5432
    %v5465 = vsel %vm5401, %v5369, %v5433
    %v5466 = vsel %vm5402, %v5370, %v5434
    %v5467 = vsel %vm5403, %v5371, %v5435
    %v5468 = vsel %vm5404, %v5372, %v5436
    %v5469 = vsel %vm5405, %v5373, %v5437
    %v5470 = vsel %vm5406, %v5374, %v5438
    %v5471 = vsel %vm5407, %v5375, %v5439
    %v5472 = vsel %vm5408, %v5376, %v5440
    %v5473 = vsel %vm5409, %v5377, %v5441
    %v5474 = vsel %vm5410, %v5378, %v5442
    %v5475 = vsel %vm5411, %v5379, %v5443
    %v5476 = vsel %vm5412, %v5380, %v5444
    %v5477 = vsel %vm5413, %v5381, %v5445
    %v5478 = vsel %vm5414, %v5382, %v5446
    %v5479 = vsel %vm5415, %v5383, %v5447
    %v5480 = vsel %vm5416, %v5384, %v5448
    %v5481 = vsel %vm5417, %v5385, %v5449
    %v5482 = vsel %vm5418, %v5386, %v5450
    %v5483 = vsel %vm5419, %v5387, %v5451
    %v5484 = vsel %vm5420, %v5388, %v5452
    %v5485 = vsel %vm5421, %v5389, %v5453
    %v5486 = vsel %vm5422, %v5390, %v5454
    %v5487 = vsel %vm5423, %v5391, %v5455
    %v5488 = vsel %vm5424, %v5392, %v5456
    %vm5489 = vcmp.gt.bf16.partialorder %v572, 0
    %vm5490 = vcmp.gt.bf16.partialorder %v573, 0
    %vm5491 = vcmp.gt.bf16.partialorder %v574, 0
    %vm5492 = vcmp.gt.bf16.partialorder %v575, 0
    %vm5493 = vcmp.gt.bf16.partialorder %v576, 0
    %vm5494 = vcmp.gt.bf16.partialorder %v577, 0
    %vm5495 = vcmp.gt.bf16.partialorder %v578, 0
    %vm5496 = vcmp.gt.bf16.partialorder %v579, 0
    %vm5497 = vcmp.gt.bf16.partialorder %v580, 0
    %vm5498 = vcmp.gt.bf16.partialorder %v581, 0
    %vm5499 = vcmp.gt.bf16.partialorder %v582, 0
    %vm5500 = vcmp.gt.bf16.partialorder %v583, 0
    %vm5501 = vcmp.gt.bf16.partialorder %v584, 0
    %vm5502 = vcmp.gt.bf16.partialorder %v585, 0
    %vm5503 = vcmp.gt.bf16.partialorder %v586, 0
    %vm5504 = vcmp.gt.bf16.partialorder %v587, 0
    %vm5505 = vcmp.gt.bf16.partialorder %v588, 0
    %vm5506 = vcmp.gt.bf16.partialorder %v589, 0
    %vm5507 = vcmp.gt.bf16.partialorder %v590, 0
    %vm5508 = vcmp.gt.bf16.partialorder %v591, 0
    %vm5509 = vcmp.gt.bf16.partialorder %v592, 0
    %vm5510 = vcmp.gt.bf16.partialorder %v593, 0
    %vm5511 = vcmp.gt.bf16.partialorder %v594, 0
    %vm5512 = vcmp.gt.bf16.partialorder %v595, 0
    %vm5513 = vcmp.gt.bf16.partialorder %v596, 0
    %vm5514 = vcmp.gt.bf16.partialorder %v597, 0
    %vm5515 = vcmp.gt.bf16.partialorder %v598, 0
    %vm5516 = vcmp.gt.bf16.partialorder %v599, 0
    %vm5517 = vcmp.gt.bf16.partialorder %v600, 0
    %vm5518 = vcmp.gt.bf16.partialorder %v601, 0
    %vm5519 = vcmp.gt.bf16.partialorder %v602, 0
    %vm5520 = vcmp.gt.bf16.partialorder %v603, 0
    %v5521 = vsel %vm5489, 65537, 0
    %v5522 = vsel %vm5490, 65537, 0
    %v5523 = vsel %vm5491, 65537, 0
    %v5524 = vsel %vm5492, 65537, 0
    %v5525 = vsel %vm5493, 65537, 0
    %v5526 = vsel %vm5494, 65537, 0
    %v5527 = vsel %vm5495, 65537, 0
    %v5528 = vsel %vm5496, 65537, 0
    %v5529 = vsel %vm5497, 65537, 0
    %v5530 = vsel %vm5498, 65537, 0
    %v5531 = vsel %vm5499, 65537, 0
    %v5532 = vsel %vm5500, 65537, 0
    %v5533 = vsel %vm5501, 65537, 0
    %v5534 = vsel %vm5502, 65537, 0
    %v5535 = vsel %vm5503, 65537, 0
    %v5536 = vsel %vm5504, 65537, 0
    %v5537 = vsel %vm5505, 65537, 0
    %v5538 = vsel %vm5506, 65537, 0
    %v5539 = vsel %vm5507, 65537, 0
    %v5540 = vsel %vm5508, 65537, 0
    %v5541 = vsel %vm5509, 65537, 0
    %v5542 = vsel %vm5510, 65537, 0
    %v5543 = vsel %vm5511, 65537, 0
    %v5544 = vsel %vm5512, 65537, 0
    %v5545 = vsel %vm5513, 65537, 0
    %v5546 = vsel %vm5514, 65537, 0
    %v5547 = vsel %vm5515, 65537, 0
    %v5548 = vsel %vm5516, 65537, 0
    %v5549 = vsel %vm5517, 65537, 0
    %v5550 = vsel %vm5518, 65537, 0
    %v5551 = vsel %vm5519, 65537, 0
    %v5552 = vsel %vm5520, 65537, 0
    %v5553 = vunpack.c.l.b16 %v5521
    %v5554 = vunpack.c.l.b16 %v5522
    %v5555 = vunpack.c.l.b16 %v5523
    %v5556 = vunpack.c.l.b16 %v5524
    %v5557 = vunpack.c.l.b16 %v5525
    %v5558 = vunpack.c.l.b16 %v5526
    %v5559 = vunpack.c.l.b16 %v5527
    %v5560 = vunpack.c.l.b16 %v5528
    %v5561 = vunpack.c.l.b16 %v5529
    %v5562 = vunpack.c.l.b16 %v5530
    %v5563 = vunpack.c.l.b16 %v5531
    %v5564 = vunpack.c.l.b16 %v5532
    %v5565 = vunpack.c.l.b16 %v5533
    %v5566 = vunpack.c.l.b16 %v5534
    %v5567 = vunpack.c.l.b16 %v5535
    %v5568 = vunpack.c.l.b16 %v5536
    %v5569 = vunpack.c.l.b16 %v5537
    %v5570 = vunpack.c.l.b16 %v5538
    %v5571 = vunpack.c.l.b16 %v5539
    %v5572 = vunpack.c.l.b16 %v5540
    %v5573 = vunpack.c.l.b16 %v5541
    %v5574 = vunpack.c.l.b16 %v5542
    %v5575 = vunpack.c.l.b16 %v5543
    %v5576 = vunpack.c.l.b16 %v5544
    %v5577 = vunpack.c.l.b16 %v5545
    %v5578 = vunpack.c.l.b16 %v5546
    %v5579 = vunpack.c.l.b16 %v5547
    %v5580 = vunpack.c.l.b16 %v5548
    %v5581 = vunpack.c.l.b16 %v5549
    %v5582 = vunpack.c.l.b16 %v5550
    %v5583 = vunpack.c.l.b16 %v5551
    %v5584 = vunpack.c.l.b16 %v5552
    %vm5585 = vcmp.ne.s32.totalorder %v5553, 0
    %vm5586 = vcmp.ne.s32.totalorder %v5554, 0
    %vm5587 = vcmp.ne.s32.totalorder %v5555, 0
    %vm5588 = vcmp.ne.s32.totalorder %v5556, 0
    %vm5589 = vcmp.ne.s32.totalorder %v5557, 0
    %vm5590 = vcmp.ne.s32.totalorder %v5558, 0
    %vm5591 = vcmp.ne.s32.totalorder %v5559, 0
    %vm5592 = vcmp.ne.s32.totalorder %v5560, 0
    %vm5593 = vcmp.ne.s32.totalorder %v5561, 0
    %vm5594 = vcmp.ne.s32.totalorder %v5562, 0
    %vm5595 = vcmp.ne.s32.totalorder %v5563, 0
    %vm5596 = vcmp.ne.s32.totalorder %v5564, 0
    %vm5597 = vcmp.ne.s32.totalorder %v5565, 0
    %vm5598 = vcmp.ne.s32.totalorder %v5566, 0
    %vm5599 = vcmp.ne.s32.totalorder %v5567, 0
    %vm5600 = vcmp.ne.s32.totalorder %v5568, 0
    %vm5601 = vcmp.ne.s32.totalorder %v5569, 0
    %vm5602 = vcmp.ne.s32.totalorder %v5570, 0
    %vm5603 = vcmp.ne.s32.totalorder %v5571, 0
    %vm5604 = vcmp.ne.s32.totalorder %v5572, 0
    %vm5605 = vcmp.ne.s32.totalorder %v5573, 0
    %vm5606 = vcmp.ne.s32.totalorder %v5574, 0
    %vm5607 = vcmp.ne.s32.totalorder %v5575, 0
    %vm5608 = vcmp.ne.s32.totalorder %v5576, 0
    %vm5609 = vcmp.ne.s32.totalorder %v5577, 0
    %vm5610 = vcmp.ne.s32.totalorder %v5578, 0
    %vm5611 = vcmp.ne.s32.totalorder %v5579, 0
    %vm5612 = vcmp.ne.s32.totalorder %v5580, 0
    %vm5613 = vcmp.ne.s32.totalorder %v5581, 0
    %vm5614 = vcmp.ne.s32.totalorder %v5582, 0
    %vm5615 = vcmp.ne.s32.totalorder %v5583, 0
    %vm5616 = vcmp.ne.s32.totalorder %v5584, 0
    %v5617 = vsel %vm5585, %v5457, -9e+15
    %v5618 = vsel %vm5586, %v5458, -9e+15
    %v5619 = vsel %vm5587, %v5459, -9e+15
    %v5620 = vsel %vm5588, %v5460, -9e+15
    %v5621 = vsel %vm5589, %v5461, -9e+15
    %v5622 = vsel %vm5590, %v5462, -9e+15
    %v5623 = vsel %vm5591, %v5463, -9e+15
    %v5624 = vsel %vm5592, %v5464, -9e+15
    %v5625 = vsel %vm5593, %v5465, -9e+15
    %v5626 = vsel %vm5594, %v5466, -9e+15
    %v5627 = vsel %vm5595, %v5467, -9e+15
    %v5628 = vsel %vm5596, %v5468, -9e+15
    %v5629 = vsel %vm5597, %v5469, -9e+15
    %v5630 = vsel %vm5598, %v5470, -9e+15
    %v5631 = vsel %vm5599, %v5471, -9e+15
    %v5632 = vsel %vm5600, %v5472, -9e+15
    %v5633 = vsel %vm5601, %v5473, -9e+15
    %v5634 = vsel %vm5602, %v5474, -9e+15
    %v5635 = vsel %vm5603, %v5475, -9e+15
    %v5636 = vsel %vm5604, %v5476, -9e+15
    %v5637 = vsel %vm5605, %v5477, -9e+15
    %v5638 = vsel %vm5606, %v5478, -9e+15
    %v5639 = vsel %vm5607, %v5479, -9e+15
    %v5640 = vsel %vm5608, %v5480, -9e+15
    %v5641 = vsel %vm5609, %v5481, -9e+15
    %v5642 = vsel %vm5610, %v5482, -9e+15
    %v5643 = vsel %vm5611, %v5483, -9e+15
    %v5644 = vsel %vm5612, %v5484, -9e+15
    %v5645 = vsel %vm5613, %v5485, -9e+15
    %v5646 = vsel %vm5614, %v5486, -9e+15
    %v5647 = vsel %vm5615, %v5487, -9e+15
    %v5648 = vsel %vm5616, %v5488, -9e+15
    %vm5649 = vcmask 130048
    %v5650 = vsel %vm5649, %v5617, -inf
    %5651 = vmax.xlane.f32.xlu0 %v5650
    %v5652 = vpop.xlane.xlu0 %5651
    %v5653 = vsel %vm5649, %v5618, -inf
    %5654 = vmax.xlane.f32.xlu0 %v5653
    %v5655 = vpop.xlane.xlu0 %5654
    %v5656 = vsel %vm5649, %v5619, -inf
    %5657 = vmax.xlane.f32.xlu0 %v5656
    %v5658 = vpop.xlane.xlu0 %5657
    %v5659 = vsel %vm5649, %v5620, -inf
    %5660 = vmax.xlane.f32.xlu0 %v5659
    %v5661 = vpop.xlane.xlu0 %5660
    %v5662 = vsel %vm5649, %v5621, -inf
    %5663 = vmax.xlane.f32.xlu0 %v5662
    %v5664 = vpop.xlane.xlu0 %5663
    %v5665 = vsel %vm5649, %v5622, -inf
    %5666 = vmax.xlane.f32.xlu0 %v5665
    %v5667 = vpop.xlane.xlu0 %5666
    %v5668 = vsel %vm5649, %v5623, -inf
    %5669 = vmax.xlane.f32.xlu0 %v5668
    %v5670 = vpop.xlane.xlu0 %5669
    %v5671 = vsel %vm5649, %v5624, -inf
    %5672 = vmax.xlane.f32.xlu0 %v5671
    %v5673 = vpop.xlane.xlu0 %5672
    %v5674 = vsel %vm5649, %v5625, -inf
    %5675 = vmax.xlane.f32.xlu0 %v5674
    %v5676 = vpop.xlane.xlu0 %5675
    %v5677 = vsel %vm5649, %v5626, -inf
    %5678 = vmax.xlane.f32.xlu0 %v5677
    %v5679 = vpop.xlane.xlu0 %5678
    %v5680 = vsel %vm5649, %v5627, -inf
    %5681 = vmax.xlane.f32.xlu0 %v5680
    %v5682 = vpop.xlane.xlu0 %5681
    %v5683 = vsel %vm5649, %v5628, -inf
    %5684 = vmax.xlane.f32.xlu0 %v5683
    %v5685 = vpop.xlane.xlu0 %5684
    %v5686 = vsel %vm5649, %v5629, -inf
    %5687 = vmax.xlane.f32.xlu0 %v5686
    %v5688 = vpop.xlane.xlu0 %5687
    %v5689 = vsel %vm5649, %v5630, -inf
    %5690 = vmax.xlane.f32.xlu0 %v5689
    %v5691 = vpop.xlane.xlu0 %5690
    %v5692 = vsel %vm5649, %v5631, -inf
    %5693 = vmax.xlane.f32.xlu0 %v5692
    %v5694 = vpop.xlane.xlu0 %5693
    %v5695 = vsel %vm5649, %v5632, -inf
    %5696 = vmax.xlane.f32.xlu0 %v5695
    %v5697 = vpop.xlane.xlu0 %5696
    %v5698 = vsel %vm5649, %v5633, -inf
    %5699 = vmax.xlane.f32.xlu0 %v5698
    %v5700 = vpop.xlane.xlu0 %5699
    %v5701 = vsel %vm5649, %v5634, -inf
    %5702 = vmax.xlane.f32.xlu0 %v5701
    %v5703 = vpop.xlane.xlu0 %5702
    %v5704 = vsel %vm5649, %v5635, -inf
    %5705 = vmax.xlane.f32.xlu0 %v5704
    %v5706 = vpop.xlane.xlu0 %5705
    %v5707 = vsel %vm5649, %v5636, -inf
    %5708 = vmax.xlane.f32.xlu0 %v5707
    %v5709 = vpop.xlane.xlu0 %5708
    %v5710 = vsel %vm5649, %v5637, -inf
    %5711 = vmax.xlane.f32.xlu0 %v5710
    %v5712 = vpop.xlane.xlu0 %5711
    %v5713 = vsel %vm5649, %v5638, -inf
    %5714 = vmax.xlane.f32.xlu0 %v5713
    %v5715 = vpop.xlane.xlu0 %5714
    %v5716 = vsel %vm5649, %v5639, -inf
    %5717 = vmax.xlane.f32.xlu0 %v5716
    %v5718 = vpop.xlane.xlu0 %5717
    %v5719 = vsel %vm5649, %v5640, -inf
    %5720 = vmax.xlane.f32.xlu0 %v5719
    %v5721 = vpop.xlane.xlu0 %5720
    %v5722 = vsel %vm5649, %v5641, -inf
    %5723 = vmax.xlane.f32.xlu0 %v5722
    %v5724 = vpop.xlane.xlu0 %5723
    %v5725 = vsel %vm5649, %v5642, -inf
    %5726 = vmax.xlane.f32.xlu0 %v5725
    %v5727 = vpop.xlane.xlu0 %5726
    %v5728 = vsel %vm5649, %v5643, -inf
    %5729 = vmax.xlane.f32.xlu0 %v5728
    %v5730 = vpop.xlane.xlu0 %5729
    %v5731 = vsel %vm5649, %v5644, -inf
    %5732 = vmax.xlane.f32.xlu0 %v5731
    %v5733 = vpop.xlane.xlu0 %5732
    %v5734 = vsel %vm5649, %v5645, -inf
    %5735 = vmax.xlane.f32.xlu0 %v5734
    %v5736 = vpop.xlane.xlu0 %5735
    %v5737 = vsel %vm5649, %v5646, -inf
    %5738 = vmax.xlane.f32.xlu0 %v5737
    %v5739 = vpop.xlane.xlu0 %5738
    %v5740 = vsel %vm5649, %v5647, -inf
    %5741 = vmax.xlane.f32.xlu0 %v5740
    %v5742 = vpop.xlane.xlu0 %5741
    %v5743 = vsel %vm5649, %v5648, -inf
    %5744 = vmax.xlane.f32.xlu0 %v5743
    %v5745 = vpop.xlane.xlu0 %5744
    %v5746 = vsub.f32 %v5617, %v5652
    %v5747 = vsub.f32 %v5618, %v5655
    %v5748 = vsub.f32 %v5619, %v5658
    %v5749 = vsub.f32 %v5620, %v5661
    %v5750 = vsub.f32 %v5621, %v5664
    %v5751 = vsub.f32 %v5622, %v5667
    %v5752 = vsub.f32 %v5623, %v5670
    %v5753 = vsub.f32 %v5624, %v5673
    %v5754 = vsub.f32 %v5625, %v5676
    %v5755 = vsub.f32 %v5626, %v5679
    %v5756 = vsub.f32 %v5627, %v5682
    %v5757 = vsub.f32 %v5628, %v5685
    %v5758 = vsub.f32 %v5629, %v5688
    %v5759 = vsub.f32 %v5630, %v5691
    %v5760 = vsub.f32 %v5631, %v5694
    %v5761 = vsub.f32 %v5632, %v5697
    %v5762 = vsub.f32 %v5633, %v5700
    %v5763 = vsub.f32 %v5634, %v5703
    %v5764 = vsub.f32 %v5635, %v5706
    %v5765 = vsub.f32 %v5636, %v5709
    %v5766 = vsub.f32 %v5637, %v5712
    %v5767 = vsub.f32 %v5638, %v5715
    %v5768 = vsub.f32 %v5639, %v5718
    %v5769 = vsub.f32 %v5640, %v5721
    %v5770 = vsub.f32 %v5641, %v5724
    %v5771 = vsub.f32 %v5642, %v5727
    %v5772 = vsub.f32 %v5643, %v5730
    %v5773 = vsub.f32 %v5644, %v5733
    %v5774 = vsub.f32 %v5645, %v5736
    %v5775 = vsub.f32 %v5646, %v5739
    %v5776 = vsub.f32 %v5647, %v5742
    %v5777 = vsub.f32 %v5648, %v5745
    %v5778 = vmul.f32 %v5746, 1.442695
    %v5779 = vpow.pop %v5778
    %v5780 = vmul.f32 %v5747, 1.442695
    %v5781 = vpow.pop %v5780
    %v5782 = vmul.f32 %v5748, 1.442695
    %v5783 = vpow.pop %v5782
    %v5784 = vmul.f32 %v5749, 1.442695
    %v5785 = vpow.pop %v5784
    %v5786 = vmul.f32 %v5750, 1.442695
    %v5787 = vpow.pop %v5786
    %v5788 = vmul.f32 %v5751, 1.442695
    %v5789 = vpow.pop %v5788
    %v5790 = vmul.f32 %v5752, 1.442695
    %v5791 = vpow.pop %v5790
    %v5792 = vmul.f32 %v5753, 1.442695
    %v5793 = vpow.pop %v5792
    %v5794 = vmul.f32 %v5754, 1.442695
    %v5795 = vpow.pop %v5794
    %v5796 = vmul.f32 %v5755, 1.442695
    %v5797 = vpow.pop %v5796
    %v5798 = vmul.f32 %v5756, 1.442695
    %v5799 = vpow.pop %v5798
    %v5800 = vmul.f32 %v5757, 1.442695
    %v5801 = vpow.pop %v5800
    %v5802 = vmul.f32 %v5758, 1.442695
    %v5803 = vpow.pop %v5802
    %v5804 = vmul.f32 %v5759, 1.442695
    %v5805 = vpow.pop %v5804
    %v5806 = vmul.f32 %v5760, 1.442695
    %v5807 = vpow.pop %v5806
    %v5808 = vmul.f32 %v5761, 1.442695
    %v5809 = vpow.pop %v5808
    %v5810 = vmul.f32 %v5762, 1.442695
    %v5811 = vpow.pop %v5810
    %v5812 = vmul.f32 %v5763, 1.442695
    %v5813 = vpow.pop %v5812
    %v5814 = vmul.f32 %v5764, 1.442695
    %v5815 = vpow.pop %v5814
    %v5816 = vmul.f32 %v5765, 1.442695
    %v5817 = vpow.pop %v5816
    %v5818 = vmul.f32 %v5766, 1.442695
    %v5819 = vpow.pop %v5818
    %v5820 = vmul.f32 %v5767, 1.442695
    %v5821 = vpow.pop %v5820
    %v5822 = vmul.f32 %v5768, 1.442695
    %v5823 = vpow.pop %v5822
    %v5824 = vmul.f32 %v5769, 1.442695
    %v5825 = vpow.pop %v5824
    %v5826 = vmul.f32 %v5770, 1.442695
    %v5827 = vpow.pop %v5826
    %v5828 = vmul.f32 %v5771, 1.442695
    %v5829 = vpow.pop %v5828
    %v5830 = vmul.f32 %v5772, 1.442695
    %v5831 = vpow.pop %v5830
    %v5832 = vmul.f32 %v5773, 1.442695
    %v5833 = vpow.pop %v5832
    %v5834 = vmul.f32 %v5774, 1.442695
    %v5835 = vpow.pop %v5834
    %v5836 = vmul.f32 %v5775, 1.442695
    %v5837 = vpow.pop %v5836
    %v5838 = vmul.f32 %v5776, 1.442695
    %v5839 = vpow.pop %v5838
    %v5840 = vmul.f32 %v5777, 1.442695
    %v5841 = vpow.pop %v5840
    %v5842 = vsel %vm5649, %v5779, 0.0
    %5843 = vadd.xlane.f32.xlu0 %v5842
    %v5844 = vpop.xlane.xlu0 %5843
    %v5845 = vsel %vm5649, %v5781, 0.0
    %5846 = vadd.xlane.f32.xlu0 %v5845
    %v5847 = vpop.xlane.xlu0 %5846
    %v5848 = vsel %vm5649, %v5783, 0.0
    %5849 = vadd.xlane.f32.xlu0 %v5848
    %v5850 = vpop.xlane.xlu0 %5849
    %v5851 = vsel %vm5649, %v5785, 0.0
    %5852 = vadd.xlane.f32.xlu0 %v5851
    %v5853 = vpop.xlane.xlu0 %5852
    %v5854 = vsel %vm5649, %v5787, 0.0
    %5855 = vadd.xlane.f32.xlu0 %v5854
    %v5856 = vpop.xlane.xlu0 %5855
    %v5857 = vsel %vm5649, %v5789, 0.0
    %5858 = vadd.xlane.f32.xlu0 %v5857
    %v5859 = vpop.xlane.xlu0 %5858
    %v5860 = vsel %vm5649, %v5791, 0.0
    %5861 = vadd.xlane.f32.xlu0 %v5860
    %v5862 = vpop.xlane.xlu0 %5861
    %v5863 = vsel %vm5649, %v5793, 0.0
    %5864 = vadd.xlane.f32.xlu0 %v5863
    %v5865 = vpop.xlane.xlu0 %5864
    %v5866 = vsel %vm5649, %v5795, 0.0
    %5867 = vadd.xlane.f32.xlu0 %v5866
    %v5868 = vpop.xlane.xlu0 %5867
    %v5869 = vsel %vm5649, %v5797, 0.0
    %5870 = vadd.xlane.f32.xlu0 %v5869
    %v5871 = vpop.xlane.xlu0 %5870
    %v5872 = vsel %vm5649, %v5799, 0.0
    %5873 = vadd.xlane.f32.xlu0 %v5872
    %v5874 = vpop.xlane.xlu0 %5873
    %v5875 = vsel %vm5649, %v5801, 0.0
    %5876 = vadd.xlane.f32.xlu0 %v5875
    %v5877 = vpop.xlane.xlu0 %5876
    %v5878 = vsel %vm5649, %v5803, 0.0
    %5879 = vadd.xlane.f32.xlu0 %v5878
    %v5880 = vpop.xlane.xlu0 %5879
    %v5881 = vsel %vm5649, %v5805, 0.0
    %5882 = vadd.xlane.f32.xlu0 %v5881
    %v5883 = vpop.xlane.xlu0 %5882
    %v5884 = vsel %vm5649, %v5807, 0.0
    %5885 = vadd.xlane.f32.xlu0 %v5884
    %v5886 = vpop.xlane.xlu0 %5885
    %v5887 = vsel %vm5649, %v5809, 0.0
    %5888 = vadd.xlane.f32.xlu0 %v5887
    %v5889 = vpop.xlane.xlu0 %5888
    %v5890 = vsel %vm5649, %v5811, 0.0
    %5891 = vadd.xlane.f32.xlu0 %v5890
    %v5892 = vpop.xlane.xlu0 %5891
    %v5893 = vsel %vm5649, %v5813, 0.0
    %5894 = vadd.xlane.f32.xlu0 %v5893
    %v5895 = vpop.xlane.xlu0 %5894
    %v5896 = vsel %vm5649, %v5815, 0.0
    %5897 = vadd.xlane.f32.xlu0 %v5896
    %v5898 = vpop.xlane.xlu0 %5897
    %v5899 = vsel %vm5649, %v5817, 0.0
    %5900 = vadd.xlane.f32.xlu0 %v5899
    %v5901 = vpop.xlane.xlu0 %5900
    %v5902 = vsel %vm5649, %v5819, 0.0
    %5903 = vadd.xlane.f32.xlu0 %v5902
    %v5904 = vpop.xlane.xlu0 %5903
    %v5905 = vsel %vm5649, %v5821, 0.0
    %5906 = vadd.xlane.f32.xlu0 %v5905
    %v5907 = vpop.xlane.xlu0 %5906
    %v5908 = vsel %vm5649, %v5823, 0.0
    %5909 = vadd.xlane.f32.xlu0 %v5908
    %v5910 = vpop.xlane.xlu0 %5909
    %v5911 = vsel %vm5649, %v5825, 0.0
    %5912 = vadd.xlane.f32.xlu0 %v5911
    %v5913 = vpop.xlane.xlu0 %5912
    %v5914 = vsel %vm5649, %v5827, 0.0
    %5915 = vadd.xlane.f32.xlu0 %v5914
    %v5916 = vpop.xlane.xlu0 %5915
    %v5917 = vsel %vm5649, %v5829, 0.0
    %5918 = vadd.xlane.f32.xlu0 %v5917
    %v5919 = vpop.xlane.xlu0 %5918
    %v5920 = vsel %vm5649, %v5831, 0.0
    %5921 = vadd.xlane.f32.xlu0 %v5920
    %v5922 = vpop.xlane.xlu0 %5921
    %v5923 = vsel %vm5649, %v5833, 0.0
    %5924 = vadd.xlane.f32.xlu0 %v5923
    %v5925 = vpop.xlane.xlu0 %5924
    %v5926 = vsel %vm5649, %v5835, 0.0
    %5927 = vadd.xlane.f32.xlu0 %v5926
    %v5928 = vpop.xlane.xlu0 %5927
    %v5929 = vsel %vm5649, %v5837, 0.0
    %5930 = vadd.xlane.f32.xlu0 %v5929
    %v5931 = vpop.xlane.xlu0 %5930
    %v5932 = vsel %vm5649, %v5839, 0.0
    %5933 = vadd.xlane.f32.xlu0 %v5932
    %v5934 = vpop.xlane.xlu0 %5933
    %v5935 = vsel %vm5649, %v5841, 0.0
    %5936 = vadd.xlane.f32.xlu0 %v5935
    %v5937 = vpop.xlane.xlu0 %5936
    %v5938 = vrcp.pop %v5844
    %v5939 = vmul.f32 %v5779, %v5938
    %v5940 = vrcp.pop %v5847
    %v5941 = vmul.f32 %v5781, %v5940
    %v5942 = vrcp.pop %v5850
    %v5943 = vmul.f32 %v5783, %v5942
    %v5944 = vrcp.pop %v5853
    %v5945 = vmul.f32 %v5785, %v5944
    %v5946 = vrcp.pop %v5856
    %v5947 = vmul.f32 %v5787, %v5946
    %v5948 = vrcp.pop %v5859
    %v5949 = vmul.f32 %v5789, %v5948
    %v5950 = vrcp.pop %v5862
    %v5951 = vmul.f32 %v5791, %v5950
    %v5952 = vrcp.pop %v5865
    %v5953 = vmul.f32 %v5793, %v5952
    %v5954 = vrcp.pop %v5868
    %v5955 = vmul.f32 %v5795, %v5954
    %v5956 = vrcp.pop %v5871
    %v5957 = vmul.f32 %v5797, %v5956
    %v5958 = vrcp.pop %v5874
    %v5959 = vmul.f32 %v5799, %v5958
    %v5960 = vrcp.pop %v5877
    %v5961 = vmul.f32 %v5801, %v5960
    %v5962 = vrcp.pop %v5880
    %v5963 = vmul.f32 %v5803, %v5962
    %v5964 = vrcp.pop %v5883
    %v5965 = vmul.f32 %v5805, %v5964
    %v5966 = vrcp.pop %v5886
    %v5967 = vmul.f32 %v5807, %v5966
    %v5968 = vrcp.pop %v5889
    %v5969 = vmul.f32 %v5809, %v5968
    %v5970 = vrcp.pop %v5892
    %v5971 = vmul.f32 %v5811, %v5970
    %v5972 = vrcp.pop %v5895
    %v5973 = vmul.f32 %v5813, %v5972
    %v5974 = vrcp.pop %v5898
    %v5975 = vmul.f32 %v5815, %v5974
    %v5976 = vrcp.pop %v5901
    %v5977 = vmul.f32 %v5817, %v5976
    %v5978 = vrcp.pop %v5904
    %v5979 = vmul.f32 %v5819, %v5978
    %v5980 = vrcp.pop %v5907
    %v5981 = vmul.f32 %v5821, %v5980
    %v5982 = vrcp.pop %v5910
    %v5983 = vmul.f32 %v5823, %v5982
    %v5984 = vrcp.pop %v5913
    %v5985 = vmul.f32 %v5825, %v5984
    %v5986 = vrcp.pop %v5916
    %v5987 = vmul.f32 %v5827, %v5986
    %v5988 = vrcp.pop %v5919
    %v5989 = vmul.f32 %v5829, %v5988
    %v5990 = vrcp.pop %v5922
    %v5991 = vmul.f32 %v5831, %v5990
    %v5992 = vrcp.pop %v5925
    %v5993 = vmul.f32 %v5833, %v5992
    %v5994 = vrcp.pop %v5928
    %v5995 = vmul.f32 %v5835, %v5994
    %v5996 = vrcp.pop %v5931
    %v5997 = vmul.f32 %v5837, %v5996
    %v5998 = vrcp.pop %v5934
    %v5999 = vmul.f32 %v5839, %v5998
    %v6000 = vrcp.pop %v5937
    %v6001 = vmul.f32 %v5841, %v6000
    %v6002 = vlaneseq
    %v6003 = vshrl.u32 %v6002, 7
    %v6004 = vsub.s32 0, %v6003
    %v6005 = vrot.slane %v5939, %v6004
    %6007 = vbcast.lane.b32.xlu0 %v6005, 256
    %v6008 = vpop.permute.xlu0 %6007
    %s6010 = sor.u32 256, 8
    %6011 = vbcast.lane.b32.xlu0 %v6005, %s6010
    %v6012 = vpop.permute.xlu0 %6011
    %v6013 = vlaneseq
    %v6014 = vshrl.u32 %v6013, 7
    %v6015 = vsub.s32 1, %v6014
    %v6016 = vrot.slane %v5939, %v6015
    %6018 = vbcast.lane.b32.xlu0 %v6016, 256
    %v6019 = vpop.permute.xlu0 %6018
    %s6021 = sor.u32 256, 8
    %6022 = vbcast.lane.b32.xlu0 %v6016, %s6021
    %v6023 = vpop.permute.xlu0 %6022
    %v6024 = vlaneseq
    %v6025 = vshrl.u32 %v6024, 7
    %v6026 = vsub.s32 2, %v6025
    %v6027 = vrot.slane %v5939, %v6026
    %6029 = vbcast.lane.b32.xlu0 %v6027, 256
    %v6030 = vpop.permute.xlu0 %6029
    %s6032 = sor.u32 256, 8
    %6033 = vbcast.lane.b32.xlu0 %v6027, %s6032
    %v6034 = vpop.permute.xlu0 %6033
    %v6035 = vlaneseq
    %v6036 = vshrl.u32 %v6035, 7
    %v6037 = vsub.s32 3, %v6036
    %v6038 = vrot.slane %v5939, %v6037
    %6040 = vbcast.lane.b32.xlu0 %v6038, 256
    %v6041 = vpop.permute.xlu0 %6040
    %s6043 = sor.u32 256, 8
    %6044 = vbcast.lane.b32.xlu0 %v6038, %s6043
    %v6045 = vpop.permute.xlu0 %6044
    %v6046 = vlaneseq
    %v6047 = vshrl.u32 %v6046, 7
    %v6048 = vsub.s32 4, %v6047
    %v6049 = vrot.slane %v5939, %v6048
    %6051 = vbcast.lane.b32.xlu0 %v6049, 256
    %v6052 = vpop.permute.xlu0 %6051
    %s6054 = sor.u32 256, 8
    %6055 = vbcast.lane.b32.xlu0 %v6049, %s6054
    %v6056 = vpop.permute.xlu0 %6055
    %v6057 = vlaneseq
    %v6058 = vshrl.u32 %v6057, 7
    %v6059 = vsub.s32 5, %v6058
    %v6060 = vrot.slane %v5939, %v6059
    %6062 = vbcast.lane.b32.xlu0 %v6060, 256
    %v6063 = vpop.permute.xlu0 %6062
    %s6065 = sor.u32 256, 8
    %6066 = vbcast.lane.b32.xlu0 %v6060, %s6065
    %v6067 = vpop.permute.xlu0 %6066
    %v6068 = vlaneseq
    %v6069 = vshrl.u32 %v6068, 7
    %v6070 = vsub.s32 6, %v6069
    %v6071 = vrot.slane %v5939, %v6070
    %6073 = vbcast.lane.b32.xlu0 %v6071, 256
    %v6074 = vpop.permute.xlu0 %6073
    %s6076 = sor.u32 256, 8
    %6077 = vbcast.lane.b32.xlu0 %v6071, %s6076
    %v6078 = vpop.permute.xlu0 %6077
    %v6079 = vlaneseq
    %v6080 = vshrl.u32 %v6079, 7
    %v6081 = vsub.s32 7, %v6080
    %v6082 = vrot.slane %v5939, %v6081
    %6084 = vbcast.lane.b32.xlu0 %v6082, 256
    %v6085 = vpop.permute.xlu0 %6084
    %s6087 = sor.u32 256, 8
    %6088 = vbcast.lane.b32.xlu0 %v6082, %s6087
    %v6089 = vpop.permute.xlu0 %6088
    %v6090 = vlaneseq
    %v6091 = vshrl.u32 %v6090, 7
    %v6092 = vsub.s32 0, %v6091
    %v6093 = vrot.slane %v5941, %v6092
    %6095 = vbcast.lane.b32.xlu0 %v6093, 256
    %v6096 = vpop.permute.xlu0 %6095
    %s6098 = sor.u32 256, 8
    %6099 = vbcast.lane.b32.xlu0 %v6093, %s6098
    %v6100 = vpop.permute.xlu0 %6099
    %v6101 = vlaneseq
    %v6102 = vshrl.u32 %v6101, 7
    %v6103 = vsub.s32 1, %v6102
    %v6104 = vrot.slane %v5941, %v6103
    %6106 = vbcast.lane.b32.xlu0 %v6104, 256
    %v6107 = vpop.permute.xlu0 %6106
    %s6109 = sor.u32 256, 8
    %6110 = vbcast.lane.b32.xlu0 %v6104, %s6109
    %v6111 = vpop.permute.xlu0 %6110
    %v6112 = vlaneseq
    %v6113 = vshrl.u32 %v6112, 7
    %v6114 = vsub.s32 2, %v6113
    %v6115 = vrot.slane %v5941, %v6114
    %6117 = vbcast.lane.b32.xlu0 %v6115, 256
    %v6118 = vpop.permute.xlu0 %6117
    %s6120 = sor.u32 256, 8
    %6121 = vbcast.lane.b32.xlu0 %v6115, %s6120
    %v6122 = vpop.permute.xlu0 %6121
    %v6123 = vlaneseq
    %v6124 = vshrl.u32 %v6123, 7
    %v6125 = vsub.s32 3, %v6124
    %v6126 = vrot.slane %v5941, %v6125
    %6128 = vbcast.lane.b32.xlu0 %v6126, 256
    %v6129 = vpop.permute.xlu0 %6128
    %s6131 = sor.u32 256, 8
    %6132 = vbcast.lane.b32.xlu0 %v6126, %s6131
    %v6133 = vpop.permute.xlu0 %6132
    %v6134 = vlaneseq
    %v6135 = vshrl.u32 %v6134, 7
    %v6136 = vsub.s32 4, %v6135
    %v6137 = vrot.slane %v5941, %v6136
    %6139 = vbcast.lane.b32.xlu0 %v6137, 256
    %v6140 = vpop.permute.xlu0 %6139
    %s6142 = sor.u32 256, 8
    %6143 = vbcast.lane.b32.xlu0 %v6137, %s6142
    %v6144 = vpop.permute.xlu0 %6143
    %v6145 = vlaneseq
    %v6146 = vshrl.u32 %v6145, 7
    %v6147 = vsub.s32 5, %v6146
    %v6148 = vrot.slane %v5941, %v6147
    %6150 = vbcast.lane.b32.xlu0 %v6148, 256
    %v6151 = vpop.permute.xlu0 %6150
    %s6153 = sor.u32 256, 8
    %6154 = vbcast.lane.b32.xlu0 %v6148, %s6153
    %v6155 = vpop.permute.xlu0 %6154
    %v6156 = vlaneseq
    %v6157 = vshrl.u32 %v6156, 7
    %v6158 = vsub.s32 6, %v6157
    %v6159 = vrot.slane %v5941, %v6158
    %6161 = vbcast.lane.b32.xlu0 %v6159, 256
    %v6162 = vpop.permute.xlu0 %6161
    %s6164 = sor.u32 256, 8
    %6165 = vbcast.lane.b32.xlu0 %v6159, %s6164
    %v6166 = vpop.permute.xlu0 %6165
    %v6167 = vlaneseq
    %v6168 = vshrl.u32 %v6167, 7
    %v6169 = vsub.s32 7, %v6168
    %v6170 = vrot.slane %v5941, %v6169
    %6172 = vbcast.lane.b32.xlu0 %v6170, 256
    %v6173 = vpop.permute.xlu0 %6172
    %s6175 = sor.u32 256, 8
    %6176 = vbcast.lane.b32.xlu0 %v6170, %s6175
    %v6177 = vpop.permute.xlu0 %6176
    %v6178 = vlaneseq
    %v6179 = vshrl.u32 %v6178, 7
    %v6180 = vsub.s32 0, %v6179
    %v6181 = vrot.slane %v5943, %v6180
    %6183 = vbcast.lane.b32.xlu0 %v6181, 256
    %v6184 = vpop.permute.xlu0 %6183
    %s6186 = sor.u32 256, 8
    %6187 = vbcast.lane.b32.xlu0 %v6181, %s6186
    %v6188 = vpop.permute.xlu0 %6187
    %v6189 = vlaneseq
    %v6190 = vshrl.u32 %v6189, 7
    %v6191 = vsub.s32 1, %v6190
    %v6192 = vrot.slane %v5943, %v6191
    %6194 = vbcast.lane.b32.xlu0 %v6192, 256
    %v6195 = vpop.permute.xlu0 %6194
    %s6197 = sor.u32 256, 8
    %6198 = vbcast.lane.b32.xlu0 %v6192, %s6197
    %v6199 = vpop.permute.xlu0 %6198
    %v6200 = vlaneseq
    %v6201 = vshrl.u32 %v6200, 7
    %v6202 = vsub.s32 2, %v6201
    %v6203 = vrot.slane %v5943, %v6202
    %6205 = vbcast.lane.b32.xlu0 %v6203, 256
    %v6206 = vpop.permute.xlu0 %6205
    %s6208 = sor.u32 256, 8
    %6209 = vbcast.lane.b32.xlu0 %v6203, %s6208
    %v6210 = vpop.permute.xlu0 %6209
    %v6211 = vlaneseq
    %v6212 = vshrl.u32 %v6211, 7
    %v6213 = vsub.s32 3, %v6212
    %v6214 = vrot.slane %v5943, %v6213
    %6216 = vbcast.lane.b32.xlu0 %v6214, 256
    %v6217 = vpop.permute.xlu0 %6216
    %s6219 = sor.u32 256, 8
    %6220 = vbcast.lane.b32.xlu0 %v6214, %s6219
    %v6221 = vpop.permute.xlu0 %6220
    %v6222 = vlaneseq
    %v6223 = vshrl.u32 %v6222, 7
    %v6224 = vsub.s32 4, %v6223
    %v6225 = vrot.slane %v5943, %v6224
    %6227 = vbcast.lane.b32.xlu0 %v6225, 256
    %v6228 = vpop.permute.xlu0 %6227
    %s6230 = sor.u32 256, 8
    %6231 = vbcast.lane.b32.xlu0 %v6225, %s6230
    %v6232 = vpop.permute.xlu0 %6231
    %v6233 = vlaneseq
    %v6234 = vshrl.u32 %v6233, 7
    %v6235 = vsub.s32 5, %v6234
    %v6236 = vrot.slane %v5943, %v6235
    %6238 = vbcast.lane.b32.xlu0 %v6236, 256
    %v6239 = vpop.permute.xlu0 %6238
    %s6241 = sor.u32 256, 8
    %6242 = vbcast.lane.b32.xlu0 %v6236, %s6241
    %v6243 = vpop.permute.xlu0 %6242
    %v6244 = vlaneseq
    %v6245 = vshrl.u32 %v6244, 7
    %v6246 = vsub.s32 6, %v6245
    %v6247 = vrot.slane %v5943, %v6246
    %6249 = vbcast.lane.b32.xlu0 %v6247, 256
    %v6250 = vpop.permute.xlu0 %6249
    %s6252 = sor.u32 256, 8
    %6253 = vbcast.lane.b32.xlu0 %v6247, %s6252
    %v6254 = vpop.permute.xlu0 %6253
    %v6255 = vlaneseq
    %v6256 = vshrl.u32 %v6255, 7
    %v6257 = vsub.s32 7, %v6256
    %v6258 = vrot.slane %v5943, %v6257
    %6260 = vbcast.lane.b32.xlu0 %v6258, 256
    %v6261 = vpop.permute.xlu0 %6260
    %s6263 = sor.u32 256, 8
    %6264 = vbcast.lane.b32.xlu0 %v6258, %s6263
    %v6265 = vpop.permute.xlu0 %6264
    %v6266 = vlaneseq
    %v6267 = vshrl.u32 %v6266, 7
    %v6268 = vsub.s32 0, %v6267
    %v6269 = vrot.slane %v5945, %v6268
    %6271 = vbcast.lane.b32.xlu0 %v6269, 256
    %v6272 = vpop.permute.xlu0 %6271
    %s6274 = sor.u32 256, 8
    %6275 = vbcast.lane.b32.xlu0 %v6269, %s6274
    %v6276 = vpop.permute.xlu0 %6275
    %v6277 = vlaneseq
    %v6278 = vshrl.u32 %v6277, 7
    %v6279 = vsub.s32 1, %v6278
    %v6280 = vrot.slane %v5945, %v6279
    %6282 = vbcast.lane.b32.xlu0 %v6280, 256
    %v6283 = vpop.permute.xlu0 %6282
    %s6285 = sor.u32 256, 8
    %6286 = vbcast.lane.b32.xlu0 %v6280, %s6285
    %v6287 = vpop.permute.xlu0 %6286
    %v6288 = vlaneseq
    %v6289 = vshrl.u32 %v6288, 7
    %v6290 = vsub.s32 2, %v6289
    %v6291 = vrot.slane %v5945, %v6290
    %6293 = vbcast.lane.b32.xlu0 %v6291, 256
    %v6294 = vpop.permute.xlu0 %6293
    %s6296 = sor.u32 256, 8
    %6297 = vbcast.lane.b32.xlu0 %v6291, %s6296
    %v6298 = vpop.permute.xlu0 %6297
    %v6299 = vlaneseq
    %v6300 = vshrl.u32 %v6299, 7
    %v6301 = vsub.s32 3, %v6300
    %v6302 = vrot.slane %v5945, %v6301
    %6304 = vbcast.lane.b32.xlu0 %v6302, 256
    %v6305 = vpop.permute.xlu0 %6304
    %s6307 = sor.u32 256, 8
    %6308 = vbcast.lane.b32.xlu0 %v6302, %s6307
    %v6309 = vpop.permute.xlu0 %6308
    %v6310 = vlaneseq
    %v6311 = vshrl.u32 %v6310, 7
    %v6312 = vsub.s32 4, %v6311
    %v6313 = vrot.slane %v5945, %v6312
    %6315 = vbcast.lane.b32.xlu0 %v6313, 256
    %v6316 = vpop.permute.xlu0 %6315
    %s6318 = sor.u32 256, 8
    %6319 = vbcast.lane.b32.xlu0 %v6313, %s6318
    %v6320 = vpop.permute.xlu0 %6319
    %v6321 = vlaneseq
    %v6322 = vshrl.u32 %v6321, 7
    %v6323 = vsub.s32 5, %v6322
    %v6324 = vrot.slane %v5945, %v6323
    %6326 = vbcast.lane.b32.xlu0 %v6324, 256
    %v6327 = vpop.permute.xlu0 %6326
    %s6329 = sor.u32 256, 8
    %6330 = vbcast.lane.b32.xlu0 %v6324, %s6329
    %v6331 = vpop.permute.xlu0 %6330
    %v6332 = vlaneseq
    %v6333 = vshrl.u32 %v6332, 7
    %v6334 = vsub.s32 6, %v6333
    %v6335 = vrot.slane %v5945, %v6334
    %6337 = vbcast.lane.b32.xlu0 %v6335, 256
    %v6338 = vpop.permute.xlu0 %6337
    %s6340 = sor.u32 256, 8
    %6341 = vbcast.lane.b32.xlu0 %v6335, %s6340
    %v6342 = vpop.permute.xlu0 %6341
    %v6343 = vlaneseq
    %v6344 = vshrl.u32 %v6343, 7
    %v6345 = vsub.s32 7, %v6344
    %v6346 = vrot.slane %v5945, %v6345
    %6348 = vbcast.lane.b32.xlu0 %v6346, 256
    %v6349 = vpop.permute.xlu0 %6348
    %s6351 = sor.u32 256, 8
    %6352 = vbcast.lane.b32.xlu0 %v6346, %s6351
    %v6353 = vpop.permute.xlu0 %6352
    %v6354 = vlaneseq
    %v6355 = vshrl.u32 %v6354, 7
    %v6356 = vsub.s32 0, %v6355
    %v6357 = vrot.slane %v5947, %v6356
    %6359 = vbcast.lane.b32.xlu0 %v6357, 256
    %v6360 = vpop.permute.xlu0 %6359
    %s6362 = sor.u32 256, 8
    %6363 = vbcast.lane.b32.xlu0 %v6357, %s6362
    %v6364 = vpop.permute.xlu0 %6363
    %v6365 = vlaneseq
    %v6366 = vshrl.u32 %v6365, 7
    %v6367 = vsub.s32 1, %v6366
    %v6368 = vrot.slane %v5947, %v6367
    %6370 = vbcast.lane.b32.xlu0 %v6368, 256
    %v6371 = vpop.permute.xlu0 %6370
    %s6373 = sor.u32 256, 8
    %6374 = vbcast.lane.b32.xlu0 %v6368, %s6373
    %v6375 = vpop.permute.xlu0 %6374
    %v6376 = vlaneseq
    %v6377 = vshrl.u32 %v6376, 7
    %v6378 = vsub.s32 2, %v6377
    %v6379 = vrot.slane %v5947, %v6378
    %6381 = vbcast.lane.b32.xlu0 %v6379, 256
    %v6382 = vpop.permute.xlu0 %6381
    %s6384 = sor.u32 256, 8
    %6385 = vbcast.lane.b32.xlu0 %v6379, %s6384
    %v6386 = vpop.permute.xlu0 %6385
    %v6387 = vlaneseq
    %v6388 = vshrl.u32 %v6387, 7
    %v6389 = vsub.s32 3, %v6388
    %v6390 = vrot.slane %v5947, %v6389
    %6392 = vbcast.lane.b32.xlu0 %v6390, 256
    %v6393 = vpop.permute.xlu0 %6392
    %s6395 = sor.u32 256, 8
    %6396 = vbcast.lane.b32.xlu0 %v6390, %s6395
    %v6397 = vpop.permute.xlu0 %6396
    %v6398 = vlaneseq
    %v6399 = vshrl.u32 %v6398, 7
    %v6400 = vsub.s32 4, %v6399
    %v6401 = vrot.slane %v5947, %v6400
    %6403 = vbcast.lane.b32.xlu0 %v6401, 256
    %v6404 = vpop.permute.xlu0 %6403
    %s6406 = sor.u32 256, 8
    %6407 = vbcast.lane.b32.xlu0 %v6401, %s6406
    %v6408 = vpop.permute.xlu0 %6407
    %v6409 = vlaneseq
    %v6410 = vshrl.u32 %v6409, 7
    %v6411 = vsub.s32 5, %v6410
    %v6412 = vrot.slane %v5947, %v6411
    %6414 = vbcast.lane.b32.xlu0 %v6412, 256
    %v6415 = vpop.permute.xlu0 %6414
    %s6417 = sor.u32 256, 8
    %6418 = vbcast.lane.b32.xlu0 %v6412, %s6417
    %v6419 = vpop.permute.xlu0 %6418
    %v6420 = vlaneseq
    %v6421 = vshrl.u32 %v6420, 7
    %v6422 = vsub.s32 6, %v6421
    %v6423 = vrot.slane %v5947, %v6422
    %6425 = vbcast.lane.b32.xlu0 %v6423, 256
    %v6426 = vpop.permute.xlu0 %6425
    %s6428 = sor.u32 256, 8
    %6429 = vbcast.lane.b32.xlu0 %v6423, %s6428
    %v6430 = vpop.permute.xlu0 %6429
    %v6431 = vlaneseq
    %v6432 = vshrl.u32 %v6431, 7
    %v6433 = vsub.s32 7, %v6432
    %v6434 = vrot.slane %v5947, %v6433
    %6436 = vbcast.lane.b32.xlu0 %v6434, 256
    %v6437 = vpop.permute.xlu0 %6436
    %s6439 = sor.u32 256, 8
    %6440 = vbcast.lane.b32.xlu0 %v6434, %s6439
    %v6441 = vpop.permute.xlu0 %6440
    %v6442 = vlaneseq
    %v6443 = vshrl.u32 %v6442, 7
    %v6444 = vsub.s32 0, %v6443
    %v6445 = vrot.slane %v5949, %v6444
    %6447 = vbcast.lane.b32.xlu0 %v6445, 256
    %v6448 = vpop.permute.xlu0 %6447
    %s6450 = sor.u32 256, 8
    %6451 = vbcast.lane.b32.xlu0 %v6445, %s6450
    %v6452 = vpop.permute.xlu0 %6451
    %v6453 = vlaneseq
    %v6454 = vshrl.u32 %v6453, 7
    %v6455 = vsub.s32 1, %v6454
    %v6456 = vrot.slane %v5949, %v6455
    %6458 = vbcast.lane.b32.xlu0 %v6456, 256
    %v6459 = vpop.permute.xlu0 %6458
    %s6461 = sor.u32 256, 8
    %6462 = vbcast.lane.b32.xlu0 %v6456, %s6461
    %v6463 = vpop.permute.xlu0 %6462
    %v6464 = vlaneseq
    %v6465 = vshrl.u32 %v6464, 7
    %v6466 = vsub.s32 2, %v6465
    %v6467 = vrot.slane %v5949, %v6466
    %6469 = vbcast.lane.b32.xlu0 %v6467, 256
    %v6470 = vpop.permute.xlu0 %6469
    %s6472 = sor.u32 256, 8
    %6473 = vbcast.lane.b32.xlu0 %v6467, %s6472
    %v6474 = vpop.permute.xlu0 %6473
    %v6475 = vlaneseq
    %v6476 = vshrl.u32 %v6475, 7
    %v6477 = vsub.s32 3, %v6476
    %v6478 = vrot.slane %v5949, %v6477
    %6480 = vbcast.lane.b32.xlu0 %v6478, 256
    %v6481 = vpop.permute.xlu0 %6480
    %s6483 = sor.u32 256, 8
    %6484 = vbcast.lane.b32.xlu0 %v6478, %s6483
    %v6485 = vpop.permute.xlu0 %6484
    %v6486 = vlaneseq
    %v6487 = vshrl.u32 %v6486, 7
    %v6488 = vsub.s32 4, %v6487
    %v6489 = vrot.slane %v5949, %v6488
    %6491 = vbcast.lane.b32.xlu0 %v6489, 256
    %v6492 = vpop.permute.xlu0 %6491
    %s6494 = sor.u32 256, 8
    %6495 = vbcast.lane.b32.xlu0 %v6489, %s6494
    %v6496 = vpop.permute.xlu0 %6495
    %v6497 = vlaneseq
    %v6498 = vshrl.u32 %v6497, 7
    %v6499 = vsub.s32 5, %v6498
    %v6500 = vrot.slane %v5949, %v6499
    %6502 = vbcast.lane.b32.xlu0 %v6500, 256
    %v6503 = vpop.permute.xlu0 %6502
    %s6505 = sor.u32 256, 8
    %6506 = vbcast.lane.b32.xlu0 %v6500, %s6505
    %v6507 = vpop.permute.xlu0 %6506
    %v6508 = vlaneseq
    %v6509 = vshrl.u32 %v6508, 7
    %v6510 = vsub.s32 6, %v6509
    %v6511 = vrot.slane %v5949, %v6510
    %6513 = vbcast.lane.b32.xlu0 %v6511, 256
    %v6514 = vpop.permute.xlu0 %6513
    %s6516 = sor.u32 256, 8
    %6517 = vbcast.lane.b32.xlu0 %v6511, %s6516
    %v6518 = vpop.permute.xlu0 %6517
    %v6519 = vlaneseq
    %v6520 = vshrl.u32 %v6519, 7
    %v6521 = vsub.s32 7, %v6520
    %v6522 = vrot.slane %v5949, %v6521
    %6524 = vbcast.lane.b32.xlu0 %v6522, 256
    %v6525 = vpop.permute.xlu0 %6524
    %s6527 = sor.u32 256, 8
    %6528 = vbcast.lane.b32.xlu0 %v6522, %s6527
    %v6529 = vpop.permute.xlu0 %6528
    %v6530 = vlaneseq
    %v6531 = vshrl.u32 %v6530, 7
    %v6532 = vsub.s32 0, %v6531
    %v6533 = vrot.slane %v5951, %v6532
    %6535 = vbcast.lane.b32.xlu0 %v6533, 256
    %v6536 = vpop.permute.xlu0 %6535
    %s6538 = sor.u32 256, 8
    %6539 = vbcast.lane.b32.xlu0 %v6533, %s6538
    %v6540 = vpop.permute.xlu0 %6539
    %v6541 = vlaneseq
    %v6542 = vshrl.u32 %v6541, 7
    %v6543 = vsub.s32 1, %v6542
    %v6544 = vrot.slane %v5951, %v6543
    %6546 = vbcast.lane.b32.xlu0 %v6544, 256
    %v6547 = vpop.permute.xlu0 %6546
    %s6549 = sor.u32 256, 8
    %6550 = vbcast.lane.b32.xlu0 %v6544, %s6549
    %v6551 = vpop.permute.xlu0 %6550
    %v6552 = vlaneseq
    %v6553 = vshrl.u32 %v6552, 7
    %v6554 = vsub.s32 2, %v6553
    %v6555 = vrot.slane %v5951, %v6554
    %6557 = vbcast.lane.b32.xlu0 %v6555, 256
    %v6558 = vpop.permute.xlu0 %6557
    %s6560 = sor.u32 256, 8
    %6561 = vbcast.lane.b32.xlu0 %v6555, %s6560
    %v6562 = vpop.permute.xlu0 %6561
    %v6563 = vlaneseq
    %v6564 = vshrl.u32 %v6563, 7
    %v6565 = vsub.s32 3, %v6564
    %v6566 = vrot.slane %v5951, %v6565
    %6568 = vbcast.lane.b32.xlu0 %v6566, 256
    %v6569 = vpop.permute.xlu0 %6568
    %s6571 = sor.u32 256, 8
    %6572 = vbcast.lane.b32.xlu0 %v6566, %s6571
    %v6573 = vpop.permute.xlu0 %6572
    %v6574 = vlaneseq
    %v6575 = vshrl.u32 %v6574, 7
    %v6576 = vsub.s32 4, %v6575
    %v6577 = vrot.slane %v5951, %v6576
    %6579 = vbcast.lane.b32.xlu0 %v6577, 256
    %v6580 = vpop.permute.xlu0 %6579
    %s6582 = sor.u32 256, 8
    %6583 = vbcast.lane.b32.xlu0 %v6577, %s6582
    %v6584 = vpop.permute.xlu0 %6583
    %v6585 = vlaneseq
    %v6586 = vshrl.u32 %v6585, 7
    %v6587 = vsub.s32 5, %v6586
    %v6588 = vrot.slane %v5951, %v6587
    %6590 = vbcast.lane.b32.xlu0 %v6588, 256
    %v6591 = vpop.permute.xlu0 %6590
    %s6593 = sor.u32 256, 8
    %6594 = vbcast.lane.b32.xlu0 %v6588, %s6593
    %v6595 = vpop.permute.xlu0 %6594
    %v6596 = vlaneseq
    %v6597 = vshrl.u32 %v6596, 7
    %v6598 = vsub.s32 6, %v6597
    %v6599 = vrot.slane %v5951, %v6598
    %6601 = vbcast.lane.b32.xlu0 %v6599, 256
    %v6602 = vpop.permute.xlu0 %6601
    %s6604 = sor.u32 256, 8
    %6605 = vbcast.lane.b32.xlu0 %v6599, %s6604
    %v6606 = vpop.permute.xlu0 %6605
    %v6607 = vlaneseq
    %v6608 = vshrl.u32 %v6607, 7
    %v6609 = vsub.s32 7, %v6608
    %v6610 = vrot.slane %v5951, %v6609
    %6612 = vbcast.lane.b32.xlu0 %v6610, 256
    %v6613 = vpop.permute.xlu0 %6612
    %s6615 = sor.u32 256, 8
    %6616 = vbcast.lane.b32.xlu0 %v6610, %s6615
    %v6617 = vpop.permute.xlu0 %6616
    %v6618 = vlaneseq
    %v6619 = vshrl.u32 %v6618, 7
    %v6620 = vsub.s32 0, %v6619
    %v6621 = vrot.slane %v5953, %v6620
    %6623 = vbcast.lane.b32.xlu0 %v6621, 256
    %v6624 = vpop.permute.xlu0 %6623
    %s6626 = sor.u32 256, 8
    %6627 = vbcast.lane.b32.xlu0 %v6621, %s6626
    %v6628 = vpop.permute.xlu0 %6627
    %v6629 = vlaneseq
    %v6630 = vshrl.u32 %v6629, 7
    %v6631 = vsub.s32 1, %v6630
    %v6632 = vrot.slane %v5953, %v6631
    %6634 = vbcast.lane.b32.xlu0 %v6632, 256
    %v6635 = vpop.permute.xlu0 %6634
    %s6637 = sor.u32 256, 8
    %6638 = vbcast.lane.b32.xlu0 %v6632, %s6637
    %v6639 = vpop.permute.xlu0 %6638
    %v6640 = vlaneseq
    %v6641 = vshrl.u32 %v6640, 7
    %v6642 = vsub.s32 2, %v6641
    %v6643 = vrot.slane %v5953, %v6642
    %6645 = vbcast.lane.b32.xlu0 %v6643, 256
    %v6646 = vpop.permute.xlu0 %6645
    %s6648 = sor.u32 256, 8
    %6649 = vbcast.lane.b32.xlu0 %v6643, %s6648
    %v6650 = vpop.permute.xlu0 %6649
    %v6651 = vlaneseq
    %v6652 = vshrl.u32 %v6651, 7
    %v6653 = vsub.s32 3, %v6652
    %v6654 = vrot.slane %v5953, %v6653
    %6656 = vbcast.lane.b32.xlu0 %v6654, 256
    %v6657 = vpop.permute.xlu0 %6656
    %s6659 = sor.u32 256, 8
    %6660 = vbcast.lane.b32.xlu0 %v6654, %s6659
    %v6661 = vpop.permute.xlu0 %6660
    %v6662 = vlaneseq
    %v6663 = vshrl.u32 %v6662, 7
    %v6664 = vsub.s32 4, %v6663
    %v6665 = vrot.slane %v5953, %v6664
    %6667 = vbcast.lane.b32.xlu0 %v6665, 256
    %v6668 = vpop.permute.xlu0 %6667
    %s6670 = sor.u32 256, 8
    %6671 = vbcast.lane.b32.xlu0 %v6665, %s6670
    %v6672 = vpop.permute.xlu0 %6671
    %v6673 = vlaneseq
    %v6674 = vshrl.u32 %v6673, 7
    %v6675 = vsub.s32 5, %v6674
    %v6676 = vrot.slane %v5953, %v6675
    %6678 = vbcast.lane.b32.xlu0 %v6676, 256
    %v6679 = vpop.permute.xlu0 %6678
    %s6681 = sor.u32 256, 8
    %6682 = vbcast.lane.b32.xlu0 %v6676, %s6681
    %v6683 = vpop.permute.xlu0 %6682
    %v6684 = vlaneseq
    %v6685 = vshrl.u32 %v6684, 7
    %v6686 = vsub.s32 6, %v6685
    %v6687 = vrot.slane %v5953, %v6686
    %6689 = vbcast.lane.b32.xlu0 %v6687, 256
    %v6690 = vpop.permute.xlu0 %6689
    %s6692 = sor.u32 256, 8
    %6693 = vbcast.lane.b32.xlu0 %v6687, %s6692
    %v6694 = vpop.permute.xlu0 %6693
    %v6695 = vlaneseq
    %v6696 = vshrl.u32 %v6695, 7
    %v6697 = vsub.s32 7, %v6696
    %v6698 = vrot.slane %v5953, %v6697
    %6700 = vbcast.lane.b32.xlu0 %v6698, 256
    %v6701 = vpop.permute.xlu0 %6700
    %s6703 = sor.u32 256, 8
    %6704 = vbcast.lane.b32.xlu0 %v6698, %s6703
    %v6705 = vpop.permute.xlu0 %6704
    %v6706 = vlaneseq
    %v6707 = vshrl.u32 %v6706, 7
    %v6708 = vsub.s32 0, %v6707
    %v6709 = vrot.slane %v5955, %v6708
    %6711 = vbcast.lane.b32.xlu0 %v6709, 256
    %v6712 = vpop.permute.xlu0 %6711
    %s6714 = sor.u32 256, 8
    %6715 = vbcast.lane.b32.xlu0 %v6709, %s6714
    %v6716 = vpop.permute.xlu0 %6715
    %v6717 = vlaneseq
    %v6718 = vshrl.u32 %v6717, 7
    %v6719 = vsub.s32 1, %v6718
    %v6720 = vrot.slane %v5955, %v6719
    %6722 = vbcast.lane.b32.xlu0 %v6720, 256
    %v6723 = vpop.permute.xlu0 %6722
    %s6725 = sor.u32 256, 8
    %6726 = vbcast.lane.b32.xlu0 %v6720, %s6725
    %v6727 = vpop.permute.xlu0 %6726
    %v6728 = vlaneseq
    %v6729 = vshrl.u32 %v6728, 7
    %v6730 = vsub.s32 2, %v6729
    %v6731 = vrot.slane %v5955, %v6730
    %6733 = vbcast.lane.b32.xlu0 %v6731, 256
    %v6734 = vpop.permute.xlu0 %6733
    %s6736 = sor.u32 256, 8
    %6737 = vbcast.lane.b32.xlu0 %v6731, %s6736
    %v6738 = vpop.permute.xlu0 %6737
    %v6739 = vlaneseq
    %v6740 = vshrl.u32 %v6739, 7
    %v6741 = vsub.s32 3, %v6740
    %v6742 = vrot.slane %v5955, %v6741
    %6744 = vbcast.lane.b32.xlu0 %v6742, 256
    %v6745 = vpop.permute.xlu0 %6744
    %s6747 = sor.u32 256, 8
    %6748 = vbcast.lane.b32.xlu0 %v6742, %s6747
    %v6749 = vpop.permute.xlu0 %6748
    %v6750 = vlaneseq
    %v6751 = vshrl.u32 %v6750, 7
    %v6752 = vsub.s32 4, %v6751
    %v6753 = vrot.slane %v5955, %v6752
    %6755 = vbcast.lane.b32.xlu0 %v6753, 256
    %v6756 = vpop.permute.xlu0 %6755
    %s6758 = sor.u32 256, 8
    %6759 = vbcast.lane.b32.xlu0 %v6753, %s6758
    %v6760 = vpop.permute.xlu0 %6759
    %v6761 = vlaneseq
    %v6762 = vshrl.u32 %v6761, 7
    %v6763 = vsub.s32 5, %v6762
    %v6764 = vrot.slane %v5955, %v6763
    %6766 = vbcast.lane.b32.xlu0 %v6764, 256
    %v6767 = vpop.permute.xlu0 %6766
    %s6769 = sor.u32 256, 8
    %6770 = vbcast.lane.b32.xlu0 %v6764, %s6769
    %v6771 = vpop.permute.xlu0 %6770
    %v6772 = vlaneseq
    %v6773 = vshrl.u32 %v6772, 7
    %v6774 = vsub.s32 6, %v6773
    %v6775 = vrot.slane %v5955, %v6774
    %6777 = vbcast.lane.b32.xlu0 %v6775, 256
    %v6778 = vpop.permute.xlu0 %6777
    %s6780 = sor.u32 256, 8
    %6781 = vbcast.lane.b32.xlu0 %v6775, %s6780
    %v6782 = vpop.permute.xlu0 %6781
    %v6783 = vlaneseq
    %v6784 = vshrl.u32 %v6783, 7
    %v6785 = vsub.s32 7, %v6784
    %v6786 = vrot.slane %v5955, %v6785
    %6788 = vbcast.lane.b32.xlu0 %v6786, 256
    %v6789 = vpop.permute.xlu0 %6788
    %s6791 = sor.u32 256, 8
    %6792 = vbcast.lane.b32.xlu0 %v6786, %s6791
    %v6793 = vpop.permute.xlu0 %6792
    %v6794 = vlaneseq
    %v6795 = vshrl.u32 %v6794, 7
    %v6796 = vsub.s32 0, %v6795
    %v6797 = vrot.slane %v5957, %v6796
    %6799 = vbcast.lane.b32.xlu0 %v6797, 256
    %v6800 = vpop.permute.xlu0 %6799
    %s6802 = sor.u32 256, 8
    %6803 = vbcast.lane.b32.xlu0 %v6797, %s6802
    %v6804 = vpop.permute.xlu0 %6803
    %v6805 = vlaneseq
    %v6806 = vshrl.u32 %v6805, 7
    %v6807 = vsub.s32 1, %v6806
    %v6808 = vrot.slane %v5957, %v6807
    %6810 = vbcast.lane.b32.xlu0 %v6808, 256
    %v6811 = vpop.permute.xlu0 %6810
    %s6813 = sor.u32 256, 8
    %6814 = vbcast.lane.b32.xlu0 %v6808, %s6813
    %v6815 = vpop.permute.xlu0 %6814
    %v6816 = vlaneseq
    %v6817 = vshrl.u32 %v6816, 7
    %v6818 = vsub.s32 2, %v6817
    %v6819 = vrot.slane %v5957, %v6818
    %6821 = vbcast.lane.b32.xlu0 %v6819, 256
    %v6822 = vpop.permute.xlu0 %6821
    %s6824 = sor.u32 256, 8
    %6825 = vbcast.lane.b32.xlu0 %v6819, %s6824
    %v6826 = vpop.permute.xlu0 %6825
    %v6827 = vlaneseq
    %v6828 = vshrl.u32 %v6827, 7
    %v6829 = vsub.s32 3, %v6828
    %v6830 = vrot.slane %v5957, %v6829
    %6832 = vbcast.lane.b32.xlu0 %v6830, 256
    %v6833 = vpop.permute.xlu0 %6832
    %s6835 = sor.u32 256, 8
    %6836 = vbcast.lane.b32.xlu0 %v6830, %s6835
    %v6837 = vpop.permute.xlu0 %6836
    %v6838 = vlaneseq
    %v6839 = vshrl.u32 %v6838, 7
    %v6840 = vsub.s32 4, %v6839
    %v6841 = vrot.slane %v5957, %v6840
    %6843 = vbcast.lane.b32.xlu0 %v6841, 256
    %v6844 = vpop.permute.xlu0 %6843
    %s6846 = sor.u32 256, 8
    %6847 = vbcast.lane.b32.xlu0 %v6841, %s6846
    %v6848 = vpop.permute.xlu0 %6847
    %v6849 = vlaneseq
    %v6850 = vshrl.u32 %v6849, 7
    %v6851 = vsub.s32 5, %v6850
    %v6852 = vrot.slane %v5957, %v6851
    %6854 = vbcast.lane.b32.xlu0 %v6852, 256
    %v6855 = vpop.permute.xlu0 %6854
    %s6857 = sor.u32 256, 8
    %6858 = vbcast.lane.b32.xlu0 %v6852, %s6857
    %v6859 = vpop.permute.xlu0 %6858
    %v6860 = vlaneseq
    %v6861 = vshrl.u32 %v6860, 7
    %v6862 = vsub.s32 6, %v6861
    %v6863 = vrot.slane %v5957, %v6862
    %6865 = vbcast.lane.b32.xlu0 %v6863, 256
    %v6866 = vpop.permute.xlu0 %6865
    %s6868 = sor.u32 256, 8
    %6869 = vbcast.lane.b32.xlu0 %v6863, %s6868
    %v6870 = vpop.permute.xlu0 %6869
    %v6871 = vlaneseq
    %v6872 = vshrl.u32 %v6871, 7
    %v6873 = vsub.s32 7, %v6872
    %v6874 = vrot.slane %v5957, %v6873
    %6876 = vbcast.lane.b32.xlu0 %v6874, 256
    %v6877 = vpop.permute.xlu0 %6876
    %s6879 = sor.u32 256, 8
    %6880 = vbcast.lane.b32.xlu0 %v6874, %s6879
    %v6881 = vpop.permute.xlu0 %6880
    %v6882 = vlaneseq
    %v6883 = vshrl.u32 %v6882, 7
    %v6884 = vsub.s32 0, %v6883
    %v6885 = vrot.slane %v5959, %v6884
    %6887 = vbcast.lane.b32.xlu0 %v6885, 256
    %v6888 = vpop.permute.xlu0 %6887
    %s6890 = sor.u32 256, 8
    %6891 = vbcast.lane.b32.xlu0 %v6885, %s6890
    %v6892 = vpop.permute.xlu0 %6891
    %v6893 = vlaneseq
    %v6894 = vshrl.u32 %v6893, 7
    %v6895 = vsub.s32 1, %v6894
    %v6896 = vrot.slane %v5959, %v6895
    %6898 = vbcast.lane.b32.xlu0 %v6896, 256
    %v6899 = vpop.permute.xlu0 %6898
    %s6901 = sor.u32 256, 8
    %6902 = vbcast.lane.b32.xlu0 %v6896, %s6901
    %v6903 = vpop.permute.xlu0 %6902
    %v6904 = vlaneseq
    %v6905 = vshrl.u32 %v6904, 7
    %v6906 = vsub.s32 2, %v6905
    %v6907 = vrot.slane %v5959, %v6906
    %6909 = vbcast.lane.b32.xlu0 %v6907, 256
    %v6910 = vpop.permute.xlu0 %6909
    %s6912 = sor.u32 256, 8
    %6913 = vbcast.lane.b32.xlu0 %v6907, %s6912
    %v6914 = vpop.permute.xlu0 %6913
    %v6915 = vlaneseq
    %v6916 = vshrl.u32 %v6915, 7
    %v6917 = vsub.s32 3, %v6916
    %v6918 = vrot.slane %v5959, %v6917
    %6920 = vbcast.lane.b32.xlu0 %v6918, 256
    %v6921 = vpop.permute.xlu0 %6920
    %s6923 = sor.u32 256, 8
    %6924 = vbcast.lane.b32.xlu0 %v6918, %s6923
    %v6925 = vpop.permute.xlu0 %6924
    %v6926 = vlaneseq
    %v6927 = vshrl.u32 %v6926, 7
    %v6928 = vsub.s32 4, %v6927
    %v6929 = vrot.slane %v5959, %v6928
    %6931 = vbcast.lane.b32.xlu0 %v6929, 256
    %v6932 = vpop.permute.xlu0 %6931
    %s6934 = sor.u32 256, 8
    %6935 = vbcast.lane.b32.xlu0 %v6929, %s6934
    %v6936 = vpop.permute.xlu0 %6935
    %v6937 = vlaneseq
    %v6938 = vshrl.u32 %v6937, 7
    %v6939 = vsub.s32 5, %v6938
    %v6940 = vrot.slane %v5959, %v6939
    %6942 = vbcast.lane.b32.xlu0 %v6940, 256
    %v6943 = vpop.permute.xlu0 %6942
    %s6945 = sor.u32 256, 8
    %6946 = vbcast.lane.b32.xlu0 %v6940, %s6945
    %v6947 = vpop.permute.xlu0 %6946
    %v6948 = vlaneseq
    %v6949 = vshrl.u32 %v6948, 7
    %v6950 = vsub.s32 6, %v6949
    %v6951 = vrot.slane %v5959, %v6950
    %6953 = vbcast.lane.b32.xlu0 %v6951, 256
    %v6954 = vpop.permute.xlu0 %6953
    %s6956 = sor.u32 256, 8
    %6957 = vbcast.lane.b32.xlu0 %v6951, %s6956
    %v6958 = vpop.permute.xlu0 %6957
    %v6959 = vlaneseq
    %v6960 = vshrl.u32 %v6959, 7
    %v6961 = vsub.s32 7, %v6960
    %v6962 = vrot.slane %v5959, %v6961
    %6964 = vbcast.lane.b32.xlu0 %v6962, 256
    %v6965 = vpop.permute.xlu0 %6964
    %s6967 = sor.u32 256, 8
    %6968 = vbcast.lane.b32.xlu0 %v6962, %s6967
    %v6969 = vpop.permute.xlu0 %6968
    %v6970 = vlaneseq
    %v6971 = vshrl.u32 %v6970, 7
    %v6972 = vsub.s32 0, %v6971
    %v6973 = vrot.slane %v5961, %v6972
    %6975 = vbcast.lane.b32.xlu0 %v6973, 256
    %v6976 = vpop.permute.xlu0 %6975
    %s6978 = sor.u32 256, 8
    %6979 = vbcast.lane.b32.xlu0 %v6973, %s6978
    %v6980 = vpop.permute.xlu0 %6979
    %v6981 = vlaneseq
    %v6982 = vshrl.u32 %v6981, 7
    %v6983 = vsub.s32 1, %v6982
    %v6984 = vrot.slane %v5961, %v6983
    %6986 = vbcast.lane.b32.xlu0 %v6984, 256
    %v6987 = vpop.permute.xlu0 %6986
    %s6989 = sor.u32 256, 8
    %6990 = vbcast.lane.b32.xlu0 %v6984, %s6989
    %v6991 = vpop.permute.xlu0 %6990
    %v6992 = vlaneseq
    %v6993 = vshrl.u32 %v6992, 7
    %v6994 = vsub.s32 2, %v6993
    %v6995 = vrot.slane %v5961, %v6994
    %6997 = vbcast.lane.b32.xlu0 %v6995, 256
    %v6998 = vpop.permute.xlu0 %6997
    %s7000 = sor.u32 256, 8
    %7001 = vbcast.lane.b32.xlu0 %v6995, %s7000
    %v7002 = vpop.permute.xlu0 %7001
    %v7003 = vlaneseq
    %v7004 = vshrl.u32 %v7003, 7
    %v7005 = vsub.s32 3, %v7004
    %v7006 = vrot.slane %v5961, %v7005
    %7008 = vbcast.lane.b32.xlu0 %v7006, 256
    %v7009 = vpop.permute.xlu0 %7008
    %s7011 = sor.u32 256, 8
    %7012 = vbcast.lane.b32.xlu0 %v7006, %s7011
    %v7013 = vpop.permute.xlu0 %7012
    %v7014 = vlaneseq
    %v7015 = vshrl.u32 %v7014, 7
    %v7016 = vsub.s32 4, %v7015
    %v7017 = vrot.slane %v5961, %v7016
    %7019 = vbcast.lane.b32.xlu0 %v7017, 256
    %v7020 = vpop.permute.xlu0 %7019
    %s7022 = sor.u32 256, 8
    %7023 = vbcast.lane.b32.xlu0 %v7017, %s7022
    %v7024 = vpop.permute.xlu0 %7023
    %v7025 = vlaneseq
    %v7026 = vshrl.u32 %v7025, 7
    %v7027 = vsub.s32 5, %v7026
    %v7028 = vrot.slane %v5961, %v7027
    %7030 = vbcast.lane.b32.xlu0 %v7028, 256
    %v7031 = vpop.permute.xlu0 %7030
    %s7033 = sor.u32 256, 8
    %7034 = vbcast.lane.b32.xlu0 %v7028, %s7033
    %v7035 = vpop.permute.xlu0 %7034
    %v7036 = vlaneseq
    %v7037 = vshrl.u32 %v7036, 7
    %v7038 = vsub.s32 6, %v7037
    %v7039 = vrot.slane %v5961, %v7038
    %7041 = vbcast.lane.b32.xlu0 %v7039, 256
    %v7042 = vpop.permute.xlu0 %7041
    %s7044 = sor.u32 256, 8
    %7045 = vbcast.lane.b32.xlu0 %v7039, %s7044
    %v7046 = vpop.permute.xlu0 %7045
    %v7047 = vlaneseq
    %v7048 = vshrl.u32 %v7047, 7
    %v7049 = vsub.s32 7, %v7048
    %v7050 = vrot.slane %v5961, %v7049
    %7052 = vbcast.lane.b32.xlu0 %v7050, 256
    %v7053 = vpop.permute.xlu0 %7052
    %s7055 = sor.u32 256, 8
    %7056 = vbcast.lane.b32.xlu0 %v7050, %s7055
    %v7057 = vpop.permute.xlu0 %7056
    %v7058 = vlaneseq
    %v7059 = vshrl.u32 %v7058, 7
    %v7060 = vsub.s32 0, %v7059
    %v7061 = vrot.slane %v5963, %v7060
    %7063 = vbcast.lane.b32.xlu0 %v7061, 256
    %v7064 = vpop.permute.xlu0 %7063
    %s7066 = sor.u32 256, 8
    %7067 = vbcast.lane.b32.xlu0 %v7061, %s7066
    %v7068 = vpop.permute.xlu0 %7067
    %v7069 = vlaneseq
    %v7070 = vshrl.u32 %v7069, 7
    %v7071 = vsub.s32 1, %v7070
    %v7072 = vrot.slane %v5963, %v7071
    %7074 = vbcast.lane.b32.xlu0 %v7072, 256
    %v7075 = vpop.permute.xlu0 %7074
    %s7077 = sor.u32 256, 8
    %7078 = vbcast.lane.b32.xlu0 %v7072, %s7077
    %v7079 = vpop.permute.xlu0 %7078
    %v7080 = vlaneseq
    %v7081 = vshrl.u32 %v7080, 7
    %v7082 = vsub.s32 2, %v7081
    %v7083 = vrot.slane %v5963, %v7082
    %7085 = vbcast.lane.b32.xlu0 %v7083, 256
    %v7086 = vpop.permute.xlu0 %7085
    %s7088 = sor.u32 256, 8
    %7089 = vbcast.lane.b32.xlu0 %v7083, %s7088
    %v7090 = vpop.permute.xlu0 %7089
    %v7091 = vlaneseq
    %v7092 = vshrl.u32 %v7091, 7
    %v7093 = vsub.s32 3, %v7092
    %v7094 = vrot.slane %v5963, %v7093
    %7096 = vbcast.lane.b32.xlu0 %v7094, 256
    %v7097 = vpop.permute.xlu0 %7096
    %s7099 = sor.u32 256, 8
    %7100 = vbcast.lane.b32.xlu0 %v7094, %s7099
    %v7101 = vpop.permute.xlu0 %7100
    %v7102 = vlaneseq
    %v7103 = vshrl.u32 %v7102, 7
    %v7104 = vsub.s32 4, %v7103
    %v7105 = vrot.slane %v5963, %v7104
    %7107 = vbcast.lane.b32.xlu0 %v7105, 256
    %v7108 = vpop.permute.xlu0 %7107
    %s7110 = sor.u32 256, 8
    %7111 = vbcast.lane.b32.xlu0 %v7105, %s7110
    %v7112 = vpop.permute.xlu0 %7111
    %v7113 = vlaneseq
    %v7114 = vshrl.u32 %v7113, 7
    %v7115 = vsub.s32 5, %v7114
    %v7116 = vrot.slane %v5963, %v7115
    %7118 = vbcast.lane.b32.xlu0 %v7116, 256
    %v7119 = vpop.permute.xlu0 %7118
    %s7121 = sor.u32 256, 8
    %7122 = vbcast.lane.b32.xlu0 %v7116, %s7121
    %v7123 = vpop.permute.xlu0 %7122
    %v7124 = vlaneseq
    %v7125 = vshrl.u32 %v7124, 7
    %v7126 = vsub.s32 6, %v7125
    %v7127 = vrot.slane %v5963, %v7126
    %7129 = vbcast.lane.b32.xlu0 %v7127, 256
    %v7130 = vpop.permute.xlu0 %7129
    %s7132 = sor.u32 256, 8
    %7133 = vbcast.lane.b32.xlu0 %v7127, %s7132
    %v7134 = vpop.permute.xlu0 %7133
    %v7135 = vlaneseq
    %v7136 = vshrl.u32 %v7135, 7
    %v7137 = vsub.s32 7, %v7136
    %v7138 = vrot.slane %v5963, %v7137
    %7140 = vbcast.lane.b32.xlu0 %v7138, 256
    %v7141 = vpop.permute.xlu0 %7140
    %s7143 = sor.u32 256, 8
    %7144 = vbcast.lane.b32.xlu0 %v7138, %s7143
    %v7145 = vpop.permute.xlu0 %7144
    %v7146 = vlaneseq
    %v7147 = vshrl.u32 %v7146, 7
    %v7148 = vsub.s32 0, %v7147
    %v7149 = vrot.slane %v5965, %v7148
    %7151 = vbcast.lane.b32.xlu0 %v7149, 256
    %v7152 = vpop.permute.xlu0 %7151
    %s7154 = sor.u32 256, 8
    %7155 = vbcast.lane.b32.xlu0 %v7149, %s7154
    %v7156 = vpop.permute.xlu0 %7155
    %v7157 = vlaneseq
    %v7158 = vshrl.u32 %v7157, 7
    %v7159 = vsub.s32 1, %v7158
    %v7160 = vrot.slane %v5965, %v7159
    %7162 = vbcast.lane.b32.xlu0 %v7160, 256
    %v7163 = vpop.permute.xlu0 %7162
    %s7165 = sor.u32 256, 8
    %7166 = vbcast.lane.b32.xlu0 %v7160, %s7165
    %v7167 = vpop.permute.xlu0 %7166
    %v7168 = vlaneseq
    %v7169 = vshrl.u32 %v7168, 7
    %v7170 = vsub.s32 2, %v7169
    %v7171 = vrot.slane %v5965, %v7170
    %7173 = vbcast.lane.b32.xlu0 %v7171, 256
    %v7174 = vpop.permute.xlu0 %7173
    %s7176 = sor.u32 256, 8
    %7177 = vbcast.lane.b32.xlu0 %v7171, %s7176
    %v7178 = vpop.permute.xlu0 %7177
    %v7179 = vlaneseq
    %v7180 = vshrl.u32 %v7179, 7
    %v7181 = vsub.s32 3, %v7180
    %v7182 = vrot.slane %v5965, %v7181
    %7184 = vbcast.lane.b32.xlu0 %v7182, 256
    %v7185 = vpop.permute.xlu0 %7184
    %s7187 = sor.u32 256, 8
    %7188 = vbcast.lane.b32.xlu0 %v7182, %s7187
    %v7189 = vpop.permute.xlu0 %7188
    %v7190 = vlaneseq
    %v7191 = vshrl.u32 %v7190, 7
    %v7192 = vsub.s32 4, %v7191
    %v7193 = vrot.slane %v5965, %v7192
    %7195 = vbcast.lane.b32.xlu0 %v7193, 256
    %v7196 = vpop.permute.xlu0 %7195
    %s7198 = sor.u32 256, 8
    %7199 = vbcast.lane.b32.xlu0 %v7193, %s7198
    %v7200 = vpop.permute.xlu0 %7199
    %v7201 = vlaneseq
    %v7202 = vshrl.u32 %v7201, 7
    %v7203 = vsub.s32 5, %v7202
    %v7204 = vrot.slane %v5965, %v7203
    %7206 = vbcast.lane.b32.xlu0 %v7204, 256
    %v7207 = vpop.permute.xlu0 %7206
    %s7209 = sor.u32 256, 8
    %7210 = vbcast.lane.b32.xlu0 %v7204, %s7209
    %v7211 = vpop.permute.xlu0 %7210
    %v7212 = vlaneseq
    %v7213 = vshrl.u32 %v7212, 7
    %v7214 = vsub.s32 6, %v7213
    %v7215 = vrot.slane %v5965, %v7214
    %7217 = vbcast.lane.b32.xlu0 %v7215, 256
    %v7218 = vpop.permute.xlu0 %7217
    %s7220 = sor.u32 256, 8
    %7221 = vbcast.lane.b32.xlu0 %v7215, %s7220
    %v7222 = vpop.permute.xlu0 %7221
    %v7223 = vlaneseq
    %v7224 = vshrl.u32 %v7223, 7
    %v7225 = vsub.s32 7, %v7224
    %v7226 = vrot.slane %v5965, %v7225
    %7228 = vbcast.lane.b32.xlu0 %v7226, 256
    %v7229 = vpop.permute.xlu0 %7228
    %s7231 = sor.u32 256, 8
    %7232 = vbcast.lane.b32.xlu0 %v7226, %s7231
    %v7233 = vpop.permute.xlu0 %7232
    %v7234 = vlaneseq
    %v7235 = vshrl.u32 %v7234, 7
    %v7236 = vsub.s32 0, %v7235
    %v7237 = vrot.slane %v5967, %v7236
    %7239 = vbcast.lane.b32.xlu0 %v7237, 256
    %v7240 = vpop.permute.xlu0 %7239
    %s7242 = sor.u32 256, 8
    %7243 = vbcast.lane.b32.xlu0 %v7237, %s7242
    %v7244 = vpop.permute.xlu0 %7243
    %v7245 = vlaneseq
    %v7246 = vshrl.u32 %v7245, 7
    %v7247 = vsub.s32 1, %v7246
    %v7248 = vrot.slane %v5967, %v7247
    %7250 = vbcast.lane.b32.xlu0 %v7248, 256
    %v7251 = vpop.permute.xlu0 %7250
    %s7253 = sor.u32 256, 8
    %7254 = vbcast.lane.b32.xlu0 %v7248, %s7253
    %v7255 = vpop.permute.xlu0 %7254
    %v7256 = vlaneseq
    %v7257 = vshrl.u32 %v7256, 7
    %v7258 = vsub.s32 2, %v7257
    %v7259 = vrot.slane %v5967, %v7258
    %7261 = vbcast.lane.b32.xlu0 %v7259, 256
    %v7262 = vpop.permute.xlu0 %7261
    %s7264 = sor.u32 256, 8
    %7265 = vbcast.lane.b32.xlu0 %v7259, %s7264
    %v7266 = vpop.permute.xlu0 %7265
    %v7267 = vlaneseq
    %v7268 = vshrl.u32 %v7267, 7
    %v7269 = vsub.s32 3, %v7268
    %v7270 = vrot.slane %v5967, %v7269
    %7272 = vbcast.lane.b32.xlu0 %v7270, 256
    %v7273 = vpop.permute.xlu0 %7272
    %s7275 = sor.u32 256, 8
    %7276 = vbcast.lane.b32.xlu0 %v7270, %s7275
    %v7277 = vpop.permute.xlu0 %7276
    %v7278 = vlaneseq
    %v7279 = vshrl.u32 %v7278, 7
    %v7280 = vsub.s32 4, %v7279
    %v7281 = vrot.slane %v5967, %v7280
    %7283 = vbcast.lane.b32.xlu0 %v7281, 256
    %v7284 = vpop.permute.xlu0 %7283
    %s7286 = sor.u32 256, 8
    %7287 = vbcast.lane.b32.xlu0 %v7281, %s7286
    %v7288 = vpop.permute.xlu0 %7287
    %v7289 = vlaneseq
    %v7290 = vshrl.u32 %v7289, 7
    %v7291 = vsub.s32 5, %v7290
    %v7292 = vrot.slane %v5967, %v7291
    %7294 = vbcast.lane.b32.xlu0 %v7292, 256
    %v7295 = vpop.permute.xlu0 %7294
    %s7297 = sor.u32 256, 8
    %7298 = vbcast.lane.b32.xlu0 %v7292, %s7297
    %v7299 = vpop.permute.xlu0 %7298
    %v7300 = vlaneseq
    %v7301 = vshrl.u32 %v7300, 7
    %v7302 = vsub.s32 6, %v7301
    %v7303 = vrot.slane %v5967, %v7302
    %7305 = vbcast.lane.b32.xlu0 %v7303, 256
    %v7306 = vpop.permute.xlu0 %7305
    %s7308 = sor.u32 256, 8
    %7309 = vbcast.lane.b32.xlu0 %v7303, %s7308
    %v7310 = vpop.permute.xlu0 %7309
    %v7311 = vlaneseq
    %v7312 = vshrl.u32 %v7311, 7
    %v7313 = vsub.s32 7, %v7312
    %v7314 = vrot.slane %v5967, %v7313
    %7316 = vbcast.lane.b32.xlu0 %v7314, 256
    %v7317 = vpop.permute.xlu0 %7316
    %s7319 = sor.u32 256, 8
    %7320 = vbcast.lane.b32.xlu0 %v7314, %s7319
    %v7321 = vpop.permute.xlu0 %7320
    %v7322 = vlaneseq
    %v7323 = vshrl.u32 %v7322, 7
    %v7324 = vsub.s32 0, %v7323
    %v7325 = vrot.slane %v5969, %v7324
    %7327 = vbcast.lane.b32.xlu0 %v7325, 256
    %v7328 = vpop.permute.xlu0 %7327
    %s7330 = sor.u32 256, 8
    %7331 = vbcast.lane.b32.xlu0 %v7325, %s7330
    %v7332 = vpop.permute.xlu0 %7331
    %v7333 = vlaneseq
    %v7334 = vshrl.u32 %v7333, 7
    %v7335 = vsub.s32 1, %v7334
    %v7336 = vrot.slane %v5969, %v7335
    %7338 = vbcast.lane.b32.xlu0 %v7336, 256
    %v7339 = vpop.permute.xlu0 %7338
    %s7341 = sor.u32 256, 8
    %7342 = vbcast.lane.b32.xlu0 %v7336, %s7341
    %v7343 = vpop.permute.xlu0 %7342
    %v7344 = vlaneseq
    %v7345 = vshrl.u32 %v7344, 7
    %v7346 = vsub.s32 2, %v7345
    %v7347 = vrot.slane %v5969, %v7346
    %7349 = vbcast.lane.b32.xlu0 %v7347, 256
    %v7350 = vpop.permute.xlu0 %7349
    %s7352 = sor.u32 256, 8
    %7353 = vbcast.lane.b32.xlu0 %v7347, %s7352
    %v7354 = vpop.permute.xlu0 %7353
    %v7355 = vlaneseq
    %v7356 = vshrl.u32 %v7355, 7
    %v7357 = vsub.s32 3, %v7356
    %v7358 = vrot.slane %v5969, %v7357
    %7360 = vbcast.lane.b32.xlu0 %v7358, 256
    %v7361 = vpop.permute.xlu0 %7360
    %s7363 = sor.u32 256, 8
    %7364 = vbcast.lane.b32.xlu0 %v7358, %s7363
    %v7365 = vpop.permute.xlu0 %7364
    %v7366 = vlaneseq
    %v7367 = vshrl.u32 %v7366, 7
    %v7368 = vsub.s32 4, %v7367
    %v7369 = vrot.slane %v5969, %v7368
    %7371 = vbcast.lane.b32.xlu0 %v7369, 256
    %v7372 = vpop.permute.xlu0 %7371
    %s7374 = sor.u32 256, 8
    %7375 = vbcast.lane.b32.xlu0 %v7369, %s7374
    %v7376 = vpop.permute.xlu0 %7375
    %v7377 = vlaneseq
    %v7378 = vshrl.u32 %v7377, 7
    %v7379 = vsub.s32 5, %v7378
    %v7380 = vrot.slane %v5969, %v7379
    %7382 = vbcast.lane.b32.xlu0 %v7380, 256
    %v7383 = vpop.permute.xlu0 %7382
    %s7385 = sor.u32 256, 8
    %7386 = vbcast.lane.b32.xlu0 %v7380, %s7385
    %v7387 = vpop.permute.xlu0 %7386
    %v7388 = vlaneseq
    %v7389 = vshrl.u32 %v7388, 7
    %v7390 = vsub.s32 6, %v7389
    %v7391 = vrot.slane %v5969, %v7390
    %7393 = vbcast.lane.b32.xlu0 %v7391, 256
    %v7394 = vpop.permute.xlu0 %7393
    %s7396 = sor.u32 256, 8
    %7397 = vbcast.lane.b32.xlu0 %v7391, %s7396
    %v7398 = vpop.permute.xlu0 %7397
    %v7399 = vlaneseq
    %v7400 = vshrl.u32 %v7399, 7
    %v7401 = vsub.s32 7, %v7400
    %v7402 = vrot.slane %v5969, %v7401
    %7404 = vbcast.lane.b32.xlu0 %v7402, 256
    %v7405 = vpop.permute.xlu0 %7404
    %s7407 = sor.u32 256, 8
    %7408 = vbcast.lane.b32.xlu0 %v7402, %s7407
    %v7409 = vpop.permute.xlu0 %7408
    %v7410 = vlaneseq
    %v7411 = vshrl.u32 %v7410, 7
    %v7412 = vsub.s32 0, %v7411
    %v7413 = vrot.slane %v5971, %v7412
    %7415 = vbcast.lane.b32.xlu0 %v7413, 256
    %v7416 = vpop.permute.xlu0 %7415
    %s7418 = sor.u32 256, 8
    %7419 = vbcast.lane.b32.xlu0 %v7413, %s7418
    %v7420 = vpop.permute.xlu0 %7419
    %v7421 = vlaneseq
    %v7422 = vshrl.u32 %v7421, 7
    %v7423 = vsub.s32 1, %v7422
    %v7424 = vrot.slane %v5971, %v7423
    %7426 = vbcast.lane.b32.xlu0 %v7424, 256
    %v7427 = vpop.permute.xlu0 %7426
    %s7429 = sor.u32 256, 8
    %7430 = vbcast.lane.b32.xlu0 %v7424, %s7429
    %v7431 = vpop.permute.xlu0 %7430
    %v7432 = vlaneseq
    %v7433 = vshrl.u32 %v7432, 7
    %v7434 = vsub.s32 2, %v7433
    %v7435 = vrot.slane %v5971, %v7434
    %7437 = vbcast.lane.b32.xlu0 %v7435, 256
    %v7438 = vpop.permute.xlu0 %7437
    %s7440 = sor.u32 256, 8
    %7441 = vbcast.lane.b32.xlu0 %v7435, %s7440
    %v7442 = vpop.permute.xlu0 %7441
    %v7443 = vlaneseq
    %v7444 = vshrl.u32 %v7443, 7
    %v7445 = vsub.s32 3, %v7444
    %v7446 = vrot.slane %v5971, %v7445
    %7448 = vbcast.lane.b32.xlu0 %v7446, 256
    %v7449 = vpop.permute.xlu0 %7448
    %s7451 = sor.u32 256, 8
    %7452 = vbcast.lane.b32.xlu0 %v7446, %s7451
    %v7453 = vpop.permute.xlu0 %7452
    %v7454 = vlaneseq
    %v7455 = vshrl.u32 %v7454, 7
    %v7456 = vsub.s32 4, %v7455
    %v7457 = vrot.slane %v5971, %v7456
    %7459 = vbcast.lane.b32.xlu0 %v7457, 256
    %v7460 = vpop.permute.xlu0 %7459
    %s7462 = sor.u32 256, 8
    %7463 = vbcast.lane.b32.xlu0 %v7457, %s7462
    %v7464 = vpop.permute.xlu0 %7463
    %v7465 = vlaneseq
    %v7466 = vshrl.u32 %v7465, 7
    %v7467 = vsub.s32 5, %v7466
    %v7468 = vrot.slane %v5971, %v7467
    %7470 = vbcast.lane.b32.xlu0 %v7468, 256
    %v7471 = vpop.permute.xlu0 %7470
    %s7473 = sor.u32 256, 8
    %7474 = vbcast.lane.b32.xlu0 %v7468, %s7473
    %v7475 = vpop.permute.xlu0 %7474
    %v7476 = vlaneseq
    %v7477 = vshrl.u32 %v7476, 7
    %v7478 = vsub.s32 6, %v7477
    %v7479 = vrot.slane %v5971, %v7478
    %7481 = vbcast.lane.b32.xlu0 %v7479, 256
    %v7482 = vpop.permute.xlu0 %7481
    %s7484 = sor.u32 256, 8
    %7485 = vbcast.lane.b32.xlu0 %v7479, %s7484
    %v7486 = vpop.permute.xlu0 %7485
    %v7487 = vlaneseq
    %v7488 = vshrl.u32 %v7487, 7
    %v7489 = vsub.s32 7, %v7488
    %v7490 = vrot.slane %v5971, %v7489
    %7492 = vbcast.lane.b32.xlu0 %v7490, 256
    %v7493 = vpop.permute.xlu0 %7492
    %s7495 = sor.u32 256, 8
    %7496 = vbcast.lane.b32.xlu0 %v7490, %s7495
    %v7497 = vpop.permute.xlu0 %7496
    %v7498 = vlaneseq
    %v7499 = vshrl.u32 %v7498, 7
    %v7500 = vsub.s32 0, %v7499
    %v7501 = vrot.slane %v5973, %v7500
    %7503 = vbcast.lane.b32.xlu0 %v7501, 256
    %v7504 = vpop.permute.xlu0 %7503
    %s7506 = sor.u32 256, 8
    %7507 = vbcast.lane.b32.xlu0 %v7501, %s7506
    %v7508 = vpop.permute.xlu0 %7507
    %v7509 = vlaneseq
    %v7510 = vshrl.u32 %v7509, 7
    %v7511 = vsub.s32 1, %v7510
    %v7512 = vrot.slane %v5973, %v7511
    %7514 = vbcast.lane.b32.xlu0 %v7512, 256
    %v7515 = vpop.permute.xlu0 %7514
    %s7517 = sor.u32 256, 8
    %7518 = vbcast.lane.b32.xlu0 %v7512, %s7517
    %v7519 = vpop.permute.xlu0 %7518
    %v7520 = vlaneseq
    %v7521 = vshrl.u32 %v7520, 7
    %v7522 = vsub.s32 2, %v7521
    %v7523 = vrot.slane %v5973, %v7522
    %7525 = vbcast.lane.b32.xlu0 %v7523, 256
    %v7526 = vpop.permute.xlu0 %7525
    %s7528 = sor.u32 256, 8
    %7529 = vbcast.lane.b32.xlu0 %v7523, %s7528
    %v7530 = vpop.permute.xlu0 %7529
    %v7531 = vlaneseq
    %v7532 = vshrl.u32 %v7531, 7
    %v7533 = vsub.s32 3, %v7532
    %v7534 = vrot.slane %v5973, %v7533
    %7536 = vbcast.lane.b32.xlu0 %v7534, 256
    %v7537 = vpop.permute.xlu0 %7536
    %s7539 = sor.u32 256, 8
    %7540 = vbcast.lane.b32.xlu0 %v7534, %s7539
    %v7541 = vpop.permute.xlu0 %7540
    %v7542 = vlaneseq
    %v7543 = vshrl.u32 %v7542, 7
    %v7544 = vsub.s32 4, %v7543
    %v7545 = vrot.slane %v5973, %v7544
    %7547 = vbcast.lane.b32.xlu0 %v7545, 256
    %v7548 = vpop.permute.xlu0 %7547
    %s7550 = sor.u32 256, 8
    %7551 = vbcast.lane.b32.xlu0 %v7545, %s7550
    %v7552 = vpop.permute.xlu0 %7551
    %v7553 = vlaneseq
    %v7554 = vshrl.u32 %v7553, 7
    %v7555 = vsub.s32 5, %v7554
    %v7556 = vrot.slane %v5973, %v7555
    %7558 = vbcast.lane.b32.xlu0 %v7556, 256
    %v7559 = vpop.permute.xlu0 %7558
    %s7561 = sor.u32 256, 8
    %7562 = vbcast.lane.b32.xlu0 %v7556, %s7561
    %v7563 = vpop.permute.xlu0 %7562
    %v7564 = vlaneseq
    %v7565 = vshrl.u32 %v7564, 7
    %v7566 = vsub.s32 6, %v7565
    %v7567 = vrot.slane %v5973, %v7566
    %7569 = vbcast.lane.b32.xlu0 %v7567, 256
    %v7570 = vpop.permute.xlu0 %7569
    %s7572 = sor.u32 256, 8
    %7573 = vbcast.lane.b32.xlu0 %v7567, %s7572
    %v7574 = vpop.permute.xlu0 %7573
    %v7575 = vlaneseq
    %v7576 = vshrl.u32 %v7575, 7
    %v7577 = vsub.s32 7, %v7576
    %v7578 = vrot.slane %v5973, %v7577
    %7580 = vbcast.lane.b32.xlu0 %v7578, 256
    %v7581 = vpop.permute.xlu0 %7580
    %s7583 = sor.u32 256, 8
    %7584 = vbcast.lane.b32.xlu0 %v7578, %s7583
    %v7585 = vpop.permute.xlu0 %7584
    %v7586 = vlaneseq
    %v7587 = vshrl.u32 %v7586, 7
    %v7588 = vsub.s32 0, %v7587
    %v7589 = vrot.slane %v5975, %v7588
    %7591 = vbcast.lane.b32.xlu0 %v7589, 256
    %v7592 = vpop.permute.xlu0 %7591
    %s7594 = sor.u32 256, 8
    %7595 = vbcast.lane.b32.xlu0 %v7589, %s7594
    %v7596 = vpop.permute.xlu0 %7595
    %v7597 = vlaneseq
    %v7598 = vshrl.u32 %v7597, 7
    %v7599 = vsub.s32 1, %v7598
    %v7600 = vrot.slane %v5975, %v7599
    %7602 = vbcast.lane.b32.xlu0 %v7600, 256
    %v7603 = vpop.permute.xlu0 %7602
    %s7605 = sor.u32 256, 8
    %7606 = vbcast.lane.b32.xlu0 %v7600, %s7605
    %v7607 = vpop.permute.xlu0 %7606
    %v7608 = vlaneseq
    %v7609 = vshrl.u32 %v7608, 7
    %v7610 = vsub.s32 2, %v7609
    %v7611 = vrot.slane %v5975, %v7610
    %7613 = vbcast.lane.b32.xlu0 %v7611, 256
    %v7614 = vpop.permute.xlu0 %7613
    %s7616 = sor.u32 256, 8
    %7617 = vbcast.lane.b32.xlu0 %v7611, %s7616
    %v7618 = vpop.permute.xlu0 %7617
    %v7619 = vlaneseq
    %v7620 = vshrl.u32 %v7619, 7
    %v7621 = vsub.s32 3, %v7620
    %v7622 = vrot.slane %v5975, %v7621
    %7624 = vbcast.lane.b32.xlu0 %v7622, 256
    %v7625 = vpop.permute.xlu0 %7624
    %s7627 = sor.u32 256, 8
    %7628 = vbcast.lane.b32.xlu0 %v7622, %s7627
    %v7629 = vpop.permute.xlu0 %7628
    %v7630 = vlaneseq
    %v7631 = vshrl.u32 %v7630, 7
    %v7632 = vsub.s32 4, %v7631
    %v7633 = vrot.slane %v5975, %v7632
    %7635 = vbcast.lane.b32.xlu0 %v7633, 256
    %v7636 = vpop.permute.xlu0 %7635
    %s7638 = sor.u32 256, 8
    %7639 = vbcast.lane.b32.xlu0 %v7633, %s7638
    %v7640 = vpop.permute.xlu0 %7639
    %v7641 = vlaneseq
    %v7642 = vshrl.u32 %v7641, 7
    %v7643 = vsub.s32 5, %v7642
    %v7644 = vrot.slane %v5975, %v7643
    %7646 = vbcast.lane.b32.xlu0 %v7644, 256
    %v7647 = vpop.permute.xlu0 %7646
    %s7649 = sor.u32 256, 8
    %7650 = vbcast.lane.b32.xlu0 %v7644, %s7649
    %v7651 = vpop.permute.xlu0 %7650
    %v7652 = vlaneseq
    %v7653 = vshrl.u32 %v7652, 7
    %v7654 = vsub.s32 6, %v7653
    %v7655 = vrot.slane %v5975, %v7654
    %7657 = vbcast.lane.b32.xlu0 %v7655, 256
    %v7658 = vpop.permute.xlu0 %7657
    %s7660 = sor.u32 256, 8
    %7661 = vbcast.lane.b32.xlu0 %v7655, %s7660
    %v7662 = vpop.permute.xlu0 %7661
    %v7663 = vlaneseq
    %v7664 = vshrl.u32 %v7663, 7
    %v7665 = vsub.s32 7, %v7664
    %v7666 = vrot.slane %v5975, %v7665
    %7668 = vbcast.lane.b32.xlu0 %v7666, 256
    %v7669 = vpop.permute.xlu0 %7668
    %s7671 = sor.u32 256, 8
    %7672 = vbcast.lane.b32.xlu0 %v7666, %s7671
    %v7673 = vpop.permute.xlu0 %7672
    %v7674 = vlaneseq
    %v7675 = vshrl.u32 %v7674, 7
    %v7676 = vsub.s32 0, %v7675
    %v7677 = vrot.slane %v5977, %v7676
    %7679 = vbcast.lane.b32.xlu0 %v7677, 256
    %v7680 = vpop.permute.xlu0 %7679
    %s7682 = sor.u32 256, 8
    %7683 = vbcast.lane.b32.xlu0 %v7677, %s7682
    %v7684 = vpop.permute.xlu0 %7683
    %v7685 = vlaneseq
    %v7686 = vshrl.u32 %v7685, 7
    %v7687 = vsub.s32 1, %v7686
    %v7688 = vrot.slane %v5977, %v7687
    %7690 = vbcast.lane.b32.xlu0 %v7688, 256
    %v7691 = vpop.permute.xlu0 %7690
    %s7693 = sor.u32 256, 8
    %7694 = vbcast.lane.b32.xlu0 %v7688, %s7693
    %v7695 = vpop.permute.xlu0 %7694
    %v7696 = vlaneseq
    %v7697 = vshrl.u32 %v7696, 7
    %v7698 = vsub.s32 2, %v7697
    %v7699 = vrot.slane %v5977, %v7698
    %7701 = vbcast.lane.b32.xlu0 %v7699, 256
    %v7702 = vpop.permute.xlu0 %7701
    %s7704 = sor.u32 256, 8
    %7705 = vbcast.lane.b32.xlu0 %v7699, %s7704
    %v7706 = vpop.permute.xlu0 %7705
    %v7707 = vlaneseq
    %v7708 = vshrl.u32 %v7707, 7
    %v7709 = vsub.s32 3, %v7708
    %v7710 = vrot.slane %v5977, %v7709
    %7712 = vbcast.lane.b32.xlu0 %v7710, 256
    %v7713 = vpop.permute.xlu0 %7712
    %s7715 = sor.u32 256, 8
    %7716 = vbcast.lane.b32.xlu0 %v7710, %s7715
    %v7717 = vpop.permute.xlu0 %7716
    %v7718 = vlaneseq
    %v7719 = vshrl.u32 %v7718, 7
    %v7720 = vsub.s32 4, %v7719
    %v7721 = vrot.slane %v5977, %v7720
    %7723 = vbcast.lane.b32.xlu0 %v7721, 256
    %v7724 = vpop.permute.xlu0 %7723
    %s7726 = sor.u32 256, 8
    %7727 = vbcast.lane.b32.xlu0 %v7721, %s7726
    %v7728 = vpop.permute.xlu0 %7727
    %v7729 = vlaneseq
    %v7730 = vshrl.u32 %v7729, 7
    %v7731 = vsub.s32 5, %v7730
    %v7732 = vrot.slane %v5977, %v7731
    %7734 = vbcast.lane.b32.xlu0 %v7732, 256
    %v7735 = vpop.permute.xlu0 %7734
    %s7737 = sor.u32 256, 8
    %7738 = vbcast.lane.b32.xlu0 %v7732, %s7737
    %v7739 = vpop.permute.xlu0 %7738
    %v7740 = vlaneseq
    %v7741 = vshrl.u32 %v7740, 7
    %v7742 = vsub.s32 6, %v7741
    %v7743 = vrot.slane %v5977, %v7742
    %7745 = vbcast.lane.b32.xlu0 %v7743, 256
    %v7746 = vpop.permute.xlu0 %7745
    %s7748 = sor.u32 256, 8
    %7749 = vbcast.lane.b32.xlu0 %v7743, %s7748
    %v7750 = vpop.permute.xlu0 %7749
    %v7751 = vlaneseq
    %v7752 = vshrl.u32 %v7751, 7
    %v7753 = vsub.s32 7, %v7752
    %v7754 = vrot.slane %v5977, %v7753
    %7756 = vbcast.lane.b32.xlu0 %v7754, 256
    %v7757 = vpop.permute.xlu0 %7756
    %s7759 = sor.u32 256, 8
    %7760 = vbcast.lane.b32.xlu0 %v7754, %s7759
    %v7761 = vpop.permute.xlu0 %7760
    %v7762 = vlaneseq
    %v7763 = vshrl.u32 %v7762, 7
    %v7764 = vsub.s32 0, %v7763
    %v7765 = vrot.slane %v5979, %v7764
    %7767 = vbcast.lane.b32.xlu0 %v7765, 256
    %v7768 = vpop.permute.xlu0 %7767
    %s7770 = sor.u32 256, 8
    %7771 = vbcast.lane.b32.xlu0 %v7765, %s7770
    %v7772 = vpop.permute.xlu0 %7771
    %v7773 = vlaneseq
    %v7774 = vshrl.u32 %v7773, 7
    %v7775 = vsub.s32 1, %v7774
    %v7776 = vrot.slane %v5979, %v7775
    %7778 = vbcast.lane.b32.xlu0 %v7776, 256
    %v7779 = vpop.permute.xlu0 %7778
    %s7781 = sor.u32 256, 8
    %7782 = vbcast.lane.b32.xlu0 %v7776, %s7781
    %v7783 = vpop.permute.xlu0 %7782
    %v7784 = vlaneseq
    %v7785 = vshrl.u32 %v7784, 7
    %v7786 = vsub.s32 2, %v7785
    %v7787 = vrot.slane %v5979, %v7786
    %7789 = vbcast.lane.b32.xlu0 %v7787, 256
    %v7790 = vpop.permute.xlu0 %7789
    %s7792 = sor.u32 256, 8
    %7793 = vbcast.lane.b32.xlu0 %v7787, %s7792
    %v7794 = vpop.permute.xlu0 %7793
    %v7795 = vlaneseq
    %v7796 = vshrl.u32 %v7795, 7
    %v7797 = vsub.s32 3, %v7796
    %v7798 = vrot.slane %v5979, %v7797
    %7800 = vbcast.lane.b32.xlu0 %v7798, 256
    %v7801 = vpop.permute.xlu0 %7800
    %s7803 = sor.u32 256, 8
    %7804 = vbcast.lane.b32.xlu0 %v7798, %s7803
    %v7805 = vpop.permute.xlu0 %7804
    %v7806 = vlaneseq
    %v7807 = vshrl.u32 %v7806, 7
    %v7808 = vsub.s32 4, %v7807
    %v7809 = vrot.slane %v5979, %v7808
    %7811 = vbcast.lane.b32.xlu0 %v7809, 256
    %v7812 = vpop.permute.xlu0 %7811
    %s7814 = sor.u32 256, 8
    %7815 = vbcast.lane.b32.xlu0 %v7809, %s7814
    %v7816 = vpop.permute.xlu0 %7815
    %v7817 = vlaneseq
    %v7818 = vshrl.u32 %v7817, 7
    %v7819 = vsub.s32 5, %v7818
    %v7820 = vrot.slane %v5979, %v7819
    %7822 = vbcast.lane.b32.xlu0 %v7820, 256
    %v7823 = vpop.permute.xlu0 %7822
    %s7825 = sor.u32 256, 8
    %7826 = vbcast.lane.b32.xlu0 %v7820, %s7825
    %v7827 = vpop.permute.xlu0 %7826
    %v7828 = vlaneseq
    %v7829 = vshrl.u32 %v7828, 7
    %v7830 = vsub.s32 6, %v7829
    %v7831 = vrot.slane %v5979, %v7830
    %7833 = vbcast.lane.b32.xlu0 %v7831, 256
    %v7834 = vpop.permute.xlu0 %7833
    %s7836 = sor.u32 256, 8
    %7837 = vbcast.lane.b32.xlu0 %v7831, %s7836
    %v7838 = vpop.permute.xlu0 %7837
    %v7839 = vlaneseq
    %v7840 = vshrl.u32 %v7839, 7
    %v7841 = vsub.s32 7, %v7840
    %v7842 = vrot.slane %v5979, %v7841
    %7844 = vbcast.lane.b32.xlu0 %v7842, 256
    %v7845 = vpop.permute.xlu0 %7844
    %s7847 = sor.u32 256, 8
    %7848 = vbcast.lane.b32.xlu0 %v7842, %s7847
    %v7849 = vpop.permute.xlu0 %7848
    %v7850 = vlaneseq
    %v7851 = vshrl.u32 %v7850, 7
    %v7852 = vsub.s32 0, %v7851
    %v7853 = vrot.slane %v5981, %v7852
    %7855 = vbcast.lane.b32.xlu0 %v7853, 256
    %v7856 = vpop.permute.xlu0 %7855
    %s7858 = sor.u32 256, 8
    %7859 = vbcast.lane.b32.xlu0 %v7853, %s7858
    %v7860 = vpop.permute.xlu0 %7859
    %v7861 = vlaneseq
    %v7862 = vshrl.u32 %v7861, 7
    %v7863 = vsub.s32 1, %v7862
    %v7864 = vrot.slane %v5981, %v7863
    %7866 = vbcast.lane.b32.xlu0 %v7864, 256
    %v7867 = vpop.permute.xlu0 %7866
    %s7869 = sor.u32 256, 8
    %7870 = vbcast.lane.b32.xlu0 %v7864, %s7869
    %v7871 = vpop.permute.xlu0 %7870
    %v7872 = vlaneseq
    %v7873 = vshrl.u32 %v7872, 7
    %v7874 = vsub.s32 2, %v7873
    %v7875 = vrot.slane %v5981, %v7874
    %7877 = vbcast.lane.b32.xlu0 %v7875, 256
    %v7878 = vpop.permute.xlu0 %7877
    %s7880 = sor.u32 256, 8
    %7881 = vbcast.lane.b32.xlu0 %v7875, %s7880
    %v7882 = vpop.permute.xlu0 %7881
    %v7883 = vlaneseq
    %v7884 = vshrl.u32 %v7883, 7
    %v7885 = vsub.s32 3, %v7884
    %v7886 = vrot.slane %v5981, %v7885
    %7888 = vbcast.lane.b32.xlu0 %v7886, 256
    %v7889 = vpop.permute.xlu0 %7888
    %s7891 = sor.u32 256, 8
    %7892 = vbcast.lane.b32.xlu0 %v7886, %s7891
    %v7893 = vpop.permute.xlu0 %7892
    %v7894 = vlaneseq
    %v7895 = vshrl.u32 %v7894, 7
    %v7896 = vsub.s32 4, %v7895
    %v7897 = vrot.slane %v5981, %v7896
    %7899 = vbcast.lane.b32.xlu0 %v7897, 256
    %v7900 = vpop.permute.xlu0 %7899
    %s7902 = sor.u32 256, 8
    %7903 = vbcast.lane.b32.xlu0 %v7897, %s7902
    %v7904 = vpop.permute.xlu0 %7903
    %v7905 = vlaneseq
    %v7906 = vshrl.u32 %v7905, 7
    %v7907 = vsub.s32 5, %v7906
    %v7908 = vrot.slane %v5981, %v7907
    %7910 = vbcast.lane.b32.xlu0 %v7908, 256
    %v7911 = vpop.permute.xlu0 %7910
    %s7913 = sor.u32 256, 8
    %7914 = vbcast.lane.b32.xlu0 %v7908, %s7913
    %v7915 = vpop.permute.xlu0 %7914
    %v7916 = vlaneseq
    %v7917 = vshrl.u32 %v7916, 7
    %v7918 = vsub.s32 6, %v7917
    %v7919 = vrot.slane %v5981, %v7918
    %7921 = vbcast.lane.b32.xlu0 %v7919, 256
    %v7922 = vpop.permute.xlu0 %7921
    %s7924 = sor.u32 256, 8
    %7925 = vbcast.lane.b32.xlu0 %v7919, %s7924
    %v7926 = vpop.permute.xlu0 %7925
    %v7927 = vlaneseq
    %v7928 = vshrl.u32 %v7927, 7
    %v7929 = vsub.s32 7, %v7928
    %v7930 = vrot.slane %v5981, %v7929
    %7932 = vbcast.lane.b32.xlu0 %v7930, 256
    %v7933 = vpop.permute.xlu0 %7932
    %s7935 = sor.u32 256, 8
    %7936 = vbcast.lane.b32.xlu0 %v7930, %s7935
    %v7937 = vpop.permute.xlu0 %7936
    %v7938 = vlaneseq
    %v7939 = vshrl.u32 %v7938, 7
    %v7940 = vsub.s32 0, %v7939
    %v7941 = vrot.slane %v5983, %v7940
    %7943 = vbcast.lane.b32.xlu0 %v7941, 256
    %v7944 = vpop.permute.xlu0 %7943
    %s7946 = sor.u32 256, 8
    %7947 = vbcast.lane.b32.xlu0 %v7941, %s7946
    %v7948 = vpop.permute.xlu0 %7947
    %v7949 = vlaneseq
    %v7950 = vshrl.u32 %v7949, 7
    %v7951 = vsub.s32 1, %v7950
    %v7952 = vrot.slane %v5983, %v7951
    %7954 = vbcast.lane.b32.xlu0 %v7952, 256
    %v7955 = vpop.permute.xlu0 %7954
    %s7957 = sor.u32 256, 8
    %7958 = vbcast.lane.b32.xlu0 %v7952, %s7957
    %v7959 = vpop.permute.xlu0 %7958
    %v7960 = vlaneseq
    %v7961 = vshrl.u32 %v7960, 7
    %v7962 = vsub.s32 2, %v7961
    %v7963 = vrot.slane %v5983, %v7962
    %7965 = vbcast.lane.b32.xlu0 %v7963, 256
    %v7966 = vpop.permute.xlu0 %7965
    %s7968 = sor.u32 256, 8
    %7969 = vbcast.lane.b32.xlu0 %v7963, %s7968
    %v7970 = vpop.permute.xlu0 %7969
    %v7971 = vlaneseq
    %v7972 = vshrl.u32 %v7971, 7
    %v7973 = vsub.s32 3, %v7972
    %v7974 = vrot.slane %v5983, %v7973
    %7976 = vbcast.lane.b32.xlu0 %v7974, 256
    %v7977 = vpop.permute.xlu0 %7976
    %s7979 = sor.u32 256, 8
    %7980 = vbcast.lane.b32.xlu0 %v7974, %s7979
    %v7981 = vpop.permute.xlu0 %7980
    %v7982 = vlaneseq
    %v7983 = vshrl.u32 %v7982, 7
    %v7984 = vsub.s32 4, %v7983
    %v7985 = vrot.slane %v5983, %v7984
    %7987 = vbcast.lane.b32.xlu0 %v7985, 256
    %v7988 = vpop.permute.xlu0 %7987
    %s7990 = sor.u32 256, 8
    %7991 = vbcast.lane.b32.xlu0 %v7985, %s7990
    %v7992 = vpop.permute.xlu0 %7991
    %v7993 = vlaneseq
    %v7994 = vshrl.u32 %v7993, 7
    %v7995 = vsub.s32 5, %v7994
    %v7996 = vrot.slane %v5983, %v7995
    %7998 = vbcast.lane.b32.xlu0 %v7996, 256
    %v7999 = vpop.permute.xlu0 %7998
    %s8001 = sor.u32 256, 8
    %8002 = vbcast.lane.b32.xlu0 %v7996, %s8001
    %v8003 = vpop.permute.xlu0 %8002
    %v8004 = vlaneseq
    %v8005 = vshrl.u32 %v8004, 7
    %v8006 = vsub.s32 6, %v8005
    %v8007 = vrot.slane %v5983, %v8006
    %8009 = vbcast.lane.b32.xlu0 %v8007, 256
    %v8010 = vpop.permute.xlu0 %8009
    %s8012 = sor.u32 256, 8
    %8013 = vbcast.lane.b32.xlu0 %v8007, %s8012
    %v8014 = vpop.permute.xlu0 %8013
    %v8015 = vlaneseq
    %v8016 = vshrl.u32 %v8015, 7
    %v8017 = vsub.s32 7, %v8016
    %v8018 = vrot.slane %v5983, %v8017
    %8020 = vbcast.lane.b32.xlu0 %v8018, 256
    %v8021 = vpop.permute.xlu0 %8020
    %s8023 = sor.u32 256, 8
    %8024 = vbcast.lane.b32.xlu0 %v8018, %s8023
    %v8025 = vpop.permute.xlu0 %8024
    %v8026 = vlaneseq
    %v8027 = vshrl.u32 %v8026, 7
    %v8028 = vsub.s32 0, %v8027
    %v8029 = vrot.slane %v5985, %v8028
    %8031 = vbcast.lane.b32.xlu0 %v8029, 256
    %v8032 = vpop.permute.xlu0 %8031
    %s8034 = sor.u32 256, 8
    %8035 = vbcast.lane.b32.xlu0 %v8029, %s8034
    %v8036 = vpop.permute.xlu0 %8035
    %v8037 = vlaneseq
    %v8038 = vshrl.u32 %v8037, 7
    %v8039 = vsub.s32 1, %v8038
    %v8040 = vrot.slane %v5985, %v8039
    %8042 = vbcast.lane.b32.xlu0 %v8040, 256
    %v8043 = vpop.permute.xlu0 %8042
    %s8045 = sor.u32 256, 8
    %8046 = vbcast.lane.b32.xlu0 %v8040, %s8045
    %v8047 = vpop.permute.xlu0 %8046
    %v8048 = vlaneseq
    %v8049 = vshrl.u32 %v8048, 7
    %v8050 = vsub.s32 2, %v8049
    %v8051 = vrot.slane %v5985, %v8050
    %8053 = vbcast.lane.b32.xlu0 %v8051, 256
    %v8054 = vpop.permute.xlu0 %8053
    %s8056 = sor.u32 256, 8
    %8057 = vbcast.lane.b32.xlu0 %v8051, %s8056
    %v8058 = vpop.permute.xlu0 %8057
    %v8059 = vlaneseq
    %v8060 = vshrl.u32 %v8059, 7
    %v8061 = vsub.s32 3, %v8060
    %v8062 = vrot.slane %v5985, %v8061
    %8064 = vbcast.lane.b32.xlu0 %v8062, 256
    %v8065 = vpop.permute.xlu0 %8064
    %s8067 = sor.u32 256, 8
    %8068 = vbcast.lane.b32.xlu0 %v8062, %s8067
    %v8069 = vpop.permute.xlu0 %8068
    %v8070 = vlaneseq
    %v8071 = vshrl.u32 %v8070, 7
    %v8072 = vsub.s32 4, %v8071
    %v8073 = vrot.slane %v5985, %v8072
    %8075 = vbcast.lane.b32.xlu0 %v8073, 256
    %v8076 = vpop.permute.xlu0 %8075
    %s8078 = sor.u32 256, 8
    %8079 = vbcast.lane.b32.xlu0 %v8073, %s8078
    %v8080 = vpop.permute.xlu0 %8079
    %v8081 = vlaneseq
    %v8082 = vshrl.u32 %v8081, 7
    %v8083 = vsub.s32 5, %v8082
    %v8084 = vrot.slane %v5985, %v8083
    %8086 = vbcast.lane.b32.xlu0 %v8084, 256
    %v8087 = vpop.permute.xlu0 %8086
    %s8089 = sor.u32 256, 8
    %8090 = vbcast.lane.b32.xlu0 %v8084, %s8089
    %v8091 = vpop.permute.xlu0 %8090
    %v8092 = vlaneseq
    %v8093 = vshrl.u32 %v8092, 7
    %v8094 = vsub.s32 6, %v8093
    %v8095 = vrot.slane %v5985, %v8094
    %8097 = vbcast.lane.b32.xlu0 %v8095, 256
    %v8098 = vpop.permute.xlu0 %8097
    %s8100 = sor.u32 256, 8
    %8101 = vbcast.lane.b32.xlu0 %v8095, %s8100
    %v8102 = vpop.permute.xlu0 %8101
    %v8103 = vlaneseq
    %v8104 = vshrl.u32 %v8103, 7
    %v8105 = vsub.s32 7, %v8104
    %v8106 = vrot.slane %v5985, %v8105
    %8108 = vbcast.lane.b32.xlu0 %v8106, 256
    %v8109 = vpop.permute.xlu0 %8108
    %s8111 = sor.u32 256, 8
    %8112 = vbcast.lane.b32.xlu0 %v8106, %s8111
    %v8113 = vpop.permute.xlu0 %8112
    %v8114 = vlaneseq
    %v8115 = vshrl.u32 %v8114, 7
    %v8116 = vsub.s32 0, %v8115
    %v8117 = vrot.slane %v5987, %v8116
    %8119 = vbcast.lane.b32.xlu0 %v8117, 256
    %v8120 = vpop.permute.xlu0 %8119
    %s8122 = sor.u32 256, 8
    %8123 = vbcast.lane.b32.xlu0 %v8117, %s8122
    %v8124 = vpop.permute.xlu0 %8123
    %v8125 = vlaneseq
    %v8126 = vshrl.u32 %v8125, 7
    %v8127 = vsub.s32 1, %v8126
    %v8128 = vrot.slane %v5987, %v8127
    %8130 = vbcast.lane.b32.xlu0 %v8128, 256
    %v8131 = vpop.permute.xlu0 %8130
    %s8133 = sor.u32 256, 8
    %8134 = vbcast.lane.b32.xlu0 %v8128, %s8133
    %v8135 = vpop.permute.xlu0 %8134
    %v8136 = vlaneseq
    %v8137 = vshrl.u32 %v8136, 7
    %v8138 = vsub.s32 2, %v8137
    %v8139 = vrot.slane %v5987, %v8138
    %8141 = vbcast.lane.b32.xlu0 %v8139, 256
    %v8142 = vpop.permute.xlu0 %8141
    %s8144 = sor.u32 256, 8
    %8145 = vbcast.lane.b32.xlu0 %v8139, %s8144
    %v8146 = vpop.permute.xlu0 %8145
    %v8147 = vlaneseq
    %v8148 = vshrl.u32 %v8147, 7
    %v8149 = vsub.s32 3, %v8148
    %v8150 = vrot.slane %v5987, %v8149
    %8152 = vbcast.lane.b32.xlu0 %v8150, 256
    %v8153 = vpop.permute.xlu0 %8152
    %s8155 = sor.u32 256, 8
    %8156 = vbcast.lane.b32.xlu0 %v8150, %s8155
    %v8157 = vpop.permute.xlu0 %8156
    %v8158 = vlaneseq
    %v8159 = vshrl.u32 %v8158, 7
    %v8160 = vsub.s32 4, %v8159
    %v8161 = vrot.slane %v5987, %v8160
    %8163 = vbcast.lane.b32.xlu0 %v8161, 256
    %v8164 = vpop.permute.xlu0 %8163
    %s8166 = sor.u32 256, 8
    %8167 = vbcast.lane.b32.xlu0 %v8161, %s8166
    %v8168 = vpop.permute.xlu0 %8167
    %v8169 = vlaneseq
    %v8170 = vshrl.u32 %v8169, 7
    %v8171 = vsub.s32 5, %v8170
    %v8172 = vrot.slane %v5987, %v8171
    %8174 = vbcast.lane.b32.xlu0 %v8172, 256
    %v8175 = vpop.permute.xlu0 %8174
    %s8177 = sor.u32 256, 8
    %8178 = vbcast.lane.b32.xlu0 %v8172, %s8177
    %v8179 = vpop.permute.xlu0 %8178
    %v8180 = vlaneseq
    %v8181 = vshrl.u32 %v8180, 7
    %v8182 = vsub.s32 6, %v8181
    %v8183 = vrot.slane %v5987, %v8182
    %8185 = vbcast.lane.b32.xlu0 %v8183, 256
    %v8186 = vpop.permute.xlu0 %8185
    %s8188 = sor.u32 256, 8
    %8189 = vbcast.lane.b32.xlu0 %v8183, %s8188
    %v8190 = vpop.permute.xlu0 %8189
    %v8191 = vlaneseq
    %v8192 = vshrl.u32 %v8191, 7
    %v8193 = vsub.s32 7, %v8192
    %v8194 = vrot.slane %v5987, %v8193
    %8196 = vbcast.lane.b32.xlu0 %v8194, 256
    %v8197 = vpop.permute.xlu0 %8196
    %s8199 = sor.u32 256, 8
    %8200 = vbcast.lane.b32.xlu0 %v8194, %s8199
    %v8201 = vpop.permute.xlu0 %8200
    %v8202 = vlaneseq
    %v8203 = vshrl.u32 %v8202, 7
    %v8204 = vsub.s32 0, %v8203
    %v8205 = vrot.slane %v5989, %v8204
    %8207 = vbcast.lane.b32.xlu0 %v8205, 256
    %v8208 = vpop.permute.xlu0 %8207
    %s8210 = sor.u32 256, 8
    %8211 = vbcast.lane.b32.xlu0 %v8205, %s8210
    %v8212 = vpop.permute.xlu0 %8211
    %v8213 = vlaneseq
    %v8214 = vshrl.u32 %v8213, 7
    %v8215 = vsub.s32 1, %v8214
    %v8216 = vrot.slane %v5989, %v8215
    %8218 = vbcast.lane.b32.xlu0 %v8216, 256
    %v8219 = vpop.permute.xlu0 %8218
    %s8221 = sor.u32 256, 8
    %8222 = vbcast.lane.b32.xlu0 %v8216, %s8221
    %v8223 = vpop.permute.xlu0 %8222
    %v8224 = vlaneseq
    %v8225 = vshrl.u32 %v8224, 7
    %v8226 = vsub.s32 2, %v8225
    %v8227 = vrot.slane %v5989, %v8226
    %8229 = vbcast.lane.b32.xlu0 %v8227, 256
    %v8230 = vpop.permute.xlu0 %8229
    %s8232 = sor.u32 256, 8
    %8233 = vbcast.lane.b32.xlu0 %v8227, %s8232
    %v8234 = vpop.permute.xlu0 %8233
    %v8235 = vlaneseq
    %v8236 = vshrl.u32 %v8235, 7
    %v8237 = vsub.s32 3, %v8236
    %v8238 = vrot.slane %v5989, %v8237
    %8240 = vbcast.lane.b32.xlu0 %v8238, 256
    %v8241 = vpop.permute.xlu0 %8240
    %s8243 = sor.u32 256, 8
    %8244 = vbcast.lane.b32.xlu0 %v8238, %s8243
    %v8245 = vpop.permute.xlu0 %8244
    %v8246 = vlaneseq
    %v8247 = vshrl.u32 %v8246, 7
    %v8248 = vsub.s32 4, %v8247
    %v8249 = vrot.slane %v5989, %v8248
    %8251 = vbcast.lane.b32.xlu0 %v8249, 256
    %v8252 = vpop.permute.xlu0 %8251
    %s8254 = sor.u32 256, 8
    %8255 = vbcast.lane.b32.xlu0 %v8249, %s8254
    %v8256 = vpop.permute.xlu0 %8255
    %v8257 = vlaneseq
    %v8258 = vshrl.u32 %v8257, 7
    %v8259 = vsub.s32 5, %v8258
    %v8260 = vrot.slane %v5989, %v8259
    %8262 = vbcast.lane.b32.xlu0 %v8260, 256
    %v8263 = vpop.permute.xlu0 %8262
    %s8265 = sor.u32 256, 8
    %8266 = vbcast.lane.b32.xlu0 %v8260, %s8265
    %v8267 = vpop.permute.xlu0 %8266
    %v8268 = vlaneseq
    %v8269 = vshrl.u32 %v8268, 7
    %v8270 = vsub.s32 6, %v8269
    %v8271 = vrot.slane %v5989, %v8270
    %8273 = vbcast.lane.b32.xlu0 %v8271, 256
    %v8274 = vpop.permute.xlu0 %8273
    %s8276 = sor.u32 256, 8
    %8277 = vbcast.lane.b32.xlu0 %v8271, %s8276
    %v8278 = vpop.permute.xlu0 %8277
    %v8279 = vlaneseq
    %v8280 = vshrl.u32 %v8279, 7
    %v8281 = vsub.s32 7, %v8280
    %v8282 = vrot.slane %v5989, %v8281
    %8284 = vbcast.lane.b32.xlu0 %v8282, 256
    %v8285 = vpop.permute.xlu0 %8284
    %s8287 = sor.u32 256, 8
    %8288 = vbcast.lane.b32.xlu0 %v8282, %s8287
    %v8289 = vpop.permute.xlu0 %8288
    %v8290 = vlaneseq
    %v8291 = vshrl.u32 %v8290, 7
    %v8292 = vsub.s32 0, %v8291
    %v8293 = vrot.slane %v5991, %v8292
    %8295 = vbcast.lane.b32.xlu0 %v8293, 256
    %v8296 = vpop.permute.xlu0 %8295
    %s8298 = sor.u32 256, 8
    %8299 = vbcast.lane.b32.xlu0 %v8293, %s8298
    %v8300 = vpop.permute.xlu0 %8299
    %v8301 = vlaneseq
    %v8302 = vshrl.u32 %v8301, 7
    %v8303 = vsub.s32 1, %v8302
    %v8304 = vrot.slane %v5991, %v8303
    %8306 = vbcast.lane.b32.xlu0 %v8304, 256
    %v8307 = vpop.permute.xlu0 %8306
    %s8309 = sor.u32 256, 8
    %8310 = vbcast.lane.b32.xlu0 %v8304, %s8309
    %v8311 = vpop.permute.xlu0 %8310
    %v8312 = vlaneseq
    %v8313 = vshrl.u32 %v8312, 7
    %v8314 = vsub.s32 2, %v8313
    %v8315 = vrot.slane %v5991, %v8314
    %8317 = vbcast.lane.b32.xlu0 %v8315, 256
    %v8318 = vpop.permute.xlu0 %8317
    %s8320 = sor.u32 256, 8
    %8321 = vbcast.lane.b32.xlu0 %v8315, %s8320
    %v8322 = vpop.permute.xlu0 %8321
    %v8323 = vlaneseq
    %v8324 = vshrl.u32 %v8323, 7
    %v8325 = vsub.s32 3, %v8324
    %v8326 = vrot.slane %v5991, %v8325
    %8328 = vbcast.lane.b32.xlu0 %v8326, 256
    %v8329 = vpop.permute.xlu0 %8328
    %s8331 = sor.u32 256, 8
    %8332 = vbcast.lane.b32.xlu0 %v8326, %s8331
    %v8333 = vpop.permute.xlu0 %8332
    %v8334 = vlaneseq
    %v8335 = vshrl.u32 %v8334, 7
    %v8336 = vsub.s32 4, %v8335
    %v8337 = vrot.slane %v5991, %v8336
    %8339 = vbcast.lane.b32.xlu0 %v8337, 256
    %v8340 = vpop.permute.xlu0 %8339
    %s8342 = sor.u32 256, 8
    %8343 = vbcast.lane.b32.xlu0 %v8337, %s8342
    %v8344 = vpop.permute.xlu0 %8343
    %v8345 = vlaneseq
    %v8346 = vshrl.u32 %v8345, 7
    %v8347 = vsub.s32 5, %v8346
    %v8348 = vrot.slane %v5991, %v8347
    %8350 = vbcast.lane.b32.xlu0 %v8348, 256
    %v8351 = vpop.permute.xlu0 %8350
    %s8353 = sor.u32 256, 8
    %8354 = vbcast.lane.b32.xlu0 %v8348, %s8353
    %v8355 = vpop.permute.xlu0 %8354
    %v8356 = vlaneseq
    %v8357 = vshrl.u32 %v8356, 7
    %v8358 = vsub.s32 6, %v8357
    %v8359 = vrot.slane %v5991, %v8358
    %8361 = vbcast.lane.b32.xlu0 %v8359, 256
    %v8362 = vpop.permute.xlu0 %8361
    %s8364 = sor.u32 256, 8
    %8365 = vbcast.lane.b32.xlu0 %v8359, %s8364
    %v8366 = vpop.permute.xlu0 %8365
    %v8367 = vlaneseq
    %v8368 = vshrl.u32 %v8367, 7
    %v8369 = vsub.s32 7, %v8368
    %v8370 = vrot.slane %v5991, %v8369
    %8372 = vbcast.lane.b32.xlu0 %v8370, 256
    %v8373 = vpop.permute.xlu0 %8372
    %s8375 = sor.u32 256, 8
    %8376 = vbcast.lane.b32.xlu0 %v8370, %s8375
    %v8377 = vpop.permute.xlu0 %8376
    %v8378 = vlaneseq
    %v8379 = vshrl.u32 %v8378, 7
    %v8380 = vsub.s32 0, %v8379
    %v8381 = vrot.slane %v5993, %v8380
    %8383 = vbcast.lane.b32.xlu0 %v8381, 256
    %v8384 = vpop.permute.xlu0 %8383
    %s8386 = sor.u32 256, 8
    %8387 = vbcast.lane.b32.xlu0 %v8381, %s8386
    %v8388 = vpop.permute.xlu0 %8387
    %v8389 = vlaneseq
    %v8390 = vshrl.u32 %v8389, 7
    %v8391 = vsub.s32 1, %v8390
    %v8392 = vrot.slane %v5993, %v8391
    %8394 = vbcast.lane.b32.xlu0 %v8392, 256
    %v8395 = vpop.permute.xlu0 %8394
    %s8397 = sor.u32 256, 8
    %8398 = vbcast.lane.b32.xlu0 %v8392, %s8397
    %v8399 = vpop.permute.xlu0 %8398
    %v8400 = vlaneseq
    %v8401 = vshrl.u32 %v8400, 7
    %v8402 = vsub.s32 2, %v8401
    %v8403 = vrot.slane %v5993, %v8402
    %8405 = vbcast.lane.b32.xlu0 %v8403, 256
    %v8406 = vpop.permute.xlu0 %8405
    %s8408 = sor.u32 256, 8
    %8409 = vbcast.lane.b32.xlu0 %v8403, %s8408
    %v8410 = vpop.permute.xlu0 %8409
    %v8411 = vlaneseq
    %v8412 = vshrl.u32 %v8411, 7
    %v8413 = vsub.s32 3, %v8412
    %v8414 = vrot.slane %v5993, %v8413
    %8416 = vbcast.lane.b32.xlu0 %v8414, 256
    %v8417 = vpop.permute.xlu0 %8416
    %s8419 = sor.u32 256, 8
    %8420 = vbcast.lane.b32.xlu0 %v8414, %s8419
    %v8421 = vpop.permute.xlu0 %8420
    %v8422 = vlaneseq
    %v8423 = vshrl.u32 %v8422, 7
    %v8424 = vsub.s32 4, %v8423
    %v8425 = vrot.slane %v5993, %v8424
    %8427 = vbcast.lane.b32.xlu0 %v8425, 256
    %v8428 = vpop.permute.xlu0 %8427
    %s8430 = sor.u32 256, 8
    %8431 = vbcast.lane.b32.xlu0 %v8425, %s8430
    %v8432 = vpop.permute.xlu0 %8431
    %v8433 = vlaneseq
    %v8434 = vshrl.u32 %v8433, 7
    %v8435 = vsub.s32 5, %v8434
    %v8436 = vrot.slane %v5993, %v8435
    %8438 = vbcast.lane.b32.xlu0 %v8436, 256
    %v8439 = vpop.permute.xlu0 %8438
    %s8441 = sor.u32 256, 8
    %8442 = vbcast.lane.b32.xlu0 %v8436, %s8441
    %v8443 = vpop.permute.xlu0 %8442
    %v8444 = vlaneseq
    %v8445 = vshrl.u32 %v8444, 7
    %v8446 = vsub.s32 6, %v8445
    %v8447 = vrot.slane %v5993, %v8446
    %8449 = vbcast.lane.b32.xlu0 %v8447, 256
    %v8450 = vpop.permute.xlu0 %8449
    %s8452 = sor.u32 256, 8
    %8453 = vbcast.lane.b32.xlu0 %v8447, %s8452
    %v8454 = vpop.permute.xlu0 %8453
    %v8455 = vlaneseq
    %v8456 = vshrl.u32 %v8455, 7
    %v8457 = vsub.s32 7, %v8456
    %v8458 = vrot.slane %v5993, %v8457
    %8460 = vbcast.lane.b32.xlu0 %v8458, 256
    %v8461 = vpop.permute.xlu0 %8460
    %s8463 = sor.u32 256, 8
    %8464 = vbcast.lane.b32.xlu0 %v8458, %s8463
    %v8465 = vpop.permute.xlu0 %8464
    %v8466 = vlaneseq
    %v8467 = vshrl.u32 %v8466, 7
    %v8468 = vsub.s32 0, %v8467
    %v8469 = vrot.slane %v5995, %v8468
    %8471 = vbcast.lane.b32.xlu0 %v8469, 256
    %v8472 = vpop.permute.xlu0 %8471
    %s8474 = sor.u32 256, 8
    %8475 = vbcast.lane.b32.xlu0 %v8469, %s8474
    %v8476 = vpop.permute.xlu0 %8475
    %v8477 = vlaneseq
    %v8478 = vshrl.u32 %v8477, 7
    %v8479 = vsub.s32 1, %v8478
    %v8480 = vrot.slane %v5995, %v8479
    %8482 = vbcast.lane.b32.xlu0 %v8480, 256
    %v8483 = vpop.permute.xlu0 %8482
    %s8485 = sor.u32 256, 8
    %8486 = vbcast.lane.b32.xlu0 %v8480, %s8485
    %v8487 = vpop.permute.xlu0 %8486
    %v8488 = vlaneseq
    %v8489 = vshrl.u32 %v8488, 7
    %v8490 = vsub.s32 2, %v8489
    %v8491 = vrot.slane %v5995, %v8490
    %8493 = vbcast.lane.b32.xlu0 %v8491, 256
    %v8494 = vpop.permute.xlu0 %8493
    %s8496 = sor.u32 256, 8
    %8497 = vbcast.lane.b32.xlu0 %v8491, %s8496
    %v8498 = vpop.permute.xlu0 %8497
    %v8499 = vlaneseq
    %v8500 = vshrl.u32 %v8499, 7
    %v8501 = vsub.s32 3, %v8500
    %v8502 = vrot.slane %v5995, %v8501
    %8504 = vbcast.lane.b32.xlu0 %v8502, 256
    %v8505 = vpop.permute.xlu0 %8504
    %s8507 = sor.u32 256, 8
    %8508 = vbcast.lane.b32.xlu0 %v8502, %s8507
    %v8509 = vpop.permute.xlu0 %8508
    %v8510 = vlaneseq
    %v8511 = vshrl.u32 %v8510, 7
    %v8512 = vsub.s32 4, %v8511
    %v8513 = vrot.slane %v5995, %v8512
    %8515 = vbcast.lane.b32.xlu0 %v8513, 256
    %v8516 = vpop.permute.xlu0 %8515
    %s8518 = sor.u32 256, 8
    %8519 = vbcast.lane.b32.xlu0 %v8513, %s8518
    %v8520 = vpop.permute.xlu0 %8519
    %v8521 = vlaneseq
    %v8522 = vshrl.u32 %v8521, 7
    %v8523 = vsub.s32 5, %v8522
    %v8524 = vrot.slane %v5995, %v8523
    %8526 = vbcast.lane.b32.xlu0 %v8524, 256
    %v8527 = vpop.permute.xlu0 %8526
    %s8529 = sor.u32 256, 8
    %8530 = vbcast.lane.b32.xlu0 %v8524, %s8529
    %v8531 = vpop.permute.xlu0 %8530
    %v8532 = vlaneseq
    %v8533 = vshrl.u32 %v8532, 7
    %v8534 = vsub.s32 6, %v8533
    %v8535 = vrot.slane %v5995, %v8534
    %8537 = vbcast.lane.b32.xlu0 %v8535, 256
    %v8538 = vpop.permute.xlu0 %8537
    %s8540 = sor.u32 256, 8
    %8541 = vbcast.lane.b32.xlu0 %v8535, %s8540
    %v8542 = vpop.permute.xlu0 %8541
    %v8543 = vlaneseq
    %v8544 = vshrl.u32 %v8543, 7
    %v8545 = vsub.s32 7, %v8544
    %v8546 = vrot.slane %v5995, %v8545
    %8548 = vbcast.lane.b32.xlu0 %v8546, 256
    %v8549 = vpop.permute.xlu0 %8548
    %s8551 = sor.u32 256, 8
    %8552 = vbcast.lane.b32.xlu0 %v8546, %s8551
    %v8553 = vpop.permute.xlu0 %8552
    %v8554 = vlaneseq
    %v8555 = vshrl.u32 %v8554, 7
    %v8556 = vsub.s32 0, %v8555
    %v8557 = vrot.slane %v5997, %v8556
    %8559 = vbcast.lane.b32.xlu0 %v8557, 256
    %v8560 = vpop.permute.xlu0 %8559
    %s8562 = sor.u32 256, 8
    %8563 = vbcast.lane.b32.xlu0 %v8557, %s8562
    %v8564 = vpop.permute.xlu0 %8563
    %v8565 = vlaneseq
    %v8566 = vshrl.u32 %v8565, 7
    %v8567 = vsub.s32 1, %v8566
    %v8568 = vrot.slane %v5997, %v8567
    %8570 = vbcast.lane.b32.xlu0 %v8568, 256
    %v8571 = vpop.permute.xlu0 %8570
    %s8573 = sor.u32 256, 8
    %8574 = vbcast.lane.b32.xlu0 %v8568, %s8573
    %v8575 = vpop.permute.xlu0 %8574
    %v8576 = vlaneseq
    %v8577 = vshrl.u32 %v8576, 7
    %v8578 = vsub.s32 2, %v8577
    %v8579 = vrot.slane %v5997, %v8578
    %8581 = vbcast.lane.b32.xlu0 %v8579, 256
    %v8582 = vpop.permute.xlu0 %8581
    %s8584 = sor.u32 256, 8
    %8585 = vbcast.lane.b32.xlu0 %v8579, %s8584
    %v8586 = vpop.permute.xlu0 %8585
    %v8587 = vlaneseq
    %v8588 = vshrl.u32 %v8587, 7
    %v8589 = vsub.s32 3, %v8588
    %v8590 = vrot.slane %v5997, %v8589
    %8592 = vbcast.lane.b32.xlu0 %v8590, 256
    %v8593 = vpop.permute.xlu0 %8592
    %s8595 = sor.u32 256, 8
    %8596 = vbcast.lane.b32.xlu0 %v8590, %s8595
    %v8597 = vpop.permute.xlu0 %8596
    %v8598 = vlaneseq
    %v8599 = vshrl.u32 %v8598, 7
    %v8600 = vsub.s32 4, %v8599
    %v8601 = vrot.slane %v5997, %v8600
    %8603 = vbcast.lane.b32.xlu0 %v8601, 256
    %v8604 = vpop.permute.xlu0 %8603
    %s8606 = sor.u32 256, 8
    %8607 = vbcast.lane.b32.xlu0 %v8601, %s8606
    %v8608 = vpop.permute.xlu0 %8607
    %v8609 = vlaneseq
    %v8610 = vshrl.u32 %v8609, 7
    %v8611 = vsub.s32 5, %v8610
    %v8612 = vrot.slane %v5997, %v8611
    %8614 = vbcast.lane.b32.xlu0 %v8612, 256
    %v8615 = vpop.permute.xlu0 %8614
    %s8617 = sor.u32 256, 8
    %8618 = vbcast.lane.b32.xlu0 %v8612, %s8617
    %v8619 = vpop.permute.xlu0 %8618
    %v8620 = vlaneseq
    %v8621 = vshrl.u32 %v8620, 7
    %v8622 = vsub.s32 6, %v8621
    %v8623 = vrot.slane %v5997, %v8622
    %8625 = vbcast.lane.b32.xlu0 %v8623, 256
    %v8626 = vpop.permute.xlu0 %8625
    %s8628 = sor.u32 256, 8
    %8629 = vbcast.lane.b32.xlu0 %v8623, %s8628
    %v8630 = vpop.permute.xlu0 %8629
    %v8631 = vlaneseq
    %v8632 = vshrl.u32 %v8631, 7
    %v8633 = vsub.s32 7, %v8632
    %v8634 = vrot.slane %v5997, %v8633
    %8636 = vbcast.lane.b32.xlu0 %v8634, 256
    %v8637 = vpop.permute.xlu0 %8636
    %s8639 = sor.u32 256, 8
    %8640 = vbcast.lane.b32.xlu0 %v8634, %s8639
    %v8641 = vpop.permute.xlu0 %8640
    %v8642 = vlaneseq
    %v8643 = vshrl.u32 %v8642, 7
    %v8644 = vsub.s32 0, %v8643
    %v8645 = vrot.slane %v5999, %v8644
    %8647 = vbcast.lane.b32.xlu0 %v8645, 256
    %v8648 = vpop.permute.xlu0 %8647
    %s8650 = sor.u32 256, 8
    %8651 = vbcast.lane.b32.xlu0 %v8645, %s8650
    %v8652 = vpop.permute.xlu0 %8651
    %v8653 = vlaneseq
    %v8654 = vshrl.u32 %v8653, 7
    %v8655 = vsub.s32 1, %v8654
    %v8656 = vrot.slane %v5999, %v8655
    %8658 = vbcast.lane.b32.xlu0 %v8656, 256
    %v8659 = vpop.permute.xlu0 %8658
    %s8661 = sor.u32 256, 8
    %8662 = vbcast.lane.b32.xlu0 %v8656, %s8661
    %v8663 = vpop.permute.xlu0 %8662
    %v8664 = vlaneseq
    %v8665 = vshrl.u32 %v8664, 7
    %v8666 = vsub.s32 2, %v8665
    %v8667 = vrot.slane %v5999, %v8666
    %8669 = vbcast.lane.b32.xlu0 %v8667, 256
    %v8670 = vpop.permute.xlu0 %8669
    %s8672 = sor.u32 256, 8
    %8673 = vbcast.lane.b32.xlu0 %v8667, %s8672
    %v8674 = vpop.permute.xlu0 %8673
    %v8675 = vlaneseq
    %v8676 = vshrl.u32 %v8675, 7
    %v8677 = vsub.s32 3, %v8676
    %v8678 = vrot.slane %v5999, %v8677
    %8680 = vbcast.lane.b32.xlu0 %v8678, 256
    %v8681 = vpop.permute.xlu0 %8680
    %s8683 = sor.u32 256, 8
    %8684 = vbcast.lane.b32.xlu0 %v8678, %s8683
    %v8685 = vpop.permute.xlu0 %8684
    %v8686 = vlaneseq
    %v8687 = vshrl.u32 %v8686, 7
    %v8688 = vsub.s32 4, %v8687
    %v8689 = vrot.slane %v5999, %v8688
    %8691 = vbcast.lane.b32.xlu0 %v8689, 256
    %v8692 = vpop.permute.xlu0 %8691
    %s8694 = sor.u32 256, 8
    %8695 = vbcast.lane.b32.xlu0 %v8689, %s8694
    %v8696 = vpop.permute.xlu0 %8695
    %v8697 = vlaneseq
    %v8698 = vshrl.u32 %v8697, 7
    %v8699 = vsub.s32 5, %v8698
    %v8700 = vrot.slane %v5999, %v8699
    %8702 = vbcast.lane.b32.xlu0 %v8700, 256
    %v8703 = vpop.permute.xlu0 %8702
    %s8705 = sor.u32 256, 8
    %8706 = vbcast.lane.b32.xlu0 %v8700, %s8705
    %v8707 = vpop.permute.xlu0 %8706
    %v8708 = vlaneseq
    %v8709 = vshrl.u32 %v8708, 7
    %v8710 = vsub.s32 6, %v8709
    %v8711 = vrot.slane %v5999, %v8710
    %8713 = vbcast.lane.b32.xlu0 %v8711, 256
    %v8714 = vpop.permute.xlu0 %8713
    %s8716 = sor.u32 256, 8
    %8717 = vbcast.lane.b32.xlu0 %v8711, %s8716
    %v8718 = vpop.permute.xlu0 %8717
    %v8719 = vlaneseq
    %v8720 = vshrl.u32 %v8719, 7
    %v8721 = vsub.s32 7, %v8720
    %v8722 = vrot.slane %v5999, %v8721
    %8724 = vbcast.lane.b32.xlu0 %v8722, 256
    %v8725 = vpop.permute.xlu0 %8724
    %s8727 = sor.u32 256, 8
    %8728 = vbcast.lane.b32.xlu0 %v8722, %s8727
    %v8729 = vpop.permute.xlu0 %8728
    %v8730 = vlaneseq
    %v8731 = vshrl.u32 %v8730, 7
    %v8732 = vsub.s32 0, %v8731
    %v8733 = vrot.slane %v6001, %v8732
    %8735 = vbcast.lane.b32.xlu0 %v8733, 256
    %v8736 = vpop.permute.xlu0 %8735
    %s8738 = sor.u32 256, 8
    %8739 = vbcast.lane.b32.xlu0 %v8733, %s8738
    %v8740 = vpop.permute.xlu0 %8739
    %v8741 = vlaneseq
    %v8742 = vshrl.u32 %v8741, 7
    %v8743 = vsub.s32 1, %v8742
    %v8744 = vrot.slane %v6001, %v8743
    %8746 = vbcast.lane.b32.xlu0 %v8744, 256
    %v8747 = vpop.permute.xlu0 %8746
    %s8749 = sor.u32 256, 8
    %8750 = vbcast.lane.b32.xlu0 %v8744, %s8749
    %v8751 = vpop.permute.xlu0 %8750
    %v8752 = vlaneseq
    %v8753 = vshrl.u32 %v8752, 7
    %v8754 = vsub.s32 2, %v8753
    %v8755 = vrot.slane %v6001, %v8754
    %8757 = vbcast.lane.b32.xlu0 %v8755, 256
    %v8758 = vpop.permute.xlu0 %8757
    %s8760 = sor.u32 256, 8
    %8761 = vbcast.lane.b32.xlu0 %v8755, %s8760
    %v8762 = vpop.permute.xlu0 %8761
    %v8763 = vlaneseq
    %v8764 = vshrl.u32 %v8763, 7
    %v8765 = vsub.s32 3, %v8764
    %v8766 = vrot.slane %v6001, %v8765
    %8768 = vbcast.lane.b32.xlu0 %v8766, 256
    %v8769 = vpop.permute.xlu0 %8768
    %s8771 = sor.u32 256, 8
    %8772 = vbcast.lane.b32.xlu0 %v8766, %s8771
    %v8773 = vpop.permute.xlu0 %8772
    %v8774 = vlaneseq
    %v8775 = vshrl.u32 %v8774, 7
    %v8776 = vsub.s32 4, %v8775
    %v8777 = vrot.slane %v6001, %v8776
    %8779 = vbcast.lane.b32.xlu0 %v8777, 256
    %v8780 = vpop.permute.xlu0 %8779
    %s8782 = sor.u32 256, 8
    %8783 = vbcast.lane.b32.xlu0 %v8777, %s8782
    %v8784 = vpop.permute.xlu0 %8783
    %v8785 = vlaneseq
    %v8786 = vshrl.u32 %v8785, 7
    %v8787 = vsub.s32 5, %v8786
    %v8788 = vrot.slane %v6001, %v8787
    %8790 = vbcast.lane.b32.xlu0 %v8788, 256
    %v8791 = vpop.permute.xlu0 %8790
    %s8793 = sor.u32 256, 8
    %8794 = vbcast.lane.b32.xlu0 %v8788, %s8793
    %v8795 = vpop.permute.xlu0 %8794
    %v8796 = vlaneseq
    %v8797 = vshrl.u32 %v8796, 7
    %v8798 = vsub.s32 6, %v8797
    %v8799 = vrot.slane %v6001, %v8798
    %8801 = vbcast.lane.b32.xlu0 %v8799, 256
    %v8802 = vpop.permute.xlu0 %8801
    %s8804 = sor.u32 256, 8
    %8805 = vbcast.lane.b32.xlu0 %v8799, %s8804
    %v8806 = vpop.permute.xlu0 %8805
    %v8807 = vlaneseq
    %v8808 = vshrl.u32 %v8807, 7
    %v8809 = vsub.s32 7, %v8808
    %v8810 = vrot.slane %v6001, %v8809
    %8812 = vbcast.lane.b32.xlu0 %v8810, 256
    %v8813 = vpop.permute.xlu0 %8812
    %s8815 = sor.u32 256, 8
    %8816 = vbcast.lane.b32.xlu0 %v8810, %s8815
    %v8817 = vpop.permute.xlu0 %8816
    %v8818 = vmul.f32 %v6008, %v60
    %v8819 = vmul.f32 %v6012, %v61
    %v8820 = vmul.f32 %v6019, %v62
    %v8821 = vmul.f32 %v6023, %v63
    %v8822 = vmul.f32 %v6030, %v64
    %v8823 = vmul.f32 %v6034, %v65
    %v8824 = vmul.f32 %v6041, %v66
    %v8825 = vmul.f32 %v6045, %v67
    %v8826 = vmul.f32 %v6052, %v68
    %v8827 = vmul.f32 %v6056, %v69
    %v8828 = vmul.f32 %v6063, %v70
    %v8829 = vmul.f32 %v6067, %v71
    %v8830 = vmul.f32 %v6074, %v72
    %v8831 = vmul.f32 %v6078, %v73
    %v8832 = vmul.f32 %v6085, %v74
    %v8833 = vmul.f32 %v6089, %v75
    %v8834 = vmul.f32 %v6096, %v76
    %v8835 = vmul.f32 %v6100, %v77
    %v8836 = vmul.f32 %v6107, %v78
    %v8837 = vmul.f32 %v6111, %v79
    %v8838 = vmul.f32 %v6118, %v80
    %v8839 = vmul.f32 %v6122, %v81
    %v8840 = vmul.f32 %v6129, %v82
    %v8841 = vmul.f32 %v6133, %v83
    %v8842 = vmul.f32 %v6140, %v84
    %v8843 = vmul.f32 %v6144, %v85
    %v8844 = vmul.f32 %v6151, %v86
    %v8845 = vmul.f32 %v6155, %v87
    %v8846 = vmul.f32 %v6162, %v88
    %v8847 = vmul.f32 %v6166, %v89
    %v8848 = vmul.f32 %v6173, %v90
    %v8849 = vmul.f32 %v6177, %v91
    %v8850 = vmul.f32 %v6184, %v92
    %v8851 = vmul.f32 %v6188, %v93
    %v8852 = vmul.f32 %v6195, %v94
    %v8853 = vmul.f32 %v6199, %v95
    %v8854 = vmul.f32 %v6206, %v96
    %v8855 = vmul.f32 %v6210, %v97
    %v8856 = vmul.f32 %v6217, %v98
    %v8857 = vmul.f32 %v6221, %v99
    %v8858 = vmul.f32 %v6228, %v100
    %v8859 = vmul.f32 %v6232, %v101
    %v8860 = vmul.f32 %v6239, %v102
    %v8861 = vmul.f32 %v6243, %v103
    %v8862 = vmul.f32 %v6250, %v104
    %v8863 = vmul.f32 %v6254, %v105
    %v8864 = vmul.f32 %v6261, %v106
    %v8865 = vmul.f32 %v6265, %v107
    %v8866 = vmul.f32 %v6272, %v108
    %v8867 = vmul.f32 %v6276, %v109
    %v8868 = vmul.f32 %v6283, %v110
    %v8869 = vmul.f32 %v6287, %v111
    %v8870 = vmul.f32 %v6294, %v112
    %v8871 = vmul.f32 %v6298, %v113
    %v8872 = vmul.f32 %v6305, %v114
    %v8873 = vmul.f32 %v6309, %v115
    %v8874 = vmul.f32 %v6316, %v116
    %v8875 = vmul.f32 %v6320, %v117
    %v8876 = vmul.f32 %v6327, %v118
    %v8877 = vmul.f32 %v6331, %v119
    %v8878 = vmul.f32 %v6338, %v120
    %v8879 = vmul.f32 %v6342, %v121
    %v8880 = vmul.f32 %v6349, %v122
    %v8881 = vmul.f32 %v6353, %v123
    %v8882 = vmul.f32 %v6360, %v124
    %v8883 = vmul.f32 %v6364, %v125
    %v8884 = vmul.f32 %v6371, %v126
    %v8885 = vmul.f32 %v6375, %v127
    %v8886 = vmul.f32 %v6382, %v128
    %v8887 = vmul.f32 %v6386, %v129
    %v8888 = vmul.f32 %v6393, %v130
    %v8889 = vmul.f32 %v6397, %v131
    %v8890 = vmul.f32 %v6404, %v132
    %v8891 = vmul.f32 %v6408, %v133
    %v8892 = vmul.f32 %v6415, %v134
    %v8893 = vmul.f32 %v6419, %v135
    %v8894 = vmul.f32 %v6426, %v136
    %v8895 = vmul.f32 %v6430, %v137
    %v8896 = vmul.f32 %v6437, %v138
    %v8897 = vmul.f32 %v6441, %v139
    %v8898 = vmul.f32 %v6448, %v140
    %v8899 = vmul.f32 %v6452, %v141
    %v8900 = vmul.f32 %v6459, %v142
    %v8901 = vmul.f32 %v6463, %v143
    %v8902 = vmul.f32 %v6470, %v144
    %v8903 = vmul.f32 %v6474, %v145
    %v8904 = vmul.f32 %v6481, %v146
    %v8905 = vmul.f32 %v6485, %v147
    %v8906 = vmul.f32 %v6492, %v148
    %v8907 = vmul.f32 %v6496, %v149
    %v8908 = vmul.f32 %v6503, %v150
    %v8909 = vmul.f32 %v6507, %v151
    %v8910 = vmul.f32 %v6514, %v152
    %v8911 = vmul.f32 %v6518, %v153
    %v8912 = vmul.f32 %v6525, %v154
    %v8913 = vmul.f32 %v6529, %v155
    %v8914 = vmul.f32 %v6536, %v156
    %v8915 = vmul.f32 %v6540, %v157
    %v8916 = vmul.f32 %v6547, %v158
    %v8917 = vmul.f32 %v6551, %v159
    %v8918 = vmul.f32 %v6558, %v160
    %v8919 = vmul.f32 %v6562, %v161
    %v8920 = vmul.f32 %v6569, %v162
    %v8921 = vmul.f32 %v6573, %v163
    %v8922 = vmul.f32 %v6580, %v164
    %v8923 = vmul.f32 %v6584, %v165
    %v8924 = vmul.f32 %v6591, %v166
    %v8925 = vmul.f32 %v6595, %v167
    %v8926 = vmul.f32 %v6602, %v168
    %v8927 = vmul.f32 %v6606, %v169
    %v8928 = vmul.f32 %v6613, %v170
    %v8929 = vmul.f32 %v6617, %v171
    %v8930 = vmul.f32 %v6624, %v172
    %v8931 = vmul.f32 %v6628, %v173
    %v8932 = vmul.f32 %v6635, %v174
    %v8933 = vmul.f32 %v6639, %v175
    %v8934 = vmul.f32 %v6646, %v176
    %v8935 = vmul.f32 %v6650, %v177
    %v8936 = vmul.f32 %v6657, %v178
    %v8937 = vmul.f32 %v6661, %v179
    %v8938 = vmul.f32 %v6668, %v180
    %v8939 = vmul.f32 %v6672, %v181
    %v8940 = vmul.f32 %v6679, %v182
    %v8941 = vmul.f32 %v6683, %v183
    %v8942 = vmul.f32 %v6690, %v184
    %v8943 = vmul.f32 %v6694, %v185
    %v8944 = vmul.f32 %v6701, %v186
    %v8945 = vmul.f32 %v6705, %v187
    %v8946 = vmul.f32 %v6712, %v188
    %v8947 = vmul.f32 %v6716, %v189
    %v8948 = vmul.f32 %v6723, %v190
    %v8949 = vmul.f32 %v6727, %v191
    %v8950 = vmul.f32 %v6734, %v192
    %v8951 = vmul.f32 %v6738, %v193
    %v8952 = vmul.f32 %v6745, %v194
    %v8953 = vmul.f32 %v6749, %v195
    %v8954 = vmul.f32 %v6756, %v196
    %v8955 = vmul.f32 %v6760, %v197
    %v8956 = vmul.f32 %v6767, %v198
    %v8957 = vmul.f32 %v6771, %v199
    %v8958 = vmul.f32 %v6778, %v200
    %v8959 = vmul.f32 %v6782, %v201
    %v8960 = vmul.f32 %v6789, %v202
    %v8961 = vmul.f32 %v6793, %v203
    %v8962 = vmul.f32 %v6800, %v204
    %v8963 = vmul.f32 %v6804, %v205
    %v8964 = vmul.f32 %v6811, %v206
    %v8965 = vmul.f32 %v6815, %v207
    %v8966 = vmul.f32 %v6822, %v208
    %v8967 = vmul.f32 %v6826, %v209
    %v8968 = vmul.f32 %v6833, %v210
    %v8969 = vmul.f32 %v6837, %v211
    %v8970 = vmul.f32 %v6844, %v212
    %v8971 = vmul.f32 %v6848, %v213
    %v8972 = vmul.f32 %v6855, %v214
    %v8973 = vmul.f32 %v6859, %v215
    %v8974 = vmul.f32 %v6866, %v216
    %v8975 = vmul.f32 %v6870, %v217
    %v8976 = vmul.f32 %v6877, %v218
    %v8977 = vmul.f32 %v6881, %v219
    %v8978 = vmul.f32 %v6888, %v220
    %v8979 = vmul.f32 %v6892, %v221
    %v8980 = vmul.f32 %v6899, %v222
    %v8981 = vmul.f32 %v6903, %v223
    %v8982 = vmul.f32 %v6910, %v224
    %v8983 = vmul.f32 %v6914, %v225
    %v8984 = vmul.f32 %v6921, %v226
    %v8985 = vmul.f32 %v6925, %v227
    %v8986 = vmul.f32 %v6932, %v228
    %v8987 = vmul.f32 %v6936, %v229
    %v8988 = vmul.f32 %v6943, %v230
    %v8989 = vmul.f32 %v6947, %v231
    %v8990 = vmul.f32 %v6954, %v232
    %v8991 = vmul.f32 %v6958, %v233
    %v8992 = vmul.f32 %v6965, %v234
    %v8993 = vmul.f32 %v6969, %v235
    %v8994 = vmul.f32 %v6976, %v236
    %v8995 = vmul.f32 %v6980, %v237
    %v8996 = vmul.f32 %v6987, %v238
    %v8997 = vmul.f32 %v6991, %v239
    %v8998 = vmul.f32 %v6998, %v240
    %v8999 = vmul.f32 %v7002, %v241
    %v9000 = vmul.f32 %v7009, %v242
    %v9001 = vmul.f32 %v7013, %v243
    %v9002 = vmul.f32 %v7020, %v244
    %v9003 = vmul.f32 %v7024, %v245
    %v9004 = vmul.f32 %v7031, %v246
    %v9005 = vmul.f32 %v7035, %v247
    %v9006 = vmul.f32 %v7042, %v248
    %v9007 = vmul.f32 %v7046, %v249
    %v9008 = vmul.f32 %v7053, %v250
    %v9009 = vmul.f32 %v7057, %v251
    %v9010 = vmul.f32 %v7064, %v252
    %v9011 = vmul.f32 %v7068, %v253
    %v9012 = vmul.f32 %v7075, %v254
    %v9013 = vmul.f32 %v7079, %v255
    %v9014 = vmul.f32 %v7086, %v256
    %v9015 = vmul.f32 %v7090, %v257
    %v9016 = vmul.f32 %v7097, %v258
    %v9017 = vmul.f32 %v7101, %v259
    %v9018 = vmul.f32 %v7108, %v260
    %v9019 = vmul.f32 %v7112, %v261
    %v9020 = vmul.f32 %v7119, %v262
    %v9021 = vmul.f32 %v7123, %v263
    %v9022 = vmul.f32 %v7130, %v264
    %v9023 = vmul.f32 %v7134, %v265
    %v9024 = vmul.f32 %v7141, %v266
    %v9025 = vmul.f32 %v7145, %v267
    %v9026 = vmul.f32 %v7152, %v268
    %v9027 = vmul.f32 %v7156, %v269
    %v9028 = vmul.f32 %v7163, %v270
    %v9029 = vmul.f32 %v7167, %v271
    %v9030 = vmul.f32 %v7174, %v272
    %v9031 = vmul.f32 %v7178, %v273
    %v9032 = vmul.f32 %v7185, %v274
    %v9033 = vmul.f32 %v7189, %v275
    %v9034 = vmul.f32 %v7196, %v276
    %v9035 = vmul.f32 %v7200, %v277
    %v9036 = vmul.f32 %v7207, %v278
    %v9037 = vmul.f32 %v7211, %v279
    %v9038 = vmul.f32 %v7218, %v280
    %v9039 = vmul.f32 %v7222, %v281
    %v9040 = vmul.f32 %v7229, %v282
    %v9041 = vmul.f32 %v7233, %v283
    %v9042 = vmul.f32 %v7240, %v284
    %v9043 = vmul.f32 %v7244, %v285
    %v9044 = vmul.f32 %v7251, %v286
    %v9045 = vmul.f32 %v7255, %v287
    %v9046 = vmul.f32 %v7262, %v288
    %v9047 = vmul.f32 %v7266, %v289
    %v9048 = vmul.f32 %v7273, %v290
    %v9049 = vmul.f32 %v7277, %v291
    %v9050 = vmul.f32 %v7284, %v292
    %v9051 = vmul.f32 %v7288, %v293
    %v9052 = vmul.f32 %v7295, %v294
    %v9053 = vmul.f32 %v7299, %v295
    %v9054 = vmul.f32 %v7306, %v296
    %v9055 = vmul.f32 %v7310, %v297
    %v9056 = vmul.f32 %v7317, %v298
    %v9057 = vmul.f32 %v7321, %v299
    %v9058 = vmul.f32 %v7328, %v300
    %v9059 = vmul.f32 %v7332, %v301
    %v9060 = vmul.f32 %v7339, %v302
    %v9061 = vmul.f32 %v7343, %v303
    %v9062 = vmul.f32 %v7350, %v304
    %v9063 = vmul.f32 %v7354, %v305
    %v9064 = vmul.f32 %v7361, %v306
    %v9065 = vmul.f32 %v7365, %v307
    %v9066 = vmul.f32 %v7372, %v308
    %v9067 = vmul.f32 %v7376, %v309
    %v9068 = vmul.f32 %v7383, %v310
    %v9069 = vmul.f32 %v7387, %v311
    %v9070 = vmul.f32 %v7394, %v312
    %v9071 = vmul.f32 %v7398, %v313
    %v9072 = vmul.f32 %v7405, %v314
    %v9073 = vmul.f32 %v7409, %v315
    %v9074 = vmul.f32 %v7416, %v316
    %v9075 = vmul.f32 %v7420, %v317
    %v9076 = vmul.f32 %v7427, %v318
    %v9077 = vmul.f32 %v7431, %v319
    %v9078 = vmul.f32 %v7438, %v320
    %v9079 = vmul.f32 %v7442, %v321
    %v9080 = vmul.f32 %v7449, %v322
    %v9081 = vmul.f32 %v7453, %v323
    %v9082 = vmul.f32 %v7460, %v324
    %v9083 = vmul.f32 %v7464, %v325
    %v9084 = vmul.f32 %v7471, %v326
    %v9085 = vmul.f32 %v7475, %v327
    %v9086 = vmul.f32 %v7482, %v328
    %v9087 = vmul.f32 %v7486, %v329
    %v9088 = vmul.f32 %v7493, %v330
    %v9089 = vmul.f32 %v7497, %v331
    %v9090 = vmul.f32 %v7504, %v332
    %v9091 = vmul.f32 %v7508, %v333
    %v9092 = vmul.f32 %v7515, %v334
    %v9093 = vmul.f32 %v7519, %v335
    %v9094 = vmul.f32 %v7526, %v336
    %v9095 = vmul.f32 %v7530, %v337
    %v9096 = vmul.f32 %v7537, %v338
    %v9097 = vmul.f32 %v7541, %v339
    %v9098 = vmul.f32 %v7548, %v340
    %v9099 = vmul.f32 %v7552, %v341
    %v9100 = vmul.f32 %v7559, %v342
    %v9101 = vmul.f32 %v7563, %v343
    %v9102 = vmul.f32 %v7570, %v344
    %v9103 = vmul.f32 %v7574, %v345
    %v9104 = vmul.f32 %v7581, %v346
    %v9105 = vmul.f32 %v7585, %v347
    %v9106 = vmul.f32 %v7592, %v348
    %v9107 = vmul.f32 %v7596, %v349
    %v9108 = vmul.f32 %v7603, %v350
    %v9109 = vmul.f32 %v7607, %v351
    %v9110 = vmul.f32 %v7614, %v352
    %v9111 = vmul.f32 %v7618, %v353
    %v9112 = vmul.f32 %v7625, %v354
    %v9113 = vmul.f32 %v7629, %v355
    %v9114 = vmul.f32 %v7636, %v356
    %v9115 = vmul.f32 %v7640, %v357
    %v9116 = vmul.f32 %v7647, %v358
    %v9117 = vmul.f32 %v7651, %v359
    %v9118 = vmul.f32 %v7658, %v360
    %v9119 = vmul.f32 %v7662, %v361
    %v9120 = vmul.f32 %v7669, %v362
    %v9121 = vmul.f32 %v7673, %v363
    %v9122 = vmul.f32 %v7680, %v364
    %v9123 = vmul.f32 %v7684, %v365
    %v9124 = vmul.f32 %v7691, %v366
    %v9125 = vmul.f32 %v7695, %v367
    %v9126 = vmul.f32 %v7702, %v368
    %v9127 = vmul.f32 %v7706, %v369
    %v9128 = vmul.f32 %v7713, %v370
    %v9129 = vmul.f32 %v7717, %v371
    %v9130 = vmul.f32 %v7724, %v372
    %v9131 = vmul.f32 %v7728, %v373
    %v9132 = vmul.f32 %v7735, %v374
    %v9133 = vmul.f32 %v7739, %v375
    %v9134 = vmul.f32 %v7746, %v376
    %v9135 = vmul.f32 %v7750, %v377
    %v9136 = vmul.f32 %v7757, %v378
    %v9137 = vmul.f32 %v7761, %v379
    %v9138 = vmul.f32 %v7768, %v380
    %v9139 = vmul.f32 %v7772, %v381
    %v9140 = vmul.f32 %v7779, %v382
    %v9141 = vmul.f32 %v7783, %v383
    %v9142 = vmul.f32 %v7790, %v384
    %v9143 = vmul.f32 %v7794, %v385
    %v9144 = vmul.f32 %v7801, %v386
    %v9145 = vmul.f32 %v7805, %v387
    %v9146 = vmul.f32 %v7812, %v388
    %v9147 = vmul.f32 %v7816, %v389
    %v9148 = vmul.f32 %v7823, %v390
    %v9149 = vmul.f32 %v7827, %v391
    %v9150 = vmul.f32 %v7834, %v392
    %v9151 = vmul.f32 %v7838, %v393
    %v9152 = vmul.f32 %v7845, %v394
    %v9153 = vmul.f32 %v7849, %v395
    %v9154 = vmul.f32 %v7856, %v396
    %v9155 = vmul.f32 %v7860, %v397
    %v9156 = vmul.f32 %v7867, %v398
    %v9157 = vmul.f32 %v7871, %v399
    %v9158 = vmul.f32 %v7878, %v400
    %v9159 = vmul.f32 %v7882, %v401
    %v9160 = vmul.f32 %v7889, %v402
    %v9161 = vmul.f32 %v7893, %v403
    %v9162 = vmul.f32 %v7900, %v404
    %v9163 = vmul.f32 %v7904, %v405
    %v9164 = vmul.f32 %v7911, %v406
    %v9165 = vmul.f32 %v7915, %v407
    %v9166 = vmul.f32 %v7922, %v408
    %v9167 = vmul.f32 %v7926, %v409
    %v9168 = vmul.f32 %v7933, %v410
    %v9169 = vmul.f32 %v7937, %v411
    %v9170 = vmul.f32 %v7944, %v412
    %v9171 = vmul.f32 %v7948, %v413
    %v9172 = vmul.f32 %v7955, %v414
    %v9173 = vmul.f32 %v7959, %v415
    %v9174 = vmul.f32 %v7966, %v416
    %v9175 = vmul.f32 %v7970, %v417
    %v9176 = vmul.f32 %v7977, %v418
    %v9177 = vmul.f32 %v7981, %v419
    %v9178 = vmul.f32 %v7988, %v420
    %v9179 = vmul.f32 %v7992, %v421
    %v9180 = vmul.f32 %v7999, %v422
    %v9181 = vmul.f32 %v8003, %v423
    %v9182 = vmul.f32 %v8010, %v424
    %v9183 = vmul.f32 %v8014, %v425
    %v9184 = vmul.f32 %v8021, %v426
    %v9185 = vmul.f32 %v8025, %v427
    %v9186 = vmul.f32 %v8032, %v428
    %v9187 = vmul.f32 %v8036, %v429
    %v9188 = vmul.f32 %v8043, %v430
    %v9189 = vmul.f32 %v8047, %v431
    %v9190 = vmul.f32 %v8054, %v432
    %v9191 = vmul.f32 %v8058, %v433
    %v9192 = vmul.f32 %v8065, %v434
    %v9193 = vmul.f32 %v8069, %v435
    %v9194 = vmul.f32 %v8076, %v436
    %v9195 = vmul.f32 %v8080, %v437
    %v9196 = vmul.f32 %v8087, %v438
    %v9197 = vmul.f32 %v8091, %v439
    %v9198 = vmul.f32 %v8098, %v440
    %v9199 = vmul.f32 %v8102, %v441
    %v9200 = vmul.f32 %v8109, %v442
    %v9201 = vmul.f32 %v8113, %v443
    %v9202 = vmul.f32 %v8120, %v444
    %v9203 = vmul.f32 %v8124, %v445
    %v9204 = vmul.f32 %v8131, %v446
    %v9205 = vmul.f32 %v8135, %v447
    %v9206 = vmul.f32 %v8142, %v448
    %v9207 = vmul.f32 %v8146, %v449
    %v9208 = vmul.f32 %v8153, %v450
    %v9209 = vmul.f32 %v8157, %v451
    %v9210 = vmul.f32 %v8164, %v452
    %v9211 = vmul.f32 %v8168, %v453
    %v9212 = vmul.f32 %v8175, %v454
    %v9213 = vmul.f32 %v8179, %v455
    %v9214 = vmul.f32 %v8186, %v456
    %v9215 = vmul.f32 %v8190, %v457
    %v9216 = vmul.f32 %v8197, %v458
    %v9217 = vmul.f32 %v8201, %v459
    %v9218 = vmul.f32 %v8208, %v460
    %v9219 = vmul.f32 %v8212, %v461
    %v9220 = vmul.f32 %v8219, %v462
    %v9221 = vmul.f32 %v8223, %v463
    %v9222 = vmul.f32 %v8230, %v464
    %v9223 = vmul.f32 %v8234, %v465
    %v9224 = vmul.f32 %v8241, %v466
    %v9225 = vmul.f32 %v8245, %v467
    %v9226 = vmul.f32 %v8252, %v468
    %v9227 = vmul.f32 %v8256, %v469
    %v9228 = vmul.f32 %v8263, %v470
    %v9229 = vmul.f32 %v8267, %v471
    %v9230 = vmul.f32 %v8274, %v472
    %v9231 = vmul.f32 %v8278, %v473
    %v9232 = vmul.f32 %v8285, %v474
    %v9233 = vmul.f32 %v8289, %v475
    %v9234 = vmul.f32 %v8296, %v476
    %v9235 = vmul.f32 %v8300, %v477
    %v9236 = vmul.f32 %v8307, %v478
    %v9237 = vmul.f32 %v8311, %v479
    %v9238 = vmul.f32 %v8318, %v480
    %v9239 = vmul.f32 %v8322, %v481
    %v9240 = vmul.f32 %v8329, %v482
    %v9241 = vmul.f32 %v8333, %v483
    %v9242 = vmul.f32 %v8340, %v484
    %v9243 = vmul.f32 %v8344, %v485
    %v9244 = vmul.f32 %v8351, %v486
    %v9245 = vmul.f32 %v8355, %v487
    %v9246 = vmul.f32 %v8362, %v488
    %v9247 = vmul.f32 %v8366, %v489
    %v9248 = vmul.f32 %v8373, %v490
    %v9249 = vmul.f32 %v8377, %v491
    %v9250 = vmul.f32 %v8384, %v492
    %v9251 = vmul.f32 %v8388, %v493
    %v9252 = vmul.f32 %v8395, %v494
    %v9253 = vmul.f32 %v8399, %v495
    %v9254 = vmul.f32 %v8406, %v496
    %v9255 = vmul.f32 %v8410, %v497
    %v9256 = vmul.f32 %v8417, %v498
    %v9257 = vmul.f32 %v8421, %v499
    %v9258 = vmul.f32 %v8428, %v500
    %v9259 = vmul.f32 %v8432, %v501
    %v9260 = vmul.f32 %v8439, %v502
    %v9261 = vmul.f32 %v8443, %v503
    %v9262 = vmul.f32 %v8450, %v504
    %v9263 = vmul.f32 %v8454, %v505
    %v9264 = vmul.f32 %v8461, %v506
    %v9265 = vmul.f32 %v8465, %v507
    %v9266 = vmul.f32 %v8472, %v508
    %v9267 = vmul.f32 %v8476, %v509
    %v9268 = vmul.f32 %v8483, %v510
    %v9269 = vmul.f32 %v8487, %v511
    %v9270 = vmul.f32 %v8494, %v512
    %v9271 = vmul.f32 %v8498, %v513
    %v9272 = vmul.f32 %v8505, %v514
    %v9273 = vmul.f32 %v8509, %v515
    %v9274 = vmul.f32 %v8516, %v516
    %v9275 = vmul.f32 %v8520, %v517
    %v9276 = vmul.f32 %v8527, %v518
    %v9277 = vmul.f32 %v8531, %v519
    %v9278 = vmul.f32 %v8538, %v520
    %v9279 = vmul.f32 %v8542, %v521
    %v9280 = vmul.f32 %v8549, %v522
    %v9281 = vmul.f32 %v8553, %v523
    %v9282 = vmul.f32 %v8560, %v524
    %v9283 = vmul.f32 %v8564, %v525
    %v9284 = vmul.f32 %v8571, %v526
    %v9285 = vmul.f32 %v8575, %v527
    %v9286 = vmul.f32 %v8582, %v528
    %v9287 = vmul.f32 %v8586, %v529
    %v9288 = vmul.f32 %v8593, %v530
    %v9289 = vmul.f32 %v8597, %v531
    %v9290 = vmul.f32 %v8604, %v532
    %v9291 = vmul.f32 %v8608, %v533
    %v9292 = vmul.f32 %v8615, %v534
    %v9293 = vmul.f32 %v8619, %v535
    %v9294 = vmul.f32 %v8626, %v536
    %v9295 = vmul.f32 %v8630, %v537
    %v9296 = vmul.f32 %v8637, %v538
    %v9297 = vmul.f32 %v8641, %v539
    %v9298 = vmul.f32 %v8648, %v540
    %v9299 = vmul.f32 %v8652, %v541
    %v9300 = vmul.f32 %v8659, %v542
    %v9301 = vmul.f32 %v8663, %v543
    %v9302 = vmul.f32 %v8670, %v544
    %v9303 = vmul.f32 %v8674, %v545
    %v9304 = vmul.f32 %v8681, %v546
    %v9305 = vmul.f32 %v8685, %v547
    %v9306 = vmul.f32 %v8692, %v548
    %v9307 = vmul.f32 %v8696, %v549
    %v9308 = vmul.f32 %v8703, %v550
    %v9309 = vmul.f32 %v8707, %v551
    %v9310 = vmul.f32 %v8714, %v552
    %v9311 = vmul.f32 %v8718, %v553
    %v9312 = vmul.f32 %v8725, %v554
    %v9313 = vmul.f32 %v8729, %v555
    %v9314 = vmul.f32 %v8736, %v556
    %v9315 = vmul.f32 %v8740, %v557
    %v9316 = vmul.f32 %v8747, %v558
    %v9317 = vmul.f32 %v8751, %v559
    %v9318 = vmul.f32 %v8758, %v560
    %v9319 = vmul.f32 %v8762, %v561
    %v9320 = vmul.f32 %v8769, %v562
    %v9321 = vmul.f32 %v8773, %v563
    %v9322 = vmul.f32 %v8780, %v564
    %v9323 = vmul.f32 %v8784, %v565
    %v9324 = vmul.f32 %v8791, %v566
    %v9325 = vmul.f32 %v8795, %v567
    %v9326 = vmul.f32 %v8802, %v568
    %v9327 = vmul.f32 %v8806, %v569
    %v9328 = vmul.f32 %v8813, %v570
    %v9329 = vmul.f32 %v8817, %v571
    %v9330 = vadd.f32 %v8818, %v8819
    %v9331 = vrot.slane %v9330, 4
    %v9332 = vadd.f32 %v9330, %v9331
    %v9333 = vrot.slane %v9332, 2
    %v9334 = vadd.f32 %v9332, %v9333
    %v9335 = vrot.slane %v9334, 1
    %v9336 = vadd.f32 %v9334, %v9335
    %v9337 = vadd.f32 %v8820, %v8821
    %v9338 = vrot.slane %v9337, 4
    %v9339 = vadd.f32 %v9337, %v9338
    %v9340 = vrot.slane %v9339, 2
    %v9341 = vadd.f32 %v9339, %v9340
    %v9342 = vrot.slane %v9341, 1
    %v9343 = vadd.f32 %v9341, %v9342
    %v9344 = vadd.f32 %v8822, %v8823
    %v9345 = vrot.slane %v9344, 4
    %v9346 = vadd.f32 %v9344, %v9345
    %v9347 = vrot.slane %v9346, 2
    %v9348 = vadd.f32 %v9346, %v9347
    %v9349 = vrot.slane %v9348, 1
    %v9350 = vadd.f32 %v9348, %v9349
    %v9351 = vadd.f32 %v8824, %v8825
    %v9352 = vrot.slane %v9351, 4
    %v9353 = vadd.f32 %v9351, %v9352
    %v9354 = vrot.slane %v9353, 2
    %v9355 = vadd.f32 %v9353, %v9354
    %v9356 = vrot.slane %v9355, 1
    %v9357 = vadd.f32 %v9355, %v9356
    %v9358 = vadd.f32 %v8826, %v8827
    %v9359 = vrot.slane %v9358, 4
    %v9360 = vadd.f32 %v9358, %v9359
    %v9361 = vrot.slane %v9360, 2
    %v9362 = vadd.f32 %v9360, %v9361
    %v9363 = vrot.slane %v9362, 1
    %v9364 = vadd.f32 %v9362, %v9363
    %v9365 = vadd.f32 %v8828, %v8829
    %v9366 = vrot.slane %v9365, 4
    %v9367 = vadd.f32 %v9365, %v9366
    %v9368 = vrot.slane %v9367, 2
    %v9369 = vadd.f32 %v9367, %v9368
    %v9370 = vrot.slane %v9369, 1
    %v9371 = vadd.f32 %v9369, %v9370
    %v9372 = vadd.f32 %v8830, %v8831
    %v9373 = vrot.slane %v9372, 4
    %v9374 = vadd.f32 %v9372, %v9373
    %v9375 = vrot.slane %v9374, 2
    %v9376 = vadd.f32 %v9374, %v9375
    %v9377 = vrot.slane %v9376, 1
    %v9378 = vadd.f32 %v9376, %v9377
    %v9379 = vadd.f32 %v8832, %v8833
    %v9380 = vrot.slane %v9379, 4
    %v9381 = vadd.f32 %v9379, %v9380
    %v9382 = vrot.slane %v9381, 2
    %v9383 = vadd.f32 %v9381, %v9382
    %v9384 = vrot.slane %v9383, 1
    %v9385 = vadd.f32 %v9383, %v9384
    %v9386 = vadd.f32 %v8834, %v8835
    %v9387 = vrot.slane %v9386, 4
    %v9388 = vadd.f32 %v9386, %v9387
    %v9389 = vrot.slane %v9388, 2
    %v9390 = vadd.f32 %v9388, %v9389
    %v9391 = vrot.slane %v9390, 1
    %v9392 = vadd.f32 %v9390, %v9391
    %v9393 = vadd.f32 %v8836, %v8837
    %v9394 = vrot.slane %v9393, 4
    %v9395 = vadd.f32 %v9393, %v9394
    %v9396 = vrot.slane %v9395, 2
    %v9397 = vadd.f32 %v9395, %v9396
    %v9398 = vrot.slane %v9397, 1
    %v9399 = vadd.f32 %v9397, %v9398
    %v9400 = vadd.f32 %v8838, %v8839
    %v9401 = vrot.slane %v9400, 4
    %v9402 = vadd.f32 %v9400, %v9401
    %v9403 = vrot.slane %v9402, 2
    %v9404 = vadd.f32 %v9402, %v9403
    %v9405 = vrot.slane %v9404, 1
    %v9406 = vadd.f32 %v9404, %v9405
    %v9407 = vadd.f32 %v8840, %v8841
    %v9408 = vrot.slane %v9407, 4
    %v9409 = vadd.f32 %v9407, %v9408
    %v9410 = vrot.slane %v9409, 2
    %v9411 = vadd.f32 %v9409, %v9410
    %v9412 = vrot.slane %v9411, 1
    %v9413 = vadd.f32 %v9411, %v9412
    %v9414 = vadd.f32 %v8842, %v8843
    %v9415 = vrot.slane %v9414, 4
    %v9416 = vadd.f32 %v9414, %v9415
    %v9417 = vrot.slane %v9416, 2
    %v9418 = vadd.f32 %v9416, %v9417
    %v9419 = vrot.slane %v9418, 1
    %v9420 = vadd.f32 %v9418, %v9419
    %v9421 = vadd.f32 %v8844, %v8845
    %v9422 = vrot.slane %v9421, 4
    %v9423 = vadd.f32 %v9421, %v9422
    %v9424 = vrot.slane %v9423, 2
    %v9425 = vadd.f32 %v9423, %v9424
    %v9426 = vrot.slane %v9425, 1
    %v9427 = vadd.f32 %v9425, %v9426
    %v9428 = vadd.f32 %v8846, %v8847
    %v9429 = vrot.slane %v9428, 4
    %v9430 = vadd.f32 %v9428, %v9429
    %v9431 = vrot.slane %v9430, 2
    %v9432 = vadd.f32 %v9430, %v9431
    %v9433 = vrot.slane %v9432, 1
    %v9434 = vadd.f32 %v9432, %v9433
    %v9435 = vadd.f32 %v8848, %v8849
    %v9436 = vrot.slane %v9435, 4
    %v9437 = vadd.f32 %v9435, %v9436
    %v9438 = vrot.slane %v9437, 2
    %v9439 = vadd.f32 %v9437, %v9438
    %v9440 = vrot.slane %v9439, 1
    %v9441 = vadd.f32 %v9439, %v9440
    %v9442 = vadd.f32 %v8850, %v8851
    %v9443 = vrot.slane %v9442, 4
    %v9444 = vadd.f32 %v9442, %v9443
    %v9445 = vrot.slane %v9444, 2
    %v9446 = vadd.f32 %v9444, %v9445
    %v9447 = vrot.slane %v9446, 1
    %v9448 = vadd.f32 %v9446, %v9447
    %v9449 = vadd.f32 %v8852, %v8853
    %v9450 = vrot.slane %v9449, 4
    %v9451 = vadd.f32 %v9449, %v9450
    %v9452 = vrot.slane %v9451, 2
    %v9453 = vadd.f32 %v9451, %v9452
    %v9454 = vrot.slane %v9453, 1
    %v9455 = vadd.f32 %v9453, %v9454
    %v9456 = vadd.f32 %v8854, %v8855
    %v9457 = vrot.slane %v9456, 4
    %v9458 = vadd.f32 %v9456, %v9457
    %v9459 = vrot.slane %v9458, 2
    %v9460 = vadd.f32 %v9458, %v9459
    %v9461 = vrot.slane %v9460, 1
    %v9462 = vadd.f32 %v9460, %v9461
    %v9463 = vadd.f32 %v8856, %v8857
    %v9464 = vrot.slane %v9463, 4
    %v9465 = vadd.f32 %v9463, %v9464
    %v9466 = vrot.slane %v9465, 2
    %v9467 = vadd.f32 %v9465, %v9466
    %v9468 = vrot.slane %v9467, 1
    %v9469 = vadd.f32 %v9467, %v9468
    %v9470 = vadd.f32 %v8858, %v8859
    %v9471 = vrot.slane %v9470, 4
    %v9472 = vadd.f32 %v9470, %v9471
    %v9473 = vrot.slane %v9472, 2
    %v9474 = vadd.f32 %v9472, %v9473
    %v9475 = vrot.slane %v9474, 1
    %v9476 = vadd.f32 %v9474, %v9475
    %v9477 = vadd.f32 %v8860, %v8861
    %v9478 = vrot.slane %v9477, 4
    %v9479 = vadd.f32 %v9477, %v9478
    %v9480 = vrot.slane %v9479, 2
    %v9481 = vadd.f32 %v9479, %v9480
    %v9482 = vrot.slane %v9481, 1
    %v9483 = vadd.f32 %v9481, %v9482
    %v9484 = vadd.f32 %v8862, %v8863
    %v9485 = vrot.slane %v9484, 4
    %v9486 = vadd.f32 %v9484, %v9485
    %v9487 = vrot.slane %v9486, 2
    %v9488 = vadd.f32 %v9486, %v9487
    %v9489 = vrot.slane %v9488, 1
    %v9490 = vadd.f32 %v9488, %v9489
    %v9491 = vadd.f32 %v8864, %v8865
    %v9492 = vrot.slane %v9491, 4
    %v9493 = vadd.f32 %v9491, %v9492
    %v9494 = vrot.slane %v9493, 2
    %v9495 = vadd.f32 %v9493, %v9494
    %v9496 = vrot.slane %v9495, 1
    %v9497 = vadd.f32 %v9495, %v9496
    %v9498 = vadd.f32 %v8866, %v8867
    %v9499 = vrot.slane %v9498, 4
    %v9500 = vadd.f32 %v9498, %v9499
    %v9501 = vrot.slane %v9500, 2
    %v9502 = vadd.f32 %v9500, %v9501
    %v9503 = vrot.slane %v9502, 1
    %v9504 = vadd.f32 %v9502, %v9503
    %v9505 = vadd.f32 %v8868, %v8869
    %v9506 = vrot.slane %v9505, 4
    %v9507 = vadd.f32 %v9505, %v9506
    %v9508 = vrot.slane %v9507, 2
    %v9509 = vadd.f32 %v9507, %v9508
    %v9510 = vrot.slane %v9509, 1
    %v9511 = vadd.f32 %v9509, %v9510
    %v9512 = vadd.f32 %v8870, %v8871
    %v9513 = vrot.slane %v9512, 4
    %v9514 = vadd.f32 %v9512, %v9513
    %v9515 = vrot.slane %v9514, 2
    %v9516 = vadd.f32 %v9514, %v9515
    %v9517 = vrot.slane %v9516, 1
    %v9518 = vadd.f32 %v9516, %v9517
    %v9519 = vadd.f32 %v8872, %v8873
    %v9520 = vrot.slane %v9519, 4
    %v9521 = vadd.f32 %v9519, %v9520
    %v9522 = vrot.slane %v9521, 2
    %v9523 = vadd.f32 %v9521, %v9522
    %v9524 = vrot.slane %v9523, 1
    %v9525 = vadd.f32 %v9523, %v9524
    %v9526 = vadd.f32 %v8874, %v8875
    %v9527 = vrot.slane %v9526, 4
    %v9528 = vadd.f32 %v9526, %v9527
    %v9529 = vrot.slane %v9528, 2
    %v9530 = vadd.f32 %v9528, %v9529
    %v9531 = vrot.slane %v9530, 1
    %v9532 = vadd.f32 %v9530, %v9531
    %v9533 = vadd.f32 %v8876, %v8877
    %v9534 = vrot.slane %v9533, 4
    %v9535 = vadd.f32 %v9533, %v9534
    %v9536 = vrot.slane %v9535, 2
    %v9537 = vadd.f32 %v9535, %v9536
    %v9538 = vrot.slane %v9537, 1
    %v9539 = vadd.f32 %v9537, %v9538
    %v9540 = vadd.f32 %v8878, %v8879
    %v9541 = vrot.slane %v9540, 4
    %v9542 = vadd.f32 %v9540, %v9541
    %v9543 = vrot.slane %v9542, 2
    %v9544 = vadd.f32 %v9542, %v9543
    %v9545 = vrot.slane %v9544, 1
    %v9546 = vadd.f32 %v9544, %v9545
    %v9547 = vadd.f32 %v8880, %v8881
    %v9548 = vrot.slane %v9547, 4
    %v9549 = vadd.f32 %v9547, %v9548
    %v9550 = vrot.slane %v9549, 2
    %v9551 = vadd.f32 %v9549, %v9550
    %v9552 = vrot.slane %v9551, 1
    %v9553 = vadd.f32 %v9551, %v9552
    %v9554 = vadd.f32 %v8882, %v8883
    %v9555 = vrot.slane %v9554, 4
    %v9556 = vadd.f32 %v9554, %v9555
    %v9557 = vrot.slane %v9556, 2
    %v9558 = vadd.f32 %v9556, %v9557
    %v9559 = vrot.slane %v9558, 1
    %v9560 = vadd.f32 %v9558, %v9559
    %v9561 = vadd.f32 %v8884, %v8885
    %v9562 = vrot.slane %v9561, 4
    %v9563 = vadd.f32 %v9561, %v9562
    %v9564 = vrot.slane %v9563, 2
    %v9565 = vadd.f32 %v9563, %v9564
    %v9566 = vrot.slane %v9565, 1
    %v9567 = vadd.f32 %v9565, %v9566
    %v9568 = vadd.f32 %v8886, %v8887
    %v9569 = vrot.slane %v9568, 4
    %v9570 = vadd.f32 %v9568, %v9569
    %v9571 = vrot.slane %v9570, 2
    %v9572 = vadd.f32 %v9570, %v9571
    %v9573 = vrot.slane %v9572, 1
    %v9574 = vadd.f32 %v9572, %v9573
    %v9575 = vadd.f32 %v8888, %v8889
    %v9576 = vrot.slane %v9575, 4
    %v9577 = vadd.f32 %v9575, %v9576
    %v9578 = vrot.slane %v9577, 2
    %v9579 = vadd.f32 %v9577, %v9578
    %v9580 = vrot.slane %v9579, 1
    %v9581 = vadd.f32 %v9579, %v9580
    %v9582 = vadd.f32 %v8890, %v8891
    %v9583 = vrot.slane %v9582, 4
    %v9584 = vadd.f32 %v9582, %v9583
    %v9585 = vrot.slane %v9584, 2
    %v9586 = vadd.f32 %v9584, %v9585
    %v9587 = vrot.slane %v9586, 1
    %v9588 = vadd.f32 %v9586, %v9587
    %v9589 = vadd.f32 %v8892, %v8893
    %v9590 = vrot.slane %v9589, 4
    %v9591 = vadd.f32 %v9589, %v9590
    %v9592 = vrot.slane %v9591, 2
    %v9593 = vadd.f32 %v9591, %v9592
    %v9594 = vrot.slane %v9593, 1
    %v9595 = vadd.f32 %v9593, %v9594
    %v9596 = vadd.f32 %v8894, %v8895
    %v9597 = vrot.slane %v9596, 4
    %v9598 = vadd.f32 %v9596, %v9597
    %v9599 = vrot.slane %v9598, 2
    %v9600 = vadd.f32 %v9598, %v9599
    %v9601 = vrot.slane %v9600, 1
    %v9602 = vadd.f32 %v9600, %v9601
    %v9603 = vadd.f32 %v8896, %v8897
    %v9604 = vrot.slane %v9603, 4
    %v9605 = vadd.f32 %v9603, %v9604
    %v9606 = vrot.slane %v9605, 2
    %v9607 = vadd.f32 %v9605, %v9606
    %v9608 = vrot.slane %v9607, 1
    %v9609 = vadd.f32 %v9607, %v9608
    %v9610 = vadd.f32 %v8898, %v8899
    %v9611 = vrot.slane %v9610, 4
    %v9612 = vadd.f32 %v9610, %v9611
    %v9613 = vrot.slane %v9612, 2
    %v9614 = vadd.f32 %v9612, %v9613
    %v9615 = vrot.slane %v9614, 1
    %v9616 = vadd.f32 %v9614, %v9615
    %v9617 = vadd.f32 %v8900, %v8901
    %v9618 = vrot.slane %v9617, 4
    %v9619 = vadd.f32 %v9617, %v9618
    %v9620 = vrot.slane %v9619, 2
    %v9621 = vadd.f32 %v9619, %v9620
    %v9622 = vrot.slane %v9621, 1
    %v9623 = vadd.f32 %v9621, %v9622
    %v9624 = vadd.f32 %v8902, %v8903
    %v9625 = vrot.slane %v9624, 4
    %v9626 = vadd.f32 %v9624, %v9625
    %v9627 = vrot.slane %v9626, 2
    %v9628 = vadd.f32 %v9626, %v9627
    %v9629 = vrot.slane %v9628, 1
    %v9630 = vadd.f32 %v9628, %v9629
    %v9631 = vadd.f32 %v8904, %v8905
    %v9632 = vrot.slane %v9631, 4
    %v9633 = vadd.f32 %v9631, %v9632
    %v9634 = vrot.slane %v9633, 2
    %v9635 = vadd.f32 %v9633, %v9634
    %v9636 = vrot.slane %v9635, 1
    %v9637 = vadd.f32 %v9635, %v9636
    %v9638 = vadd.f32 %v8906, %v8907
    %v9639 = vrot.slane %v9638, 4
    %v9640 = vadd.f32 %v9638, %v9639
    %v9641 = vrot.slane %v9640, 2
    %v9642 = vadd.f32 %v9640, %v9641
    %v9643 = vrot.slane %v9642, 1
    %v9644 = vadd.f32 %v9642, %v9643
    %v9645 = vadd.f32 %v8908, %v8909
    %v9646 = vrot.slane %v9645, 4
    %v9647 = vadd.f32 %v9645, %v9646
    %v9648 = vrot.slane %v9647, 2
    %v9649 = vadd.f32 %v9647, %v9648
    %v9650 = vrot.slane %v9649, 1
    %v9651 = vadd.f32 %v9649, %v9650
    %v9652 = vadd.f32 %v8910, %v8911
    %v9653 = vrot.slane %v9652, 4
    %v9654 = vadd.f32 %v9652, %v9653
    %v9655 = vrot.slane %v9654, 2
    %v9656 = vadd.f32 %v9654, %v9655
    %v9657 = vrot.slane %v9656, 1
    %v9658 = vadd.f32 %v9656, %v9657
    %v9659 = vadd.f32 %v8912, %v8913
    %v9660 = vrot.slane %v9659, 4
    %v9661 = vadd.f32 %v9659, %v9660
    %v9662 = vrot.slane %v9661, 2
    %v9663 = vadd.f32 %v9661, %v9662
    %v9664 = vrot.slane %v9663, 1
    %v9665 = vadd.f32 %v9663, %v9664
    %v9666 = vadd.f32 %v8914, %v8915
    %v9667 = vrot.slane %v9666, 4
    %v9668 = vadd.f32 %v9666, %v9667
    %v9669 = vrot.slane %v9668, 2
    %v9670 = vadd.f32 %v9668, %v9669
    %v9671 = vrot.slane %v9670, 1
    %v9672 = vadd.f32 %v9670, %v9671
    %v9673 = vadd.f32 %v8916, %v8917
    %v9674 = vrot.slane %v9673, 4
    %v9675 = vadd.f32 %v9673, %v9674
    %v9676 = vrot.slane %v9675, 2
    %v9677 = vadd.f32 %v9675, %v9676
    %v9678 = vrot.slane %v9677, 1
    %v9679 = vadd.f32 %v9677, %v9678
    %v9680 = vadd.f32 %v8918, %v8919
    %v9681 = vrot.slane %v9680, 4
    %v9682 = vadd.f32 %v9680, %v9681
    %v9683 = vrot.slane %v9682, 2
    %v9684 = vadd.f32 %v9682, %v9683
    %v9685 = vrot.slane %v9684, 1
    %v9686 = vadd.f32 %v9684, %v9685
    %v9687 = vadd.f32 %v8920, %v8921
    %v9688 = vrot.slane %v9687, 4
    %v9689 = vadd.f32 %v9687, %v9688
    %v9690 = vrot.slane %v9689, 2
    %v9691 = vadd.f32 %v9689, %v9690
    %v9692 = vrot.slane %v9691, 1
    %v9693 = vadd.f32 %v9691, %v9692
    %v9694 = vadd.f32 %v8922, %v8923
    %v9695 = vrot.slane %v9694, 4
    %v9696 = vadd.f32 %v9694, %v9695
    %v9697 = vrot.slane %v9696, 2
    %v9698 = vadd.f32 %v9696, %v9697
    %v9699 = vrot.slane %v9698, 1
    %v9700 = vadd.f32 %v9698, %v9699
    %v9701 = vadd.f32 %v8924, %v8925
    %v9702 = vrot.slane %v9701, 4
    %v9703 = vadd.f32 %v9701, %v9702
    %v9704 = vrot.slane %v9703, 2
    %v9705 = vadd.f32 %v9703, %v9704
    %v9706 = vrot.slane %v9705, 1
    %v9707 = vadd.f32 %v9705, %v9706
    %v9708 = vadd.f32 %v8926, %v8927
    %v9709 = vrot.slane %v9708, 4
    %v9710 = vadd.f32 %v9708, %v9709
    %v9711 = vrot.slane %v9710, 2
    %v9712 = vadd.f32 %v9710, %v9711
    %v9713 = vrot.slane %v9712, 1
    %v9714 = vadd.f32 %v9712, %v9713
    %v9715 = vadd.f32 %v8928, %v8929
    %v9716 = vrot.slane %v9715, 4
    %v9717 = vadd.f32 %v9715, %v9716
    %v9718 = vrot.slane %v9717, 2
    %v9719 = vadd.f32 %v9717, %v9718
    %v9720 = vrot.slane %v9719, 1
    %v9721 = vadd.f32 %v9719, %v9720
    %v9722 = vadd.f32 %v8930, %v8931
    %v9723 = vrot.slane %v9722, 4
    %v9724 = vadd.f32 %v9722, %v9723
    %v9725 = vrot.slane %v9724, 2
    %v9726 = vadd.f32 %v9724, %v9725
    %v9727 = vrot.slane %v9726, 1
    %v9728 = vadd.f32 %v9726, %v9727
    %v9729 = vadd.f32 %v8932, %v8933
    %v9730 = vrot.slane %v9729, 4
    %v9731 = vadd.f32 %v9729, %v9730
    %v9732 = vrot.slane %v9731, 2
    %v9733 = vadd.f32 %v9731, %v9732
    %v9734 = vrot.slane %v9733, 1
    %v9735 = vadd.f32 %v9733, %v9734
    %v9736 = vadd.f32 %v8934, %v8935
    %v9737 = vrot.slane %v9736, 4
    %v9738 = vadd.f32 %v9736, %v9737
    %v9739 = vrot.slane %v9738, 2
    %v9740 = vadd.f32 %v9738, %v9739
    %v9741 = vrot.slane %v9740, 1
    %v9742 = vadd.f32 %v9740, %v9741
    %v9743 = vadd.f32 %v8936, %v8937
    %v9744 = vrot.slane %v9743, 4
    %v9745 = vadd.f32 %v9743, %v9744
    %v9746 = vrot.slane %v9745, 2
    %v9747 = vadd.f32 %v9745, %v9746
    %v9748 = vrot.slane %v9747, 1
    %v9749 = vadd.f32 %v9747, %v9748
    %v9750 = vadd.f32 %v8938, %v8939
    %v9751 = vrot.slane %v9750, 4
    %v9752 = vadd.f32 %v9750, %v9751
    %v9753 = vrot.slane %v9752, 2
    %v9754 = vadd.f32 %v9752, %v9753
    %v9755 = vrot.slane %v9754, 1
    %v9756 = vadd.f32 %v9754, %v9755
    %v9757 = vadd.f32 %v8940, %v8941
    %v9758 = vrot.slane %v9757, 4
    %v9759 = vadd.f32 %v9757, %v9758
    %v9760 = vrot.slane %v9759, 2
    %v9761 = vadd.f32 %v9759, %v9760
    %v9762 = vrot.slane %v9761, 1
    %v9763 = vadd.f32 %v9761, %v9762
    %v9764 = vadd.f32 %v8942, %v8943
    %v9765 = vrot.slane %v9764, 4
    %v9766 = vadd.f32 %v9764, %v9765
    %v9767 = vrot.slane %v9766, 2
    %v9768 = vadd.f32 %v9766, %v9767
    %v9769 = vrot.slane %v9768, 1
    %v9770 = vadd.f32 %v9768, %v9769
    %v9771 = vadd.f32 %v8944, %v8945
    %v9772 = vrot.slane %v9771, 4
    %v9773 = vadd.f32 %v9771, %v9772
    %v9774 = vrot.slane %v9773, 2
    %v9775 = vadd.f32 %v9773, %v9774
    %v9776 = vrot.slane %v9775, 1
    %v9777 = vadd.f32 %v9775, %v9776
    %v9778 = vadd.f32 %v8946, %v8947
    %v9779 = vrot.slane %v9778, 4
    %v9780 = vadd.f32 %v9778, %v9779
    %v9781 = vrot.slane %v9780, 2
    %v9782 = vadd.f32 %v9780, %v9781
    %v9783 = vrot.slane %v9782, 1
    %v9784 = vadd.f32 %v9782, %v9783
    %v9785 = vadd.f32 %v8948, %v8949
    %v9786 = vrot.slane %v9785, 4
    %v9787 = vadd.f32 %v9785, %v9786
    %v9788 = vrot.slane %v9787, 2
    %v9789 = vadd.f32 %v9787, %v9788
    %v9790 = vrot.slane %v9789, 1
    %v9791 = vadd.f32 %v9789, %v9790
    %v9792 = vadd.f32 %v8950, %v8951
    %v9793 = vrot.slane %v9792, 4
    %v9794 = vadd.f32 %v9792, %v9793
    %v9795 = vrot.slane %v9794, 2
    %v9796 = vadd.f32 %v9794, %v9795
    %v9797 = vrot.slane %v9796, 1
    %v9798 = vadd.f32 %v9796, %v9797
    %v9799 = vadd.f32 %v8952, %v8953
    %v9800 = vrot.slane %v9799, 4
    %v9801 = vadd.f32 %v9799, %v9800
    %v9802 = vrot.slane %v9801, 2
    %v9803 = vadd.f32 %v9801, %v9802
    %v9804 = vrot.slane %v9803, 1
    %v9805 = vadd.f32 %v9803, %v9804
    %v9806 = vadd.f32 %v8954, %v8955
    %v9807 = vrot.slane %v9806, 4
    %v9808 = vadd.f32 %v9806, %v9807
    %v9809 = vrot.slane %v9808, 2
    %v9810 = vadd.f32 %v9808, %v9809
    %v9811 = vrot.slane %v9810, 1
    %v9812 = vadd.f32 %v9810, %v9811
    %v9813 = vadd.f32 %v8956, %v8957
    %v9814 = vrot.slane %v9813, 4
    %v9815 = vadd.f32 %v9813, %v9814
    %v9816 = vrot.slane %v9815, 2
    %v9817 = vadd.f32 %v9815, %v9816
    %v9818 = vrot.slane %v9817, 1
    %v9819 = vadd.f32 %v9817, %v9818
    %v9820 = vadd.f32 %v8958, %v8959
    %v9821 = vrot.slane %v9820, 4
    %v9822 = vadd.f32 %v9820, %v9821
    %v9823 = vrot.slane %v9822, 2
    %v9824 = vadd.f32 %v9822, %v9823
    %v9825 = vrot.slane %v9824, 1
    %v9826 = vadd.f32 %v9824, %v9825
    %v9827 = vadd.f32 %v8960, %v8961
    %v9828 = vrot.slane %v9827, 4
    %v9829 = vadd.f32 %v9827, %v9828
    %v9830 = vrot.slane %v9829, 2
    %v9831 = vadd.f32 %v9829, %v9830
    %v9832 = vrot.slane %v9831, 1
    %v9833 = vadd.f32 %v9831, %v9832
    %v9834 = vadd.f32 %v8962, %v8963
    %v9835 = vrot.slane %v9834, 4
    %v9836 = vadd.f32 %v9834, %v9835
    %v9837 = vrot.slane %v9836, 2
    %v9838 = vadd.f32 %v9836, %v9837
    %v9839 = vrot.slane %v9838, 1
    %v9840 = vadd.f32 %v9838, %v9839
    %v9841 = vadd.f32 %v8964, %v8965
    %v9842 = vrot.slane %v9841, 4
    %v9843 = vadd.f32 %v9841, %v9842
    %v9844 = vrot.slane %v9843, 2
    %v9845 = vadd.f32 %v9843, %v9844
    %v9846 = vrot.slane %v9845, 1
    %v9847 = vadd.f32 %v9845, %v9846
    %v9848 = vadd.f32 %v8966, %v8967
    %v9849 = vrot.slane %v9848, 4
    %v9850 = vadd.f32 %v9848, %v9849
    %v9851 = vrot.slane %v9850, 2
    %v9852 = vadd.f32 %v9850, %v9851
    %v9853 = vrot.slane %v9852, 1
    %v9854 = vadd.f32 %v9852, %v9853
    %v9855 = vadd.f32 %v8968, %v8969
    %v9856 = vrot.slane %v9855, 4
    %v9857 = vadd.f32 %v9855, %v9856
    %v9858 = vrot.slane %v9857, 2
    %v9859 = vadd.f32 %v9857, %v9858
    %v9860 = vrot.slane %v9859, 1
    %v9861 = vadd.f32 %v9859, %v9860
    %v9862 = vadd.f32 %v8970, %v8971
    %v9863 = vrot.slane %v9862, 4
    %v9864 = vadd.f32 %v9862, %v9863
    %v9865 = vrot.slane %v9864, 2
    %v9866 = vadd.f32 %v9864, %v9865
    %v9867 = vrot.slane %v9866, 1
    %v9868 = vadd.f32 %v9866, %v9867
    %v9869 = vadd.f32 %v8972, %v8973
    %v9870 = vrot.slane %v9869, 4
    %v9871 = vadd.f32 %v9869, %v9870
    %v9872 = vrot.slane %v9871, 2
    %v9873 = vadd.f32 %v9871, %v9872
    %v9874 = vrot.slane %v9873, 1
    %v9875 = vadd.f32 %v9873, %v9874
    %v9876 = vadd.f32 %v8974, %v8975
    %v9877 = vrot.slane %v9876, 4
    %v9878 = vadd.f32 %v9876, %v9877
    %v9879 = vrot.slane %v9878, 2
    %v9880 = vadd.f32 %v9878, %v9879
    %v9881 = vrot.slane %v9880, 1
    %v9882 = vadd.f32 %v9880, %v9881
    %v9883 = vadd.f32 %v8976, %v8977
    %v9884 = vrot.slane %v9883, 4
    %v9885 = vadd.f32 %v9883, %v9884
    %v9886 = vrot.slane %v9885, 2
    %v9887 = vadd.f32 %v9885, %v9886
    %v9888 = vrot.slane %v9887, 1
    %v9889 = vadd.f32 %v9887, %v9888
    %v9890 = vadd.f32 %v8978, %v8979
    %v9891 = vrot.slane %v9890, 4
    %v9892 = vadd.f32 %v9890, %v9891
    %v9893 = vrot.slane %v9892, 2
    %v9894 = vadd.f32 %v9892, %v9893
    %v9895 = vrot.slane %v9894, 1
    %v9896 = vadd.f32 %v9894, %v9895
    %v9897 = vadd.f32 %v8980, %v8981
    %v9898 = vrot.slane %v9897, 4
    %v9899 = vadd.f32 %v9897, %v9898
    %v9900 = vrot.slane %v9899, 2
    %v9901 = vadd.f32 %v9899, %v9900
    %v9902 = vrot.slane %v9901, 1
    %v9903 = vadd.f32 %v9901, %v9902
    %v9904 = vadd.f32 %v8982, %v8983
    %v9905 = vrot.slane %v9904, 4
    %v9906 = vadd.f32 %v9904, %v9905
    %v9907 = vrot.slane %v9906, 2
    %v9908 = vadd.f32 %v9906, %v9907
    %v9909 = vrot.slane %v9908, 1
    %v9910 = vadd.f32 %v9908, %v9909
    %v9911 = vadd.f32 %v8984, %v8985
    %v9912 = vrot.slane %v9911, 4
    %v9913 = vadd.f32 %v9911, %v9912
    %v9914 = vrot.slane %v9913, 2
    %v9915 = vadd.f32 %v9913, %v9914
    %v9916 = vrot.slane %v9915, 1
    %v9917 = vadd.f32 %v9915, %v9916
    %v9918 = vadd.f32 %v8986, %v8987
    %v9919 = vrot.slane %v9918, 4
    %v9920 = vadd.f32 %v9918, %v9919
    %v9921 = vrot.slane %v9920, 2
    %v9922 = vadd.f32 %v9920, %v9921
    %v9923 = vrot.slane %v9922, 1
    %v9924 = vadd.f32 %v9922, %v9923
    %v9925 = vadd.f32 %v8988, %v8989
    %v9926 = vrot.slane %v9925, 4
    %v9927 = vadd.f32 %v9925, %v9926
    %v9928 = vrot.slane %v9927, 2
    %v9929 = vadd.f32 %v9927, %v9928
    %v9930 = vrot.slane %v9929, 1
    %v9931 = vadd.f32 %v9929, %v9930
    %v9932 = vadd.f32 %v8990, %v8991
    %v9933 = vrot.slane %v9932, 4
    %v9934 = vadd.f32 %v9932, %v9933
    %v9935 = vrot.slane %v9934, 2
    %v9936 = vadd.f32 %v9934, %v9935
    %v9937 = vrot.slane %v9936, 1
    %v9938 = vadd.f32 %v9936, %v9937
    %v9939 = vadd.f32 %v8992, %v8993
    %v9940 = vrot.slane %v9939, 4
    %v9941 = vadd.f32 %v9939, %v9940
    %v9942 = vrot.slane %v9941, 2
    %v9943 = vadd.f32 %v9941, %v9942
    %v9944 = vrot.slane %v9943, 1
    %v9945 = vadd.f32 %v9943, %v9944
    %v9946 = vadd.f32 %v8994, %v8995
    %v9947 = vrot.slane %v9946, 4
    %v9948 = vadd.f32 %v9946, %v9947
    %v9949 = vrot.slane %v9948, 2
    %v9950 = vadd.f32 %v9948, %v9949
    %v9951 = vrot.slane %v9950, 1
    %v9952 = vadd.f32 %v9950, %v9951
    %v9953 = vadd.f32 %v8996, %v8997
    %v9954 = vrot.slane %v9953, 4
    %v9955 = vadd.f32 %v9953, %v9954
    %v9956 = vrot.slane %v9955, 2
    %v9957 = vadd.f32 %v9955, %v9956
    %v9958 = vrot.slane %v9957, 1
    %v9959 = vadd.f32 %v9957, %v9958
    %v9960 = vadd.f32 %v8998, %v8999
    %v9961 = vrot.slane %v9960, 4
    %v9962 = vadd.f32 %v9960, %v9961
    %v9963 = vrot.slane %v9962, 2
    %v9964 = vadd.f32 %v9962, %v9963
    %v9965 = vrot.slane %v9964, 1
    %v9966 = vadd.f32 %v9964, %v9965
    %v9967 = vadd.f32 %v9000, %v9001
    %v9968 = vrot.slane %v9967, 4
    %v9969 = vadd.f32 %v9967, %v9968
    %v9970 = vrot.slane %v9969, 2
    %v9971 = vadd.f32 %v9969, %v9970
    %v9972 = vrot.slane %v9971, 1
    %v9973 = vadd.f32 %v9971, %v9972
    %v9974 = vadd.f32 %v9002, %v9003
    %v9975 = vrot.slane %v9974, 4
    %v9976 = vadd.f32 %v9974, %v9975
    %v9977 = vrot.slane %v9976, 2
    %v9978 = vadd.f32 %v9976, %v9977
    %v9979 = vrot.slane %v9978, 1
    %v9980 = vadd.f32 %v9978, %v9979
    %v9981 = vadd.f32 %v9004, %v9005
    %v9982 = vrot.slane %v9981, 4
    %v9983 = vadd.f32 %v9981, %v9982
    %v9984 = vrot.slane %v9983, 2
    %v9985 = vadd.f32 %v9983, %v9984
    %v9986 = vrot.slane %v9985, 1
    %v9987 = vadd.f32 %v9985, %v9986
    %v9988 = vadd.f32 %v9006, %v9007
    %v9989 = vrot.slane %v9988, 4
    %v9990 = vadd.f32 %v9988, %v9989
    %v9991 = vrot.slane %v9990, 2
    %v9992 = vadd.f32 %v9990, %v9991
    %v9993 = vrot.slane %v9992, 1
    %v9994 = vadd.f32 %v9992, %v9993
    %v9995 = vadd.f32 %v9008, %v9009
    %v9996 = vrot.slane %v9995, 4
    %v9997 = vadd.f32 %v9995, %v9996
    %v9998 = vrot.slane %v9997, 2
    %v9999 = vadd.f32 %v9997, %v9998
    %v10000 = vrot.slane %v9999, 1
    %v10001 = vadd.f32 %v9999, %v10000
    %v10002 = vadd.f32 %v9010, %v9011
    %v10003 = vrot.slane %v10002, 4
    %v10004 = vadd.f32 %v10002, %v10003
    %v10005 = vrot.slane %v10004, 2
    %v10006 = vadd.f32 %v10004, %v10005
    %v10007 = vrot.slane %v10006, 1
    %v10008 = vadd.f32 %v10006, %v10007
    %v10009 = vadd.f32 %v9012, %v9013
    %v10010 = vrot.slane %v10009, 4
    %v10011 = vadd.f32 %v10009, %v10010
    %v10012 = vrot.slane %v10011, 2
    %v10013 = vadd.f32 %v10011, %v10012
    %v10014 = vrot.slane %v10013, 1
    %v10015 = vadd.f32 %v10013, %v10014
    %v10016 = vadd.f32 %v9014, %v9015
    %v10017 = vrot.slane %v10016, 4
    %v10018 = vadd.f32 %v10016, %v10017
    %v10019 = vrot.slane %v10018, 2
    %v10020 = vadd.f32 %v10018, %v10019
    %v10021 = vrot.slane %v10020, 1
    %v10022 = vadd.f32 %v10020, %v10021
    %v10023 = vadd.f32 %v9016, %v9017
    %v10024 = vrot.slane %v10023, 4
    %v10025 = vadd.f32 %v10023, %v10024
    %v10026 = vrot.slane %v10025, 2
    %v10027 = vadd.f32 %v10025, %v10026
    %v10028 = vrot.slane %v10027, 1
    %v10029 = vadd.f32 %v10027, %v10028
    %v10030 = vadd.f32 %v9018, %v9019
    %v10031 = vrot.slane %v10030, 4
    %v10032 = vadd.f32 %v10030, %v10031
    %v10033 = vrot.slane %v10032, 2
    %v10034 = vadd.f32 %v10032, %v10033
    %v10035 = vrot.slane %v10034, 1
    %v10036 = vadd.f32 %v10034, %v10035
    %v10037 = vadd.f32 %v9020, %v9021
    %v10038 = vrot.slane %v10037, 4
    %v10039 = vadd.f32 %v10037, %v10038
    %v10040 = vrot.slane %v10039, 2
    %v10041 = vadd.f32 %v10039, %v10040
    %v10042 = vrot.slane %v10041, 1
    %v10043 = vadd.f32 %v10041, %v10042
    %v10044 = vadd.f32 %v9022, %v9023
    %v10045 = vrot.slane %v10044, 4
    %v10046 = vadd.f32 %v10044, %v10045
    %v10047 = vrot.slane %v10046, 2
    %v10048 = vadd.f32 %v10046, %v10047
    %v10049 = vrot.slane %v10048, 1
    %v10050 = vadd.f32 %v10048, %v10049
    %v10051 = vadd.f32 %v9024, %v9025
    %v10052 = vrot.slane %v10051, 4
    %v10053 = vadd.f32 %v10051, %v10052
    %v10054 = vrot.slane %v10053, 2
    %v10055 = vadd.f32 %v10053, %v10054
    %v10056 = vrot.slane %v10055, 1
    %v10057 = vadd.f32 %v10055, %v10056
    %v10058 = vadd.f32 %v9026, %v9027
    %v10059 = vrot.slane %v10058, 4
    %v10060 = vadd.f32 %v10058, %v10059
    %v10061 = vrot.slane %v10060, 2
    %v10062 = vadd.f32 %v10060, %v10061
    %v10063 = vrot.slane %v10062, 1
    %v10064 = vadd.f32 %v10062, %v10063
    %v10065 = vadd.f32 %v9028, %v9029
    %v10066 = vrot.slane %v10065, 4
    %v10067 = vadd.f32 %v10065, %v10066
    %v10068 = vrot.slane %v10067, 2
    %v10069 = vadd.f32 %v10067, %v10068
    %v10070 = vrot.slane %v10069, 1
    %v10071 = vadd.f32 %v10069, %v10070
    %v10072 = vadd.f32 %v9030, %v9031
    %v10073 = vrot.slane %v10072, 4
    %v10074 = vadd.f32 %v10072, %v10073
    %v10075 = vrot.slane %v10074, 2
    %v10076 = vadd.f32 %v10074, %v10075
    %v10077 = vrot.slane %v10076, 1
    %v10078 = vadd.f32 %v10076, %v10077
    %v10079 = vadd.f32 %v9032, %v9033
    %v10080 = vrot.slane %v10079, 4
    %v10081 = vadd.f32 %v10079, %v10080
    %v10082 = vrot.slane %v10081, 2
    %v10083 = vadd.f32 %v10081, %v10082
    %v10084 = vrot.slane %v10083, 1
    %v10085 = vadd.f32 %v10083, %v10084
    %v10086 = vadd.f32 %v9034, %v9035
    %v10087 = vrot.slane %v10086, 4
    %v10088 = vadd.f32 %v10086, %v10087
    %v10089 = vrot.slane %v10088, 2
    %v10090 = vadd.f32 %v10088, %v10089
    %v10091 = vrot.slane %v10090, 1
    %v10092 = vadd.f32 %v10090, %v10091
    %v10093 = vadd.f32 %v9036, %v9037
    %v10094 = vrot.slane %v10093, 4
    %v10095 = vadd.f32 %v10093, %v10094
    %v10096 = vrot.slane %v10095, 2
    %v10097 = vadd.f32 %v10095, %v10096
    %v10098 = vrot.slane %v10097, 1
    %v10099 = vadd.f32 %v10097, %v10098
    %v10100 = vadd.f32 %v9038, %v9039
    %v10101 = vrot.slane %v10100, 4
    %v10102 = vadd.f32 %v10100, %v10101
    %v10103 = vrot.slane %v10102, 2
    %v10104 = vadd.f32 %v10102, %v10103
    %v10105 = vrot.slane %v10104, 1
    %v10106 = vadd.f32 %v10104, %v10105
    %v10107 = vadd.f32 %v9040, %v9041
    %v10108 = vrot.slane %v10107, 4
    %v10109 = vadd.f32 %v10107, %v10108
    %v10110 = vrot.slane %v10109, 2
    %v10111 = vadd.f32 %v10109, %v10110
    %v10112 = vrot.slane %v10111, 1
    %v10113 = vadd.f32 %v10111, %v10112
    %v10114 = vadd.f32 %v9042, %v9043
    %v10115 = vrot.slane %v10114, 4
    %v10116 = vadd.f32 %v10114, %v10115
    %v10117 = vrot.slane %v10116, 2
    %v10118 = vadd.f32 %v10116, %v10117
    %v10119 = vrot.slane %v10118, 1
    %v10120 = vadd.f32 %v10118, %v10119
    %v10121 = vadd.f32 %v9044, %v9045
    %v10122 = vrot.slane %v10121, 4
    %v10123 = vadd.f32 %v10121, %v10122
    %v10124 = vrot.slane %v10123, 2
    %v10125 = vadd.f32 %v10123, %v10124
    %v10126 = vrot.slane %v10125, 1
    %v10127 = vadd.f32 %v10125, %v10126
    %v10128 = vadd.f32 %v9046, %v9047
    %v10129 = vrot.slane %v10128, 4
    %v10130 = vadd.f32 %v10128, %v10129
    %v10131 = vrot.slane %v10130, 2
    %v10132 = vadd.f32 %v10130, %v10131
    %v10133 = vrot.slane %v10132, 1
    %v10134 = vadd.f32 %v10132, %v10133
    %v10135 = vadd.f32 %v9048, %v9049
    %v10136 = vrot.slane %v10135, 4
    %v10137 = vadd.f32 %v10135, %v10136
    %v10138 = vrot.slane %v10137, 2
    %v10139 = vadd.f32 %v10137, %v10138
    %v10140 = vrot.slane %v10139, 1
    %v10141 = vadd.f32 %v10139, %v10140
    %v10142 = vadd.f32 %v9050, %v9051
    %v10143 = vrot.slane %v10142, 4
    %v10144 = vadd.f32 %v10142, %v10143
    %v10145 = vrot.slane %v10144, 2
    %v10146 = vadd.f32 %v10144, %v10145
    %v10147 = vrot.slane %v10146, 1
    %v10148 = vadd.f32 %v10146, %v10147
    %v10149 = vadd.f32 %v9052, %v9053
    %v10150 = vrot.slane %v10149, 4
    %v10151 = vadd.f32 %v10149, %v10150
    %v10152 = vrot.slane %v10151, 2
    %v10153 = vadd.f32 %v10151, %v10152
    %v10154 = vrot.slane %v10153, 1
    %v10155 = vadd.f32 %v10153, %v10154
    %v10156 = vadd.f32 %v9054, %v9055
    %v10157 = vrot.slane %v10156, 4
    %v10158 = vadd.f32 %v10156, %v10157
    %v10159 = vrot.slane %v10158, 2
    %v10160 = vadd.f32 %v10158, %v10159
    %v10161 = vrot.slane %v10160, 1
    %v10162 = vadd.f32 %v10160, %v10161
    %v10163 = vadd.f32 %v9056, %v9057
    %v10164 = vrot.slane %v10163, 4
    %v10165 = vadd.f32 %v10163, %v10164
    %v10166 = vrot.slane %v10165, 2
    %v10167 = vadd.f32 %v10165, %v10166
    %v10168 = vrot.slane %v10167, 1
    %v10169 = vadd.f32 %v10167, %v10168
    %v10170 = vadd.f32 %v9058, %v9059
    %v10171 = vrot.slane %v10170, 4
    %v10172 = vadd.f32 %v10170, %v10171
    %v10173 = vrot.slane %v10172, 2
    %v10174 = vadd.f32 %v10172, %v10173
    %v10175 = vrot.slane %v10174, 1
    %v10176 = vadd.f32 %v10174, %v10175
    %v10177 = vadd.f32 %v9060, %v9061
    %v10178 = vrot.slane %v10177, 4
    %v10179 = vadd.f32 %v10177, %v10178
    %v10180 = vrot.slane %v10179, 2
    %v10181 = vadd.f32 %v10179, %v10180
    %v10182 = vrot.slane %v10181, 1
    %v10183 = vadd.f32 %v10181, %v10182
    %v10184 = vadd.f32 %v9062, %v9063
    %v10185 = vrot.slane %v10184, 4
    %v10186 = vadd.f32 %v10184, %v10185
    %v10187 = vrot.slane %v10186, 2
    %v10188 = vadd.f32 %v10186, %v10187
    %v10189 = vrot.slane %v10188, 1
    %v10190 = vadd.f32 %v10188, %v10189
    %v10191 = vadd.f32 %v9064, %v9065
    %v10192 = vrot.slane %v10191, 4
    %v10193 = vadd.f32 %v10191, %v10192
    %v10194 = vrot.slane %v10193, 2
    %v10195 = vadd.f32 %v10193, %v10194
    %v10196 = vrot.slane %v10195, 1
    %v10197 = vadd.f32 %v10195, %v10196
    %v10198 = vadd.f32 %v9066, %v9067
    %v10199 = vrot.slane %v10198, 4
    %v10200 = vadd.f32 %v10198, %v10199
    %v10201 = vrot.slane %v10200, 2
    %v10202 = vadd.f32 %v10200, %v10201
    %v10203 = vrot.slane %v10202, 1
    %v10204 = vadd.f32 %v10202, %v10203
    %v10205 = vadd.f32 %v9068, %v9069
    %v10206 = vrot.slane %v10205, 4
    %v10207 = vadd.f32 %v10205, %v10206
    %v10208 = vrot.slane %v10207, 2
    %v10209 = vadd.f32 %v10207, %v10208
    %v10210 = vrot.slane %v10209, 1
    %v10211 = vadd.f32 %v10209, %v10210
    %v10212 = vadd.f32 %v9070, %v9071
    %v10213 = vrot.slane %v10212, 4
    %v10214 = vadd.f32 %v10212, %v10213
    %v10215 = vrot.slane %v10214, 2
    %v10216 = vadd.f32 %v10214, %v10215
    %v10217 = vrot.slane %v10216, 1
    %v10218 = vadd.f32 %v10216, %v10217
    %v10219 = vadd.f32 %v9072, %v9073
    %v10220 = vrot.slane %v10219, 4
    %v10221 = vadd.f32 %v10219, %v10220
    %v10222 = vrot.slane %v10221, 2
    %v10223 = vadd.f32 %v10221, %v10222
    %v10224 = vrot.slane %v10223, 1
    %v10225 = vadd.f32 %v10223, %v10224
    %v10226 = vadd.f32 %v9074, %v9075
    %v10227 = vrot.slane %v10226, 4
    %v10228 = vadd.f32 %v10226, %v10227
    %v10229 = vrot.slane %v10228, 2
    %v10230 = vadd.f32 %v10228, %v10229
    %v10231 = vrot.slane %v10230, 1
    %v10232 = vadd.f32 %v10230, %v10231
    %v10233 = vadd.f32 %v9076, %v9077
    %v10234 = vrot.slane %v10233, 4
    %v10235 = vadd.f32 %v10233, %v10234
    %v10236 = vrot.slane %v10235, 2
    %v10237 = vadd.f32 %v10235, %v10236
    %v10238 = vrot.slane %v10237, 1
    %v10239 = vadd.f32 %v10237, %v10238
    %v10240 = vadd.f32 %v9078, %v9079
    %v10241 = vrot.slane %v10240, 4
    %v10242 = vadd.f32 %v10240, %v10241
    %v10243 = vrot.slane %v10242, 2
    %v10244 = vadd.f32 %v10242, %v10243
    %v10245 = vrot.slane %v10244, 1
    %v10246 = vadd.f32 %v10244, %v10245
    %v10247 = vadd.f32 %v9080, %v9081
    %v10248 = vrot.slane %v10247, 4
    %v10249 = vadd.f32 %v10247, %v10248
    %v10250 = vrot.slane %v10249, 2
    %v10251 = vadd.f32 %v10249, %v10250
    %v10252 = vrot.slane %v10251, 1
    %v10253 = vadd.f32 %v10251, %v10252
    %v10254 = vadd.f32 %v9082, %v9083
    %v10255 = vrot.slane %v10254, 4
    %v10256 = vadd.f32 %v10254, %v10255
    %v10257 = vrot.slane %v10256, 2
    %v10258 = vadd.f32 %v10256, %v10257
    %v10259 = vrot.slane %v10258, 1
    %v10260 = vadd.f32 %v10258, %v10259
    %v10261 = vadd.f32 %v9084, %v9085
    %v10262 = vrot.slane %v10261, 4
    %v10263 = vadd.f32 %v10261, %v10262
    %v10264 = vrot.slane %v10263, 2
    %v10265 = vadd.f32 %v10263, %v10264
    %v10266 = vrot.slane %v10265, 1
    %v10267 = vadd.f32 %v10265, %v10266
    %v10268 = vadd.f32 %v9086, %v9087
    %v10269 = vrot.slane %v10268, 4
    %v10270 = vadd.f32 %v10268, %v10269
    %v10271 = vrot.slane %v10270, 2
    %v10272 = vadd.f32 %v10270, %v10271
    %v10273 = vrot.slane %v10272, 1
    %v10274 = vadd.f32 %v10272, %v10273
    %v10275 = vadd.f32 %v9088, %v9089
    %v10276 = vrot.slane %v10275, 4
    %v10277 = vadd.f32 %v10275, %v10276
    %v10278 = vrot.slane %v10277, 2
    %v10279 = vadd.f32 %v10277, %v10278
    %v10280 = vrot.slane %v10279, 1
    %v10281 = vadd.f32 %v10279, %v10280
    %v10282 = vadd.f32 %v9090, %v9091
    %v10283 = vrot.slane %v10282, 4
    %v10284 = vadd.f32 %v10282, %v10283
    %v10285 = vrot.slane %v10284, 2
    %v10286 = vadd.f32 %v10284, %v10285
    %v10287 = vrot.slane %v10286, 1
    %v10288 = vadd.f32 %v10286, %v10287
    %v10289 = vadd.f32 %v9092, %v9093
    %v10290 = vrot.slane %v10289, 4
    %v10291 = vadd.f32 %v10289, %v10290
    %v10292 = vrot.slane %v10291, 2
    %v10293 = vadd.f32 %v10291, %v10292
    %v10294 = vrot.slane %v10293, 1
    %v10295 = vadd.f32 %v10293, %v10294
    %v10296 = vadd.f32 %v9094, %v9095
    %v10297 = vrot.slane %v10296, 4
    %v10298 = vadd.f32 %v10296, %v10297
    %v10299 = vrot.slane %v10298, 2
    %v10300 = vadd.f32 %v10298, %v10299
    %v10301 = vrot.slane %v10300, 1
    %v10302 = vadd.f32 %v10300, %v10301
    %v10303 = vadd.f32 %v9096, %v9097
    %v10304 = vrot.slane %v10303, 4
    %v10305 = vadd.f32 %v10303, %v10304
    %v10306 = vrot.slane %v10305, 2
    %v10307 = vadd.f32 %v10305, %v10306
    %v10308 = vrot.slane %v10307, 1
    %v10309 = vadd.f32 %v10307, %v10308
    %v10310 = vadd.f32 %v9098, %v9099
    %v10311 = vrot.slane %v10310, 4
    %v10312 = vadd.f32 %v10310, %v10311
    %v10313 = vrot.slane %v10312, 2
    %v10314 = vadd.f32 %v10312, %v10313
    %v10315 = vrot.slane %v10314, 1
    %v10316 = vadd.f32 %v10314, %v10315
    %v10317 = vadd.f32 %v9100, %v9101
    %v10318 = vrot.slane %v10317, 4
    %v10319 = vadd.f32 %v10317, %v10318
    %v10320 = vrot.slane %v10319, 2
    %v10321 = vadd.f32 %v10319, %v10320
    %v10322 = vrot.slane %v10321, 1
    %v10323 = vadd.f32 %v10321, %v10322
    %v10324 = vadd.f32 %v9102, %v9103
    %v10325 = vrot.slane %v10324, 4
    %v10326 = vadd.f32 %v10324, %v10325
    %v10327 = vrot.slane %v10326, 2
    %v10328 = vadd.f32 %v10326, %v10327
    %v10329 = vrot.slane %v10328, 1
    %v10330 = vadd.f32 %v10328, %v10329
    %v10331 = vadd.f32 %v9104, %v9105
    %v10332 = vrot.slane %v10331, 4
    %v10333 = vadd.f32 %v10331, %v10332
    %v10334 = vrot.slane %v10333, 2
    %v10335 = vadd.f32 %v10333, %v10334
    %v10336 = vrot.slane %v10335, 1
    %v10337 = vadd.f32 %v10335, %v10336
    %v10338 = vadd.f32 %v9106, %v9107
    %v10339 = vrot.slane %v10338, 4
    %v10340 = vadd.f32 %v10338, %v10339
    %v10341 = vrot.slane %v10340, 2
    %v10342 = vadd.f32 %v10340, %v10341
    %v10343 = vrot.slane %v10342, 1
    %v10344 = vadd.f32 %v10342, %v10343
    %v10345 = vadd.f32 %v9108, %v9109
    %v10346 = vrot.slane %v10345, 4
    %v10347 = vadd.f32 %v10345, %v10346
    %v10348 = vrot.slane %v10347, 2
    %v10349 = vadd.f32 %v10347, %v10348
    %v10350 = vrot.slane %v10349, 1
    %v10351 = vadd.f32 %v10349, %v10350
    %v10352 = vadd.f32 %v9110, %v9111
    %v10353 = vrot.slane %v10352, 4
    %v10354 = vadd.f32 %v10352, %v10353
    %v10355 = vrot.slane %v10354, 2
    %v10356 = vadd.f32 %v10354, %v10355
    %v10357 = vrot.slane %v10356, 1
    %v10358 = vadd.f32 %v10356, %v10357
    %v10359 = vadd.f32 %v9112, %v9113
    %v10360 = vrot.slane %v10359, 4
    %v10361 = vadd.f32 %v10359, %v10360
    %v10362 = vrot.slane %v10361, 2
    %v10363 = vadd.f32 %v10361, %v10362
    %v10364 = vrot.slane %v10363, 1
    %v10365 = vadd.f32 %v10363, %v10364
    %v10366 = vadd.f32 %v9114, %v9115
    %v10367 = vrot.slane %v10366, 4
    %v10368 = vadd.f32 %v10366, %v10367
    %v10369 = vrot.slane %v10368, 2
    %v10370 = vadd.f32 %v10368, %v10369
    %v10371 = vrot.slane %v10370, 1
    %v10372 = vadd.f32 %v10370, %v10371
    %v10373 = vadd.f32 %v9116, %v9117
    %v10374 = vrot.slane %v10373, 4
    %v10375 = vadd.f32 %v10373, %v10374
    %v10376 = vrot.slane %v10375, 2
    %v10377 = vadd.f32 %v10375, %v10376
    %v10378 = vrot.slane %v10377, 1
    %v10379 = vadd.f32 %v10377, %v10378
    %v10380 = vadd.f32 %v9118, %v9119
    %v10381 = vrot.slane %v10380, 4
    %v10382 = vadd.f32 %v10380, %v10381
    %v10383 = vrot.slane %v10382, 2
    %v10384 = vadd.f32 %v10382, %v10383
    %v10385 = vrot.slane %v10384, 1
    %v10386 = vadd.f32 %v10384, %v10385
    %v10387 = vadd.f32 %v9120, %v9121
    %v10388 = vrot.slane %v10387, 4
    %v10389 = vadd.f32 %v10387, %v10388
    %v10390 = vrot.slane %v10389, 2
    %v10391 = vadd.f32 %v10389, %v10390
    %v10392 = vrot.slane %v10391, 1
    %v10393 = vadd.f32 %v10391, %v10392
    %v10394 = vadd.f32 %v9122, %v9123
    %v10395 = vrot.slane %v10394, 4
    %v10396 = vadd.f32 %v10394, %v10395
    %v10397 = vrot.slane %v10396, 2
    %v10398 = vadd.f32 %v10396, %v10397
    %v10399 = vrot.slane %v10398, 1
    %v10400 = vadd.f32 %v10398, %v10399
    %v10401 = vadd.f32 %v9124, %v9125
    %v10402 = vrot.slane %v10401, 4
    %v10403 = vadd.f32 %v10401, %v10402
    %v10404 = vrot.slane %v10403, 2
    %v10405 = vadd.f32 %v10403, %v10404
    %v10406 = vrot.slane %v10405, 1
    %v10407 = vadd.f32 %v10405, %v10406
    %v10408 = vadd.f32 %v9126, %v9127
    %v10409 = vrot.slane %v10408, 4
    %v10410 = vadd.f32 %v10408, %v10409
    %v10411 = vrot.slane %v10410, 2
    %v10412 = vadd.f32 %v10410, %v10411
    %v10413 = vrot.slane %v10412, 1
    %v10414 = vadd.f32 %v10412, %v10413
    %v10415 = vadd.f32 %v9128, %v9129
    %v10416 = vrot.slane %v10415, 4
    %v10417 = vadd.f32 %v10415, %v10416
    %v10418 = vrot.slane %v10417, 2
    %v10419 = vadd.f32 %v10417, %v10418
    %v10420 = vrot.slane %v10419, 1
    %v10421 = vadd.f32 %v10419, %v10420
    %v10422 = vadd.f32 %v9130, %v9131
    %v10423 = vrot.slane %v10422, 4
    %v10424 = vadd.f32 %v10422, %v10423
    %v10425 = vrot.slane %v10424, 2
    %v10426 = vadd.f32 %v10424, %v10425
    %v10427 = vrot.slane %v10426, 1
    %v10428 = vadd.f32 %v10426, %v10427
    %v10429 = vadd.f32 %v9132, %v9133
    %v10430 = vrot.slane %v10429, 4
    %v10431 = vadd.f32 %v10429, %v10430
    %v10432 = vrot.slane %v10431, 2
    %v10433 = vadd.f32 %v10431, %v10432
    %v10434 = vrot.slane %v10433, 1
    %v10435 = vadd.f32 %v10433, %v10434
    %v10436 = vadd.f32 %v9134, %v9135
    %v10437 = vrot.slane %v10436, 4
    %v10438 = vadd.f32 %v10436, %v10437
    %v10439 = vrot.slane %v10438, 2
    %v10440 = vadd.f32 %v10438, %v10439
    %v10441 = vrot.slane %v10440, 1
    %v10442 = vadd.f32 %v10440, %v10441
    %v10443 = vadd.f32 %v9136, %v9137
    %v10444 = vrot.slane %v10443, 4
    %v10445 = vadd.f32 %v10443, %v10444
    %v10446 = vrot.slane %v10445, 2
    %v10447 = vadd.f32 %v10445, %v10446
    %v10448 = vrot.slane %v10447, 1
    %v10449 = vadd.f32 %v10447, %v10448
    %v10450 = vadd.f32 %v9138, %v9139
    %v10451 = vrot.slane %v10450, 4
    %v10452 = vadd.f32 %v10450, %v10451
    %v10453 = vrot.slane %v10452, 2
    %v10454 = vadd.f32 %v10452, %v10453
    %v10455 = vrot.slane %v10454, 1
    %v10456 = vadd.f32 %v10454, %v10455
    %v10457 = vadd.f32 %v9140, %v9141
    %v10458 = vrot.slane %v10457, 4
    %v10459 = vadd.f32 %v10457, %v10458
    %v10460 = vrot.slane %v10459, 2
    %v10461 = vadd.f32 %v10459, %v10460
    %v10462 = vrot.slane %v10461, 1
    %v10463 = vadd.f32 %v10461, %v10462
    %v10464 = vadd.f32 %v9142, %v9143
    %v10465 = vrot.slane %v10464, 4
    %v10466 = vadd.f32 %v10464, %v10465
    %v10467 = vrot.slane %v10466, 2
    %v10468 = vadd.f32 %v10466, %v10467
    %v10469 = vrot.slane %v10468, 1
    %v10470 = vadd.f32 %v10468, %v10469
    %v10471 = vadd.f32 %v9144, %v9145
    %v10472 = vrot.slane %v10471, 4
    %v10473 = vadd.f32 %v10471, %v10472
    %v10474 = vrot.slane %v10473, 2
    %v10475 = vadd.f32 %v10473, %v10474
    %v10476 = vrot.slane %v10475, 1
    %v10477 = vadd.f32 %v10475, %v10476
    %v10478 = vadd.f32 %v9146, %v9147
    %v10479 = vrot.slane %v10478, 4
    %v10480 = vadd.f32 %v10478, %v10479
    %v10481 = vrot.slane %v10480, 2
    %v10482 = vadd.f32 %v10480, %v10481
    %v10483 = vrot.slane %v10482, 1
    %v10484 = vadd.f32 %v10482, %v10483
    %v10485 = vadd.f32 %v9148, %v9149
    %v10486 = vrot.slane %v10485, 4
    %v10487 = vadd.f32 %v10485, %v10486
    %v10488 = vrot.slane %v10487, 2
    %v10489 = vadd.f32 %v10487, %v10488
    %v10490 = vrot.slane %v10489, 1
    %v10491 = vadd.f32 %v10489, %v10490
    %v10492 = vadd.f32 %v9150, %v9151
    %v10493 = vrot.slane %v10492, 4
    %v10494 = vadd.f32 %v10492, %v10493
    %v10495 = vrot.slane %v10494, 2
    %v10496 = vadd.f32 %v10494, %v10495
    %v10497 = vrot.slane %v10496, 1
    %v10498 = vadd.f32 %v10496, %v10497
    %v10499 = vadd.f32 %v9152, %v9153
    %v10500 = vrot.slane %v10499, 4
    %v10501 = vadd.f32 %v10499, %v10500
    %v10502 = vrot.slane %v10501, 2
    %v10503 = vadd.f32 %v10501, %v10502
    %v10504 = vrot.slane %v10503, 1
    %v10505 = vadd.f32 %v10503, %v10504
    %v10506 = vadd.f32 %v9154, %v9155
    %v10507 = vrot.slane %v10506, 4
    %v10508 = vadd.f32 %v10506, %v10507
    %v10509 = vrot.slane %v10508, 2
    %v10510 = vadd.f32 %v10508, %v10509
    %v10511 = vrot.slane %v10510, 1
    %v10512 = vadd.f32 %v10510, %v10511
    %v10513 = vadd.f32 %v9156, %v9157
    %v10514 = vrot.slane %v10513, 4
    %v10515 = vadd.f32 %v10513, %v10514
    %v10516 = vrot.slane %v10515, 2
    %v10517 = vadd.f32 %v10515, %v10516
    %v10518 = vrot.slane %v10517, 1
    %v10519 = vadd.f32 %v10517, %v10518
    %v10520 = vadd.f32 %v9158, %v9159
    %v10521 = vrot.slane %v10520, 4
    %v10522 = vadd.f32 %v10520, %v10521
    %v10523 = vrot.slane %v10522, 2
    %v10524 = vadd.f32 %v10522, %v10523
    %v10525 = vrot.slane %v10524, 1
    %v10526 = vadd.f32 %v10524, %v10525
    %v10527 = vadd.f32 %v9160, %v9161
    %v10528 = vrot.slane %v10527, 4
    %v10529 = vadd.f32 %v10527, %v10528
    %v10530 = vrot.slane %v10529, 2
    %v10531 = vadd.f32 %v10529, %v10530
    %v10532 = vrot.slane %v10531, 1
    %v10533 = vadd.f32 %v10531, %v10532
    %v10534 = vadd.f32 %v9162, %v9163
    %v10535 = vrot.slane %v10534, 4
    %v10536 = vadd.f32 %v10534, %v10535
    %v10537 = vrot.slane %v10536, 2
    %v10538 = vadd.f32 %v10536, %v10537
    %v10539 = vrot.slane %v10538, 1
    %v10540 = vadd.f32 %v10538, %v10539
    %v10541 = vadd.f32 %v9164, %v9165
    %v10542 = vrot.slane %v10541, 4
    %v10543 = vadd.f32 %v10541, %v10542
    %v10544 = vrot.slane %v10543, 2
    %v10545 = vadd.f32 %v10543, %v10544
    %v10546 = vrot.slane %v10545, 1
    %v10547 = vadd.f32 %v10545, %v10546
    %v10548 = vadd.f32 %v9166, %v9167
    %v10549 = vrot.slane %v10548, 4
    %v10550 = vadd.f32 %v10548, %v10549
    %v10551 = vrot.slane %v10550, 2
    %v10552 = vadd.f32 %v10550, %v10551
    %v10553 = vrot.slane %v10552, 1
    %v10554 = vadd.f32 %v10552, %v10553
    %v10555 = vadd.f32 %v9168, %v9169
    %v10556 = vrot.slane %v10555, 4
    %v10557 = vadd.f32 %v10555, %v10556
    %v10558 = vrot.slane %v10557, 2
    %v10559 = vadd.f32 %v10557, %v10558
    %v10560 = vrot.slane %v10559, 1
    %v10561 = vadd.f32 %v10559, %v10560
    %v10562 = vadd.f32 %v9170, %v9171
    %v10563 = vrot.slane %v10562, 4
    %v10564 = vadd.f32 %v10562, %v10563
    %v10565 = vrot.slane %v10564, 2
    %v10566 = vadd.f32 %v10564, %v10565
    %v10567 = vrot.slane %v10566, 1
    %v10568 = vadd.f32 %v10566, %v10567
    %v10569 = vadd.f32 %v9172, %v9173
    %v10570 = vrot.slane %v10569, 4
    %v10571 = vadd.f32 %v10569, %v10570
    %v10572 = vrot.slane %v10571, 2
    %v10573 = vadd.f32 %v10571, %v10572
    %v10574 = vrot.slane %v10573, 1
    %v10575 = vadd.f32 %v10573, %v10574
    %v10576 = vadd.f32 %v9174, %v9175
    %v10577 = vrot.slane %v10576, 4
    %v10578 = vadd.f32 %v10576, %v10577
    %v10579 = vrot.slane %v10578, 2
    %v10580 = vadd.f32 %v10578, %v10579
    %v10581 = vrot.slane %v10580, 1
    %v10582 = vadd.f32 %v10580, %v10581
    %v10583 = vadd.f32 %v9176, %v9177
    %v10584 = vrot.slane %v10583, 4
    %v10585 = vadd.f32 %v10583, %v10584
    %v10586 = vrot.slane %v10585, 2
    %v10587 = vadd.f32 %v10585, %v10586
    %v10588 = vrot.slane %v10587, 1
    %v10589 = vadd.f32 %v10587, %v10588
    %v10590 = vadd.f32 %v9178, %v9179
    %v10591 = vrot.slane %v10590, 4
    %v10592 = vadd.f32 %v10590, %v10591
    %v10593 = vrot.slane %v10592, 2
    %v10594 = vadd.f32 %v10592, %v10593
    %v10595 = vrot.slane %v10594, 1
    %v10596 = vadd.f32 %v10594, %v10595
    %v10597 = vadd.f32 %v9180, %v9181
    %v10598 = vrot.slane %v10597, 4
    %v10599 = vadd.f32 %v10597, %v10598
    %v10600 = vrot.slane %v10599, 2
    %v10601 = vadd.f32 %v10599, %v10600
    %v10602 = vrot.slane %v10601, 1
    %v10603 = vadd.f32 %v10601, %v10602
    %v10604 = vadd.f32 %v9182, %v9183
    %v10605 = vrot.slane %v10604, 4
    %v10606 = vadd.f32 %v10604, %v10605
    %v10607 = vrot.slane %v10606, 2
    %v10608 = vadd.f32 %v10606, %v10607
    %v10609 = vrot.slane %v10608, 1
    %v10610 = vadd.f32 %v10608, %v10609
    %v10611 = vadd.f32 %v9184, %v9185
    %v10612 = vrot.slane %v10611, 4
    %v10613 = vadd.f32 %v10611, %v10612
    %v10614 = vrot.slane %v10613, 2
    %v10615 = vadd.f32 %v10613, %v10614
    %v10616 = vrot.slane %v10615, 1
    %v10617 = vadd.f32 %v10615, %v10616
    %v10618 = vadd.f32 %v9186, %v9187
    %v10619 = vrot.slane %v10618, 4
    %v10620 = vadd.f32 %v10618, %v10619
    %v10621 = vrot.slane %v10620, 2
    %v10622 = vadd.f32 %v10620, %v10621
    %v10623 = vrot.slane %v10622, 1
    %v10624 = vadd.f32 %v10622, %v10623
    %v10625 = vadd.f32 %v9188, %v9189
    %v10626 = vrot.slane %v10625, 4
    %v10627 = vadd.f32 %v10625, %v10626
    %v10628 = vrot.slane %v10627, 2
    %v10629 = vadd.f32 %v10627, %v10628
    %v10630 = vrot.slane %v10629, 1
    %v10631 = vadd.f32 %v10629, %v10630
    %v10632 = vadd.f32 %v9190, %v9191
    %v10633 = vrot.slane %v10632, 4
    %v10634 = vadd.f32 %v10632, %v10633
    %v10635 = vrot.slane %v10634, 2
    %v10636 = vadd.f32 %v10634, %v10635
    %v10637 = vrot.slane %v10636, 1
    %v10638 = vadd.f32 %v10636, %v10637
    %v10639 = vadd.f32 %v9192, %v9193
    %v10640 = vrot.slane %v10639, 4
    %v10641 = vadd.f32 %v10639, %v10640
    %v10642 = vrot.slane %v10641, 2
    %v10643 = vadd.f32 %v10641, %v10642
    %v10644 = vrot.slane %v10643, 1
    %v10645 = vadd.f32 %v10643, %v10644
    %v10646 = vadd.f32 %v9194, %v9195
    %v10647 = vrot.slane %v10646, 4
    %v10648 = vadd.f32 %v10646, %v10647
    %v10649 = vrot.slane %v10648, 2
    %v10650 = vadd.f32 %v10648, %v10649
    %v10651 = vrot.slane %v10650, 1
    %v10652 = vadd.f32 %v10650, %v10651
    %v10653 = vadd.f32 %v9196, %v9197
    %v10654 = vrot.slane %v10653, 4
    %v10655 = vadd.f32 %v10653, %v10654
    %v10656 = vrot.slane %v10655, 2
    %v10657 = vadd.f32 %v10655, %v10656
    %v10658 = vrot.slane %v10657, 1
    %v10659 = vadd.f32 %v10657, %v10658
    %v10660 = vadd.f32 %v9198, %v9199
    %v10661 = vrot.slane %v10660, 4
    %v10662 = vadd.f32 %v10660, %v10661
    %v10663 = vrot.slane %v10662, 2
    %v10664 = vadd.f32 %v10662, %v10663
    %v10665 = vrot.slane %v10664, 1
    %v10666 = vadd.f32 %v10664, %v10665
    %v10667 = vadd.f32 %v9200, %v9201
    %v10668 = vrot.slane %v10667, 4
    %v10669 = vadd.f32 %v10667, %v10668
    %v10670 = vrot.slane %v10669, 2
    %v10671 = vadd.f32 %v10669, %v10670
    %v10672 = vrot.slane %v10671, 1
    %v10673 = vadd.f32 %v10671, %v10672
    %v10674 = vadd.f32 %v9202, %v9203
    %v10675 = vrot.slane %v10674, 4
    %v10676 = vadd.f32 %v10674, %v10675
    %v10677 = vrot.slane %v10676, 2
    %v10678 = vadd.f32 %v10676, %v10677
    %v10679 = vrot.slane %v10678, 1
    %v10680 = vadd.f32 %v10678, %v10679
    %v10681 = vadd.f32 %v9204, %v9205
    %v10682 = vrot.slane %v10681, 4
    %v10683 = vadd.f32 %v10681, %v10682
    %v10684 = vrot.slane %v10683, 2
    %v10685 = vadd.f32 %v10683, %v10684
    %v10686 = vrot.slane %v10685, 1
    %v10687 = vadd.f32 %v10685, %v10686
    %v10688 = vadd.f32 %v9206, %v9207
    %v10689 = vrot.slane %v10688, 4
    %v10690 = vadd.f32 %v10688, %v10689
    %v10691 = vrot.slane %v10690, 2
    %v10692 = vadd.f32 %v10690, %v10691
    %v10693 = vrot.slane %v10692, 1
    %v10694 = vadd.f32 %v10692, %v10693
    %v10695 = vadd.f32 %v9208, %v9209
    %v10696 = vrot.slane %v10695, 4
    %v10697 = vadd.f32 %v10695, %v10696
    %v10698 = vrot.slane %v10697, 2
    %v10699 = vadd.f32 %v10697, %v10698
    %v10700 = vrot.slane %v10699, 1
    %v10701 = vadd.f32 %v10699, %v10700
    %v10702 = vadd.f32 %v9210, %v9211
    %v10703 = vrot.slane %v10702, 4
    %v10704 = vadd.f32 %v10702, %v10703
    %v10705 = vrot.slane %v10704, 2
    %v10706 = vadd.f32 %v10704, %v10705
    %v10707 = vrot.slane %v10706, 1
    %v10708 = vadd.f32 %v10706, %v10707
    %v10709 = vadd.f32 %v9212, %v9213
    %v10710 = vrot.slane %v10709, 4
    %v10711 = vadd.f32 %v10709, %v10710
    %v10712 = vrot.slane %v10711, 2
    %v10713 = vadd.f32 %v10711, %v10712
    %v10714 = vrot.slane %v10713, 1
    %v10715 = vadd.f32 %v10713, %v10714
    %v10716 = vadd.f32 %v9214, %v9215
    %v10717 = vrot.slane %v10716, 4
    %v10718 = vadd.f32 %v10716, %v10717
    %v10719 = vrot.slane %v10718, 2
    %v10720 = vadd.f32 %v10718, %v10719
    %v10721 = vrot.slane %v10720, 1
    %v10722 = vadd.f32 %v10720, %v10721
    %v10723 = vadd.f32 %v9216, %v9217
    %v10724 = vrot.slane %v10723, 4
    %v10725 = vadd.f32 %v10723, %v10724
    %v10726 = vrot.slane %v10725, 2
    %v10727 = vadd.f32 %v10725, %v10726
    %v10728 = vrot.slane %v10727, 1
    %v10729 = vadd.f32 %v10727, %v10728
    %v10730 = vadd.f32 %v9218, %v9219
    %v10731 = vrot.slane %v10730, 4
    %v10732 = vadd.f32 %v10730, %v10731
    %v10733 = vrot.slane %v10732, 2
    %v10734 = vadd.f32 %v10732, %v10733
    %v10735 = vrot.slane %v10734, 1
    %v10736 = vadd.f32 %v10734, %v10735
    %v10737 = vadd.f32 %v9220, %v9221
    %v10738 = vrot.slane %v10737, 4
    %v10739 = vadd.f32 %v10737, %v10738
    %v10740 = vrot.slane %v10739, 2
    %v10741 = vadd.f32 %v10739, %v10740
    %v10742 = vrot.slane %v10741, 1
    %v10743 = vadd.f32 %v10741, %v10742
    %v10744 = vadd.f32 %v9222, %v9223
    %v10745 = vrot.slane %v10744, 4
    %v10746 = vadd.f32 %v10744, %v10745
    %v10747 = vrot.slane %v10746, 2
    %v10748 = vadd.f32 %v10746, %v10747
    %v10749 = vrot.slane %v10748, 1
    %v10750 = vadd.f32 %v10748, %v10749
    %v10751 = vadd.f32 %v9224, %v9225
    %v10752 = vrot.slane %v10751, 4
    %v10753 = vadd.f32 %v10751, %v10752
    %v10754 = vrot.slane %v10753, 2
    %v10755 = vadd.f32 %v10753, %v10754
    %v10756 = vrot.slane %v10755, 1
    %v10757 = vadd.f32 %v10755, %v10756
    %v10758 = vadd.f32 %v9226, %v9227
    %v10759 = vrot.slane %v10758, 4
    %v10760 = vadd.f32 %v10758, %v10759
    %v10761 = vrot.slane %v10760, 2
    %v10762 = vadd.f32 %v10760, %v10761
    %v10763 = vrot.slane %v10762, 1
    %v10764 = vadd.f32 %v10762, %v10763
    %v10765 = vadd.f32 %v9228, %v9229
    %v10766 = vrot.slane %v10765, 4
    %v10767 = vadd.f32 %v10765, %v10766
    %v10768 = vrot.slane %v10767, 2
    %v10769 = vadd.f32 %v10767, %v10768
    %v10770 = vrot.slane %v10769, 1
    %v10771 = vadd.f32 %v10769, %v10770
    %v10772 = vadd.f32 %v9230, %v9231
    %v10773 = vrot.slane %v10772, 4
    %v10774 = vadd.f32 %v10772, %v10773
    %v10775 = vrot.slane %v10774, 2
    %v10776 = vadd.f32 %v10774, %v10775
    %v10777 = vrot.slane %v10776, 1
    %v10778 = vadd.f32 %v10776, %v10777
    %v10779 = vadd.f32 %v9232, %v9233
    %v10780 = vrot.slane %v10779, 4
    %v10781 = vadd.f32 %v10779, %v10780
    %v10782 = vrot.slane %v10781, 2
    %v10783 = vadd.f32 %v10781, %v10782
    %v10784 = vrot.slane %v10783, 1
    %v10785 = vadd.f32 %v10783, %v10784
    %v10786 = vadd.f32 %v9234, %v9235
    %v10787 = vrot.slane %v10786, 4
    %v10788 = vadd.f32 %v10786, %v10787
    %v10789 = vrot.slane %v10788, 2
    %v10790 = vadd.f32 %v10788, %v10789
    %v10791 = vrot.slane %v10790, 1
    %v10792 = vadd.f32 %v10790, %v10791
    %v10793 = vadd.f32 %v9236, %v9237
    %v10794 = vrot.slane %v10793, 4
    %v10795 = vadd.f32 %v10793, %v10794
    %v10796 = vrot.slane %v10795, 2
    %v10797 = vadd.f32 %v10795, %v10796
    %v10798 = vrot.slane %v10797, 1
    %v10799 = vadd.f32 %v10797, %v10798
    %v10800 = vadd.f32 %v9238, %v9239
    %v10801 = vrot.slane %v10800, 4
    %v10802 = vadd.f32 %v10800, %v10801
    %v10803 = vrot.slane %v10802, 2
    %v10804 = vadd.f32 %v10802, %v10803
    %v10805 = vrot.slane %v10804, 1
    %v10806 = vadd.f32 %v10804, %v10805
    %v10807 = vadd.f32 %v9240, %v9241
    %v10808 = vrot.slane %v10807, 4
    %v10809 = vadd.f32 %v10807, %v10808
    %v10810 = vrot.slane %v10809, 2
    %v10811 = vadd.f32 %v10809, %v10810
    %v10812 = vrot.slane %v10811, 1
    %v10813 = vadd.f32 %v10811, %v10812
    %v10814 = vadd.f32 %v9242, %v9243
    %v10815 = vrot.slane %v10814, 4
    %v10816 = vadd.f32 %v10814, %v10815
    %v10817 = vrot.slane %v10816, 2
    %v10818 = vadd.f32 %v10816, %v10817
    %v10819 = vrot.slane %v10818, 1
    %v10820 = vadd.f32 %v10818, %v10819
    %v10821 = vadd.f32 %v9244, %v9245
    %v10822 = vrot.slane %v10821, 4
    %v10823 = vadd.f32 %v10821, %v10822
    %v10824 = vrot.slane %v10823, 2
    %v10825 = vadd.f32 %v10823, %v10824
    %v10826 = vrot.slane %v10825, 1
    %v10827 = vadd.f32 %v10825, %v10826
    %v10828 = vadd.f32 %v9246, %v9247
    %v10829 = vrot.slane %v10828, 4
    %v10830 = vadd.f32 %v10828, %v10829
    %v10831 = vrot.slane %v10830, 2
    %v10832 = vadd.f32 %v10830, %v10831
    %v10833 = vrot.slane %v10832, 1
    %v10834 = vadd.f32 %v10832, %v10833
    %v10835 = vadd.f32 %v9248, %v9249
    %v10836 = vrot.slane %v10835, 4
    %v10837 = vadd.f32 %v10835, %v10836
    %v10838 = vrot.slane %v10837, 2
    %v10839 = vadd.f32 %v10837, %v10838
    %v10840 = vrot.slane %v10839, 1
    %v10841 = vadd.f32 %v10839, %v10840
    %v10842 = vadd.f32 %v9250, %v9251
    %v10843 = vrot.slane %v10842, 4
    %v10844 = vadd.f32 %v10842, %v10843
    %v10845 = vrot.slane %v10844, 2
    %v10846 = vadd.f32 %v10844, %v10845
    %v10847 = vrot.slane %v10846, 1
    %v10848 = vadd.f32 %v10846, %v10847
    %v10849 = vadd.f32 %v9252, %v9253
    %v10850 = vrot.slane %v10849, 4
    %v10851 = vadd.f32 %v10849, %v10850
    %v10852 = vrot.slane %v10851, 2
    %v10853 = vadd.f32 %v10851, %v10852
    %v10854 = vrot.slane %v10853, 1
    %v10855 = vadd.f32 %v10853, %v10854
    %v10856 = vadd.f32 %v9254, %v9255
    %v10857 = vrot.slane %v10856, 4
    %v10858 = vadd.f32 %v10856, %v10857
    %v10859 = vrot.slane %v10858, 2
    %v10860 = vadd.f32 %v10858, %v10859
    %v10861 = vrot.slane %v10860, 1
    %v10862 = vadd.f32 %v10860, %v10861
    %v10863 = vadd.f32 %v9256, %v9257
    %v10864 = vrot.slane %v10863, 4
    %v10865 = vadd.f32 %v10863, %v10864
    %v10866 = vrot.slane %v10865, 2
    %v10867 = vadd.f32 %v10865, %v10866
    %v10868 = vrot.slane %v10867, 1
    %v10869 = vadd.f32 %v10867, %v10868
    %v10870 = vadd.f32 %v9258, %v9259
    %v10871 = vrot.slane %v10870, 4
    %v10872 = vadd.f32 %v10870, %v10871
    %v10873 = vrot.slane %v10872, 2
    %v10874 = vadd.f32 %v10872, %v10873
    %v10875 = vrot.slane %v10874, 1
    %v10876 = vadd.f32 %v10874, %v10875
    %v10877 = vadd.f32 %v9260, %v9261
    %v10878 = vrot.slane %v10877, 4
    %v10879 = vadd.f32 %v10877, %v10878
    %v10880 = vrot.slane %v10879, 2
    %v10881 = vadd.f32 %v10879, %v10880
    %v10882 = vrot.slane %v10881, 1
    %v10883 = vadd.f32 %v10881, %v10882
    %v10884 = vadd.f32 %v9262, %v9263
    %v10885 = vrot.slane %v10884, 4
    %v10886 = vadd.f32 %v10884, %v10885
    %v10887 = vrot.slane %v10886, 2
    %v10888 = vadd.f32 %v10886, %v10887
    %v10889 = vrot.slane %v10888, 1
    %v10890 = vadd.f32 %v10888, %v10889
    %v10891 = vadd.f32 %v9264, %v9265
    %v10892 = vrot.slane %v10891, 4
    %v10893 = vadd.f32 %v10891, %v10892
    %v10894 = vrot.slane %v10893, 2
    %v10895 = vadd.f32 %v10893, %v10894
    %v10896 = vrot.slane %v10895, 1
    %v10897 = vadd.f32 %v10895, %v10896
    %v10898 = vadd.f32 %v9266, %v9267
    %v10899 = vrot.slane %v10898, 4
    %v10900 = vadd.f32 %v10898, %v10899
    %v10901 = vrot.slane %v10900, 2
    %v10902 = vadd.f32 %v10900, %v10901
    %v10903 = vrot.slane %v10902, 1
    %v10904 = vadd.f32 %v10902, %v10903
    %v10905 = vadd.f32 %v9268, %v9269
    %v10906 = vrot.slane %v10905, 4
    %v10907 = vadd.f32 %v10905, %v10906
    %v10908 = vrot.slane %v10907, 2
    %v10909 = vadd.f32 %v10907, %v10908
    %v10910 = vrot.slane %v10909, 1
    %v10911 = vadd.f32 %v10909, %v10910
    %v10912 = vadd.f32 %v9270, %v9271
    %v10913 = vrot.slane %v10912, 4
    %v10914 = vadd.f32 %v10912, %v10913
    %v10915 = vrot.slane %v10914, 2
    %v10916 = vadd.f32 %v10914, %v10915
    %v10917 = vrot.slane %v10916, 1
    %v10918 = vadd.f32 %v10916, %v10917
    %v10919 = vadd.f32 %v9272, %v9273
    %v10920 = vrot.slane %v10919, 4
    %v10921 = vadd.f32 %v10919, %v10920
    %v10922 = vrot.slane %v10921, 2
    %v10923 = vadd.f32 %v10921, %v10922
    %v10924 = vrot.slane %v10923, 1
    %v10925 = vadd.f32 %v10923, %v10924
    %v10926 = vadd.f32 %v9274, %v9275
    %v10927 = vrot.slane %v10926, 4
    %v10928 = vadd.f32 %v10926, %v10927
    %v10929 = vrot.slane %v10928, 2
    %v10930 = vadd.f32 %v10928, %v10929
    %v10931 = vrot.slane %v10930, 1
    %v10932 = vadd.f32 %v10930, %v10931
    %v10933 = vadd.f32 %v9276, %v9277
    %v10934 = vrot.slane %v10933, 4
    %v10935 = vadd.f32 %v10933, %v10934
    %v10936 = vrot.slane %v10935, 2
    %v10937 = vadd.f32 %v10935, %v10936
    %v10938 = vrot.slane %v10937, 1
    %v10939 = vadd.f32 %v10937, %v10938
    %v10940 = vadd.f32 %v9278, %v9279
    %v10941 = vrot.slane %v10940, 4
    %v10942 = vadd.f32 %v10940, %v10941
    %v10943 = vrot.slane %v10942, 2
    %v10944 = vadd.f32 %v10942, %v10943
    %v10945 = vrot.slane %v10944, 1
    %v10946 = vadd.f32 %v10944, %v10945
    %v10947 = vadd.f32 %v9280, %v9281
    %v10948 = vrot.slane %v10947, 4
    %v10949 = vadd.f32 %v10947, %v10948
    %v10950 = vrot.slane %v10949, 2
    %v10951 = vadd.f32 %v10949, %v10950
    %v10952 = vrot.slane %v10951, 1
    %v10953 = vadd.f32 %v10951, %v10952
    %v10954 = vadd.f32 %v9282, %v9283
    %v10955 = vrot.slane %v10954, 4
    %v10956 = vadd.f32 %v10954, %v10955
    %v10957 = vrot.slane %v10956, 2
    %v10958 = vadd.f32 %v10956, %v10957
    %v10959 = vrot.slane %v10958, 1
    %v10960 = vadd.f32 %v10958, %v10959
    %v10961 = vadd.f32 %v9284, %v9285
    %v10962 = vrot.slane %v10961, 4
    %v10963 = vadd.f32 %v10961, %v10962
    %v10964 = vrot.slane %v10963, 2
    %v10965 = vadd.f32 %v10963, %v10964
    %v10966 = vrot.slane %v10965, 1
    %v10967 = vadd.f32 %v10965, %v10966
    %v10968 = vadd.f32 %v9286, %v9287
    %v10969 = vrot.slane %v10968, 4
    %v10970 = vadd.f32 %v10968, %v10969
    %v10971 = vrot.slane %v10970, 2
    %v10972 = vadd.f32 %v10970, %v10971
    %v10973 = vrot.slane %v10972, 1
    %v10974 = vadd.f32 %v10972, %v10973
    %v10975 = vadd.f32 %v9288, %v9289
    %v10976 = vrot.slane %v10975, 4
    %v10977 = vadd.f32 %v10975, %v10976
    %v10978 = vrot.slane %v10977, 2
    %v10979 = vadd.f32 %v10977, %v10978
    %v10980 = vrot.slane %v10979, 1
    %v10981 = vadd.f32 %v10979, %v10980
    %v10982 = vadd.f32 %v9290, %v9291
    %v10983 = vrot.slane %v10982, 4
    %v10984 = vadd.f32 %v10982, %v10983
    %v10985 = vrot.slane %v10984, 2
    %v10986 = vadd.f32 %v10984, %v10985
    %v10987 = vrot.slane %v10986, 1
    %v10988 = vadd.f32 %v10986, %v10987
    %v10989 = vadd.f32 %v9292, %v9293
    %v10990 = vrot.slane %v10989, 4
    %v10991 = vadd.f32 %v10989, %v10990
    %v10992 = vrot.slane %v10991, 2
    %v10993 = vadd.f32 %v10991, %v10992
    %v10994 = vrot.slane %v10993, 1
    %v10995 = vadd.f32 %v10993, %v10994
    %v10996 = vadd.f32 %v9294, %v9295
    %v10997 = vrot.slane %v10996, 4
    %v10998 = vadd.f32 %v10996, %v10997
    %v10999 = vrot.slane %v10998, 2
    %v11000 = vadd.f32 %v10998, %v10999
    %v11001 = vrot.slane %v11000, 1
    %v11002 = vadd.f32 %v11000, %v11001
    %v11003 = vadd.f32 %v9296, %v9297
    %v11004 = vrot.slane %v11003, 4
    %v11005 = vadd.f32 %v11003, %v11004
    %v11006 = vrot.slane %v11005, 2
    %v11007 = vadd.f32 %v11005, %v11006
    %v11008 = vrot.slane %v11007, 1
    %v11009 = vadd.f32 %v11007, %v11008
    %v11010 = vadd.f32 %v9298, %v9299
    %v11011 = vrot.slane %v11010, 4
    %v11012 = vadd.f32 %v11010, %v11011
    %v11013 = vrot.slane %v11012, 2
    %v11014 = vadd.f32 %v11012, %v11013
    %v11015 = vrot.slane %v11014, 1
    %v11016 = vadd.f32 %v11014, %v11015
    %v11017 = vadd.f32 %v9300, %v9301
    %v11018 = vrot.slane %v11017, 4
    %v11019 = vadd.f32 %v11017, %v11018
    %v11020 = vrot.slane %v11019, 2
    %v11021 = vadd.f32 %v11019, %v11020
    %v11022 = vrot.slane %v11021, 1
    %v11023 = vadd.f32 %v11021, %v11022
    %v11024 = vadd.f32 %v9302, %v9303
    %v11025 = vrot.slane %v11024, 4
    %v11026 = vadd.f32 %v11024, %v11025
    %v11027 = vrot.slane %v11026, 2
    %v11028 = vadd.f32 %v11026, %v11027
    %v11029 = vrot.slane %v11028, 1
    %v11030 = vadd.f32 %v11028, %v11029
    %v11031 = vadd.f32 %v9304, %v9305
    %v11032 = vrot.slane %v11031, 4
    %v11033 = vadd.f32 %v11031, %v11032
    %v11034 = vrot.slane %v11033, 2
    %v11035 = vadd.f32 %v11033, %v11034
    %v11036 = vrot.slane %v11035, 1
    %v11037 = vadd.f32 %v11035, %v11036
    %v11038 = vadd.f32 %v9306, %v9307
    %v11039 = vrot.slane %v11038, 4
    %v11040 = vadd.f32 %v11038, %v11039
    %v11041 = vrot.slane %v11040, 2
    %v11042 = vadd.f32 %v11040, %v11041
    %v11043 = vrot.slane %v11042, 1
    %v11044 = vadd.f32 %v11042, %v11043
    %v11045 = vadd.f32 %v9308, %v9309
    %v11046 = vrot.slane %v11045, 4
    %v11047 = vadd.f32 %v11045, %v11046
    %v11048 = vrot.slane %v11047, 2
    %v11049 = vadd.f32 %v11047, %v11048
    %v11050 = vrot.slane %v11049, 1
    %v11051 = vadd.f32 %v11049, %v11050
    %v11052 = vadd.f32 %v9310, %v9311
    %v11053 = vrot.slane %v11052, 4
    %v11054 = vadd.f32 %v11052, %v11053
    %v11055 = vrot.slane %v11054, 2
    %v11056 = vadd.f32 %v11054, %v11055
    %v11057 = vrot.slane %v11056, 1
    %v11058 = vadd.f32 %v11056, %v11057
    %v11059 = vadd.f32 %v9312, %v9313
    %v11060 = vrot.slane %v11059, 4
    %v11061 = vadd.f32 %v11059, %v11060
    %v11062 = vrot.slane %v11061, 2
    %v11063 = vadd.f32 %v11061, %v11062
    %v11064 = vrot.slane %v11063, 1
    %v11065 = vadd.f32 %v11063, %v11064
    %v11066 = vadd.f32 %v9314, %v9315
    %v11067 = vrot.slane %v11066, 4
    %v11068 = vadd.f32 %v11066, %v11067
    %v11069 = vrot.slane %v11068, 2
    %v11070 = vadd.f32 %v11068, %v11069
    %v11071 = vrot.slane %v11070, 1
    %v11072 = vadd.f32 %v11070, %v11071
    %v11073 = vadd.f32 %v9316, %v9317
    %v11074 = vrot.slane %v11073, 4
    %v11075 = vadd.f32 %v11073, %v11074
    %v11076 = vrot.slane %v11075, 2
    %v11077 = vadd.f32 %v11075, %v11076
    %v11078 = vrot.slane %v11077, 1
    %v11079 = vadd.f32 %v11077, %v11078
    %v11080 = vadd.f32 %v9318, %v9319
    %v11081 = vrot.slane %v11080, 4
    %v11082 = vadd.f32 %v11080, %v11081
    %v11083 = vrot.slane %v11082, 2
    %v11084 = vadd.f32 %v11082, %v11083
    %v11085 = vrot.slane %v11084, 1
    %v11086 = vadd.f32 %v11084, %v11085
    %v11087 = vadd.f32 %v9320, %v9321
    %v11088 = vrot.slane %v11087, 4
    %v11089 = vadd.f32 %v11087, %v11088
    %v11090 = vrot.slane %v11089, 2
    %v11091 = vadd.f32 %v11089, %v11090
    %v11092 = vrot.slane %v11091, 1
    %v11093 = vadd.f32 %v11091, %v11092
    %v11094 = vadd.f32 %v9322, %v9323
    %v11095 = vrot.slane %v11094, 4
    %v11096 = vadd.f32 %v11094, %v11095
    %v11097 = vrot.slane %v11096, 2
    %v11098 = vadd.f32 %v11096, %v11097
    %v11099 = vrot.slane %v11098, 1
    %v11100 = vadd.f32 %v11098, %v11099
    %v11101 = vadd.f32 %v9324, %v9325
    %v11102 = vrot.slane %v11101, 4
    %v11103 = vadd.f32 %v11101, %v11102
    %v11104 = vrot.slane %v11103, 2
    %v11105 = vadd.f32 %v11103, %v11104
    %v11106 = vrot.slane %v11105, 1
    %v11107 = vadd.f32 %v11105, %v11106
    %v11108 = vadd.f32 %v9326, %v9327
    %v11109 = vrot.slane %v11108, 4
    %v11110 = vadd.f32 %v11108, %v11109
    %v11111 = vrot.slane %v11110, 2
    %v11112 = vadd.f32 %v11110, %v11111
    %v11113 = vrot.slane %v11112, 1
    %v11114 = vadd.f32 %v11112, %v11113
    %v11115 = vadd.f32 %v9328, %v9329
    %v11116 = vrot.slane %v11115, 4
    %v11117 = vadd.f32 %v11115, %v11116
    %v11118 = vrot.slane %v11117, 2
    %v11119 = vadd.f32 %v11117, %v11118
    %v11120 = vrot.slane %v11119, 1
    %v11121 = vadd.f32 %v11119, %v11120
    %v11154 = vrot.slane %v606, 1
    %v11155 = vrot.slane %v606, 2
    %v11156 = vrot.slane %v606, 3
    %v11157 = vrot.slane %v606, 4
    %v11158 = vrot.slane %v606, 5
    %v11159 = vrot.slane %v606, 6
    %v11160 = vrot.slane %v606, 7
    %v11161 = vrot.slane %v607, 1
    %v11162 = vrot.slane %v607, 2
    %v11163 = vrot.slane %v607, 3
    %v11164 = vrot.slane %v607, 4
    %v11165 = vrot.slane %v607, 5
    %v11166 = vrot.slane %v607, 6
    %v11167 = vrot.slane %v607, 7
    %v11168 = vrot.slane %v608, 1
    %v11169 = vrot.slane %v608, 2
    %v11170 = vrot.slane %v608, 3
    %v11171 = vrot.slane %v608, 4
    %v11172 = vrot.slane %v608, 5
    %v11173 = vrot.slane %v608, 6
    %v11174 = vrot.slane %v608, 7
    %v11175 = vrot.slane %v609, 1
    %v11176 = vrot.slane %v609, 2
    %v11177 = vrot.slane %v609, 3
    %v11178 = vrot.slane %v609, 4
    %v11179 = vrot.slane %v609, 5
    %v11180 = vrot.slane %v609, 6
    %v11181 = vrot.slane %v609, 7
    %v11182 = vrot.slane %v610, 1
    %v11183 = vrot.slane %v610, 2
    %v11184 = vrot.slane %v610, 3
    %v11185 = vrot.slane %v610, 4
    %v11186 = vrot.slane %v610, 5
    %v11187 = vrot.slane %v610, 6
    %v11188 = vrot.slane %v610, 7
    %v11189 = vrot.slane %v611, 1
    %v11190 = vrot.slane %v611, 2
    %v11191 = vrot.slane %v611, 3
    %v11192 = vrot.slane %v611, 4
    %v11193 = vrot.slane %v611, 5
    %v11194 = vrot.slane %v611, 6
    %v11195 = vrot.slane %v611, 7
    %v11196 = vrot.slane %v612, 1
    %v11197 = vrot.slane %v612, 2
    %v11198 = vrot.slane %v612, 3
    %v11199 = vrot.slane %v612, 4
    %v11200 = vrot.slane %v612, 5
    %v11201 = vrot.slane %v612, 6
    %v11202 = vrot.slane %v612, 7
    %v11203 = vrot.slane %v613, 1
    %v11204 = vrot.slane %v613, 2
    %v11205 = vrot.slane %v613, 3
    %v11206 = vrot.slane %v613, 4
    %v11207 = vrot.slane %v613, 5
    %v11208 = vrot.slane %v613, 6
    %v11209 = vrot.slane %v613, 7
    %v11210 = vrot.slane %v614, 1
    %v11211 = vrot.slane %v614, 2
    %v11212 = vrot.slane %v614, 3
    %v11213 = vrot.slane %v614, 4
    %v11214 = vrot.slane %v614, 5
    %v11215 = vrot.slane %v614, 6
    %v11216 = vrot.slane %v614, 7
    %v11217 = vrot.slane %v615, 1
    %v11218 = vrot.slane %v615, 2
    %v11219 = vrot.slane %v615, 3
    %v11220 = vrot.slane %v615, 4
    %v11221 = vrot.slane %v615, 5
    %v11222 = vrot.slane %v615, 6
    %v11223 = vrot.slane %v615, 7
    %v11224 = vrot.slane %v616, 1
    %v11225 = vrot.slane %v616, 2
    %v11226 = vrot.slane %v616, 3
    %v11227 = vrot.slane %v616, 4
    %v11228 = vrot.slane %v616, 5
    %v11229 = vrot.slane %v616, 6
    %v11230 = vrot.slane %v616, 7
    %v11231 = vrot.slane %v617, 1
    %v11232 = vrot.slane %v617, 2
    %v11233 = vrot.slane %v617, 3
    %v11234 = vrot.slane %v617, 4
    %v11235 = vrot.slane %v617, 5
    %v11236 = vrot.slane %v617, 6
    %v11237 = vrot.slane %v617, 7
    %v11238 = vrot.slane %v618, 1
    %v11239 = vrot.slane %v618, 2
    %v11240 = vrot.slane %v618, 3
    %v11241 = vrot.slane %v618, 4
    %v11242 = vrot.slane %v618, 5
    %v11243 = vrot.slane %v618, 6
    %v11244 = vrot.slane %v618, 7
    %v11245 = vrot.slane %v619, 1
    %v11246 = vrot.slane %v619, 2
    %v11247 = vrot.slane %v619, 3
    %v11248 = vrot.slane %v619, 4
    %v11249 = vrot.slane %v619, 5
    %v11250 = vrot.slane %v619, 6
    %v11251 = vrot.slane %v619, 7
    %v11252 = vrot.slane %v620, 1
    %v11253 = vrot.slane %v620, 2
    %v11254 = vrot.slane %v620, 3
    %v11255 = vrot.slane %v620, 4
    %v11256 = vrot.slane %v620, 5
    %v11257 = vrot.slane %v620, 6
    %v11258 = vrot.slane %v620, 7
    %v11259 = vrot.slane %v621, 1
    %v11260 = vrot.slane %v621, 2
    %v11261 = vrot.slane %v621, 3
    %v11262 = vrot.slane %v621, 4
    %v11263 = vrot.slane %v621, 5
    %v11264 = vrot.slane %v621, 6
    %v11265 = vrot.slane %v621, 7
    %v11266 = vrot.slane %v622, 1
    %v11267 = vrot.slane %v622, 2
    %v11268 = vrot.slane %v622, 3
    %v11269 = vrot.slane %v622, 4
    %v11270 = vrot.slane %v622, 5
    %v11271 = vrot.slane %v622, 6
    %v11272 = vrot.slane %v622, 7
    %v11273 = vrot.slane %v623, 1
    %v11274 = vrot.slane %v623, 2
    %v11275 = vrot.slane %v623, 3
    %v11276 = vrot.slane %v623, 4
    %v11277 = vrot.slane %v623, 5
    %v11278 = vrot.slane %v623, 6
    %v11279 = vrot.slane %v623, 7
    %v11280 = vrot.slane %v624, 1
    %v11281 = vrot.slane %v624, 2
    %v11282 = vrot.slane %v624, 3
    %v11283 = vrot.slane %v624, 4
    %v11284 = vrot.slane %v624, 5
    %v11285 = vrot.slane %v624, 6
    %v11286 = vrot.slane %v624, 7
    %v11287 = vrot.slane %v625, 1
    %v11288 = vrot.slane %v625, 2
    %v11289 = vrot.slane %v625, 3
    %v11290 = vrot.slane %v625, 4
    %v11291 = vrot.slane %v625, 5
    %v11292 = vrot.slane %v625, 6
    %v11293 = vrot.slane %v625, 7
    %v11294 = vrot.slane %v626, 1
    %v11295 = vrot.slane %v626, 2
    %v11296 = vrot.slane %v626, 3
    %v11297 = vrot.slane %v626, 4
    %v11298 = vrot.slane %v626, 5
    %v11299 = vrot.slane %v626, 6
    %v11300 = vrot.slane %v626, 7
    %v11301 = vrot.slane %v627, 1
    %v11302 = vrot.slane %v627, 2
    %v11303 = vrot.slane %v627, 3
    %v11304 = vrot.slane %v627, 4
    %v11305 = vrot.slane %v627, 5
    %v11306 = vrot.slane %v627, 6
    %v11307 = vrot.slane %v627, 7
    %v11308 = vrot.slane %v628, 1
    %v11309 = vrot.slane %v628, 2
    %v11310 = vrot.slane %v628, 3
    %v11311 = vrot.slane %v628, 4
    %v11312 = vrot.slane %v628, 5
    %v11313 = vrot.slane %v628, 6
    %v11314 = vrot.slane %v628, 7
    %v11315 = vrot.slane %v629, 1
    %v11316 = vrot.slane %v629, 2
    %v11317 = vrot.slane %v629, 3
    %v11318 = vrot.slane %v629, 4
    %v11319 = vrot.slane %v629, 5
    %v11320 = vrot.slane %v629, 6
    %v11321 = vrot.slane %v629, 7
    %v11322 = vrot.slane %v630, 1
    %v11323 = vrot.slane %v630, 2
    %v11324 = vrot.slane %v630, 3
    %v11325 = vrot.slane %v630, 4
    %v11326 = vrot.slane %v630, 5
    %v11327 = vrot.slane %v630, 6
    %v11328 = vrot.slane %v630, 7
    %v11329 = vrot.slane %v631, 1
    %v11330 = vrot.slane %v631, 2
    %v11331 = vrot.slane %v631, 3
    %v11332 = vrot.slane %v631, 4
    %v11333 = vrot.slane %v631, 5
    %v11334 = vrot.slane %v631, 6
    %v11335 = vrot.slane %v631, 7
    %v11336 = vrot.slane %v632, 1
    %v11337 = vrot.slane %v632, 2
    %v11338 = vrot.slane %v632, 3
    %v11339 = vrot.slane %v632, 4
    %v11340 = vrot.slane %v632, 5
    %v11341 = vrot.slane %v632, 6
    %v11342 = vrot.slane %v632, 7
    %v11343 = vrot.slane %v633, 1
    %v11344 = vrot.slane %v633, 2
    %v11345 = vrot.slane %v633, 3
    %v11346 = vrot.slane %v633, 4
    %v11347 = vrot.slane %v633, 5
    %v11348 = vrot.slane %v633, 6
    %v11349 = vrot.slane %v633, 7
    %v11350 = vrot.slane %v634, 1
    %v11351 = vrot.slane %v634, 2
    %v11352 = vrot.slane %v634, 3
    %v11353 = vrot.slane %v634, 4
    %v11354 = vrot.slane %v634, 5
    %v11355 = vrot.slane %v634, 6
    %v11356 = vrot.slane %v634, 7
    %v11357 = vrot.slane %v635, 1
    %v11358 = vrot.slane %v635, 2
    %v11359 = vrot.slane %v635, 3
    %v11360 = vrot.slane %v635, 4
    %v11361 = vrot.slane %v635, 5
    %v11362 = vrot.slane %v635, 6
    %v11363 = vrot.slane %v635, 7
    %v11364 = vrot.slane %v636, 1
    %v11365 = vrot.slane %v636, 2
    %v11366 = vrot.slane %v636, 3
    %v11367 = vrot.slane %v636, 4
    %v11368 = vrot.slane %v636, 5
    %v11369 = vrot.slane %v636, 6
    %v11370 = vrot.slane %v636, 7
    %v11371 = vrot.slane %v637, 1
    %v11372 = vrot.slane %v637, 2
    %v11373 = vrot.slane %v637, 3
    %v11374 = vrot.slane %v637, 4
    %v11375 = vrot.slane %v637, 5
    %v11376 = vrot.slane %v637, 6
    %v11377 = vrot.slane %v637, 7
    %v11634 = vadd.f32 %v9336, %v606
    %v11635 = vadd.f32 %v9343, %v11154
    %v11636 = vadd.f32 %v9350, %v11155
    %v11637 = vadd.f32 %v9357, %v11156
    %v11638 = vadd.f32 %v9364, %v11157
    %v11639 = vadd.f32 %v9371, %v11158
    %v11640 = vadd.f32 %v9378, %v11159
    %v11641 = vadd.f32 %v9385, %v11160
    %v11642 = vadd.f32 %v9392, %v607
    %v11643 = vadd.f32 %v9399, %v11161
    %v11644 = vadd.f32 %v9406, %v11162
    %v11645 = vadd.f32 %v9413, %v11163
    %v11646 = vadd.f32 %v9420, %v11164
    %v11647 = vadd.f32 %v9427, %v11165
    %v11648 = vadd.f32 %v9434, %v11166
    %v11649 = vadd.f32 %v9441, %v11167
    %v11650 = vadd.f32 %v9448, %v608
    %v11651 = vadd.f32 %v9455, %v11168
    %v11652 = vadd.f32 %v9462, %v11169
    %v11653 = vadd.f32 %v9469, %v11170
    %v11654 = vadd.f32 %v9476, %v11171
    %v11655 = vadd.f32 %v9483, %v11172
    %v11656 = vadd.f32 %v9490, %v11173
    %v11657 = vadd.f32 %v9497, %v11174
    %v11658 = vadd.f32 %v9504, %v609
    %v11659 = vadd.f32 %v9511, %v11175
    %v11660 = vadd.f32 %v9518, %v11176
    %v11661 = vadd.f32 %v9525, %v11177
    %v11662 = vadd.f32 %v9532, %v11178
    %v11663 = vadd.f32 %v9539, %v11179
    %v11664 = vadd.f32 %v9546, %v11180
    %v11665 = vadd.f32 %v9553, %v11181
    %v11666 = vadd.f32 %v9560, %v610
    %v11667 = vadd.f32 %v9567, %v11182
    %v11668 = vadd.f32 %v9574, %v11183
    %v11669 = vadd.f32 %v9581, %v11184
    %v11670 = vadd.f32 %v9588, %v11185
    %v11671 = vadd.f32 %v9595, %v11186
    %v11672 = vadd.f32 %v9602, %v11187
    %v11673 = vadd.f32 %v9609, %v11188
    %v11674 = vadd.f32 %v9616, %v611
    %v11675 = vadd.f32 %v9623, %v11189
    %v11676 = vadd.f32 %v9630, %v11190
    %v11677 = vadd.f32 %v9637, %v11191
    %v11678 = vadd.f32 %v9644, %v11192
    %v11679 = vadd.f32 %v9651, %v11193
    %v11680 = vadd.f32 %v9658, %v11194
    %v11681 = vadd.f32 %v9665, %v11195
    %v11682 = vadd.f32 %v9672, %v612
    %v11683 = vadd.f32 %v9679, %v11196
    %v11684 = vadd.f32 %v9686, %v11197
    %v11685 = vadd.f32 %v9693, %v11198
    %v11686 = vadd.f32 %v9700, %v11199
    %v11687 = vadd.f32 %v9707, %v11200
    %v11688 = vadd.f32 %v9714, %v11201
    %v11689 = vadd.f32 %v9721, %v11202
    %v11690 = vadd.f32 %v9728, %v613
    %v11691 = vadd.f32 %v9735, %v11203
    %v11692 = vadd.f32 %v9742, %v11204
    %v11693 = vadd.f32 %v9749, %v11205
    %v11694 = vadd.f32 %v9756, %v11206
    %v11695 = vadd.f32 %v9763, %v11207
    %v11696 = vadd.f32 %v9770, %v11208
    %v11697 = vadd.f32 %v9777, %v11209
    %v11698 = vadd.f32 %v9784, %v614
    %v11699 = vadd.f32 %v9791, %v11210
    %v11700 = vadd.f32 %v9798, %v11211
    %v11701 = vadd.f32 %v9805, %v11212
    %v11702 = vadd.f32 %v9812, %v11213
    %v11703 = vadd.f32 %v9819, %v11214
    %v11704 = vadd.f32 %v9826, %v11215
    %v11705 = vadd.f32 %v9833, %v11216
    %v11706 = vadd.f32 %v9840, %v615
    %v11707 = vadd.f32 %v9847, %v11217
    %v11708 = vadd.f32 %v9854, %v11218
    %v11709 = vadd.f32 %v9861, %v11219
    %v11710 = vadd.f32 %v9868, %v11220
    %v11711 = vadd.f32 %v9875, %v11221
    %v11712 = vadd.f32 %v9882, %v11222
    %v11713 = vadd.f32 %v9889, %v11223
    %v11714 = vadd.f32 %v9896, %v616
    %v11715 = vadd.f32 %v9903, %v11224
    %v11716 = vadd.f32 %v9910, %v11225
    %v11717 = vadd.f32 %v9917, %v11226
    %v11718 = vadd.f32 %v9924, %v11227
    %v11719 = vadd.f32 %v9931, %v11228
    %v11720 = vadd.f32 %v9938, %v11229
    %v11721 = vadd.f32 %v9945, %v11230
    %v11722 = vadd.f32 %v9952, %v617
    %v11723 = vadd.f32 %v9959, %v11231
    %v11724 = vadd.f32 %v9966, %v11232
    %v11725 = vadd.f32 %v9973, %v11233
    %v11726 = vadd.f32 %v9980, %v11234
    %v11727 = vadd.f32 %v9987, %v11235
    %v11728 = vadd.f32 %v9994, %v11236
    %v11729 = vadd.f32 %v10001, %v11237
    %v11730 = vadd.f32 %v10008, %v618
    %v11731 = vadd.f32 %v10015, %v11238
    %v11732 = vadd.f32 %v10022, %v11239
    %v11733 = vadd.f32 %v10029, %v11240
    %v11734 = vadd.f32 %v10036, %v11241
    %v11735 = vadd.f32 %v10043, %v11242
    %v11736 = vadd.f32 %v10050, %v11243
    %v11737 = vadd.f32 %v10057, %v11244
    %v11738 = vadd.f32 %v10064, %v619
    %v11739 = vadd.f32 %v10071, %v11245
    %v11740 = vadd.f32 %v10078, %v11246
    %v11741 = vadd.f32 %v10085, %v11247
    %v11742 = vadd.f32 %v10092, %v11248
    %v11743 = vadd.f32 %v10099, %v11249
    %v11744 = vadd.f32 %v10106, %v11250
    %v11745 = vadd.f32 %v10113, %v11251
    %v11746 = vadd.f32 %v10120, %v620
    %v11747 = vadd.f32 %v10127, %v11252
    %v11748 = vadd.f32 %v10134, %v11253
    %v11749 = vadd.f32 %v10141, %v11254
    %v11750 = vadd.f32 %v10148, %v11255
    %v11751 = vadd.f32 %v10155, %v11256
    %v11752 = vadd.f32 %v10162, %v11257
    %v11753 = vadd.f32 %v10169, %v11258
    %v11754 = vadd.f32 %v10176, %v621
    %v11755 = vadd.f32 %v10183, %v11259
    %v11756 = vadd.f32 %v10190, %v11260
    %v11757 = vadd.f32 %v10197, %v11261
    %v11758 = vadd.f32 %v10204, %v11262
    %v11759 = vadd.f32 %v10211, %v11263
    %v11760 = vadd.f32 %v10218, %v11264
    %v11761 = vadd.f32 %v10225, %v11265
    %v11762 = vadd.f32 %v10232, %v622
    %v11763 = vadd.f32 %v10239, %v11266
    %v11764 = vadd.f32 %v10246, %v11267
    %v11765 = vadd.f32 %v10253, %v11268
    %v11766 = vadd.f32 %v10260, %v11269
    %v11767 = vadd.f32 %v10267, %v11270
    %v11768 = vadd.f32 %v10274, %v11271
    %v11769 = vadd.f32 %v10281, %v11272
    %v11770 = vadd.f32 %v10288, %v623
    %v11771 = vadd.f32 %v10295, %v11273
    %v11772 = vadd.f32 %v10302, %v11274
    %v11773 = vadd.f32 %v10309, %v11275
    %v11774 = vadd.f32 %v10316, %v11276
    %v11775 = vadd.f32 %v10323, %v11277
    %v11776 = vadd.f32 %v10330, %v11278
    %v11777 = vadd.f32 %v10337, %v11279
    %v11778 = vadd.f32 %v10344, %v624
    %v11779 = vadd.f32 %v10351, %v11280
    %v11780 = vadd.f32 %v10358, %v11281
    %v11781 = vadd.f32 %v10365, %v11282
    %v11782 = vadd.f32 %v10372, %v11283
    %v11783 = vadd.f32 %v10379, %v11284
    %v11784 = vadd.f32 %v10386, %v11285
    %v11785 = vadd.f32 %v10393, %v11286
    %v11786 = vadd.f32 %v10400, %v625
    %v11787 = vadd.f32 %v10407, %v11287
    %v11788 = vadd.f32 %v10414, %v11288
    %v11789 = vadd.f32 %v10421, %v11289
    %v11790 = vadd.f32 %v10428, %v11290
    %v11791 = vadd.f32 %v10435, %v11291
    %v11792 = vadd.f32 %v10442, %v11292
    %v11793 = vadd.f32 %v10449, %v11293
    %v11794 = vadd.f32 %v10456, %v626
    %v11795 = vadd.f32 %v10463, %v11294
    %v11796 = vadd.f32 %v10470, %v11295
    %v11797 = vadd.f32 %v10477, %v11296
    %v11798 = vadd.f32 %v10484, %v11297
    %v11799 = vadd.f32 %v10491, %v11298
    %v11800 = vadd.f32 %v10498, %v11299
    %v11801 = vadd.f32 %v10505, %v11300
    %v11802 = vadd.f32 %v10512, %v627
    %v11803 = vadd.f32 %v10519, %v11301
    %v11804 = vadd.f32 %v10526, %v11302
    %v11805 = vadd.f32 %v10533, %v11303
    %v11806 = vadd.f32 %v10540, %v11304
    %v11807 = vadd.f32 %v10547, %v11305
    %v11808 = vadd.f32 %v10554, %v11306
    %v11809 = vadd.f32 %v10561, %v11307
    %v11810 = vadd.f32 %v10568, %v628
    %v11811 = vadd.f32 %v10575, %v11308
    %v11812 = vadd.f32 %v10582, %v11309
    %v11813 = vadd.f32 %v10589, %v11310
    %v11814 = vadd.f32 %v10596, %v11311
    %v11815 = vadd.f32 %v10603, %v11312
    %v11816 = vadd.f32 %v10610, %v11313
    %v11817 = vadd.f32 %v10617, %v11314
    %v11818 = vadd.f32 %v10624, %v629
    %v11819 = vadd.f32 %v10631, %v11315
    %v11820 = vadd.f32 %v10638, %v11316
    %v11821 = vadd.f32 %v10645, %v11317
    %v11822 = vadd.f32 %v10652, %v11318
    %v11823 = vadd.f32 %v10659, %v11319
    %v11824 = vadd.f32 %v10666, %v11320
    %v11825 = vadd.f32 %v10673, %v11321
    %v11826 = vadd.f32 %v10680, %v630
    %v11827 = vadd.f32 %v10687, %v11322
    %v11828 = vadd.f32 %v10694, %v11323
    %v11829 = vadd.f32 %v10701, %v11324
    %v11830 = vadd.f32 %v10708, %v11325
    %v11831 = vadd.f32 %v10715, %v11326
    %v11832 = vadd.f32 %v10722, %v11327
    %v11833 = vadd.f32 %v10729, %v11328
    %v11834 = vadd.f32 %v10736, %v631
    %v11835 = vadd.f32 %v10743, %v11329
    %v11836 = vadd.f32 %v10750, %v11330
    %v11837 = vadd.f32 %v10757, %v11331
    %v11838 = vadd.f32 %v10764, %v11332
    %v11839 = vadd.f32 %v10771, %v11333
    %v11840 = vadd.f32 %v10778, %v11334
    %v11841 = vadd.f32 %v10785, %v11335
    %v11842 = vadd.f32 %v10792, %v632
    %v11843 = vadd.f32 %v10799, %v11336
    %v11844 = vadd.f32 %v10806, %v11337
    %v11845 = vadd.f32 %v10813, %v11338
    %v11846 = vadd.f32 %v10820, %v11339
    %v11847 = vadd.f32 %v10827, %v11340
    %v11848 = vadd.f32 %v10834, %v11341
    %v11849 = vadd.f32 %v10841, %v11342
    %v11850 = vadd.f32 %v10848, %v633
    %v11851 = vadd.f32 %v10855, %v11343
    %v11852 = vadd.f32 %v10862, %v11344
    %v11853 = vadd.f32 %v10869, %v11345
    %v11854 = vadd.f32 %v10876, %v11346
    %v11855 = vadd.f32 %v10883, %v11347
    %v11856 = vadd.f32 %v10890, %v11348
    %v11857 = vadd.f32 %v10897, %v11349
    %v11858 = vadd.f32 %v10904, %v634
    %v11859 = vadd.f32 %v10911, %v11350
    %v11860 = vadd.f32 %v10918, %v11351
    %v11861 = vadd.f32 %v10925, %v11352
    %v11862 = vadd.f32 %v10932, %v11353
    %v11863 = vadd.f32 %v10939, %v11354
    %v11864 = vadd.f32 %v10946, %v11355
    %v11865 = vadd.f32 %v10953, %v11356
    %v11866 = vadd.f32 %v10960, %v635
    %v11867 = vadd.f32 %v10967, %v11357
    %v11868 = vadd.f32 %v10974, %v11358
    %v11869 = vadd.f32 %v10981, %v11359
    %v11870 = vadd.f32 %v10988, %v11360
    %v11871 = vadd.f32 %v10995, %v11361
    %v11872 = vadd.f32 %v11002, %v11362
    %v11873 = vadd.f32 %v11009, %v11363
    %v11874 = vadd.f32 %v11016, %v636
    %v11875 = vadd.f32 %v11023, %v11364
    %v11876 = vadd.f32 %v11030, %v11365
    %v11877 = vadd.f32 %v11037, %v11366
    %v11878 = vadd.f32 %v11044, %v11367
    %v11879 = vadd.f32 %v11051, %v11368
    %v11880 = vadd.f32 %v11058, %v11369
    %v11881 = vadd.f32 %v11065, %v11370
    %v11882 = vadd.f32 %v11072, %v637
    %v11883 = vadd.f32 %v11079, %v11371
    %v11884 = vadd.f32 %v11086, %v11372
    %v11885 = vadd.f32 %v11093, %v11373
    %v11886 = vadd.f32 %v11100, %v11374
    %v11887 = vadd.f32 %v11107, %v11375
    %v11888 = vadd.f32 %v11114, %v11376
    %v11889 = vadd.f32 %v11121, %v11377
    %vm11890 = vcmp.gt.f32.partialorder %v11634, 0.0
    %vm11891 = vcmp.gt.f32.partialorder %v11635, 0.0
    %vm11892 = vcmp.gt.f32.partialorder %v11636, 0.0
    %vm11893 = vcmp.gt.f32.partialorder %v11637, 0.0
    %vm11894 = vcmp.gt.f32.partialorder %v11638, 0.0
    %vm11895 = vcmp.gt.f32.partialorder %v11639, 0.0
    %vm11896 = vcmp.gt.f32.partialorder %v11640, 0.0
    %vm11897 = vcmp.gt.f32.partialorder %v11641, 0.0
    %vm11898 = vcmp.gt.f32.partialorder %v11642, 0.0
    %vm11899 = vcmp.gt.f32.partialorder %v11643, 0.0
    %vm11900 = vcmp.gt.f32.partialorder %v11644, 0.0
    %vm11901 = vcmp.gt.f32.partialorder %v11645, 0.0
    %vm11902 = vcmp.gt.f32.partialorder %v11646, 0.0
    %vm11903 = vcmp.gt.f32.partialorder %v11647, 0.0
    %vm11904 = vcmp.gt.f32.partialorder %v11648, 0.0
    %vm11905 = vcmp.gt.f32.partialorder %v11649, 0.0
    %vm11906 = vcmp.gt.f32.partialorder %v11650, 0.0
    %vm11907 = vcmp.gt.f32.partialorder %v11651, 0.0
    %vm11908 = vcmp.gt.f32.partialorder %v11652, 0.0
    %vm11909 = vcmp.gt.f32.partialorder %v11653, 0.0
    %vm11910 = vcmp.gt.f32.partialorder %v11654, 0.0
    %vm11911 = vcmp.gt.f32.partialorder %v11655, 0.0
    %vm11912 = vcmp.gt.f32.partialorder %v11656, 0.0
    %vm11913 = vcmp.gt.f32.partialorder %v11657, 0.0
    %vm11914 = vcmp.gt.f32.partialorder %v11658, 0.0
    %vm11915 = vcmp.gt.f32.partialorder %v11659, 0.0
    %vm11916 = vcmp.gt.f32.partialorder %v11660, 0.0
    %vm11917 = vcmp.gt.f32.partialorder %v11661, 0.0
    %vm11918 = vcmp.gt.f32.partialorder %v11662, 0.0
    %vm11919 = vcmp.gt.f32.partialorder %v11663, 0.0
    %vm11920 = vcmp.gt.f32.partialorder %v11664, 0.0
    %vm11921 = vcmp.gt.f32.partialorder %v11665, 0.0
    %vm11922 = vcmp.gt.f32.partialorder %v11666, 0.0
    %vm11923 = vcmp.gt.f32.partialorder %v11667, 0.0
    %vm11924 = vcmp.gt.f32.partialorder %v11668, 0.0
    %vm11925 = vcmp.gt.f32.partialorder %v11669, 0.0
    %vm11926 = vcmp.gt.f32.partialorder %v11670, 0.0
    %vm11927 = vcmp.gt.f32.partialorder %v11671, 0.0
    %vm11928 = vcmp.gt.f32.partialorder %v11672, 0.0
    %vm11929 = vcmp.gt.f32.partialorder %v11673, 0.0
    %vm11930 = vcmp.gt.f32.partialorder %v11674, 0.0
    %vm11931 = vcmp.gt.f32.partialorder %v11675, 0.0
    %vm11932 = vcmp.gt.f32.partialorder %v11676, 0.0
    %vm11933 = vcmp.gt.f32.partialorder %v11677, 0.0
    %vm11934 = vcmp.gt.f32.partialorder %v11678, 0.0
    %vm11935 = vcmp.gt.f32.partialorder %v11679, 0.0
    %vm11936 = vcmp.gt.f32.partialorder %v11680, 0.0
    %vm11937 = vcmp.gt.f32.partialorder %v11681, 0.0
    %vm11938 = vcmp.gt.f32.partialorder %v11682, 0.0
    %vm11939 = vcmp.gt.f32.partialorder %v11683, 0.0
    %vm11940 = vcmp.gt.f32.partialorder %v11684, 0.0
    %vm11941 = vcmp.gt.f32.partialorder %v11685, 0.0
    %vm11942 = vcmp.gt.f32.partialorder %v11686, 0.0
    %vm11943 = vcmp.gt.f32.partialorder %v11687, 0.0
    %vm11944 = vcmp.gt.f32.partialorder %v11688, 0.0
    %vm11945 = vcmp.gt.f32.partialorder %v11689, 0.0
    %vm11946 = vcmp.gt.f32.partialorder %v11690, 0.0
    %vm11947 = vcmp.gt.f32.partialorder %v11691, 0.0
    %vm11948 = vcmp.gt.f32.partialorder %v11692, 0.0
    %vm11949 = vcmp.gt.f32.partialorder %v11693, 0.0
    %vm11950 = vcmp.gt.f32.partialorder %v11694, 0.0
    %vm11951 = vcmp.gt.f32.partialorder %v11695, 0.0
    %vm11952 = vcmp.gt.f32.partialorder %v11696, 0.0
    %vm11953 = vcmp.gt.f32.partialorder %v11697, 0.0
    %vm11954 = vcmp.gt.f32.partialorder %v11698, 0.0
    %vm11955 = vcmp.gt.f32.partialorder %v11699, 0.0
    %vm11956 = vcmp.gt.f32.partialorder %v11700, 0.0
    %vm11957 = vcmp.gt.f32.partialorder %v11701, 0.0
    %vm11958 = vcmp.gt.f32.partialorder %v11702, 0.0
    %vm11959 = vcmp.gt.f32.partialorder %v11703, 0.0
    %vm11960 = vcmp.gt.f32.partialorder %v11704, 0.0
    %vm11961 = vcmp.gt.f32.partialorder %v11705, 0.0
    %vm11962 = vcmp.gt.f32.partialorder %v11706, 0.0
    %vm11963 = vcmp.gt.f32.partialorder %v11707, 0.0
    %vm11964 = vcmp.gt.f32.partialorder %v11708, 0.0
    %vm11965 = vcmp.gt.f32.partialorder %v11709, 0.0
    %vm11966 = vcmp.gt.f32.partialorder %v11710, 0.0
    %vm11967 = vcmp.gt.f32.partialorder %v11711, 0.0
    %vm11968 = vcmp.gt.f32.partialorder %v11712, 0.0
    %vm11969 = vcmp.gt.f32.partialorder %v11713, 0.0
    %vm11970 = vcmp.gt.f32.partialorder %v11714, 0.0
    %vm11971 = vcmp.gt.f32.partialorder %v11715, 0.0
    %vm11972 = vcmp.gt.f32.partialorder %v11716, 0.0
    %vm11973 = vcmp.gt.f32.partialorder %v11717, 0.0
    %vm11974 = vcmp.gt.f32.partialorder %v11718, 0.0
    %vm11975 = vcmp.gt.f32.partialorder %v11719, 0.0
    %vm11976 = vcmp.gt.f32.partialorder %v11720, 0.0
    %vm11977 = vcmp.gt.f32.partialorder %v11721, 0.0
    %vm11978 = vcmp.gt.f32.partialorder %v11722, 0.0
    %vm11979 = vcmp.gt.f32.partialorder %v11723, 0.0
    %vm11980 = vcmp.gt.f32.partialorder %v11724, 0.0
    %vm11981 = vcmp.gt.f32.partialorder %v11725, 0.0
    %vm11982 = vcmp.gt.f32.partialorder %v11726, 0.0
    %vm11983 = vcmp.gt.f32.partialorder %v11727, 0.0
    %vm11984 = vcmp.gt.f32.partialorder %v11728, 0.0
    %vm11985 = vcmp.gt.f32.partialorder %v11729, 0.0
    %vm11986 = vcmp.gt.f32.partialorder %v11730, 0.0
    %vm11987 = vcmp.gt.f32.partialorder %v11731, 0.0
    %vm11988 = vcmp.gt.f32.partialorder %v11732, 0.0
    %vm11989 = vcmp.gt.f32.partialorder %v11733, 0.0
    %vm11990 = vcmp.gt.f32.partialorder %v11734, 0.0
    %vm11991 = vcmp.gt.f32.partialorder %v11735, 0.0
    %vm11992 = vcmp.gt.f32.partialorder %v11736, 0.0
    %vm11993 = vcmp.gt.f32.partialorder %v11737, 0.0
    %vm11994 = vcmp.gt.f32.partialorder %v11738, 0.0
    %vm11995 = vcmp.gt.f32.partialorder %v11739, 0.0
    %vm11996 = vcmp.gt.f32.partialorder %v11740, 0.0
    %vm11997 = vcmp.gt.f32.partialorder %v11741, 0.0
    %vm11998 = vcmp.gt.f32.partialorder %v11742, 0.0
    %vm11999 = vcmp.gt.f32.partialorder %v11743, 0.0
    %vm12000 = vcmp.gt.f32.partialorder %v11744, 0.0
    %vm12001 = vcmp.gt.f32.partialorder %v11745, 0.0
    %vm12002 = vcmp.gt.f32.partialorder %v11746, 0.0
    %vm12003 = vcmp.gt.f32.partialorder %v11747, 0.0
    %vm12004 = vcmp.gt.f32.partialorder %v11748, 0.0
    %vm12005 = vcmp.gt.f32.partialorder %v11749, 0.0
    %vm12006 = vcmp.gt.f32.partialorder %v11750, 0.0
    %vm12007 = vcmp.gt.f32.partialorder %v11751, 0.0
    %vm12008 = vcmp.gt.f32.partialorder %v11752, 0.0
    %vm12009 = vcmp.gt.f32.partialorder %v11753, 0.0
    %vm12010 = vcmp.gt.f32.partialorder %v11754, 0.0
    %vm12011 = vcmp.gt.f32.partialorder %v11755, 0.0
    %vm12012 = vcmp.gt.f32.partialorder %v11756, 0.0
    %vm12013 = vcmp.gt.f32.partialorder %v11757, 0.0
    %vm12014 = vcmp.gt.f32.partialorder %v11758, 0.0
    %vm12015 = vcmp.gt.f32.partialorder %v11759, 0.0
    %vm12016 = vcmp.gt.f32.partialorder %v11760, 0.0
    %vm12017 = vcmp.gt.f32.partialorder %v11761, 0.0
    %vm12018 = vcmp.gt.f32.partialorder %v11762, 0.0
    %vm12019 = vcmp.gt.f32.partialorder %v11763, 0.0
    %vm12020 = vcmp.gt.f32.partialorder %v11764, 0.0
    %vm12021 = vcmp.gt.f32.partialorder %v11765, 0.0
    %vm12022 = vcmp.gt.f32.partialorder %v11766, 0.0
    %vm12023 = vcmp.gt.f32.partialorder %v11767, 0.0
    %vm12024 = vcmp.gt.f32.partialorder %v11768, 0.0
    %vm12025 = vcmp.gt.f32.partialorder %v11769, 0.0
    %vm12026 = vcmp.gt.f32.partialorder %v11770, 0.0
    %vm12027 = vcmp.gt.f32.partialorder %v11771, 0.0
    %vm12028 = vcmp.gt.f32.partialorder %v11772, 0.0
    %vm12029 = vcmp.gt.f32.partialorder %v11773, 0.0
    %vm12030 = vcmp.gt.f32.partialorder %v11774, 0.0
    %vm12031 = vcmp.gt.f32.partialorder %v11775, 0.0
    %vm12032 = vcmp.gt.f32.partialorder %v11776, 0.0
    %vm12033 = vcmp.gt.f32.partialorder %v11777, 0.0
    %vm12034 = vcmp.gt.f32.partialorder %v11778, 0.0
    %vm12035 = vcmp.gt.f32.partialorder %v11779, 0.0
    %vm12036 = vcmp.gt.f32.partialorder %v11780, 0.0
    %vm12037 = vcmp.gt.f32.partialorder %v11781, 0.0
    %vm12038 = vcmp.gt.f32.partialorder %v11782, 0.0
    %vm12039 = vcmp.gt.f32.partialorder %v11783, 0.0
    %vm12040 = vcmp.gt.f32.partialorder %v11784, 0.0
    %vm12041 = vcmp.gt.f32.partialorder %v11785, 0.0
    %vm12042 = vcmp.gt.f32.partialorder %v11786, 0.0
    %vm12043 = vcmp.gt.f32.partialorder %v11787, 0.0
    %vm12044 = vcmp.gt.f32.partialorder %v11788, 0.0
    %vm12045 = vcmp.gt.f32.partialorder %v11789, 0.0
    %vm12046 = vcmp.gt.f32.partialorder %v11790, 0.0
    %vm12047 = vcmp.gt.f32.partialorder %v11791, 0.0
    %vm12048 = vcmp.gt.f32.partialorder %v11792, 0.0
    %vm12049 = vcmp.gt.f32.partialorder %v11793, 0.0
    %vm12050 = vcmp.gt.f32.partialorder %v11794, 0.0
    %vm12051 = vcmp.gt.f32.partialorder %v11795, 0.0
    %vm12052 = vcmp.gt.f32.partialorder %v11796, 0.0
    %vm12053 = vcmp.gt.f32.partialorder %v11797, 0.0
    %vm12054 = vcmp.gt.f32.partialorder %v11798, 0.0
    %vm12055 = vcmp.gt.f32.partialorder %v11799, 0.0
    %vm12056 = vcmp.gt.f32.partialorder %v11800, 0.0
    %vm12057 = vcmp.gt.f32.partialorder %v11801, 0.0
    %vm12058 = vcmp.gt.f32.partialorder %v11802, 0.0
    %vm12059 = vcmp.gt.f32.partialorder %v11803, 0.0
    %vm12060 = vcmp.gt.f32.partialorder %v11804, 0.0
    %vm12061 = vcmp.gt.f32.partialorder %v11805, 0.0
    %vm12062 = vcmp.gt.f32.partialorder %v11806, 0.0
    %vm12063 = vcmp.gt.f32.partialorder %v11807, 0.0
    %vm12064 = vcmp.gt.f32.partialorder %v11808, 0.0
    %vm12065 = vcmp.gt.f32.partialorder %v11809, 0.0
    %vm12066 = vcmp.gt.f32.partialorder %v11810, 0.0
    %vm12067 = vcmp.gt.f32.partialorder %v11811, 0.0
    %vm12068 = vcmp.gt.f32.partialorder %v11812, 0.0
    %vm12069 = vcmp.gt.f32.partialorder %v11813, 0.0
    %vm12070 = vcmp.gt.f32.partialorder %v11814, 0.0
    %vm12071 = vcmp.gt.f32.partialorder %v11815, 0.0
    %vm12072 = vcmp.gt.f32.partialorder %v11816, 0.0
    %vm12073 = vcmp.gt.f32.partialorder %v11817, 0.0
    %vm12074 = vcmp.gt.f32.partialorder %v11818, 0.0
    %vm12075 = vcmp.gt.f32.partialorder %v11819, 0.0
    %vm12076 = vcmp.gt.f32.partialorder %v11820, 0.0
    %vm12077 = vcmp.gt.f32.partialorder %v11821, 0.0
    %vm12078 = vcmp.gt.f32.partialorder %v11822, 0.0
    %vm12079 = vcmp.gt.f32.partialorder %v11823, 0.0
    %vm12080 = vcmp.gt.f32.partialorder %v11824, 0.0
    %vm12081 = vcmp.gt.f32.partialorder %v11825, 0.0
    %vm12082 = vcmp.gt.f32.partialorder %v11826, 0.0
    %vm12083 = vcmp.gt.f32.partialorder %v11827, 0.0
    %vm12084 = vcmp.gt.f32.partialorder %v11828, 0.0
    %vm12085 = vcmp.gt.f32.partialorder %v11829, 0.0
    %vm12086 = vcmp.gt.f32.partialorder %v11830, 0.0
    %vm12087 = vcmp.gt.f32.partialorder %v11831, 0.0
    %vm12088 = vcmp.gt.f32.partialorder %v11832, 0.0
    %vm12089 = vcmp.gt.f32.partialorder %v11833, 0.0
    %vm12090 = vcmp.gt.f32.partialorder %v11834, 0.0
    %vm12091 = vcmp.gt.f32.partialorder %v11835, 0.0
    %vm12092 = vcmp.gt.f32.partialorder %v11836, 0.0
    %vm12093 = vcmp.gt.f32.partialorder %v11837, 0.0
    %vm12094 = vcmp.gt.f32.partialorder %v11838, 0.0
    %vm12095 = vcmp.gt.f32.partialorder %v11839, 0.0
    %vm12096 = vcmp.gt.f32.partialorder %v11840, 0.0
    %vm12097 = vcmp.gt.f32.partialorder %v11841, 0.0
    %vm12098 = vcmp.gt.f32.partialorder %v11842, 0.0
    %vm12099 = vcmp.gt.f32.partialorder %v11843, 0.0
    %vm12100 = vcmp.gt.f32.partialorder %v11844, 0.0
    %vm12101 = vcmp.gt.f32.partialorder %v11845, 0.0
    %vm12102 = vcmp.gt.f32.partialorder %v11846, 0.0
    %vm12103 = vcmp.gt.f32.partialorder %v11847, 0.0
    %vm12104 = vcmp.gt.f32.partialorder %v11848, 0.0
    %vm12105 = vcmp.gt.f32.partialorder %v11849, 0.0
    %vm12106 = vcmp.gt.f32.partialorder %v11850, 0.0
    %vm12107 = vcmp.gt.f32.partialorder %v11851, 0.0
    %vm12108 = vcmp.gt.f32.partialorder %v11852, 0.0
    %vm12109 = vcmp.gt.f32.partialorder %v11853, 0.0
    %vm12110 = vcmp.gt.f32.partialorder %v11854, 0.0
    %vm12111 = vcmp.gt.f32.partialorder %v11855, 0.0
    %vm12112 = vcmp.gt.f32.partialorder %v11856, 0.0
    %vm12113 = vcmp.gt.f32.partialorder %v11857, 0.0
    %vm12114 = vcmp.gt.f32.partialorder %v11858, 0.0
    %vm12115 = vcmp.gt.f32.partialorder %v11859, 0.0
    %vm12116 = vcmp.gt.f32.partialorder %v11860, 0.0
    %vm12117 = vcmp.gt.f32.partialorder %v11861, 0.0
    %vm12118 = vcmp.gt.f32.partialorder %v11862, 0.0
    %vm12119 = vcmp.gt.f32.partialorder %v11863, 0.0
    %vm12120 = vcmp.gt.f32.partialorder %v11864, 0.0
    %vm12121 = vcmp.gt.f32.partialorder %v11865, 0.0
    %vm12122 = vcmp.gt.f32.partialorder %v11866, 0.0
    %vm12123 = vcmp.gt.f32.partialorder %v11867, 0.0
    %vm12124 = vcmp.gt.f32.partialorder %v11868, 0.0
    %vm12125 = vcmp.gt.f32.partialorder %v11869, 0.0
    %vm12126 = vcmp.gt.f32.partialorder %v11870, 0.0
    %vm12127 = vcmp.gt.f32.partialorder %v11871, 0.0
    %vm12128 = vcmp.gt.f32.partialorder %v11872, 0.0
    %vm12129 = vcmp.gt.f32.partialorder %v11873, 0.0
    %vm12130 = vcmp.gt.f32.partialorder %v11874, 0.0
    %vm12131 = vcmp.gt.f32.partialorder %v11875, 0.0
    %vm12132 = vcmp.gt.f32.partialorder %v11876, 0.0
    %vm12133 = vcmp.gt.f32.partialorder %v11877, 0.0
    %vm12134 = vcmp.gt.f32.partialorder %v11878, 0.0
    %vm12135 = vcmp.gt.f32.partialorder %v11879, 0.0
    %vm12136 = vcmp.gt.f32.partialorder %v11880, 0.0
    %vm12137 = vcmp.gt.f32.partialorder %v11881, 0.0
    %vm12138 = vcmp.gt.f32.partialorder %v11882, 0.0
    %vm12139 = vcmp.gt.f32.partialorder %v11883, 0.0
    %vm12140 = vcmp.gt.f32.partialorder %v11884, 0.0
    %vm12141 = vcmp.gt.f32.partialorder %v11885, 0.0
    %vm12142 = vcmp.gt.f32.partialorder %v11886, 0.0
    %vm12143 = vcmp.gt.f32.partialorder %v11887, 0.0
    %vm12144 = vcmp.gt.f32.partialorder %v11888, 0.0
    %vm12145 = vcmp.gt.f32.partialorder %v11889, 0.0
    %v12146 = vmin.f32 %v11634, 0.0
    %v12147 = vmin.f32 %v11635, 0.0
    %v12148 = vmin.f32 %v11636, 0.0
    %v12149 = vmin.f32 %v11637, 0.0
    %v12150 = vmin.f32 %v11638, 0.0
    %v12151 = vmin.f32 %v11639, 0.0
    %v12152 = vmin.f32 %v11640, 0.0
    %v12153 = vmin.f32 %v11641, 0.0
    %v12154 = vmin.f32 %v11642, 0.0
    %v12155 = vmin.f32 %v11643, 0.0
    %v12156 = vmin.f32 %v11644, 0.0
    %v12157 = vmin.f32 %v11645, 0.0
    %v12158 = vmin.f32 %v11646, 0.0
    %v12159 = vmin.f32 %v11647, 0.0
    %v12160 = vmin.f32 %v11648, 0.0
    %v12161 = vmin.f32 %v11649, 0.0
    %v12162 = vmin.f32 %v11650, 0.0
    %v12163 = vmin.f32 %v11651, 0.0
    %v12164 = vmin.f32 %v11652, 0.0
    %v12165 = vmin.f32 %v11653, 0.0
    %v12166 = vmin.f32 %v11654, 0.0
    %v12167 = vmin.f32 %v11655, 0.0
    %v12168 = vmin.f32 %v11656, 0.0
    %v12169 = vmin.f32 %v11657, 0.0
    %v12170 = vmin.f32 %v11658, 0.0
    %v12171 = vmin.f32 %v11659, 0.0
    %v12172 = vmin.f32 %v11660, 0.0
    %v12173 = vmin.f32 %v11661, 0.0
    %v12174 = vmin.f32 %v11662, 0.0
    %v12175 = vmin.f32 %v11663, 0.0
    %v12176 = vmin.f32 %v11664, 0.0
    %v12177 = vmin.f32 %v11665, 0.0
    %v12178 = vmin.f32 %v11666, 0.0
    %v12179 = vmin.f32 %v11667, 0.0
    %v12180 = vmin.f32 %v11668, 0.0
    %v12181 = vmin.f32 %v11669, 0.0
    %v12182 = vmin.f32 %v11670, 0.0
    %v12183 = vmin.f32 %v11671, 0.0
    %v12184 = vmin.f32 %v11672, 0.0
    %v12185 = vmin.f32 %v11673, 0.0
    %v12186 = vmin.f32 %v11674, 0.0
    %v12187 = vmin.f32 %v11675, 0.0
    %v12188 = vmin.f32 %v11676, 0.0
    %v12189 = vmin.f32 %v11677, 0.0
    %v12190 = vmin.f32 %v11678, 0.0
    %v12191 = vmin.f32 %v11679, 0.0
    %v12192 = vmin.f32 %v11680, 0.0
    %v12193 = vmin.f32 %v11681, 0.0
    %v12194 = vmin.f32 %v11682, 0.0
    %v12195 = vmin.f32 %v11683, 0.0
    %v12196 = vmin.f32 %v11684, 0.0
    %v12197 = vmin.f32 %v11685, 0.0
    %v12198 = vmin.f32 %v11686, 0.0
    %v12199 = vmin.f32 %v11687, 0.0
    %v12200 = vmin.f32 %v11688, 0.0
    %v12201 = vmin.f32 %v11689, 0.0
    %v12202 = vmin.f32 %v11690, 0.0
    %v12203 = vmin.f32 %v11691, 0.0
    %v12204 = vmin.f32 %v11692, 0.0
    %v12205 = vmin.f32 %v11693, 0.0
    %v12206 = vmin.f32 %v11694, 0.0
    %v12207 = vmin.f32 %v11695, 0.0
    %v12208 = vmin.f32 %v11696, 0.0
    %v12209 = vmin.f32 %v11697, 0.0
    %v12210 = vmin.f32 %v11698, 0.0
    %v12211 = vmin.f32 %v11699, 0.0
    %v12212 = vmin.f32 %v11700, 0.0
    %v12213 = vmin.f32 %v11701, 0.0
    %v12214 = vmin.f32 %v11702, 0.0
    %v12215 = vmin.f32 %v11703, 0.0
    %v12216 = vmin.f32 %v11704, 0.0
    %v12217 = vmin.f32 %v11705, 0.0
    %v12218 = vmin.f32 %v11706, 0.0
    %v12219 = vmin.f32 %v11707, 0.0
    %v12220 = vmin.f32 %v11708, 0.0
    %v12221 = vmin.f32 %v11709, 0.0
    %v12222 = vmin.f32 %v11710, 0.0
    %v12223 = vmin.f32 %v11711, 0.0
    %v12224 = vmin.f32 %v11712, 0.0
    %v12225 = vmin.f32 %v11713, 0.0
    %v12226 = vmin.f32 %v11714, 0.0
    %v12227 = vmin.f32 %v11715, 0.0
    %v12228 = vmin.f32 %v11716, 0.0
    %v12229 = vmin.f32 %v11717, 0.0
    %v12230 = vmin.f32 %v11718, 0.0
    %v12231 = vmin.f32 %v11719, 0.0
    %v12232 = vmin.f32 %v11720, 0.0
    %v12233 = vmin.f32 %v11721, 0.0
    %v12234 = vmin.f32 %v11722, 0.0
    %v12235 = vmin.f32 %v11723, 0.0
    %v12236 = vmin.f32 %v11724, 0.0
    %v12237 = vmin.f32 %v11725, 0.0
    %v12238 = vmin.f32 %v11726, 0.0
    %v12239 = vmin.f32 %v11727, 0.0
    %v12240 = vmin.f32 %v11728, 0.0
    %v12241 = vmin.f32 %v11729, 0.0
    %v12242 = vmin.f32 %v11730, 0.0
    %v12243 = vmin.f32 %v11731, 0.0
    %v12244 = vmin.f32 %v11732, 0.0
    %v12245 = vmin.f32 %v11733, 0.0
    %v12246 = vmin.f32 %v11734, 0.0
    %v12247 = vmin.f32 %v11735, 0.0
    %v12248 = vmin.f32 %v11736, 0.0
    %v12249 = vmin.f32 %v11737, 0.0
    %v12250 = vmin.f32 %v11738, 0.0
    %v12251 = vmin.f32 %v11739, 0.0
    %v12252 = vmin.f32 %v11740, 0.0
    %v12253 = vmin.f32 %v11741, 0.0
    %v12254 = vmin.f32 %v11742, 0.0
    %v12255 = vmin.f32 %v11743, 0.0
    %v12256 = vmin.f32 %v11744, 0.0
    %v12257 = vmin.f32 %v11745, 0.0
    %v12258 = vmin.f32 %v11746, 0.0
    %v12259 = vmin.f32 %v11747, 0.0
    %v12260 = vmin.f32 %v11748, 0.0
    %v12261 = vmin.f32 %v11749, 0.0
    %v12262 = vmin.f32 %v11750, 0.0
    %v12263 = vmin.f32 %v11751, 0.0
    %v12264 = vmin.f32 %v11752, 0.0
    %v12265 = vmin.f32 %v11753, 0.0
    %v12266 = vmin.f32 %v11754, 0.0
    %v12267 = vmin.f32 %v11755, 0.0
    %v12268 = vmin.f32 %v11756, 0.0
    %v12269 = vmin.f32 %v11757, 0.0
    %v12270 = vmin.f32 %v11758, 0.0
    %v12271 = vmin.f32 %v11759, 0.0
    %v12272 = vmin.f32 %v11760, 0.0
    %v12273 = vmin.f32 %v11761, 0.0
    %v12274 = vmin.f32 %v11762, 0.0
    %v12275 = vmin.f32 %v11763, 0.0
    %v12276 = vmin.f32 %v11764, 0.0
    %v12277 = vmin.f32 %v11765, 0.0
    %v12278 = vmin.f32 %v11766, 0.0
    %v12279 = vmin.f32 %v11767, 0.0
    %v12280 = vmin.f32 %v11768, 0.0
    %v12281 = vmin.f32 %v11769, 0.0
    %v12282 = vmin.f32 %v11770, 0.0
    %v12283 = vmin.f32 %v11771, 0.0
    %v12284 = vmin.f32 %v11772, 0.0
    %v12285 = vmin.f32 %v11773, 0.0
    %v12286 = vmin.f32 %v11774, 0.0
    %v12287 = vmin.f32 %v11775, 0.0
    %v12288 = vmin.f32 %v11776, 0.0
    %v12289 = vmin.f32 %v11777, 0.0
    %v12290 = vmin.f32 %v11778, 0.0
    %v12291 = vmin.f32 %v11779, 0.0
    %v12292 = vmin.f32 %v11780, 0.0
    %v12293 = vmin.f32 %v11781, 0.0
    %v12294 = vmin.f32 %v11782, 0.0
    %v12295 = vmin.f32 %v11783, 0.0
    %v12296 = vmin.f32 %v11784, 0.0
    %v12297 = vmin.f32 %v11785, 0.0
    %v12298 = vmin.f32 %v11786, 0.0
    %v12299 = vmin.f32 %v11787, 0.0
    %v12300 = vmin.f32 %v11788, 0.0
    %v12301 = vmin.f32 %v11789, 0.0
    %v12302 = vmin.f32 %v11790, 0.0
    %v12303 = vmin.f32 %v11791, 0.0
    %v12304 = vmin.f32 %v11792, 0.0
    %v12305 = vmin.f32 %v11793, 0.0
    %v12306 = vmin.f32 %v11794, 0.0
    %v12307 = vmin.f32 %v11795, 0.0
    %v12308 = vmin.f32 %v11796, 0.0
    %v12309 = vmin.f32 %v11797, 0.0
    %v12310 = vmin.f32 %v11798, 0.0
    %v12311 = vmin.f32 %v11799, 0.0
    %v12312 = vmin.f32 %v11800, 0.0
    %v12313 = vmin.f32 %v11801, 0.0
    %v12314 = vmin.f32 %v11802, 0.0
    %v12315 = vmin.f32 %v11803, 0.0
    %v12316 = vmin.f32 %v11804, 0.0
    %v12317 = vmin.f32 %v11805, 0.0
    %v12318 = vmin.f32 %v11806, 0.0
    %v12319 = vmin.f32 %v11807, 0.0
    %v12320 = vmin.f32 %v11808, 0.0
    %v12321 = vmin.f32 %v11809, 0.0
    %v12322 = vmin.f32 %v11810, 0.0
    %v12323 = vmin.f32 %v11811, 0.0
    %v12324 = vmin.f32 %v11812, 0.0
    %v12325 = vmin.f32 %v11813, 0.0
    %v12326 = vmin.f32 %v11814, 0.0
    %v12327 = vmin.f32 %v11815, 0.0
    %v12328 = vmin.f32 %v11816, 0.0
    %v12329 = vmin.f32 %v11817, 0.0
    %v12330 = vmin.f32 %v11818, 0.0
    %v12331 = vmin.f32 %v11819, 0.0
    %v12332 = vmin.f32 %v11820, 0.0
    %v12333 = vmin.f32 %v11821, 0.0
    %v12334 = vmin.f32 %v11822, 0.0
    %v12335 = vmin.f32 %v11823, 0.0
    %v12336 = vmin.f32 %v11824, 0.0
    %v12337 = vmin.f32 %v11825, 0.0
    %v12338 = vmin.f32 %v11826, 0.0
    %v12339 = vmin.f32 %v11827, 0.0
    %v12340 = vmin.f32 %v11828, 0.0
    %v12341 = vmin.f32 %v11829, 0.0
    %v12342 = vmin.f32 %v11830, 0.0
    %v12343 = vmin.f32 %v11831, 0.0
    %v12344 = vmin.f32 %v11832, 0.0
    %v12345 = vmin.f32 %v11833, 0.0
    %v12346 = vmin.f32 %v11834, 0.0
    %v12347 = vmin.f32 %v11835, 0.0
    %v12348 = vmin.f32 %v11836, 0.0
    %v12349 = vmin.f32 %v11837, 0.0
    %v12350 = vmin.f32 %v11838, 0.0
    %v12351 = vmin.f32 %v11839, 0.0
    %v12352 = vmin.f32 %v11840, 0.0
    %v12353 = vmin.f32 %v11841, 0.0
    %v12354 = vmin.f32 %v11842, 0.0
    %v12355 = vmin.f32 %v11843, 0.0
    %v12356 = vmin.f32 %v11844, 0.0
    %v12357 = vmin.f32 %v11845, 0.0
    %v12358 = vmin.f32 %v11846, 0.0
    %v12359 = vmin.f32 %v11847, 0.0
    %v12360 = vmin.f32 %v11848, 0.0
    %v12361 = vmin.f32 %v11849, 0.0
    %v12362 = vmin.f32 %v11850, 0.0
    %v12363 = vmin.f32 %v11851, 0.0
    %v12364 = vmin.f32 %v11852, 0.0
    %v12365 = vmin.f32 %v11853, 0.0
    %v12366 = vmin.f32 %v11854, 0.0
    %v12367 = vmin.f32 %v11855, 0.0
    %v12368 = vmin.f32 %v11856, 0.0
    %v12369 = vmin.f32 %v11857, 0.0
    %v12370 = vmin.f32 %v11858, 0.0
    %v12371 = vmin.f32 %v11859, 0.0
    %v12372 = vmin.f32 %v11860, 0.0
    %v12373 = vmin.f32 %v11861, 0.0
    %v12374 = vmin.f32 %v11862, 0.0
    %v12375 = vmin.f32 %v11863, 0.0
    %v12376 = vmin.f32 %v11864, 0.0
    %v12377 = vmin.f32 %v11865, 0.0
    %v12378 = vmin.f32 %v11866, 0.0
    %v12379 = vmin.f32 %v11867, 0.0
    %v12380 = vmin.f32 %v11868, 0.0
    %v12381 = vmin.f32 %v11869, 0.0
    %v12382 = vmin.f32 %v11870, 0.0
    %v12383 = vmin.f32 %v11871, 0.0
    %v12384 = vmin.f32 %v11872, 0.0
    %v12385 = vmin.f32 %v11873, 0.0
    %v12386 = vmin.f32 %v11874, 0.0
    %v12387 = vmin.f32 %v11875, 0.0
    %v12388 = vmin.f32 %v11876, 0.0
    %v12389 = vmin.f32 %v11877, 0.0
    %v12390 = vmin.f32 %v11878, 0.0
    %v12391 = vmin.f32 %v11879, 0.0
    %v12392 = vmin.f32 %v11880, 0.0
    %v12393 = vmin.f32 %v11881, 0.0
    %v12394 = vmin.f32 %v11882, 0.0
    %v12395 = vmin.f32 %v11883, 0.0
    %v12396 = vmin.f32 %v11884, 0.0
    %v12397 = vmin.f32 %v11885, 0.0
    %v12398 = vmin.f32 %v11886, 0.0
    %v12399 = vmin.f32 %v11887, 0.0
    %v12400 = vmin.f32 %v11888, 0.0
    %v12401 = vmin.f32 %v11889, 0.0
    %v12402 = vmul.f32 %v12146, 1.442695
    %v12403 = vpow.pop %v12402
    %v12404 = vmul.f32 %v12147, 1.442695
    %v12405 = vpow.pop %v12404
    %v12406 = vmul.f32 %v12148, 1.442695
    %v12407 = vpow.pop %v12406
    %v12408 = vmul.f32 %v12149, 1.442695
    %v12409 = vpow.pop %v12408
    %v12410 = vmul.f32 %v12150, 1.442695
    %v12411 = vpow.pop %v12410
    %v12412 = vmul.f32 %v12151, 1.442695
    %v12413 = vpow.pop %v12412
    %v12414 = vmul.f32 %v12152, 1.442695
    %v12415 = vpow.pop %v12414
    %v12416 = vmul.f32 %v12153, 1.442695
    %v12417 = vpow.pop %v12416
    %v12418 = vmul.f32 %v12154, 1.442695
    %v12419 = vpow.pop %v12418
    %v12420 = vmul.f32 %v12155, 1.442695
    %v12421 = vpow.pop %v12420
    %v12422 = vmul.f32 %v12156, 1.442695
    %v12423 = vpow.pop %v12422
    %v12424 = vmul.f32 %v12157, 1.442695
    %v12425 = vpow.pop %v12424
    %v12426 = vmul.f32 %v12158, 1.442695
    %v12427 = vpow.pop %v12426
    %v12428 = vmul.f32 %v12159, 1.442695
    %v12429 = vpow.pop %v12428
    %v12430 = vmul.f32 %v12160, 1.442695
    %v12431 = vpow.pop %v12430
    %v12432 = vmul.f32 %v12161, 1.442695
    %v12433 = vpow.pop %v12432
    %v12434 = vmul.f32 %v12162, 1.442695
    %v12435 = vpow.pop %v12434
    %v12436 = vmul.f32 %v12163, 1.442695
    %v12437 = vpow.pop %v12436
    %v12438 = vmul.f32 %v12164, 1.442695
    %v12439 = vpow.pop %v12438
    %v12440 = vmul.f32 %v12165, 1.442695
    %v12441 = vpow.pop %v12440
    %v12442 = vmul.f32 %v12166, 1.442695
    %v12443 = vpow.pop %v12442
    %v12444 = vmul.f32 %v12167, 1.442695
    %v12445 = vpow.pop %v12444
    %v12446 = vmul.f32 %v12168, 1.442695
    %v12447 = vpow.pop %v12446
    %v12448 = vmul.f32 %v12169, 1.442695
    %v12449 = vpow.pop %v12448
    %v12450 = vmul.f32 %v12170, 1.442695
    %v12451 = vpow.pop %v12450
    %v12452 = vmul.f32 %v12171, 1.442695
    %v12453 = vpow.pop %v12452
    %v12454 = vmul.f32 %v12172, 1.442695
    %v12455 = vpow.pop %v12454
    %v12456 = vmul.f32 %v12173, 1.442695
    %v12457 = vpow.pop %v12456
    %v12458 = vmul.f32 %v12174, 1.442695
    %v12459 = vpow.pop %v12458
    %v12460 = vmul.f32 %v12175, 1.442695
    %v12461 = vpow.pop %v12460
    %v12462 = vmul.f32 %v12176, 1.442695
    %v12463 = vpow.pop %v12462
    %v12464 = vmul.f32 %v12177, 1.442695
    %v12465 = vpow.pop %v12464
    %v12466 = vmul.f32 %v12178, 1.442695
    %v12467 = vpow.pop %v12466
    %v12468 = vmul.f32 %v12179, 1.442695
    %v12469 = vpow.pop %v12468
    %v12470 = vmul.f32 %v12180, 1.442695
    %v12471 = vpow.pop %v12470
    %v12472 = vmul.f32 %v12181, 1.442695
    %v12473 = vpow.pop %v12472
    %v12474 = vmul.f32 %v12182, 1.442695
    %v12475 = vpow.pop %v12474
    %v12476 = vmul.f32 %v12183, 1.442695
    %v12477 = vpow.pop %v12476
    %v12478 = vmul.f32 %v12184, 1.442695
    %v12479 = vpow.pop %v12478
    %v12480 = vmul.f32 %v12185, 1.442695
    %v12481 = vpow.pop %v12480
    %v12482 = vmul.f32 %v12186, 1.442695
    %v12483 = vpow.pop %v12482
    %v12484 = vmul.f32 %v12187, 1.442695
    %v12485 = vpow.pop %v12484
    %v12486 = vmul.f32 %v12188, 1.442695
    %v12487 = vpow.pop %v12486
    %v12488 = vmul.f32 %v12189, 1.442695
    %v12489 = vpow.pop %v12488
    %v12490 = vmul.f32 %v12190, 1.442695
    %v12491 = vpow.pop %v12490
    %v12492 = vmul.f32 %v12191, 1.442695
    %v12493 = vpow.pop %v12492
    %v12494 = vmul.f32 %v12192, 1.442695
    %v12495 = vpow.pop %v12494
    %v12496 = vmul.f32 %v12193, 1.442695
    %v12497 = vpow.pop %v12496
    %v12498 = vmul.f32 %v12194, 1.442695
    %v12499 = vpow.pop %v12498
    %v12500 = vmul.f32 %v12195, 1.442695
    %v12501 = vpow.pop %v12500
    %v12502 = vmul.f32 %v12196, 1.442695
    %v12503 = vpow.pop %v12502
    %v12504 = vmul.f32 %v12197, 1.442695
    %v12505 = vpow.pop %v12504
    %v12506 = vmul.f32 %v12198, 1.442695
    %v12507 = vpow.pop %v12506
    %v12508 = vmul.f32 %v12199, 1.442695
    %v12509 = vpow.pop %v12508
    %v12510 = vmul.f32 %v12200, 1.442695
    %v12511 = vpow.pop %v12510
    %v12512 = vmul.f32 %v12201, 1.442695
    %v12513 = vpow.pop %v12512
    %v12514 = vmul.f32 %v12202, 1.442695
    %v12515 = vpow.pop %v12514
    %v12516 = vmul.f32 %v12203, 1.442695
    %v12517 = vpow.pop %v12516
    %v12518 = vmul.f32 %v12204, 1.442695
    %v12519 = vpow.pop %v12518
    %v12520 = vmul.f32 %v12205, 1.442695
    %v12521 = vpow.pop %v12520
    %v12522 = vmul.f32 %v12206, 1.442695
    %v12523 = vpow.pop %v12522
    %v12524 = vmul.f32 %v12207, 1.442695
    %v12525 = vpow.pop %v12524
    %v12526 = vmul.f32 %v12208, 1.442695
    %v12527 = vpow.pop %v12526
    %v12528 = vmul.f32 %v12209, 1.442695
    %v12529 = vpow.pop %v12528
    %v12530 = vmul.f32 %v12210, 1.442695
    %v12531 = vpow.pop %v12530
    %v12532 = vmul.f32 %v12211, 1.442695
    %v12533 = vpow.pop %v12532
    %v12534 = vmul.f32 %v12212, 1.442695
    %v12535 = vpow.pop %v12534
    %v12536 = vmul.f32 %v12213, 1.442695
    %v12537 = vpow.pop %v12536
    %v12538 = vmul.f32 %v12214, 1.442695
    %v12539 = vpow.pop %v12538
    %v12540 = vmul.f32 %v12215, 1.442695
    %v12541 = vpow.pop %v12540
    %v12542 = vmul.f32 %v12216, 1.442695
    %v12543 = vpow.pop %v12542
    %v12544 = vmul.f32 %v12217, 1.442695
    %v12545 = vpow.pop %v12544
    %v12546 = vmul.f32 %v12218, 1.442695
    %v12547 = vpow.pop %v12546
    %v12548 = vmul.f32 %v12219, 1.442695
    %v12549 = vpow.pop %v12548
    %v12550 = vmul.f32 %v12220, 1.442695
    %v12551 = vpow.pop %v12550
    %v12552 = vmul.f32 %v12221, 1.442695
    %v12553 = vpow.pop %v12552
    %v12554 = vmul.f32 %v12222, 1.442695
    %v12555 = vpow.pop %v12554
    %v12556 = vmul.f32 %v12223, 1.442695
    %v12557 = vpow.pop %v12556
    %v12558 = vmul.f32 %v12224, 1.442695
    %v12559 = vpow.pop %v12558
    %v12560 = vmul.f32 %v12225, 1.442695
    %v12561 = vpow.pop %v12560
    %v12562 = vmul.f32 %v12226, 1.442695
    %v12563 = vpow.pop %v12562
    %v12564 = vmul.f32 %v12227, 1.442695
    %v12565 = vpow.pop %v12564
    %v12566 = vmul.f32 %v12228, 1.442695
    %v12567 = vpow.pop %v12566
    %v12568 = vmul.f32 %v12229, 1.442695
    %v12569 = vpow.pop %v12568
    %v12570 = vmul.f32 %v12230, 1.442695
    %v12571 = vpow.pop %v12570
    %v12572 = vmul.f32 %v12231, 1.442695
    %v12573 = vpow.pop %v12572
    %v12574 = vmul.f32 %v12232, 1.442695
    %v12575 = vpow.pop %v12574
    %v12576 = vmul.f32 %v12233, 1.442695
    %v12577 = vpow.pop %v12576
    %v12578 = vmul.f32 %v12234, 1.442695
    %v12579 = vpow.pop %v12578
    %v12580 = vmul.f32 %v12235, 1.442695
    %v12581 = vpow.pop %v12580
    %v12582 = vmul.f32 %v12236, 1.442695
    %v12583 = vpow.pop %v12582
    %v12584 = vmul.f32 %v12237, 1.442695
    %v12585 = vpow.pop %v12584
    %v12586 = vmul.f32 %v12238, 1.442695
    %v12587 = vpow.pop %v12586
    %v12588 = vmul.f32 %v12239, 1.442695
    %v12589 = vpow.pop %v12588
    %v12590 = vmul.f32 %v12240, 1.442695
    %v12591 = vpow.pop %v12590
    %v12592 = vmul.f32 %v12241, 1.442695
    %v12593 = vpow.pop %v12592
    %v12594 = vmul.f32 %v12242, 1.442695
    %v12595 = vpow.pop %v12594
    %v12596 = vmul.f32 %v12243, 1.442695
    %v12597 = vpow.pop %v12596
    %v12598 = vmul.f32 %v12244, 1.442695
    %v12599 = vpow.pop %v12598
    %v12600 = vmul.f32 %v12245, 1.442695
    %v12601 = vpow.pop %v12600
    %v12602 = vmul.f32 %v12246, 1.442695
    %v12603 = vpow.pop %v12602
    %v12604 = vmul.f32 %v12247, 1.442695
    %v12605 = vpow.pop %v12604
    %v12606 = vmul.f32 %v12248, 1.442695
    %v12607 = vpow.pop %v12606
    %v12608 = vmul.f32 %v12249, 1.442695
    %v12609 = vpow.pop %v12608
    %v12610 = vmul.f32 %v12250, 1.442695
    %v12611 = vpow.pop %v12610
    %v12612 = vmul.f32 %v12251, 1.442695
    %v12613 = vpow.pop %v12612
    %v12614 = vmul.f32 %v12252, 1.442695
    %v12615 = vpow.pop %v12614
    %v12616 = vmul.f32 %v12253, 1.442695
    %v12617 = vpow.pop %v12616
    %v12618 = vmul.f32 %v12254, 1.442695
    %v12619 = vpow.pop %v12618
    %v12620 = vmul.f32 %v12255, 1.442695
    %v12621 = vpow.pop %v12620
    %v12622 = vmul.f32 %v12256, 1.442695
    %v12623 = vpow.pop %v12622
    %v12624 = vmul.f32 %v12257, 1.442695
    %v12625 = vpow.pop %v12624
    %v12626 = vmul.f32 %v12258, 1.442695
    %v12627 = vpow.pop %v12626
    %v12628 = vmul.f32 %v12259, 1.442695
    %v12629 = vpow.pop %v12628
    %v12630 = vmul.f32 %v12260, 1.442695
    %v12631 = vpow.pop %v12630
    %v12632 = vmul.f32 %v12261, 1.442695
    %v12633 = vpow.pop %v12632
    %v12634 = vmul.f32 %v12262, 1.442695
    %v12635 = vpow.pop %v12634
    %v12636 = vmul.f32 %v12263, 1.442695
    %v12637 = vpow.pop %v12636
    %v12638 = vmul.f32 %v12264, 1.442695
    %v12639 = vpow.pop %v12638
    %v12640 = vmul.f32 %v12265, 1.442695
    %v12641 = vpow.pop %v12640
    %v12642 = vmul.f32 %v12266, 1.442695
    %v12643 = vpow.pop %v12642
    %v12644 = vmul.f32 %v12267, 1.442695
    %v12645 = vpow.pop %v12644
    %v12646 = vmul.f32 %v12268, 1.442695
    %v12647 = vpow.pop %v12646
    %v12648 = vmul.f32 %v12269, 1.442695
    %v12649 = vpow.pop %v12648
    %v12650 = vmul.f32 %v12270, 1.442695
    %v12651 = vpow.pop %v12650
    %v12652 = vmul.f32 %v12271, 1.442695
    %v12653 = vpow.pop %v12652
    %v12654 = vmul.f32 %v12272, 1.442695
    %v12655 = vpow.pop %v12654
    %v12656 = vmul.f32 %v12273, 1.442695
    %v12657 = vpow.pop %v12656
    %v12658 = vmul.f32 %v12274, 1.442695
    %v12659 = vpow.pop %v12658
    %v12660 = vmul.f32 %v12275, 1.442695
    %v12661 = vpow.pop %v12660
    %v12662 = vmul.f32 %v12276, 1.442695
    %v12663 = vpow.pop %v12662
    %v12664 = vmul.f32 %v12277, 1.442695
    %v12665 = vpow.pop %v12664
    %v12666 = vmul.f32 %v12278, 1.442695
    %v12667 = vpow.pop %v12666
    %v12668 = vmul.f32 %v12279, 1.442695
    %v12669 = vpow.pop %v12668
    %v12670 = vmul.f32 %v12280, 1.442695
    %v12671 = vpow.pop %v12670
    %v12672 = vmul.f32 %v12281, 1.442695
    %v12673 = vpow.pop %v12672
    %v12674 = vmul.f32 %v12282, 1.442695
    %v12675 = vpow.pop %v12674
    %v12676 = vmul.f32 %v12283, 1.442695
    %v12677 = vpow.pop %v12676
    %v12678 = vmul.f32 %v12284, 1.442695
    %v12679 = vpow.pop %v12678
    %v12680 = vmul.f32 %v12285, 1.442695
    %v12681 = vpow.pop %v12680
    %v12682 = vmul.f32 %v12286, 1.442695
    %v12683 = vpow.pop %v12682
    %v12684 = vmul.f32 %v12287, 1.442695
    %v12685 = vpow.pop %v12684
    %v12686 = vmul.f32 %v12288, 1.442695
    %v12687 = vpow.pop %v12686
    %v12688 = vmul.f32 %v12289, 1.442695
    %v12689 = vpow.pop %v12688
    %v12690 = vmul.f32 %v12290, 1.442695
    %v12691 = vpow.pop %v12690
    %v12692 = vmul.f32 %v12291, 1.442695
    %v12693 = vpow.pop %v12692
    %v12694 = vmul.f32 %v12292, 1.442695
    %v12695 = vpow.pop %v12694
    %v12696 = vmul.f32 %v12293, 1.442695
    %v12697 = vpow.pop %v12696
    %v12698 = vmul.f32 %v12294, 1.442695
    %v12699 = vpow.pop %v12698
    %v12700 = vmul.f32 %v12295, 1.442695
    %v12701 = vpow.pop %v12700
    %v12702 = vmul.f32 %v12296, 1.442695
    %v12703 = vpow.pop %v12702
    %v12704 = vmul.f32 %v12297, 1.442695
    %v12705 = vpow.pop %v12704
    %v12706 = vmul.f32 %v12298, 1.442695
    %v12707 = vpow.pop %v12706
    %v12708 = vmul.f32 %v12299, 1.442695
    %v12709 = vpow.pop %v12708
    %v12710 = vmul.f32 %v12300, 1.442695
    %v12711 = vpow.pop %v12710
    %v12712 = vmul.f32 %v12301, 1.442695
    %v12713 = vpow.pop %v12712
    %v12714 = vmul.f32 %v12302, 1.442695
    %v12715 = vpow.pop %v12714
    %v12716 = vmul.f32 %v12303, 1.442695
    %v12717 = vpow.pop %v12716
    %v12718 = vmul.f32 %v12304, 1.442695
    %v12719 = vpow.pop %v12718
    %v12720 = vmul.f32 %v12305, 1.442695
    %v12721 = vpow.pop %v12720
    %v12722 = vmul.f32 %v12306, 1.442695
    %v12723 = vpow.pop %v12722
    %v12724 = vmul.f32 %v12307, 1.442695
    %v12725 = vpow.pop %v12724
    %v12726 = vmul.f32 %v12308, 1.442695
    %v12727 = vpow.pop %v12726
    %v12728 = vmul.f32 %v12309, 1.442695
    %v12729 = vpow.pop %v12728
    %v12730 = vmul.f32 %v12310, 1.442695
    %v12731 = vpow.pop %v12730
    %v12732 = vmul.f32 %v12311, 1.442695
    %v12733 = vpow.pop %v12732
    %v12734 = vmul.f32 %v12312, 1.442695
    %v12735 = vpow.pop %v12734
    %v12736 = vmul.f32 %v12313, 1.442695
    %v12737 = vpow.pop %v12736
    %v12738 = vmul.f32 %v12314, 1.442695
    %v12739 = vpow.pop %v12738
    %v12740 = vmul.f32 %v12315, 1.442695
    %v12741 = vpow.pop %v12740
    %v12742 = vmul.f32 %v12316, 1.442695
    %v12743 = vpow.pop %v12742
    %v12744 = vmul.f32 %v12317, 1.442695
    %v12745 = vpow.pop %v12744
    %v12746 = vmul.f32 %v12318, 1.442695
    %v12747 = vpow.pop %v12746
    %v12748 = vmul.f32 %v12319, 1.442695
    %v12749 = vpow.pop %v12748
    %v12750 = vmul.f32 %v12320, 1.442695
    %v12751 = vpow.pop %v12750
    %v12752 = vmul.f32 %v12321, 1.442695
    %v12753 = vpow.pop %v12752
    %v12754 = vmul.f32 %v12322, 1.442695
    %v12755 = vpow.pop %v12754
    %v12756 = vmul.f32 %v12323, 1.442695
    %v12757 = vpow.pop %v12756
    %v12758 = vmul.f32 %v12324, 1.442695
    %v12759 = vpow.pop %v12758
    %v12760 = vmul.f32 %v12325, 1.442695
    %v12761 = vpow.pop %v12760
    %v12762 = vmul.f32 %v12326, 1.442695
    %v12763 = vpow.pop %v12762
    %v12764 = vmul.f32 %v12327, 1.442695
    %v12765 = vpow.pop %v12764
    %v12766 = vmul.f32 %v12328, 1.442695
    %v12767 = vpow.pop %v12766
    %v12768 = vmul.f32 %v12329, 1.442695
    %v12769 = vpow.pop %v12768
    %v12770 = vmul.f32 %v12330, 1.442695
    %v12771 = vpow.pop %v12770
    %v12772 = vmul.f32 %v12331, 1.442695
    %v12773 = vpow.pop %v12772
    %v12774 = vmul.f32 %v12332, 1.442695
    %v12775 = vpow.pop %v12774
    %v12776 = vmul.f32 %v12333, 1.442695
    %v12777 = vpow.pop %v12776
    %v12778 = vmul.f32 %v12334, 1.442695
    %v12779 = vpow.pop %v12778
    %v12780 = vmul.f32 %v12335, 1.442695
    %v12781 = vpow.pop %v12780
    %v12782 = vmul.f32 %v12336, 1.442695
    %v12783 = vpow.pop %v12782
    %v12784 = vmul.f32 %v12337, 1.442695
    %v12785 = vpow.pop %v12784
    %v12786 = vmul.f32 %v12338, 1.442695
    %v12787 = vpow.pop %v12786
    %v12788 = vmul.f32 %v12339, 1.442695
    %v12789 = vpow.pop %v12788
    %v12790 = vmul.f32 %v12340, 1.442695
    %v12791 = vpow.pop %v12790
    %v12792 = vmul.f32 %v12341, 1.442695
    %v12793 = vpow.pop %v12792
    %v12794 = vmul.f32 %v12342, 1.442695
    %v12795 = vpow.pop %v12794
    %v12796 = vmul.f32 %v12343, 1.442695
    %v12797 = vpow.pop %v12796
    %v12798 = vmul.f32 %v12344, 1.442695
    %v12799 = vpow.pop %v12798
    %v12800 = vmul.f32 %v12345, 1.442695
    %v12801 = vpow.pop %v12800
    %v12802 = vmul.f32 %v12346, 1.442695
    %v12803 = vpow.pop %v12802
    %v12804 = vmul.f32 %v12347, 1.442695
    %v12805 = vpow.pop %v12804
    %v12806 = vmul.f32 %v12348, 1.442695
    %v12807 = vpow.pop %v12806
    %v12808 = vmul.f32 %v12349, 1.442695
    %v12809 = vpow.pop %v12808
    %v12810 = vmul.f32 %v12350, 1.442695
    %v12811 = vpow.pop %v12810
    %v12812 = vmul.f32 %v12351, 1.442695
    %v12813 = vpow.pop %v12812
    %v12814 = vmul.f32 %v12352, 1.442695
    %v12815 = vpow.pop %v12814
    %v12816 = vmul.f32 %v12353, 1.442695
    %v12817 = vpow.pop %v12816
    %v12818 = vmul.f32 %v12354, 1.442695
    %v12819 = vpow.pop %v12818
    %v12820 = vmul.f32 %v12355, 1.442695
    %v12821 = vpow.pop %v12820
    %v12822 = vmul.f32 %v12356, 1.442695
    %v12823 = vpow.pop %v12822
    %v12824 = vmul.f32 %v12357, 1.442695
    %v12825 = vpow.pop %v12824
    %v12826 = vmul.f32 %v12358, 1.442695
    %v12827 = vpow.pop %v12826
    %v12828 = vmul.f32 %v12359, 1.442695
    %v12829 = vpow.pop %v12828
    %v12830 = vmul.f32 %v12360, 1.442695
    %v12831 = vpow.pop %v12830
    %v12832 = vmul.f32 %v12361, 1.442695
    %v12833 = vpow.pop %v12832
    %v12834 = vmul.f32 %v12362, 1.442695
    %v12835 = vpow.pop %v12834
    %v12836 = vmul.f32 %v12363, 1.442695
    %v12837 = vpow.pop %v12836
    %v12838 = vmul.f32 %v12364, 1.442695
    %v12839 = vpow.pop %v12838
    %v12840 = vmul.f32 %v12365, 1.442695
    %v12841 = vpow.pop %v12840
    %v12842 = vmul.f32 %v12366, 1.442695
    %v12843 = vpow.pop %v12842
    %v12844 = vmul.f32 %v12367, 1.442695
    %v12845 = vpow.pop %v12844
    %v12846 = vmul.f32 %v12368, 1.442695
    %v12847 = vpow.pop %v12846
    %v12848 = vmul.f32 %v12369, 1.442695
    %v12849 = vpow.pop %v12848
    %v12850 = vmul.f32 %v12370, 1.442695
    %v12851 = vpow.pop %v12850
    %v12852 = vmul.f32 %v12371, 1.442695
    %v12853 = vpow.pop %v12852
    %v12854 = vmul.f32 %v12372, 1.442695
    %v12855 = vpow.pop %v12854
    %v12856 = vmul.f32 %v12373, 1.442695
    %v12857 = vpow.pop %v12856
    %v12858 = vmul.f32 %v12374, 1.442695
    %v12859 = vpow.pop %v12858
    %v12860 = vmul.f32 %v12375, 1.442695
    %v12861 = vpow.pop %v12860
    %v12862 = vmul.f32 %v12376, 1.442695
    %v12863 = vpow.pop %v12862
    %v12864 = vmul.f32 %v12377, 1.442695
    %v12865 = vpow.pop %v12864
    %v12866 = vmul.f32 %v12378, 1.442695
    %v12867 = vpow.pop %v12866
    %v12868 = vmul.f32 %v12379, 1.442695
    %v12869 = vpow.pop %v12868
    %v12870 = vmul.f32 %v12380, 1.442695
    %v12871 = vpow.pop %v12870
    %v12872 = vmul.f32 %v12381, 1.442695
    %v12873 = vpow.pop %v12872
    %v12874 = vmul.f32 %v12382, 1.442695
    %v12875 = vpow.pop %v12874
    %v12876 = vmul.f32 %v12383, 1.442695
    %v12877 = vpow.pop %v12876
    %v12878 = vmul.f32 %v12384, 1.442695
    %v12879 = vpow.pop %v12878
    %v12880 = vmul.f32 %v12385, 1.442695
    %v12881 = vpow.pop %v12880
    %v12882 = vmul.f32 %v12386, 1.442695
    %v12883 = vpow.pop %v12882
    %v12884 = vmul.f32 %v12387, 1.442695
    %v12885 = vpow.pop %v12884
    %v12886 = vmul.f32 %v12388, 1.442695
    %v12887 = vpow.pop %v12886
    %v12888 = vmul.f32 %v12389, 1.442695
    %v12889 = vpow.pop %v12888
    %v12890 = vmul.f32 %v12390, 1.442695
    %v12891 = vpow.pop %v12890
    %v12892 = vmul.f32 %v12391, 1.442695
    %v12893 = vpow.pop %v12892
    %v12894 = vmul.f32 %v12392, 1.442695
    %v12895 = vpow.pop %v12894
    %v12896 = vmul.f32 %v12393, 1.442695
    %v12897 = vpow.pop %v12896
    %v12898 = vmul.f32 %v12394, 1.442695
    %v12899 = vpow.pop %v12898
    %v12900 = vmul.f32 %v12395, 1.442695
    %v12901 = vpow.pop %v12900
    %v12902 = vmul.f32 %v12396, 1.442695
    %v12903 = vpow.pop %v12902
    %v12904 = vmul.f32 %v12397, 1.442695
    %v12905 = vpow.pop %v12904
    %v12906 = vmul.f32 %v12398, 1.442695
    %v12907 = vpow.pop %v12906
    %v12908 = vmul.f32 %v12399, 1.442695
    %v12909 = vpow.pop %v12908
    %v12910 = vmul.f32 %v12400, 1.442695
    %v12911 = vpow.pop %v12910
    %v12912 = vmul.f32 %v12401, 1.442695
    %v12913 = vpow.pop %v12912
    %v12914 = vsub.f32 %v12403, 1.0
    %v12915 = vsub.f32 %v12405, 1.0
    %v12916 = vsub.f32 %v12407, 1.0
    %v12917 = vsub.f32 %v12409, 1.0
    %v12918 = vsub.f32 %v12411, 1.0
    %v12919 = vsub.f32 %v12413, 1.0
    %v12920 = vsub.f32 %v12415, 1.0
    %v12921 = vsub.f32 %v12417, 1.0
    %v12922 = vsub.f32 %v12419, 1.0
    %v12923 = vsub.f32 %v12421, 1.0
    %v12924 = vsub.f32 %v12423, 1.0
    %v12925 = vsub.f32 %v12425, 1.0
    %v12926 = vsub.f32 %v12427, 1.0
    %v12927 = vsub.f32 %v12429, 1.0
    %v12928 = vsub.f32 %v12431, 1.0
    %v12929 = vsub.f32 %v12433, 1.0
    %v12930 = vsub.f32 %v12435, 1.0
    %v12931 = vsub.f32 %v12437, 1.0
    %v12932 = vsub.f32 %v12439, 1.0
    %v12933 = vsub.f32 %v12441, 1.0
    %v12934 = vsub.f32 %v12443, 1.0
    %v12935 = vsub.f32 %v12445, 1.0
    %v12936 = vsub.f32 %v12447, 1.0
    %v12937 = vsub.f32 %v12449, 1.0
    %v12938 = vsub.f32 %v12451, 1.0
    %v12939 = vsub.f32 %v12453, 1.0
    %v12940 = vsub.f32 %v12455, 1.0
    %v12941 = vsub.f32 %v12457, 1.0
    %v12942 = vsub.f32 %v12459, 1.0
    %v12943 = vsub.f32 %v12461, 1.0
    %v12944 = vsub.f32 %v12463, 1.0
    %v12945 = vsub.f32 %v12465, 1.0
    %v12946 = vsub.f32 %v12467, 1.0
    %v12947 = vsub.f32 %v12469, 1.0
    %v12948 = vsub.f32 %v12471, 1.0
    %v12949 = vsub.f32 %v12473, 1.0
    %v12950 = vsub.f32 %v12475, 1.0
    %v12951 = vsub.f32 %v12477, 1.0
    %v12952 = vsub.f32 %v12479, 1.0
    %v12953 = vsub.f32 %v12481, 1.0
    %v12954 = vsub.f32 %v12483, 1.0
    %v12955 = vsub.f32 %v12485, 1.0
    %v12956 = vsub.f32 %v12487, 1.0
    %v12957 = vsub.f32 %v12489, 1.0
    %v12958 = vsub.f32 %v12491, 1.0
    %v12959 = vsub.f32 %v12493, 1.0
    %v12960 = vsub.f32 %v12495, 1.0
    %v12961 = vsub.f32 %v12497, 1.0
    %v12962 = vsub.f32 %v12499, 1.0
    %v12963 = vsub.f32 %v12501, 1.0
    %v12964 = vsub.f32 %v12503, 1.0
    %v12965 = vsub.f32 %v12505, 1.0
    %v12966 = vsub.f32 %v12507, 1.0
    %v12967 = vsub.f32 %v12509, 1.0
    %v12968 = vsub.f32 %v12511, 1.0
    %v12969 = vsub.f32 %v12513, 1.0
    %v12970 = vsub.f32 %v12515, 1.0
    %v12971 = vsub.f32 %v12517, 1.0
    %v12972 = vsub.f32 %v12519, 1.0
    %v12973 = vsub.f32 %v12521, 1.0
    %v12974 = vsub.f32 %v12523, 1.0
    %v12975 = vsub.f32 %v12525, 1.0
    %v12976 = vsub.f32 %v12527, 1.0
    %v12977 = vsub.f32 %v12529, 1.0
    %v12978 = vsub.f32 %v12531, 1.0
    %v12979 = vsub.f32 %v12533, 1.0
    %v12980 = vsub.f32 %v12535, 1.0
    %v12981 = vsub.f32 %v12537, 1.0
    %v12982 = vsub.f32 %v12539, 1.0
    %v12983 = vsub.f32 %v12541, 1.0
    %v12984 = vsub.f32 %v12543, 1.0
    %v12985 = vsub.f32 %v12545, 1.0
    %v12986 = vsub.f32 %v12547, 1.0
    %v12987 = vsub.f32 %v12549, 1.0
    %v12988 = vsub.f32 %v12551, 1.0
    %v12989 = vsub.f32 %v12553, 1.0
    %v12990 = vsub.f32 %v12555, 1.0
    %v12991 = vsub.f32 %v12557, 1.0
    %v12992 = vsub.f32 %v12559, 1.0
    %v12993 = vsub.f32 %v12561, 1.0
    %v12994 = vsub.f32 %v12563, 1.0
    %v12995 = vsub.f32 %v12565, 1.0
    %v12996 = vsub.f32 %v12567, 1.0
    %v12997 = vsub.f32 %v12569, 1.0
    %v12998 = vsub.f32 %v12571, 1.0
    %v12999 = vsub.f32 %v12573, 1.0
    %v13000 = vsub.f32 %v12575, 1.0
    %v13001 = vsub.f32 %v12577, 1.0
    %v13002 = vsub.f32 %v12579, 1.0
    %v13003 = vsub.f32 %v12581, 1.0
    %v13004 = vsub.f32 %v12583, 1.0
    %v13005 = vsub.f32 %v12585, 1.0
    %v13006 = vsub.f32 %v12587, 1.0
    %v13007 = vsub.f32 %v12589, 1.0
    %v13008 = vsub.f32 %v12591, 1.0
    %v13009 = vsub.f32 %v12593, 1.0
    %v13010 = vsub.f32 %v12595, 1.0
    %v13011 = vsub.f32 %v12597, 1.0
    %v13012 = vsub.f32 %v12599, 1.0
    %v13013 = vsub.f32 %v12601, 1.0
    %v13014 = vsub.f32 %v12603, 1.0
    %v13015 = vsub.f32 %v12605, 1.0
    %v13016 = vsub.f32 %v12607, 1.0
    %v13017 = vsub.f32 %v12609, 1.0
    %v13018 = vsub.f32 %v12611, 1.0
    %v13019 = vsub.f32 %v12613, 1.0
    %v13020 = vsub.f32 %v12615, 1.0
    %v13021 = vsub.f32 %v12617, 1.0
    %v13022 = vsub.f32 %v12619, 1.0
    %v13023 = vsub.f32 %v12621, 1.0
    %v13024 = vsub.f32 %v12623, 1.0
    %v13025 = vsub.f32 %v12625, 1.0
    %v13026 = vsub.f32 %v12627, 1.0
    %v13027 = vsub.f32 %v12629, 1.0
    %v13028 = vsub.f32 %v12631, 1.0
    %v13029 = vsub.f32 %v12633, 1.0
    %v13030 = vsub.f32 %v12635, 1.0
    %v13031 = vsub.f32 %v12637, 1.0
    %v13032 = vsub.f32 %v12639, 1.0
    %v13033 = vsub.f32 %v12641, 1.0
    %v13034 = vsub.f32 %v12643, 1.0
    %v13035 = vsub.f32 %v12645, 1.0
    %v13036 = vsub.f32 %v12647, 1.0
    %v13037 = vsub.f32 %v12649, 1.0
    %v13038 = vsub.f32 %v12651, 1.0
    %v13039 = vsub.f32 %v12653, 1.0
    %v13040 = vsub.f32 %v12655, 1.0
    %v13041 = vsub.f32 %v12657, 1.0
    %v13042 = vsub.f32 %v12659, 1.0
    %v13043 = vsub.f32 %v12661, 1.0
    %v13044 = vsub.f32 %v12663, 1.0
    %v13045 = vsub.f32 %v12665, 1.0
    %v13046 = vsub.f32 %v12667, 1.0
    %v13047 = vsub.f32 %v12669, 1.0
    %v13048 = vsub.f32 %v12671, 1.0
    %v13049 = vsub.f32 %v12673, 1.0
    %v13050 = vsub.f32 %v12675, 1.0
    %v13051 = vsub.f32 %v12677, 1.0
    %v13052 = vsub.f32 %v12679, 1.0
    %v13053 = vsub.f32 %v12681, 1.0
    %v13054 = vsub.f32 %v12683, 1.0
    %v13055 = vsub.f32 %v12685, 1.0
    %v13056 = vsub.f32 %v12687, 1.0
    %v13057 = vsub.f32 %v12689, 1.0
    %v13058 = vsub.f32 %v12691, 1.0
    %v13059 = vsub.f32 %v12693, 1.0
    %v13060 = vsub.f32 %v12695, 1.0
    %v13061 = vsub.f32 %v12697, 1.0
    %v13062 = vsub.f32 %v12699, 1.0
    %v13063 = vsub.f32 %v12701, 1.0
    %v13064 = vsub.f32 %v12703, 1.0
    %v13065 = vsub.f32 %v12705, 1.0
    %v13066 = vsub.f32 %v12707, 1.0
    %v13067 = vsub.f32 %v12709, 1.0
    %v13068 = vsub.f32 %v12711, 1.0
    %v13069 = vsub.f32 %v12713, 1.0
    %v13070 = vsub.f32 %v12715, 1.0
    %v13071 = vsub.f32 %v12717, 1.0
    %v13072 = vsub.f32 %v12719, 1.0
    %v13073 = vsub.f32 %v12721, 1.0
    %v13074 = vsub.f32 %v12723, 1.0
    %v13075 = vsub.f32 %v12725, 1.0
    %v13076 = vsub.f32 %v12727, 1.0
    %v13077 = vsub.f32 %v12729, 1.0
    %v13078 = vsub.f32 %v12731, 1.0
    %v13079 = vsub.f32 %v12733, 1.0
    %v13080 = vsub.f32 %v12735, 1.0
    %v13081 = vsub.f32 %v12737, 1.0
    %v13082 = vsub.f32 %v12739, 1.0
    %v13083 = vsub.f32 %v12741, 1.0
    %v13084 = vsub.f32 %v12743, 1.0
    %v13085 = vsub.f32 %v12745, 1.0
    %v13086 = vsub.f32 %v12747, 1.0
    %v13087 = vsub.f32 %v12749, 1.0
    %v13088 = vsub.f32 %v12751, 1.0
    %v13089 = vsub.f32 %v12753, 1.0
    %v13090 = vsub.f32 %v12755, 1.0
    %v13091 = vsub.f32 %v12757, 1.0
    %v13092 = vsub.f32 %v12759, 1.0
    %v13093 = vsub.f32 %v12761, 1.0
    %v13094 = vsub.f32 %v12763, 1.0
    %v13095 = vsub.f32 %v12765, 1.0
    %v13096 = vsub.f32 %v12767, 1.0
    %v13097 = vsub.f32 %v12769, 1.0
    %v13098 = vsub.f32 %v12771, 1.0
    %v13099 = vsub.f32 %v12773, 1.0
    %v13100 = vsub.f32 %v12775, 1.0
    %v13101 = vsub.f32 %v12777, 1.0
    %v13102 = vsub.f32 %v12779, 1.0
    %v13103 = vsub.f32 %v12781, 1.0
    %v13104 = vsub.f32 %v12783, 1.0
    %v13105 = vsub.f32 %v12785, 1.0
    %v13106 = vsub.f32 %v12787, 1.0
    %v13107 = vsub.f32 %v12789, 1.0
    %v13108 = vsub.f32 %v12791, 1.0
    %v13109 = vsub.f32 %v12793, 1.0
    %v13110 = vsub.f32 %v12795, 1.0
    %v13111 = vsub.f32 %v12797, 1.0
    %v13112 = vsub.f32 %v12799, 1.0
    %v13113 = vsub.f32 %v12801, 1.0
    %v13114 = vsub.f32 %v12803, 1.0
    %v13115 = vsub.f32 %v12805, 1.0
    %v13116 = vsub.f32 %v12807, 1.0
    %v13117 = vsub.f32 %v12809, 1.0
    %v13118 = vsub.f32 %v12811, 1.0
    %v13119 = vsub.f32 %v12813, 1.0
    %v13120 = vsub.f32 %v12815, 1.0
    %v13121 = vsub.f32 %v12817, 1.0
    %v13122 = vsub.f32 %v12819, 1.0
    %v13123 = vsub.f32 %v12821, 1.0
    %v13124 = vsub.f32 %v12823, 1.0
    %v13125 = vsub.f32 %v12825, 1.0
    %v13126 = vsub.f32 %v12827, 1.0
    %v13127 = vsub.f32 %v12829, 1.0
    %v13128 = vsub.f32 %v12831, 1.0
    %v13129 = vsub.f32 %v12833, 1.0
    %v13130 = vsub.f32 %v12835, 1.0
    %v13131 = vsub.f32 %v12837, 1.0
    %v13132 = vsub.f32 %v12839, 1.0
    %v13133 = vsub.f32 %v12841, 1.0
    %v13134 = vsub.f32 %v12843, 1.0
    %v13135 = vsub.f32 %v12845, 1.0
    %v13136 = vsub.f32 %v12847, 1.0
    %v13137 = vsub.f32 %v12849, 1.0
    %v13138 = vsub.f32 %v12851, 1.0
    %v13139 = vsub.f32 %v12853, 1.0
    %v13140 = vsub.f32 %v12855, 1.0
    %v13141 = vsub.f32 %v12857, 1.0
    %v13142 = vsub.f32 %v12859, 1.0
    %v13143 = vsub.f32 %v12861, 1.0
    %v13144 = vsub.f32 %v12863, 1.0
    %v13145 = vsub.f32 %v12865, 1.0
    %v13146 = vsub.f32 %v12867, 1.0
    %v13147 = vsub.f32 %v12869, 1.0
    %v13148 = vsub.f32 %v12871, 1.0
    %v13149 = vsub.f32 %v12873, 1.0
    %v13150 = vsub.f32 %v12875, 1.0
    %v13151 = vsub.f32 %v12877, 1.0
    %v13152 = vsub.f32 %v12879, 1.0
    %v13153 = vsub.f32 %v12881, 1.0
    %v13154 = vsub.f32 %v12883, 1.0
    %v13155 = vsub.f32 %v12885, 1.0
    %v13156 = vsub.f32 %v12887, 1.0
    %v13157 = vsub.f32 %v12889, 1.0
    %v13158 = vsub.f32 %v12891, 1.0
    %v13159 = vsub.f32 %v12893, 1.0
    %v13160 = vsub.f32 %v12895, 1.0
    %v13161 = vsub.f32 %v12897, 1.0
    %v13162 = vsub.f32 %v12899, 1.0
    %v13163 = vsub.f32 %v12901, 1.0
    %v13164 = vsub.f32 %v12903, 1.0
    %v13165 = vsub.f32 %v12905, 1.0
    %v13166 = vsub.f32 %v12907, 1.0
    %v13167 = vsub.f32 %v12909, 1.0
    %v13168 = vsub.f32 %v12911, 1.0
    %v13169 = vsub.f32 %v12913, 1.0
    %v13170 = vsel %vm11890, %v11634, %v12914
    %v13171 = vsel %vm11891, %v11635, %v12915
    %v13172 = vsel %vm11892, %v11636, %v12916
    %v13173 = vsel %vm11893, %v11637, %v12917
    %v13174 = vsel %vm11894, %v11638, %v12918
    %v13175 = vsel %vm11895, %v11639, %v12919
    %v13176 = vsel %vm11896, %v11640, %v12920
    %v13177 = vsel %vm11897, %v11641, %v12921
    %v13178 = vsel %vm11898, %v11642, %v12922
    %v13179 = vsel %vm11899, %v11643, %v12923
    %v13180 = vsel %vm11900, %v11644, %v12924
    %v13181 = vsel %vm11901, %v11645, %v12925
    %v13182 = vsel %vm11902, %v11646, %v12926
    %v13183 = vsel %vm11903, %v11647, %v12927
    %v13184 = vsel %vm11904, %v11648, %v12928
    %v13185 = vsel %vm11905, %v11649, %v12929
    %v13186 = vsel %vm11906, %v11650, %v12930
    %v13187 = vsel %vm11907, %v11651, %v12931
    %v13188 = vsel %vm11908, %v11652, %v12932
    %v13189 = vsel %vm11909, %v11653, %v12933
    %v13190 = vsel %vm11910, %v11654, %v12934
    %v13191 = vsel %vm11911, %v11655, %v12935
    %v13192 = vsel %vm11912, %v11656, %v12936
    %v13193 = vsel %vm11913, %v11657, %v12937
    %v13194 = vsel %vm11914, %v11658, %v12938
    %v13195 = vsel %vm11915, %v11659, %v12939
    %v13196 = vsel %vm11916, %v11660, %v12940
    %v13197 = vsel %vm11917, %v11661, %v12941
    %v13198 = vsel %vm11918, %v11662, %v12942
    %v13199 = vsel %vm11919, %v11663, %v12943
    %v13200 = vsel %vm11920, %v11664, %v12944
    %v13201 = vsel %vm11921, %v11665, %v12945
    %v13202 = vsel %vm11922, %v11666, %v12946
    %v13203 = vsel %vm11923, %v11667, %v12947
    %v13204 = vsel %vm11924, %v11668, %v12948
    %v13205 = vsel %vm11925, %v11669, %v12949
    %v13206 = vsel %vm11926, %v11670, %v12950
    %v13207 = vsel %vm11927, %v11671, %v12951
    %v13208 = vsel %vm11928, %v11672, %v12952
    %v13209 = vsel %vm11929, %v11673, %v12953
    %v13210 = vsel %vm11930, %v11674, %v12954
    %v13211 = vsel %vm11931, %v11675, %v12955
    %v13212 = vsel %vm11932, %v11676, %v12956
    %v13213 = vsel %vm11933, %v11677, %v12957
    %v13214 = vsel %vm11934, %v11678, %v12958
    %v13215 = vsel %vm11935, %v11679, %v12959
    %v13216 = vsel %vm11936, %v11680, %v12960
    %v13217 = vsel %vm11937, %v11681, %v12961
    %v13218 = vsel %vm11938, %v11682, %v12962
    %v13219 = vsel %vm11939, %v11683, %v12963
    %v13220 = vsel %vm11940, %v11684, %v12964
    %v13221 = vsel %vm11941, %v11685, %v12965
    %v13222 = vsel %vm11942, %v11686, %v12966
    %v13223 = vsel %vm11943, %v11687, %v12967
    %v13224 = vsel %vm11944, %v11688, %v12968
    %v13225 = vsel %vm11945, %v11689, %v12969
    %v13226 = vsel %vm11946, %v11690, %v12970
    %v13227 = vsel %vm11947, %v11691, %v12971
    %v13228 = vsel %vm11948, %v11692, %v12972
    %v13229 = vsel %vm11949, %v11693, %v12973
    %v13230 = vsel %vm11950, %v11694, %v12974
    %v13231 = vsel %vm11951, %v11695, %v12975
    %v13232 = vsel %vm11952, %v11696, %v12976
    %v13233 = vsel %vm11953, %v11697, %v12977
    %v13234 = vsel %vm11954, %v11698, %v12978
    %v13235 = vsel %vm11955, %v11699, %v12979
    %v13236 = vsel %vm11956, %v11700, %v12980
    %v13237 = vsel %vm11957, %v11701, %v12981
    %v13238 = vsel %vm11958, %v11702, %v12982
    %v13239 = vsel %vm11959, %v11703, %v12983
    %v13240 = vsel %vm11960, %v11704, %v12984
    %v13241 = vsel %vm11961, %v11705, %v12985
    %v13242 = vsel %vm11962, %v11706, %v12986
    %v13243 = vsel %vm11963, %v11707, %v12987
    %v13244 = vsel %vm11964, %v11708, %v12988
    %v13245 = vsel %vm11965, %v11709, %v12989
    %v13246 = vsel %vm11966, %v11710, %v12990
    %v13247 = vsel %vm11967, %v11711, %v12991
    %v13248 = vsel %vm11968, %v11712, %v12992
    %v13249 = vsel %vm11969, %v11713, %v12993
    %v13250 = vsel %vm11970, %v11714, %v12994
    %v13251 = vsel %vm11971, %v11715, %v12995
    %v13252 = vsel %vm11972, %v11716, %v12996
    %v13253 = vsel %vm11973, %v11717, %v12997
    %v13254 = vsel %vm11974, %v11718, %v12998
    %v13255 = vsel %vm11975, %v11719, %v12999
    %v13256 = vsel %vm11976, %v11720, %v13000
    %v13257 = vsel %vm11977, %v11721, %v13001
    %v13258 = vsel %vm11978, %v11722, %v13002
    %v13259 = vsel %vm11979, %v11723, %v13003
    %v13260 = vsel %vm11980, %v11724, %v13004
    %v13261 = vsel %vm11981, %v11725, %v13005
    %v13262 = vsel %vm11982, %v11726, %v13006
    %v13263 = vsel %vm11983, %v11727, %v13007
    %v13264 = vsel %vm11984, %v11728, %v13008
    %v13265 = vsel %vm11985, %v11729, %v13009
    %v13266 = vsel %vm11986, %v11730, %v13010
    %v13267 = vsel %vm11987, %v11731, %v13011
    %v13268 = vsel %vm11988, %v11732, %v13012
    %v13269 = vsel %vm11989, %v11733, %v13013
    %v13270 = vsel %vm11990, %v11734, %v13014
    %v13271 = vsel %vm11991, %v11735, %v13015
    %v13272 = vsel %vm11992, %v11736, %v13016
    %v13273 = vsel %vm11993, %v11737, %v13017
    %v13274 = vsel %vm11994, %v11738, %v13018
    %v13275 = vsel %vm11995, %v11739, %v13019
    %v13276 = vsel %vm11996, %v11740, %v13020
    %v13277 = vsel %vm11997, %v11741, %v13021
    %v13278 = vsel %vm11998, %v11742, %v13022
    %v13279 = vsel %vm11999, %v11743, %v13023
    %v13280 = vsel %vm12000, %v11744, %v13024
    %v13281 = vsel %vm12001, %v11745, %v13025
    %v13282 = vsel %vm12002, %v11746, %v13026
    %v13283 = vsel %vm12003, %v11747, %v13027
    %v13284 = vsel %vm12004, %v11748, %v13028
    %v13285 = vsel %vm12005, %v11749, %v13029
    %v13286 = vsel %vm12006, %v11750, %v13030
    %v13287 = vsel %vm12007, %v11751, %v13031
    %v13288 = vsel %vm12008, %v11752, %v13032
    %v13289 = vsel %vm12009, %v11753, %v13033
    %v13290 = vsel %vm12010, %v11754, %v13034
    %v13291 = vsel %vm12011, %v11755, %v13035
    %v13292 = vsel %vm12012, %v11756, %v13036
    %v13293 = vsel %vm12013, %v11757, %v13037
    %v13294 = vsel %vm12014, %v11758, %v13038
    %v13295 = vsel %vm12015, %v11759, %v13039
    %v13296 = vsel %vm12016, %v11760, %v13040
    %v13297 = vsel %vm12017, %v11761, %v13041
    %v13298 = vsel %vm12018, %v11762, %v13042
    %v13299 = vsel %vm12019, %v11763, %v13043
    %v13300 = vsel %vm12020, %v11764, %v13044
    %v13301 = vsel %vm12021, %v11765, %v13045
    %v13302 = vsel %vm12022, %v11766, %v13046
    %v13303 = vsel %vm12023, %v11767, %v13047
    %v13304 = vsel %vm12024, %v11768, %v13048
    %v13305 = vsel %vm12025, %v11769, %v13049
    %v13306 = vsel %vm12026, %v11770, %v13050
    %v13307 = vsel %vm12027, %v11771, %v13051
    %v13308 = vsel %vm12028, %v11772, %v13052
    %v13309 = vsel %vm12029, %v11773, %v13053
    %v13310 = vsel %vm12030, %v11774, %v13054
    %v13311 = vsel %vm12031, %v11775, %v13055
    %v13312 = vsel %vm12032, %v11776, %v13056
    %v13313 = vsel %vm12033, %v11777, %v13057
    %v13314 = vsel %vm12034, %v11778, %v13058
    %v13315 = vsel %vm12035, %v11779, %v13059
    %v13316 = vsel %vm12036, %v11780, %v13060
    %v13317 = vsel %vm12037, %v11781, %v13061
    %v13318 = vsel %vm12038, %v11782, %v13062
    %v13319 = vsel %vm12039, %v11783, %v13063
    %v13320 = vsel %vm12040, %v11784, %v13064
    %v13321 = vsel %vm12041, %v11785, %v13065
    %v13322 = vsel %vm12042, %v11786, %v13066
    %v13323 = vsel %vm12043, %v11787, %v13067
    %v13324 = vsel %vm12044, %v11788, %v13068
    %v13325 = vsel %vm12045, %v11789, %v13069
    %v13326 = vsel %vm12046, %v11790, %v13070
    %v13327 = vsel %vm12047, %v11791, %v13071
    %v13328 = vsel %vm12048, %v11792, %v13072
    %v13329 = vsel %vm12049, %v11793, %v13073
    %v13330 = vsel %vm12050, %v11794, %v13074
    %v13331 = vsel %vm12051, %v11795, %v13075
    %v13332 = vsel %vm12052, %v11796, %v13076
    %v13333 = vsel %vm12053, %v11797, %v13077
    %v13334 = vsel %vm12054, %v11798, %v13078
    %v13335 = vsel %vm12055, %v11799, %v13079
    %v13336 = vsel %vm12056, %v11800, %v13080
    %v13337 = vsel %vm12057, %v11801, %v13081
    %v13338 = vsel %vm12058, %v11802, %v13082
    %v13339 = vsel %vm12059, %v11803, %v13083
    %v13340 = vsel %vm12060, %v11804, %v13084
    %v13341 = vsel %vm12061, %v11805, %v13085
    %v13342 = vsel %vm12062, %v11806, %v13086
    %v13343 = vsel %vm12063, %v11807, %v13087
    %v13344 = vsel %vm12064, %v11808, %v13088
    %v13345 = vsel %vm12065, %v11809, %v13089
    %v13346 = vsel %vm12066, %v11810, %v13090
    %v13347 = vsel %vm12067, %v11811, %v13091
    %v13348 = vsel %vm12068, %v11812, %v13092
    %v13349 = vsel %vm12069, %v11813, %v13093
    %v13350 = vsel %vm12070, %v11814, %v13094
    %v13351 = vsel %vm12071, %v11815, %v13095
    %v13352 = vsel %vm12072, %v11816, %v13096
    %v13353 = vsel %vm12073, %v11817, %v13097
    %v13354 = vsel %vm12074, %v11818, %v13098
    %v13355 = vsel %vm12075, %v11819, %v13099
    %v13356 = vsel %vm12076, %v11820, %v13100
    %v13357 = vsel %vm12077, %v11821, %v13101
    %v13358 = vsel %vm12078, %v11822, %v13102
    %v13359 = vsel %vm12079, %v11823, %v13103
    %v13360 = vsel %vm12080, %v11824, %v13104
    %v13361 = vsel %vm12081, %v11825, %v13105
    %v13362 = vsel %vm12082, %v11826, %v13106
    %v13363 = vsel %vm12083, %v11827, %v13107
    %v13364 = vsel %vm12084, %v11828, %v13108
    %v13365 = vsel %vm12085, %v11829, %v13109
    %v13366 = vsel %vm12086, %v11830, %v13110
    %v13367 = vsel %vm12087, %v11831, %v13111
    %v13368 = vsel %vm12088, %v11832, %v13112
    %v13369 = vsel %vm12089, %v11833, %v13113
    %v13370 = vsel %vm12090, %v11834, %v13114
    %v13371 = vsel %vm12091, %v11835, %v13115
    %v13372 = vsel %vm12092, %v11836, %v13116
    %v13373 = vsel %vm12093, %v11837, %v13117
    %v13374 = vsel %vm12094, %v11838, %v13118
    %v13375 = vsel %vm12095, %v11839, %v13119
    %v13376 = vsel %vm12096, %v11840, %v13120
    %v13377 = vsel %vm12097, %v11841, %v13121
    %v13378 = vsel %vm12098, %v11842, %v13122
    %v13379 = vsel %vm12099, %v11843, %v13123
    %v13380 = vsel %vm12100, %v11844, %v13124
    %v13381 = vsel %vm12101, %v11845, %v13125
    %v13382 = vsel %vm12102, %v11846, %v13126
    %v13383 = vsel %vm12103, %v11847, %v13127
    %v13384 = vsel %vm12104, %v11848, %v13128
    %v13385 = vsel %vm12105, %v11849, %v13129
    %v13386 = vsel %vm12106, %v11850, %v13130
    %v13387 = vsel %vm12107, %v11851, %v13131
    %v13388 = vsel %vm12108, %v11852, %v13132
    %v13389 = vsel %vm12109, %v11853, %v13133
    %v13390 = vsel %vm12110, %v11854, %v13134
    %v13391 = vsel %vm12111, %v11855, %v13135
    %v13392 = vsel %vm12112, %v11856, %v13136
    %v13393 = vsel %vm12113, %v11857, %v13137
    %v13394 = vsel %vm12114, %v11858, %v13138
    %v13395 = vsel %vm12115, %v11859, %v13139
    %v13396 = vsel %vm12116, %v11860, %v13140
    %v13397 = vsel %vm12117, %v11861, %v13141
    %v13398 = vsel %vm12118, %v11862, %v13142
    %v13399 = vsel %vm12119, %v11863, %v13143
    %v13400 = vsel %vm12120, %v11864, %v13144
    %v13401 = vsel %vm12121, %v11865, %v13145
    %v13402 = vsel %vm12122, %v11866, %v13146
    %v13403 = vsel %vm12123, %v11867, %v13147
    %v13404 = vsel %vm12124, %v11868, %v13148
    %v13405 = vsel %vm12125, %v11869, %v13149
    %v13406 = vsel %vm12126, %v11870, %v13150
    %v13407 = vsel %vm12127, %v11871, %v13151
    %v13408 = vsel %vm12128, %v11872, %v13152
    %v13409 = vsel %vm12129, %v11873, %v13153
    %v13410 = vsel %vm12130, %v11874, %v13154
    %v13411 = vsel %vm12131, %v11875, %v13155
    %v13412 = vsel %vm12132, %v11876, %v13156
    %v13413 = vsel %vm12133, %v11877, %v13157
    %v13414 = vsel %vm12134, %v11878, %v13158
    %v13415 = vsel %vm12135, %v11879, %v13159
    %v13416 = vsel %vm12136, %v11880, %v13160
    %v13417 = vsel %vm12137, %v11881, %v13161
    %v13418 = vsel %vm12138, %v11882, %v13162
    %v13419 = vsel %vm12139, %v11883, %v13163
    %v13420 = vsel %vm12140, %v11884, %v13164
    %v13421 = vsel %vm12141, %v11885, %v13165
    %v13422 = vsel %vm12142, %v11886, %v13166
    %v13423 = vsel %vm12143, %v11887, %v13167
    %v13424 = vsel %vm12144, %v11888, %v13168
    %v13425 = vsel %vm12145, %v11889, %v13169
    %v13682 = vrot.slane %v13171, 7
    %v13683 = vsel %vm5098, %v13682, %v13170
    %v13684 = vrot.slane %v13172, 6
    %v13685 = vsel %vm5100, %v13684, %v13683
    %v13686 = vrot.slane %v13173, 5
    %v13687 = vsel %vm5102, %v13686, %v13685
    %v13688 = vrot.slane %v13174, 4
    %v13689 = vsel %vm5104, %v13688, %v13687
    %v13690 = vrot.slane %v13175, 3
    %v13691 = vsel %vm5106, %v13690, %v13689
    %v13692 = vrot.slane %v13176, 2
    %v13693 = vsel %vm5108, %v13692, %v13691
    %v13694 = vrot.slane %v13177, 1
    %v13695 = vsel %vm5110, %v13694, %v13693
    %v13696 = vrot.slane %v13179, 7
    %v13697 = vsel %vm5098, %v13696, %v13178
    %v13698 = vrot.slane %v13180, 6
    %v13699 = vsel %vm5100, %v13698, %v13697
    %v13700 = vrot.slane %v13181, 5
    %v13701 = vsel %vm5102, %v13700, %v13699
    %v13702 = vrot.slane %v13182, 4
    %v13703 = vsel %vm5104, %v13702, %v13701
    %v13704 = vrot.slane %v13183, 3
    %v13705 = vsel %vm5106, %v13704, %v13703
    %v13706 = vrot.slane %v13184, 2
    %v13707 = vsel %vm5108, %v13706, %v13705
    %v13708 = vrot.slane %v13185, 1
    %v13709 = vsel %vm5110, %v13708, %v13707
    %v13710 = vrot.slane %v13187, 7
    %v13711 = vsel %vm5098, %v13710, %v13186
    %v13712 = vrot.slane %v13188, 6
    %v13713 = vsel %vm5100, %v13712, %v13711
    %v13714 = vrot.slane %v13189, 5
    %v13715 = vsel %vm5102, %v13714, %v13713
    %v13716 = vrot.slane %v13190, 4
    %v13717 = vsel %vm5104, %v13716, %v13715
    %v13718 = vrot.slane %v13191, 3
    %v13719 = vsel %vm5106, %v13718, %v13717
    %v13720 = vrot.slane %v13192, 2
    %v13721 = vsel %vm5108, %v13720, %v13719
    %v13722 = vrot.slane %v13193, 1
    %v13723 = vsel %vm5110, %v13722, %v13721
    %v13724 = vrot.slane %v13195, 7
    %v13725 = vsel %vm5098, %v13724, %v13194
    %v13726 = vrot.slane %v13196, 6
    %v13727 = vsel %vm5100, %v13726, %v13725
    %v13728 = vrot.slane %v13197, 5
    %v13729 = vsel %vm5102, %v13728, %v13727
    %v13730 = vrot.slane %v13198, 4
    %v13731 = vsel %vm5104, %v13730, %v13729
    %v13732 = vrot.slane %v13199, 3
    %v13733 = vsel %vm5106, %v13732, %v13731
    %v13734 = vrot.slane %v13200, 2
    %v13735 = vsel %vm5108, %v13734, %v13733
    %v13736 = vrot.slane %v13201, 1
    %v13737 = vsel %vm5110, %v13736, %v13735
    %v13738 = vrot.slane %v13203, 7
    %v13739 = vsel %vm5098, %v13738, %v13202
    %v13740 = vrot.slane %v13204, 6
    %v13741 = vsel %vm5100, %v13740, %v13739
    %v13742 = vrot.slane %v13205, 5
    %v13743 = vsel %vm5102, %v13742, %v13741
    %v13744 = vrot.slane %v13206, 4
    %v13745 = vsel %vm5104, %v13744, %v13743
    %v13746 = vrot.slane %v13207, 3
    %v13747 = vsel %vm5106, %v13746, %v13745
    %v13748 = vrot.slane %v13208, 2
    %v13749 = vsel %vm5108, %v13748, %v13747
    %v13750 = vrot.slane %v13209, 1
    %v13751 = vsel %vm5110, %v13750, %v13749
    %v13752 = vrot.slane %v13211, 7
    %v13753 = vsel %vm5098, %v13752, %v13210
    %v13754 = vrot.slane %v13212, 6
    %v13755 = vsel %vm5100, %v13754, %v13753
    %v13756 = vrot.slane %v13213, 5
    %v13757 = vsel %vm5102, %v13756, %v13755
    %v13758 = vrot.slane %v13214, 4
    %v13759 = vsel %vm5104, %v13758, %v13757
    %v13760 = vrot.slane %v13215, 3
    %v13761 = vsel %vm5106, %v13760, %v13759
    %v13762 = vrot.slane %v13216, 2
    %v13763 = vsel %vm5108, %v13762, %v13761
    %v13764 = vrot.slane %v13217, 1
    %v13765 = vsel %vm5110, %v13764, %v13763
    %v13766 = vrot.slane %v13219, 7
    %v13767 = vsel %vm5098, %v13766, %v13218
    %v13768 = vrot.slane %v13220, 6
    %v13769 = vsel %vm5100, %v13768, %v13767
    %v13770 = vrot.slane %v13221, 5
    %v13771 = vsel %vm5102, %v13770, %v13769
    %v13772 = vrot.slane %v13222, 4
    %v13773 = vsel %vm5104, %v13772, %v13771
    %v13774 = vrot.slane %v13223, 3
    %v13775 = vsel %vm5106, %v13774, %v13773
    %v13776 = vrot.slane %v13224, 2
    %v13777 = vsel %vm5108, %v13776, %v13775
    %v13778 = vrot.slane %v13225, 1
    %v13779 = vsel %vm5110, %v13778, %v13777
    %v13780 = vrot.slane %v13227, 7
    %v13781 = vsel %vm5098, %v13780, %v13226
    %v13782 = vrot.slane %v13228, 6
    %v13783 = vsel %vm5100, %v13782, %v13781
    %v13784 = vrot.slane %v13229, 5
    %v13785 = vsel %vm5102, %v13784, %v13783
    %v13786 = vrot.slane %v13230, 4
    %v13787 = vsel %vm5104, %v13786, %v13785
    %v13788 = vrot.slane %v13231, 3
    %v13789 = vsel %vm5106, %v13788, %v13787
    %v13790 = vrot.slane %v13232, 2
    %v13791 = vsel %vm5108, %v13790, %v13789
    %v13792 = vrot.slane %v13233, 1
    %v13793 = vsel %vm5110, %v13792, %v13791
    %v13794 = vrot.slane %v13235, 7
    %v13795 = vsel %vm5098, %v13794, %v13234
    %v13796 = vrot.slane %v13236, 6
    %v13797 = vsel %vm5100, %v13796, %v13795
    %v13798 = vrot.slane %v13237, 5
    %v13799 = vsel %vm5102, %v13798, %v13797
    %v13800 = vrot.slane %v13238, 4
    %v13801 = vsel %vm5104, %v13800, %v13799
    %v13802 = vrot.slane %v13239, 3
    %v13803 = vsel %vm5106, %v13802, %v13801
    %v13804 = vrot.slane %v13240, 2
    %v13805 = vsel %vm5108, %v13804, %v13803
    %v13806 = vrot.slane %v13241, 1
    %v13807 = vsel %vm5110, %v13806, %v13805
    %v13808 = vrot.slane %v13243, 7
    %v13809 = vsel %vm5098, %v13808, %v13242
    %v13810 = vrot.slane %v13244, 6
    %v13811 = vsel %vm5100, %v13810, %v13809
    %v13812 = vrot.slane %v13245, 5
    %v13813 = vsel %vm5102, %v13812, %v13811
    %v13814 = vrot.slane %v13246, 4
    %v13815 = vsel %vm5104, %v13814, %v13813
    %v13816 = vrot.slane %v13247, 3
    %v13817 = vsel %vm5106, %v13816, %v13815
    %v13818 = vrot.slane %v13248, 2
    %v13819 = vsel %vm5108, %v13818, %v13817
    %v13820 = vrot.slane %v13249, 1
    %v13821 = vsel %vm5110, %v13820, %v13819
    %v13822 = vrot.slane %v13251, 7
    %v13823 = vsel %vm5098, %v13822, %v13250
    %v13824 = vrot.slane %v13252, 6
    %v13825 = vsel %vm5100, %v13824, %v13823
    %v13826 = vrot.slane %v13253, 5
    %v13827 = vsel %vm5102, %v13826, %v13825
    %v13828 = vrot.slane %v13254, 4
    %v13829 = vsel %vm5104, %v13828, %v13827
    %v13830 = vrot.slane %v13255, 3
    %v13831 = vsel %vm5106, %v13830, %v13829
    %v13832 = vrot.slane %v13256, 2
    %v13833 = vsel %vm5108, %v13832, %v13831
    %v13834 = vrot.slane %v13257, 1
    %v13835 = vsel %vm5110, %v13834, %v13833
    %v13836 = vrot.slane %v13259, 7
    %v13837 = vsel %vm5098, %v13836, %v13258
    %v13838 = vrot.slane %v13260, 6
    %v13839 = vsel %vm5100, %v13838, %v13837
    %v13840 = vrot.slane %v13261, 5
    %v13841 = vsel %vm5102, %v13840, %v13839
    %v13842 = vrot.slane %v13262, 4
    %v13843 = vsel %vm5104, %v13842, %v13841
    %v13844 = vrot.slane %v13263, 3
    %v13845 = vsel %vm5106, %v13844, %v13843
    %v13846 = vrot.slane %v13264, 2
    %v13847 = vsel %vm5108, %v13846, %v13845
    %v13848 = vrot.slane %v13265, 1
    %v13849 = vsel %vm5110, %v13848, %v13847
    %v13850 = vrot.slane %v13267, 7
    %v13851 = vsel %vm5098, %v13850, %v13266
    %v13852 = vrot.slane %v13268, 6
    %v13853 = vsel %vm5100, %v13852, %v13851
    %v13854 = vrot.slane %v13269, 5
    %v13855 = vsel %vm5102, %v13854, %v13853
    %v13856 = vrot.slane %v13270, 4
    %v13857 = vsel %vm5104, %v13856, %v13855
    %v13858 = vrot.slane %v13271, 3
    %v13859 = vsel %vm5106, %v13858, %v13857
    %v13860 = vrot.slane %v13272, 2
    %v13861 = vsel %vm5108, %v13860, %v13859
    %v13862 = vrot.slane %v13273, 1
    %v13863 = vsel %vm5110, %v13862, %v13861
    %v13864 = vrot.slane %v13275, 7
    %v13865 = vsel %vm5098, %v13864, %v13274
    %v13866 = vrot.slane %v13276, 6
    %v13867 = vsel %vm5100, %v13866, %v13865
    %v13868 = vrot.slane %v13277, 5
    %v13869 = vsel %vm5102, %v13868, %v13867
    %v13870 = vrot.slane %v13278, 4
    %v13871 = vsel %vm5104, %v13870, %v13869
    %v13872 = vrot.slane %v13279, 3
    %v13873 = vsel %vm5106, %v13872, %v13871
    %v13874 = vrot.slane %v13280, 2
    %v13875 = vsel %vm5108, %v13874, %v13873
    %v13876 = vrot.slane %v13281, 1
    %v13877 = vsel %vm5110, %v13876, %v13875
    %v13878 = vrot.slane %v13283, 7
    %v13879 = vsel %vm5098, %v13878, %v13282
    %v13880 = vrot.slane %v13284, 6
    %v13881 = vsel %vm5100, %v13880, %v13879
    %v13882 = vrot.slane %v13285, 5
    %v13883 = vsel %vm5102, %v13882, %v13881
    %v13884 = vrot.slane %v13286, 4
    %v13885 = vsel %vm5104, %v13884, %v13883
    %v13886 = vrot.slane %v13287, 3
    %v13887 = vsel %vm5106, %v13886, %v13885
    %v13888 = vrot.slane %v13288, 2
    %v13889 = vsel %vm5108, %v13888, %v13887
    %v13890 = vrot.slane %v13289, 1
    %v13891 = vsel %vm5110, %v13890, %v13889
    %v13892 = vrot.slane %v13291, 7
    %v13893 = vsel %vm5098, %v13892, %v13290
    %v13894 = vrot.slane %v13292, 6
    %v13895 = vsel %vm5100, %v13894, %v13893
    %v13896 = vrot.slane %v13293, 5
    %v13897 = vsel %vm5102, %v13896, %v13895
    %v13898 = vrot.slane %v13294, 4
    %v13899 = vsel %vm5104, %v13898, %v13897
    %v13900 = vrot.slane %v13295, 3
    %v13901 = vsel %vm5106, %v13900, %v13899
    %v13902 = vrot.slane %v13296, 2
    %v13903 = vsel %vm5108, %v13902, %v13901
    %v13904 = vrot.slane %v13297, 1
    %v13905 = vsel %vm5110, %v13904, %v13903
    %v13906 = vrot.slane %v13299, 7
    %v13907 = vsel %vm5098, %v13906, %v13298
    %v13908 = vrot.slane %v13300, 6
    %v13909 = vsel %vm5100, %v13908, %v13907
    %v13910 = vrot.slane %v13301, 5
    %v13911 = vsel %vm5102, %v13910, %v13909
    %v13912 = vrot.slane %v13302, 4
    %v13913 = vsel %vm5104, %v13912, %v13911
    %v13914 = vrot.slane %v13303, 3
    %v13915 = vsel %vm5106, %v13914, %v13913
    %v13916 = vrot.slane %v13304, 2
    %v13917 = vsel %vm5108, %v13916, %v13915
    %v13918 = vrot.slane %v13305, 1
    %v13919 = vsel %vm5110, %v13918, %v13917
    %v13920 = vrot.slane %v13307, 7
    %v13921 = vsel %vm5098, %v13920, %v13306
    %v13922 = vrot.slane %v13308, 6
    %v13923 = vsel %vm5100, %v13922, %v13921
    %v13924 = vrot.slane %v13309, 5
    %v13925 = vsel %vm5102, %v13924, %v13923
    %v13926 = vrot.slane %v13310, 4
    %v13927 = vsel %vm5104, %v13926, %v13925
    %v13928 = vrot.slane %v13311, 3
    %v13929 = vsel %vm5106, %v13928, %v13927
    %v13930 = vrot.slane %v13312, 2
    %v13931 = vsel %vm5108, %v13930, %v13929
    %v13932 = vrot.slane %v13313, 1
    %v13933 = vsel %vm5110, %v13932, %v13931
    %v13934 = vrot.slane %v13315, 7
    %v13935 = vsel %vm5098, %v13934, %v13314
    %v13936 = vrot.slane %v13316, 6
    %v13937 = vsel %vm5100, %v13936, %v13935
    %v13938 = vrot.slane %v13317, 5
    %v13939 = vsel %vm5102, %v13938, %v13937
    %v13940 = vrot.slane %v13318, 4
    %v13941 = vsel %vm5104, %v13940, %v13939
    %v13942 = vrot.slane %v13319, 3
    %v13943 = vsel %vm5106, %v13942, %v13941
    %v13944 = vrot.slane %v13320, 2
    %v13945 = vsel %vm5108, %v13944, %v13943
    %v13946 = vrot.slane %v13321, 1
    %v13947 = vsel %vm5110, %v13946, %v13945
    %v13948 = vrot.slane %v13323, 7
    %v13949 = vsel %vm5098, %v13948, %v13322
    %v13950 = vrot.slane %v13324, 6
    %v13951 = vsel %vm5100, %v13950, %v13949
    %v13952 = vrot.slane %v13325, 5
    %v13953 = vsel %vm5102, %v13952, %v13951
    %v13954 = vrot.slane %v13326, 4
    %v13955 = vsel %vm5104, %v13954, %v13953
    %v13956 = vrot.slane %v13327, 3
    %v13957 = vsel %vm5106, %v13956, %v13955
    %v13958 = vrot.slane %v13328, 2
    %v13959 = vsel %vm5108, %v13958, %v13957
    %v13960 = vrot.slane %v13329, 1
    %v13961 = vsel %vm5110, %v13960, %v13959
    %v13962 = vrot.slane %v13331, 7
    %v13963 = vsel %vm5098, %v13962, %v13330
    %v13964 = vrot.slane %v13332, 6
    %v13965 = vsel %vm5100, %v13964, %v13963
    %v13966 = vrot.slane %v13333, 5
    %v13967 = vsel %vm5102, %v13966, %v13965
    %v13968 = vrot.slane %v13334, 4
    %v13969 = vsel %vm5104, %v13968, %v13967
    %v13970 = vrot.slane %v13335, 3
    %v13971 = vsel %vm5106, %v13970, %v13969
    %v13972 = vrot.slane %v13336, 2
    %v13973 = vsel %vm5108, %v13972, %v13971
    %v13974 = vrot.slane %v13337, 1
    %v13975 = vsel %vm5110, %v13974, %v13973
    %v13976 = vrot.slane %v13339, 7
    %v13977 = vsel %vm5098, %v13976, %v13338
    %v13978 = vrot.slane %v13340, 6
    %v13979 = vsel %vm5100, %v13978, %v13977
    %v13980 = vrot.slane %v13341, 5
    %v13981 = vsel %vm5102, %v13980, %v13979
    %v13982 = vrot.slane %v13342, 4
    %v13983 = vsel %vm5104, %v13982, %v13981
    %v13984 = vrot.slane %v13343, 3
    %v13985 = vsel %vm5106, %v13984, %v13983
    %v13986 = vrot.slane %v13344, 2
    %v13987 = vsel %vm5108, %v13986, %v13985
    %v13988 = vrot.slane %v13345, 1
    %v13989 = vsel %vm5110, %v13988, %v13987
    %v13990 = vrot.slane %v13347, 7
    %v13991 = vsel %vm5098, %v13990, %v13346
    %v13992 = vrot.slane %v13348, 6
    %v13993 = vsel %vm5100, %v13992, %v13991
    %v13994 = vrot.slane %v13349, 5
    %v13995 = vsel %vm5102, %v13994, %v13993
    %v13996 = vrot.slane %v13350, 4
    %v13997 = vsel %vm5104, %v13996, %v13995
    %v13998 = vrot.slane %v13351, 3
    %v13999 = vsel %vm5106, %v13998, %v13997
    %v14000 = vrot.slane %v13352, 2
    %v14001 = vsel %vm5108, %v14000, %v13999
    %v14002 = vrot.slane %v13353, 1
    %v14003 = vsel %vm5110, %v14002, %v14001
    %v14004 = vrot.slane %v13355, 7
    %v14005 = vsel %vm5098, %v14004, %v13354
    %v14006 = vrot.slane %v13356, 6
    %v14007 = vsel %vm5100, %v14006, %v14005
    %v14008 = vrot.slane %v13357, 5
    %v14009 = vsel %vm5102, %v14008, %v14007
    %v14010 = vrot.slane %v13358, 4
    %v14011 = vsel %vm5104, %v14010, %v14009
    %v14012 = vrot.slane %v13359, 3
    %v14013 = vsel %vm5106, %v14012, %v14011
    %v14014 = vrot.slane %v13360, 2
    %v14015 = vsel %vm5108, %v14014, %v14013
    %v14016 = vrot.slane %v13361, 1
    %v14017 = vsel %vm5110, %v14016, %v14015
    %v14018 = vrot.slane %v13363, 7
    %v14019 = vsel %vm5098, %v14018, %v13362
    %v14020 = vrot.slane %v13364, 6
    %v14021 = vsel %vm5100, %v14020, %v14019
    %v14022 = vrot.slane %v13365, 5
    %v14023 = vsel %vm5102, %v14022, %v14021
    %v14024 = vrot.slane %v13366, 4
    %v14025 = vsel %vm5104, %v14024, %v14023
    %v14026 = vrot.slane %v13367, 3
    %v14027 = vsel %vm5106, %v14026, %v14025
    %v14028 = vrot.slane %v13368, 2
    %v14029 = vsel %vm5108, %v14028, %v14027
    %v14030 = vrot.slane %v13369, 1
    %v14031 = vsel %vm5110, %v14030, %v14029
    %v14032 = vrot.slane %v13371, 7
    %v14033 = vsel %vm5098, %v14032, %v13370
    %v14034 = vrot.slane %v13372, 6
    %v14035 = vsel %vm5100, %v14034, %v14033
    %v14036 = vrot.slane %v13373, 5
    %v14037 = vsel %vm5102, %v14036, %v14035
    %v14038 = vrot.slane %v13374, 4
    %v14039 = vsel %vm5104, %v14038, %v14037
    %v14040 = vrot.slane %v13375, 3
    %v14041 = vsel %vm5106, %v14040, %v14039
    %v14042 = vrot.slane %v13376, 2
    %v14043 = vsel %vm5108, %v14042, %v14041
    %v14044 = vrot.slane %v13377, 1
    %v14045 = vsel %vm5110, %v14044, %v14043
    %v14046 = vrot.slane %v13379, 7
    %v14047 = vsel %vm5098, %v14046, %v13378
    %v14048 = vrot.slane %v13380, 6
    %v14049 = vsel %vm5100, %v14048, %v14047
    %v14050 = vrot.slane %v13381, 5
    %v14051 = vsel %vm5102, %v14050, %v14049
    %v14052 = vrot.slane %v13382, 4
    %v14053 = vsel %vm5104, %v14052, %v14051
    %v14054 = vrot.slane %v13383, 3
    %v14055 = vsel %vm5106, %v14054, %v14053
    %v14056 = vrot.slane %v13384, 2
    %v14057 = vsel %vm5108, %v14056, %v14055
    %v14058 = vrot.slane %v13385, 1
    %v14059 = vsel %vm5110, %v14058, %v14057
    %v14060 = vrot.slane %v13387, 7
    %v14061 = vsel %vm5098, %v14060, %v13386
    %v14062 = vrot.slane %v13388, 6
    %v14063 = vsel %vm5100, %v14062, %v14061
    %v14064 = vrot.slane %v13389, 5
    %v14065 = vsel %vm5102, %v14064, %v14063
    %v14066 = vrot.slane %v13390, 4
    %v14067 = vsel %vm5104, %v14066, %v14065
    %v14068 = vrot.slane %v13391, 3
    %v14069 = vsel %vm5106, %v14068, %v14067
    %v14070 = vrot.slane %v13392, 2
    %v14071 = vsel %vm5108, %v14070, %v14069
    %v14072 = vrot.slane %v13393, 1
    %v14073 = vsel %vm5110, %v14072, %v14071
    %v14074 = vrot.slane %v13395, 7
    %v14075 = vsel %vm5098, %v14074, %v13394
    %v14076 = vrot.slane %v13396, 6
    %v14077 = vsel %vm5100, %v14076, %v14075
    %v14078 = vrot.slane %v13397, 5
    %v14079 = vsel %vm5102, %v14078, %v14077
    %v14080 = vrot.slane %v13398, 4
    %v14081 = vsel %vm5104, %v14080, %v14079
    %v14082 = vrot.slane %v13399, 3
    %v14083 = vsel %vm5106, %v14082, %v14081
    %v14084 = vrot.slane %v13400, 2
    %v14085 = vsel %vm5108, %v14084, %v14083
    %v14086 = vrot.slane %v13401, 1
    %v14087 = vsel %vm5110, %v14086, %v14085
    %v14088 = vrot.slane %v13403, 7
    %v14089 = vsel %vm5098, %v14088, %v13402
    %v14090 = vrot.slane %v13404, 6
    %v14091 = vsel %vm5100, %v14090, %v14089
    %v14092 = vrot.slane %v13405, 5
    %v14093 = vsel %vm5102, %v14092, %v14091
    %v14094 = vrot.slane %v13406, 4
    %v14095 = vsel %vm5104, %v14094, %v14093
    %v14096 = vrot.slane %v13407, 3
    %v14097 = vsel %vm5106, %v14096, %v14095
    %v14098 = vrot.slane %v13408, 2
    %v14099 = vsel %vm5108, %v14098, %v14097
    %v14100 = vrot.slane %v13409, 1
    %v14101 = vsel %vm5110, %v14100, %v14099
    %v14102 = vrot.slane %v13411, 7
    %v14103 = vsel %vm5098, %v14102, %v13410
    %v14104 = vrot.slane %v13412, 6
    %v14105 = vsel %vm5100, %v14104, %v14103
    %v14106 = vrot.slane %v13413, 5
    %v14107 = vsel %vm5102, %v14106, %v14105
    %v14108 = vrot.slane %v13414, 4
    %v14109 = vsel %vm5104, %v14108, %v14107
    %v14110 = vrot.slane %v13415, 3
    %v14111 = vsel %vm5106, %v14110, %v14109
    %v14112 = vrot.slane %v13416, 2
    %v14113 = vsel %vm5108, %v14112, %v14111
    %v14114 = vrot.slane %v13417, 1
    %v14115 = vsel %vm5110, %v14114, %v14113
    %v14116 = vrot.slane %v13419, 7
    %v14117 = vsel %vm5098, %v14116, %v13418
    %v14118 = vrot.slane %v13420, 6
    %v14119 = vsel %vm5100, %v14118, %v14117
    %v14120 = vrot.slane %v13421, 5
    %v14121 = vsel %vm5102, %v14120, %v14119
    %v14122 = vrot.slane %v13422, 4
    %v14123 = vsel %vm5104, %v14122, %v14121
    %v14124 = vrot.slane %v13423, 3
    %v14125 = vsel %vm5106, %v14124, %v14123
    %v14126 = vrot.slane %v13424, 2
    %v14127 = vsel %vm5108, %v14126, %v14125
    %v14128 = vrot.slane %v13425, 1
    %v14129 = vsel %vm5110, %v14128, %v14127
    %14162 = vst [vmem:[#allocation8] sm:$0xff] %v13695
    %14163 = vst [vmem:[#allocation8 + $0x8] sm:$0xff] %v13709
    %14164 = vst [vmem:[#allocation8 + $0x10] sm:$0xff] %v13723
    %14165 = vst [vmem:[#allocation8 + $0x18] sm:$0xff] %v13737
    %14166 = vst [vmem:[#allocation8 + $0x20] sm:$0xff] %v13751
    %14167 = vst [vmem:[#allocation8 + $0x28] sm:$0xff] %v13765
    %14168 = vst [vmem:[#allocation8 + $0x30] sm:$0xff] %v13779
    %14169 = vst [vmem:[#allocation8 + $0x38] sm:$0xff] %v13793
    %14170 = vst [vmem:[#allocation8 + $0x40] sm:$0xff] %v13807
    %14171 = vst [vmem:[#allocation8 + $0x48] sm:$0xff] %v13821
    %14172 = vst [vmem:[#allocation8 + $0x50] sm:$0xff] %v13835
    %14173 = vst [vmem:[#allocation8 + $0x58] sm:$0xff] %v13849
    %14174 = vst [vmem:[#allocation8 + $0x60] sm:$0xff] %v13863
    %14175 = vst [vmem:[#allocation8 + $0x68] sm:$0xff] %v13877
    %14176 = vst [vmem:[#allocation8 + $0x70] sm:$0xff] %v13891
    %14177 = vst [vmem:[#allocation8 + $0x78] sm:$0xff] %v13905
    %14178 = vst [vmem:[#allocation8 + $0x80] sm:$0xff] %v13919
    %14179 = vst [vmem:[#allocation8 + $0x88] sm:$0xff] %v13933
    %14180 = vst [vmem:[#allocation8 + $0x90] sm:$0xff] %v13947
    %14181 = vst [vmem:[#allocation8 + $0x98] sm:$0xff] %v13961
    %14182 = vst [vmem:[#allocation8 + $0xa0] sm:$0xff] %v13975
    %14183 = vst [vmem:[#allocation8 + $0xa8] sm:$0xff] %v13989
    %14184 = vst [vmem:[#allocation8 + $0xb0] sm:$0xff] %v14003
    %14185 = vst [vmem:[#allocation8 + $0xb8] sm:$0xff] %v14017
    %14186 = vst [vmem:[#allocation8 + $0xc0] sm:$0xff] %v14031
    %14187 = vst [vmem:[#allocation8 + $0xc8] sm:$0xff] %v14045
    %14188 = vst [vmem:[#allocation8 + $0xd0] sm:$0xff] %v14059
    %14189 = vst [vmem:[#allocation8 + $0xd8] sm:$0xff] %v14073
    %14190 = vst [vmem:[#allocation8 + $0xe0] sm:$0xff] %v14087
    %14191 = vst [vmem:[#allocation8 + $0xe8] sm:$0xff] %v14101
    %14192 = vst [vmem:[#allocation8 + $0xf0] sm:$0xff] %v14115
    %14193 = vst [vmem:[#allocation8 + $0xf8] sm:$0xff] %v14129
    // Predicated region
    $region30: #{tpu_custom_call.1} parent=1 // pred_check
      _
    $region31: #{tpu_custom_call.1} parent=1 // pred_check_branch
      %14195 = sbr.rel (0) target = $region33
    $region32: #{tpu_custom_call.1} parent=1 // pred_region
      %s14197 = ssub.s32 4096, 4096
      %14198 = vsyncadd [#allocation4], %s14197
      %s14199 = sshll.u32 [#allocation8], 4
      %s14200 = int_to_ptr.vmem [resolvable:$true] %s14199
      %14205 = dma.vmem_to_hbm [thread:$0]  %s14200, 4096, %s4, [#allocation4], 128, 128, 8
    $region33: #{tpu_custom_call.1} parent=1 // pred_fallthru
      _
    // Predicated region
    $region34: #{tpu_custom_call.1} parent=1 // pred_check
      _
    $region35: #{tpu_custom_call.1} parent=1 // pred_check_branch
      %14207 = sbr.rel (0) target = $region37
    $region36: #{tpu_custom_call.1} parent=1 // pred_region
      %14208 = dma.done [#allocation4], 4096
    $region37: #{tpu_custom_call.1} parent=1 // pred_fallthru
      _
    %14209 = vsyncpa [#allocation3], 1
    %14210 = vsyncpa [#allocation6], 1
    %14211 = vsyncpa [#allocation4], 1

</llo_original>
